<compile_context>
chip_gen: v6e
topology: v6e:2x2x1
jax: 0.10.0
libtpu: 0.0.40
codegen_flags: <defaults>
</compile_context>

<pallas_src>
import math
from functools import partial

import jax
import jax.numpy as jnp
from jax import lax
from jax.experimental import pallas as pl
from jax.experimental.pallas import tpu as pltpu

# Scaled-down configuration (reference: DIM=512, 8 heads).
DIM = 128
NUM_HEADS = 4
HEAD_DIM = DIM // NUM_HEADS
HIDDEN = DIM                       # FeedForward(hidden_dim=None) -> hidden == dim
LN_EPS = 1e-5
MASK_VALUE = -1e30                 # finite stand-in for -inf (avoids NaN rows)
MXU_DTYPE = jnp.bfloat16           # matmul operand dtype (f32 accumulation)


# ---------------------------------------------------------------------------
# elementwise helpers used inside the kernel
# ---------------------------------------------------------------------------
def _erf(x):
    # Abramowitz & Stegun 7.1.26 rational approximation (|err| < 1.5e-7).
    # TODO(synk): Mosaic has no direct erf lowering; this reproduces the
    # exact-erf GELU (nn.GELU default) to ~f32 precision with exp/select only.
    a1, a2, a3, a4, a5 = 0.254829592, -0.284496736, 1.421413741, -1.453152027, 1.061405429
    p = 0.3275911
    s = jnp.where(x < 0.0, -1.0, 1.0)
    ax = x * s
    # approx reciprocal -> EUP slot instead of a VALU-heavy f32 divide.
    t = pl.reciprocal(1.0 + p * ax, approx=True)
    poly = ((((a5 * t + a4) * t + a3) * t + a2) * t + a1) * t
    return s * (1.0 - poly * jnp.exp(-ax * ax))


def _gelu(x):
    return 0.5 * x * (1.0 + _erf(x * (1.0 / math.sqrt(2.0))))


def _c(x):
    # cast to the MXU operand dtype right before a matmul (f32 accumulate).
    return x.astype(MXU_DTYPE)


# ---------------------------------------------------------------------------
# multi-head attention on a (block_b*seq, DIM) slab, masks built in-kernel
# ---------------------------------------------------------------------------
def _mha(q2d, k2d, v2d, km, tri, scale, block_b, seq):
    """q2d/k2d/v2d: (block_b*seq, DIM) f32.
    km:  (block_b, H, seq) f32 in {0,1}, 1 == masked key, or None.
    tri: (seq, seq) bool, True == masked (self-attn triangle), or None.
    Returns (block_b*seq, DIM) f32."""
    q2d = q2d * scale                              # fold 1/sqrt(head_dim) into q
    outs = []
    for h in range(NUM_HEADS):                     # static loop, H is small
        lo = h * HEAD_DIM
        qh = _c(q2d[:, lo:lo + HEAD_DIM]).reshape(block_b, seq, HEAD_DIM)
        kh = _c(k2d[:, lo:lo + HEAD_DIM]).reshape(block_b, seq, HEAD_DIM)
        vh = _c(v2d[:, lo:lo + HEAD_DIM]).reshape(block_b, seq, HEAD_DIM)
        s = jnp.einsum('bqd,bkd->bqk', qh, kh,
                       preferred_element_type=jnp.float32)     # (block_b, S, S)
        if km is not None:
            pad_h = km[:, h, :][:, None, :] > 0.5              # (block_b, 1, S)
            if tri is not None:
                masked = jnp.logical_and(pad_h, tri[None, :, :])
            else:
                masked = jnp.broadcast_to(pad_h, s.shape)
        elif tri is not None:
            masked = jnp.broadcast_to(tri[None, :, :], s.shape)
        else:
            masked = None
        if masked is not None:
            s = jnp.where(masked, MASK_VALUE, s)
        m = jnp.max(s, axis=-1, keepdims=True)
        e = jnp.exp(s - m)
        p = e * pl.reciprocal(jnp.sum(e, axis=-1, keepdims=True), approx=True)
        outs.append(jnp.einsum('bqk,bkd->bqd', _c(p), vh,
                               preferred_element_type=jnp.float32))
    return jnp.concatenate(outs, axis=-1).reshape(block_b * seq, DIM)


# ---------------------------------------------------------------------------
# fused DecoderBlock kernel (one grid step == BLOCK_B batch elements)
# ---------------------------------------------------------------------------
def _decoder_block_kernel(*refs, scale, has_pad, block_b, seq):
    x_ref, enc_ref = refs[0], refs[1]
    km_ref = refs[2] if has_pad else None
    wofs = 3 if has_pad else 2
    (sa_wqkv, sa_bqkv, sa_wo, sa_bo,
     eda_wq, eda_bq, eda_wkv, eda_bkv, eda_wo, eda_bo,
     ln_g, ln_b, w1, b1, w2, b2, o_ref) = refs[wofs:]

    m_rows = block_b * seq
    x = x_ref[...].reshape(m_rows, DIM)            # (M, D) f32
    enc = enc_ref[...].reshape(m_rows, DIM)        # (M, D) f32

    km = km_ref[...] if has_pad else None          # (block_b, H, S) f32 {0,1}

    # Causal triangle with the reference's polarity: triu(ones,1)==0 is True
    # on the diagonal + lower triangle, and True positions get masked.
    row = lax.broadcasted_iota(jnp.int32, (seq, seq), 0)
    col = lax.broadcasted_iota(jnp.int32, (seq, seq), 1)
    tri = row >= col                               # (S, S) bool, True == masked

    # ---- masked self-attention + residual ---------------------------------
    qkv = jnp.dot(_c(x), sa_wqkv[...],
                  preferred_element_type=jnp.float32) + sa_bqkv[...]
    attn = _mha(qkv[:, :DIM], qkv[:, DIM:2 * DIM], qkv[:, 2 * DIM:],
                km, tri, scale, block_b, seq)
    x = jnp.dot(_c(attn), sa_wo[...],
                preferred_element_type=jnp.float32) + sa_bo[...] + x

    # ---- encoder-decoder (cross) attention + residual ----------------------
    q = jnp.dot(_c(x), eda_wq[...],
                preferred_element_type=jnp.float32) + eda_bq[...]
    kv = jnp.dot(_c(enc), eda_wkv[...],
                 preferred_element_type=jnp.float32) + eda_bkv[...]
    attn = _mha(q, kv[:, :DIM], kv[:, DIM:], km, None, scale, block_b, seq)
    x = jnp.dot(_c(attn), eda_wo[...],
                preferred_element_type=jnp.float32) + eda_bo[...] + x

    # ---- FeedForward (LayerNorm -> Linear -> GELU -> Linear -> GELU) + res --
    mu = jnp.mean(x, axis=-1, keepdims=True)
    var = jnp.mean(jnp.square(x - mu), axis=-1, keepdims=True)
    h = (x - mu) * lax.rsqrt(var + LN_EPS) * ln_g[...] + ln_b[...]
    h = _gelu(jnp.dot(_c(h), w1[...],
                      preferred_element_type=jnp.float32) + b1[...])
    h = _gelu(jnp.dot(_c(h), w2[...],
                      preferred_element_type=jnp.float32) + b2[...])
    o_ref[...] = (x + h).reshape(block_b, seq, DIM)


# ---------------------------------------------------------------------------
# glue (outside the kernel): padding mask with the reference's head pairing
# ---------------------------------------------------------------------------
def _key_mask(padding_mask, B):
    """(B, S) bool -> (B, H, S) f32 {0,1}, 1 == masked key.

    Replicates the reference verbatim: the torch module builds the 3-D mask
    with `.repeat(num_heads, 1, 1)` while F.multi_head_attention_forward
    indexes scores as b*num_heads + h, so head h of batch b sees
    padding_mask[(b*num_heads + h) % B]."""
    src = (jnp.arange(B)[:, None] * NUM_HEADS
           + jnp.arange(NUM_HEADS)[None, :]) % B            # (B, H)
    return padding_mask.astype(jnp.float32)[src]            # (B, H, S)


# ---------------------------------------------------------------------------
# wrapper: one pallas_call for the whole DecoderBlock forward
# ---------------------------------------------------------------------------
def decoder_block_forward(params, x, encoded, padding_mask=None, block_b=None):
    """Pallas equivalent of DecoderBlock.forward(x, encoded, padding_mask).

    `padding_mask` is a bool (B, S) array with True == masked key position
    (same convention as the bool attn_mask it is AND-ed with in the PyTorch
    reference), or None."""
    B, S, D = x.shape
    assert D == DIM
    if block_b is None:
        # Largest batch block that still leaves a parallel grid of >= 2 steps
        # (keeps both v7x TensorCores busy).
        block_b = 1
        for cand in (8, 4, 2):
            if B % cand == 0 and B // cand >= 2:
                block_b = cand
                break
    assert B % block_b == 0
    grid = (B // block_b,)
    scale = 1.0 / math.sqrt(HEAD_DIM)

    has_pad = padding_mask is not None
    km = _key_mask(padding_mask, B) if has_pad else None     # tiny (B, H, S) f32

    act_spec = pl.BlockSpec((block_b, S, D), lambda b: (b, 0, 0))
    # Whole-array, single-copy VMEM residency for the (small) weight set:
    # no per-step re-fetch and no double-buffering.
    vmem_full = pl.BlockSpec(memory_space=pltpu.MemorySpace.VMEM)

    inputs = [x, encoded]
    in_specs = [act_spec, act_spec]
    if has_pad:
        inputs.append(km)
        in_specs.append(pl.BlockSpec((block_b, NUM_HEADS, S), lambda b: (b, 0, 0)))

    p = params
    weights = [p["sa_wqkv"], p["sa_bqkv"], p["sa_wo"], p["sa_bo"],
               p["eda_wq"], p["eda_bq"], p["eda_wkv"], p["eda_bkv"],
               p["eda_wo"], p["eda_bo"],
               p["ln_g"], p["ln_b"],
               p["w1"], p["b1"], p["w2"], p["b2"]]
    inputs += weights
    in_specs += [vmem_full] * len(weights)

    kernel = partial(_decoder_block_kernel, scale=scale, has_pad=has_pad,
                     block_b=block_b, seq=S)
    # TODO(synk): at the reference scale (DIM=512, long sequences) add a grid
    # axis tiling S (or an inner pltpu.emit_pipeline) instead of whole-(S, D)
    # blocks, and re-derive vmem_limit_bytes against v7x's 64 MiB VMEM.
    return pl.pallas_call(
        kernel,
        out_shape=jax.ShapeDtypeStruct((B, S, D), jnp.float32),
        grid=grid,
        in_specs=in_specs,
        out_specs=act_spec,
        compiler_params=pltpu.CompilerParams(
            dimension_semantics=("parallel",),     # batch grid over both TCs
            vmem_limit_bytes=32 * 1024 * 1024),
    )(*inputs)


# ---------------------------------------------------------------------------
# deterministic parameter init: weights stored as (in, out) AND pre-cast to
# bf16 once here (kernel is the only reader; no per-call cast traffic).
# ---------------------------------------------------------------------------
def init_params(key):
    ks = iter(jax.random.split(key, 16))

    def w(shape, scl=0.02):
        return (scl * jax.random.normal(next(ks), shape,
                                        dtype=jnp.float32)).astype(MXU_DTYPE)

    def b(shape, scl=0.01):
        return scl * jax.random.normal(next(ks), shape, dtype=jnp.float32)

    return dict(
        # self-attention: packed Q|K|V projection + output projection
        sa_wqkv=w((DIM, 3 * DIM)), sa_bqkv=b((1, 3 * DIM)),
        sa_wo=w((DIM, DIM)),       sa_bo=b((1, DIM)),
        # encoder-decoder attention: Q from x, packed K|V from `encoded`
        eda_wq=w((DIM, DIM)),      eda_bq=b((1, DIM)),
        eda_wkv=w((DIM, 2 * DIM)), eda_bkv=b((1, 2 * DIM)),
        eda_wo=w((DIM, DIM)),      eda_bo=b((1, DIM)),
        # FeedForward: LayerNorm + two Linear layers (hidden_dim == dim)
        ln_g=jnp.ones((1, DIM), jnp.float32), ln_b=jnp.zeros((1, DIM), jnp.float32),
        w1=w((DIM, HIDDEN)), b1=b((1, HIDDEN)),
        w2=w((HIDDEN, DIM)), b2=b((1, DIM)),
    )


if __name__ == "__main__":
    key = jax.random.PRNGKey(0)
    pkey, xkey, ekey = jax.random.split(key, 3)
    params = init_params(pkey)

    B, S = 8, 16
    x = jax.random.normal(xkey, (B, S, DIM), dtype=jnp.float32)
    encoded = jax.random.normal(ekey, (B, S, DIM), dtype=jnp.float32)
    # bool padding mask, True == padded/masked key position.
    lens = jnp.array([S - 4, S, S - 7, S, S - 2, S, S - 1, S])[:, None]
    padding_mask = jnp.arange(S)[None, :] >= lens

    out = jax.jit(decoder_block_forward)(params, x, encoded, padding_mask)
    jax.block_until_ready(out)
    assert out.shape == (B, S, DIM)
    assert bool(jnp.isfinite(out).all())
    print("KERNEL_OK")
</pallas_src>

<mosaic_0001>
module attributes {stable_mosaic.version = 11 : i64} {
  func.func @_decoder_block_kernel(%arg0: i32, %arg1: memref<4x16x128xf32, #tpu.memory_space<vmem>>, %arg2: memref<4x16x128xf32, #tpu.memory_space<vmem>>, %arg3: memref<4x4x16xf32, #tpu.memory_space<vmem>>, %arg4: memref<128x384xbf16, #tpu.memory_space<vmem>>, %arg5: memref<1x384xf32, #tpu.memory_space<vmem>>, %arg6: memref<128x128xbf16, #tpu.memory_space<vmem>>, %arg7: memref<1x128xf32, #tpu.memory_space<vmem>>, %arg8: memref<128x128xbf16, #tpu.memory_space<vmem>>, %arg9: memref<1x128xf32, #tpu.memory_space<vmem>>, %arg10: memref<128x256xbf16, #tpu.memory_space<vmem>>, %arg11: memref<1x256xf32, #tpu.memory_space<vmem>>, %arg12: memref<128x128xbf16, #tpu.memory_space<vmem>>, %arg13: memref<1x128xf32, #tpu.memory_space<vmem>>, %arg14: memref<1x128xf32, #tpu.memory_space<vmem>>, %arg15: memref<1x128xf32, #tpu.memory_space<vmem>>, %arg16: memref<128x128xbf16, #tpu.memory_space<vmem>>, %arg17: memref<1x128xf32, #tpu.memory_space<vmem>>, %arg18: memref<128x128xbf16, #tpu.memory_space<vmem>>, %arg19: memref<1x128xf32, #tpu.memory_space<vmem>>, %arg20: memref<4x16x128xf32, #tpu.memory_space<vmem>>) attributes {dimension_semantics = [#tpu.dimension_semantics<parallel>], iteration_bounds = array<i64: 2>, scalar_prefetch = 0 : i64, scratch_operands = 0 : i64, tpu.core_type = #tpu.core_type<tc>, window_params = [{transform_indices = @transform_0, window_bounds = array<i64: 4, 16, 128>}, {transform_indices = @transform_1, window_bounds = array<i64: 4, 16, 128>}, {transform_indices = @transform_2, window_bounds = array<i64: 4, 4, 16>}, {pipeline_mode = #tpu.pipeline_mode<synchronous>, transform_indices = @transform_3, window_bounds = array<i64: 128, 384>}, {pipeline_mode = #tpu.pipeline_mode<synchronous>, transform_indices = @transform_4, window_bounds = array<i64: 1, 384>}, {pipeline_mode = #tpu.pipeline_mode<synchronous>, transform_indices = @transform_5, window_bounds = array<i64: 128, 128>}, {pipeline_mode = #tpu.pipeline_mode<synchronous>, transform_indices = @transform_6, window_bounds = array<i64: 1, 128>}, {pipeline_mode = #tpu.pipeline_mode<synchronous>, transform_indices = @transform_7, window_bounds = array<i64: 128, 128>}, {pipeline_mode = #tpu.pipeline_mode<synchronous>, transform_indices = @transform_8, window_bounds = array<i64: 1, 128>}, {pipeline_mode = #tpu.pipeline_mode<synchronous>, transform_indices = @transform_9, window_bounds = array<i64: 128, 256>}, {pipeline_mode = #tpu.pipeline_mode<synchronous>, transform_indices = @transform_10, window_bounds = array<i64: 1, 256>}, {pipeline_mode = #tpu.pipeline_mode<synchronous>, transform_indices = @transform_11, window_bounds = array<i64: 128, 128>}, {pipeline_mode = #tpu.pipeline_mode<synchronous>, transform_indices = @transform_12, window_bounds = array<i64: 1, 128>}, {pipeline_mode = #tpu.pipeline_mode<synchronous>, transform_indices = @transform_13, window_bounds = array<i64: 1, 128>}, {pipeline_mode = #tpu.pipeline_mode<synchronous>, transform_indices = @transform_14, window_bounds = array<i64: 1, 128>}, {pipeline_mode = #tpu.pipeline_mode<synchronous>, transform_indices = @transform_15, window_bounds = array<i64: 128, 128>}, {pipeline_mode = #tpu.pipeline_mode<synchronous>, transform_indices = @transform_16, window_bounds = array<i64: 1, 128>}, {pipeline_mode = #tpu.pipeline_mode<synchronous>, transform_indices = @transform_17, window_bounds = array<i64: 128, 128>}, {pipeline_mode = #tpu.pipeline_mode<synchronous>, transform_indices = @transform_18, window_bounds = array<i64: 1, 128>}, {transform_indices = @transform_19, window_bounds = array<i64: 4, 16, 128>}]} {
    %c0 = arith.constant 0 : index
    %c0_0 = arith.constant 0 : index
    %c0_1 = arith.constant 0 : index
    %0 = vector.load %arg1[%c0, %c0_0, %c0_1] : memref<4x16x128xf32, #tpu.memory_space<vmem>>, vector<4x16x128xf32>
    %1 = vector.shape_cast %0 : vector<4x16x128xf32> to vector<64x128xf32>
    %c0_2 = arith.constant 0 : index
    %c0_3 = arith.constant 0 : index
    %c0_4 = arith.constant 0 : index
    %2 = vector.load %arg2[%c0_2, %c0_3, %c0_4] : memref<4x16x128xf32, #tpu.memory_space<vmem>>, vector<4x16x128xf32>
    %3 = vector.shape_cast %2 : vector<4x16x128xf32> to vector<64x128xf32>
    %c0_5 = arith.constant 0 : index
    %c0_6 = arith.constant 0 : index
    %c0_7 = arith.constant 0 : index
    %4 = vector.load %arg3[%c0_5, %c0_6, %c0_7] : memref<4x4x16xf32, #tpu.memory_space<vmem>>, vector<4x4x16xf32>
    %5 = tpu.iota {dimensions = array<i32: 0>} : vector<16x16xi32>
    %6 = tpu.iota {dimensions = array<i32: 1>} : vector<16x16xi32>
    %7 = arith.cmpi sge, %5, %6 : vector<16x16xi32>
    %8 = arith.truncf %1 : vector<64x128xf32> to vector<64x128xbf16>
    %c0_8 = arith.constant 0 : index
    %c0_9 = arith.constant 0 : index
    %9 = vector.load %arg4[%c0_8, %c0_9] : memref<128x384xbf16, #tpu.memory_space<vmem>>, vector<128x384xbf16>
    %cst = arith.constant dense<0.000000e+00> : vector<64x384xf32>
    %10 = tpu.matmul %8, %9, %cst {dimension_numbers = #tpu.dot_dimension_numbers<[1], [0], [0], [1], [0, 0, 1, 1], [], []>} : vector<64x128xbf16>, vector<128x384xbf16>, vector<64x384xf32> -> vector<64x384xf32>
    %c0_10 = arith.constant 0 : index
    %c0_11 = arith.constant 0 : index
    %11 = vector.load %arg5[%c0_10, %c0_11] : memref<1x384xf32, #tpu.memory_space<vmem>>, vector<1x384xf32>
    %12 = vector.broadcast %11 : vector<1x384xf32> to vector<64x384xf32>
    %13 = arith.addf %10, %12 : vector<64x384xf32>
    %14 = vector.extract_strided_slice %13 {offsets = [0, 0], sizes = [64, 128], strides = [1, 1]} : vector<64x384xf32> to vector<64x128xf32>
    %15 = vector.extract_strided_slice %13 {offsets = [0, 128], sizes = [64, 128], strides = [1, 1]} : vector<64x384xf32> to vector<64x128xf32>
    %16 = vector.extract_strided_slice %13 {offsets = [0, 256], sizes = [64, 128], strides = [1, 1]} : vector<64x384xf32> to vector<64x128xf32>
    %cst_12 = arith.constant 0.176776692 : f32
    %17 = vector.broadcast %cst_12 : f32 to vector<64x128xf32>
    %18 = arith.mulf %14, %17 : vector<64x128xf32>
    %19 = vector.extract_strided_slice %18 {offsets = [0, 0], sizes = [64, 32], strides = [1, 1]} : vector<64x128xf32> to vector<64x32xf32>
    %20 = arith.truncf %19 : vector<64x32xf32> to vector<64x32xbf16>
    %21 = vector.shape_cast %20 : vector<64x32xbf16> to vector<4x16x32xbf16>
    %22 = vector.extract_strided_slice %15 {offsets = [0, 0], sizes = [64, 32], strides = [1, 1]} : vector<64x128xf32> to vector<64x32xf32>
    %23 = arith.truncf %22 : vector<64x32xf32> to vector<64x32xbf16>
    %24 = vector.shape_cast %23 : vector<64x32xbf16> to vector<4x16x32xbf16>
    %25 = vector.extract_strided_slice %16 {offsets = [0, 0], sizes = [64, 32], strides = [1, 1]} : vector<64x128xf32> to vector<64x32xf32>
    %26 = arith.truncf %25 : vector<64x32xf32> to vector<64x32xbf16>
    %27 = vector.shape_cast %26 : vector<64x32xbf16> to vector<4x16x32xbf16>
    "tpu.trace_start"() <{level = 10 : i32, message = "bqd,bkd->bqk"}> : () -> ()
    %cst_13 = arith.constant dense<0.000000e+00> : vector<4x16x16xf32>
    %28 = tpu.matmul %21, %24, %cst_13 {dimension_numbers = #tpu.dot_dimension_numbers<[2], [2], [1], [1], [0, 0, 0, 1, 1, 1], [0], [0]>} : vector<4x16x32xbf16>, vector<4x16x32xbf16>, vector<4x16x16xf32> -> vector<4x16x16xf32>
    "tpu.trace_stop"() : () -> ()
    %29 = vector.extract_strided_slice %4 {offsets = [0, 0, 0], sizes = [4, 1, 16], strides = [1, 1, 1]} : vector<4x4x16xf32> to vector<4x1x16xf32>
    %30 = vector.shape_cast %29 : vector<4x1x16xf32> to vector<4x16xf32>
    %31 = vector.shape_cast %30 : vector<4x16xf32> to vector<4x1x16xf32>
    %cst_14 = arith.constant 5.000000e-01 : f32
    %32 = vector.broadcast %cst_14 : f32 to vector<4x1x16xf32>
    %33 = arith.cmpf ogt, %31, %32 : vector<4x1x16xf32>
    %34 = vector.shape_cast %7 : vector<16x16xi1> to vector<1x16x16xi1>
    %35 = vector.broadcast %33 : vector<4x1x16xi1> to vector<4x16x16xi1>
    %36 = vector.broadcast %34 : vector<1x16x16xi1> to vector<4x16x16xi1>
    %37 = arith.andi %35, %36 : vector<4x16x16xi1>
    %cst_15 = arith.constant -1.000000e+30 : f32
    %38 = vector.broadcast %cst_15 : f32 to vector<4x16x16xf32>
    %39 = arith.select %37, %38, %28 : vector<4x16x16xi1>, vector<4x16x16xf32>
    %cst_16 = arith.constant dense<0xFF800000> : vector<4x16xf32>
    %40 = vector.multi_reduction <maximumf>, %39, %cst_16 [2] : vector<4x16x16xf32> to vector<4x16xf32>
    %41 = vector.shape_cast %40 : vector<4x16xf32> to vector<4x16x1xf32>
    %42 = vector.broadcast %41 : vector<4x16x1xf32> to vector<4x16x16xf32>
    %43 = arith.subf %39, %42 : vector<4x16x16xf32>
    %44 = math.exp %43 : vector<4x16x16xf32>
    %cst_17 = arith.constant dense<0.000000e+00> : vector<4x16xf32>
    %45 = vector.multi_reduction <add>, %44, %cst_17 [2] : vector<4x16x16xf32> to vector<4x16xf32>
    %46 = vector.shape_cast %45 : vector<4x16xf32> to vector<4x16x1xf32>
    %47 = tpu.reciprocal %46 {approx = true} : vector<4x16x1xf32> -> vector<4x16x1xf32>
    %48 = vector.broadcast %47 : vector<4x16x1xf32> to vector<4x16x16xf32>
    %49 = arith.mulf %44, %48 : vector<4x16x16xf32>
    %50 = arith.truncf %49 : vector<4x16x16xf32> to vector<4x16x16xbf16>
    "tpu.trace_start"() <{level = 10 : i32, message = "bqk,bkd->bqd"}> : () -> ()
    %cst_18 = arith.constant dense<0.000000e+00> : vector<4x16x32xf32>
    %51 = tpu.matmul %50, %27, %cst_18 {dimension_numbers = #tpu.dot_dimension_numbers<[2], [1], [1], [2], [0, 0, 0, 1, 1, 2], [0], [0]>} : vector<4x16x16xbf16>, vector<4x16x32xbf16>, vector<4x16x32xf32> -> vector<4x16x32xf32>
    "tpu.trace_stop"() : () -> ()
    %52 = vector.extract_strided_slice %18 {offsets = [0, 32], sizes = [64, 32], strides = [1, 1]} : vector<64x128xf32> to vector<64x32xf32>
    %53 = arith.truncf %52 : vector<64x32xf32> to vector<64x32xbf16>
    %54 = vector.shape_cast %53 : vector<64x32xbf16> to vector<4x16x32xbf16>
    %55 = vector.extract_strided_slice %15 {offsets = [0, 32], sizes = [64, 32], strides = [1, 1]} : vector<64x128xf32> to vector<64x32xf32>
    %56 = arith.truncf %55 : vector<64x32xf32> to vector<64x32xbf16>
    %57 = vector.shape_cast %56 : vector<64x32xbf16> to vector<4x16x32xbf16>
    %58 = vector.extract_strided_slice %16 {offsets = [0, 32], sizes = [64, 32], strides = [1, 1]} : vector<64x128xf32> to vector<64x32xf32>
    %59 = arith.truncf %58 : vector<64x32xf32> to vector<64x32xbf16>
    %60 = vector.shape_cast %59 : vector<64x32xbf16> to vector<4x16x32xbf16>
    "tpu.trace_start"() <{level = 10 : i32, message = "bqd,bkd->bqk"}> : () -> ()
    %cst_19 = arith.constant dense<0.000000e+00> : vector<4x16x16xf32>
    %61 = tpu.matmul %54, %57, %cst_19 {dimension_numbers = #tpu.dot_dimension_numbers<[2], [2], [1], [1], [0, 0, 0, 1, 1, 1], [0], [0]>} : vector<4x16x32xbf16>, vector<4x16x32xbf16>, vector<4x16x16xf32> -> vector<4x16x16xf32>
    "tpu.trace_stop"() : () -> ()
    %62 = vector.extract_strided_slice %4 {offsets = [0, 1, 0], sizes = [4, 1, 16], strides = [1, 1, 1]} : vector<4x4x16xf32> to vector<4x1x16xf32>
    %63 = vector.shape_cast %62 : vector<4x1x16xf32> to vector<4x16xf32>
    %64 = vector.shape_cast %63 : vector<4x16xf32> to vector<4x1x16xf32>
    %cst_20 = arith.constant 5.000000e-01 : f32
    %65 = vector.broadcast %cst_20 : f32 to vector<4x1x16xf32>
    %66 = arith.cmpf ogt, %64, %65 : vector<4x1x16xf32>
    %67 = vector.shape_cast %7 : vector<16x16xi1> to vector<1x16x16xi1>
    %68 = vector.broadcast %66 : vector<4x1x16xi1> to vector<4x16x16xi1>
    %69 = vector.broadcast %67 : vector<1x16x16xi1> to vector<4x16x16xi1>
    %70 = arith.andi %68, %69 : vector<4x16x16xi1>
    %cst_21 = arith.constant -1.000000e+30 : f32
    %71 = vector.broadcast %cst_21 : f32 to vector<4x16x16xf32>
    %72 = arith.select %70, %71, %61 : vector<4x16x16xi1>, vector<4x16x16xf32>
    %cst_22 = arith.constant dense<0xFF800000> : vector<4x16xf32>
    %73 = vector.multi_reduction <maximumf>, %72, %cst_22 [2] : vector<4x16x16xf32> to vector<4x16xf32>
    %74 = vector.shape_cast %73 : vector<4x16xf32> to vector<4x16x1xf32>
    %75 = vector.broadcast %74 : vector<4x16x1xf32> to vector<4x16x16xf32>
    %76 = arith.subf %72, %75 : vector<4x16x16xf32>
    %77 = math.exp %76 : vector<4x16x16xf32>
    %cst_23 = arith.constant dense<0.000000e+00> : vector<4x16xf32>
    %78 = vector.multi_reduction <add>, %77, %cst_23 [2] : vector<4x16x16xf32> to vector<4x16xf32>
    %79 = vector.shape_cast %78 : vector<4x16xf32> to vector<4x16x1xf32>
    %80 = tpu.reciprocal %79 {approx = true} : vector<4x16x1xf32> -> vector<4x16x1xf32>
    %81 = vector.broadcast %80 : vector<4x16x1xf32> to vector<4x16x16xf32>
    %82 = arith.mulf %77, %81 : vector<4x16x16xf32>
    %83 = arith.truncf %82 : vector<4x16x16xf32> to vector<4x16x16xbf16>
    "tpu.trace_start"() <{level = 10 : i32, message = "bqk,bkd->bqd"}> : () -> ()
    %cst_24 = arith.constant dense<0.000000e+00> : vector<4x16x32xf32>
    %84 = tpu.matmul %83, %60, %cst_24 {dimension_numbers = #tpu.dot_dimension_numbers<[2], [1], [1], [2], [0, 0, 0, 1, 1, 2], [0], [0]>} : vector<4x16x16xbf16>, vector<4x16x32xbf16>, vector<4x16x32xf32> -> vector<4x16x32xf32>
    "tpu.trace_stop"() : () -> ()
    %85 = vector.extract_strided_slice %18 {offsets = [0, 64], sizes = [64, 32], strides = [1, 1]} : vector<64x128xf32> to vector<64x32xf32>
    %86 = arith.truncf %85 : vector<64x32xf32> to vector<64x32xbf16>
    %87 = vector.shape_cast %86 : vector<64x32xbf16> to vector<4x16x32xbf16>
    %88 = vector.extract_strided_slice %15 {offsets = [0, 64], sizes = [64, 32], strides = [1, 1]} : vector<64x128xf32> to vector<64x32xf32>
    %89 = arith.truncf %88 : vector<64x32xf32> to vector<64x32xbf16>
    %90 = vector.shape_cast %89 : vector<64x32xbf16> to vector<4x16x32xbf16>
    %91 = vector.extract_strided_slice %16 {offsets = [0, 64], sizes = [64, 32], strides = [1, 1]} : vector<64x128xf32> to vector<64x32xf32>
    %92 = arith.truncf %91 : vector<64x32xf32> to vector<64x32xbf16>
    %93 = vector.shape_cast %92 : vector<64x32xbf16> to vector<4x16x32xbf16>
    "tpu.trace_start"() <{level = 10 : i32, message = "bqd,bkd->bqk"}> : () -> ()
    %cst_25 = arith.constant dense<0.000000e+00> : vector<4x16x16xf32>
    %94 = tpu.matmul %87, %90, %cst_25 {dimension_numbers = #tpu.dot_dimension_numbers<[2], [2], [1], [1], [0, 0, 0, 1, 1, 1], [0], [0]>} : vector<4x16x32xbf16>, vector<4x16x32xbf16>, vector<4x16x16xf32> -> vector<4x16x16xf32>
    "tpu.trace_stop"() : () -> ()
    %95 = vector.extract_strided_slice %4 {offsets = [0, 2, 0], sizes = [4, 1, 16], strides = [1, 1, 1]} : vector<4x4x16xf32> to vector<4x1x16xf32>
    %96 = vector.shape_cast %95 : vector<4x1x16xf32> to vector<4x16xf32>
    %97 = vector.shape_cast %96 : vector<4x16xf32> to vector<4x1x16xf32>
    %cst_26 = arith.constant 5.000000e-01 : f32
    %98 = vector.broadcast %cst_26 : f32 to vector<4x1x16xf32>
    %99 = arith.cmpf ogt, %97, %98 : vector<4x1x16xf32>
    %100 = vector.shape_cast %7 : vector<16x16xi1> to vector<1x16x16xi1>
    %101 = vector.broadcast %99 : vector<4x1x16xi1> to vector<4x16x16xi1>
    %102 = vector.broadcast %100 : vector<1x16x16xi1> to vector<4x16x16xi1>
    %103 = arith.andi %101, %102 : vector<4x16x16xi1>
    %cst_27 = arith.constant -1.000000e+30 : f32
    %104 = vector.broadcast %cst_27 : f32 to vector<4x16x16xf32>
    %105 = arith.select %103, %104, %94 : vector<4x16x16xi1>, vector<4x16x16xf32>
    %cst_28 = arith.constant dense<0xFF800000> : vector<4x16xf32>
    %106 = vector.multi_reduction <maximumf>, %105, %cst_28 [2] : vector<4x16x16xf32> to vector<4x16xf32>
    %107 = vector.shape_cast %106 : vector<4x16xf32> to vector<4x16x1xf32>
    %108 = vector.broadcast %107 : vector<4x16x1xf32> to vector<4x16x16xf32>
    %109 = arith.subf %105, %108 : vector<4x16x16xf32>
    %110 = math.exp %109 : vector<4x16x16xf32>
    %cst_29 = arith.constant dense<0.000000e+00> : vector<4x16xf32>
    %111 = vector.multi_reduction <add>, %110, %cst_29 [2] : vector<4x16x16xf32> to vector<4x16xf32>
    %112 = vector.shape_cast %111 : vector<4x16xf32> to vector<4x16x1xf32>
    %113 = tpu.reciprocal %112 {approx = true} : vector<4x16x1xf32> -> vector<4x16x1xf32>
    %114 = vector.broadcast %113 : vector<4x16x1xf32> to vector<4x16x16xf32>
    %115 = arith.mulf %110, %114 : vector<4x16x16xf32>
    %116 = arith.truncf %115 : vector<4x16x16xf32> to vector<4x16x16xbf16>
    "tpu.trace_start"() <{level = 10 : i32, message = "bqk,bkd->bqd"}> : () -> ()
    %cst_30 = arith.constant dense<0.000000e+00> : vector<4x16x32xf32>
    %117 = tpu.matmul %116, %93, %cst_30 {dimension_numbers = #tpu.dot_dimension_numbers<[2], [1], [1], [2], [0, 0, 0, 1, 1, 2], [0], [0]>} : vector<4x16x16xbf16>, vector<4x16x32xbf16>, vector<4x16x32xf32> -> vector<4x16x32xf32>
    "tpu.trace_stop"() : () -> ()
    %118 = vector.extract_strided_slice %18 {offsets = [0, 96], sizes = [64, 32], strides = [1, 1]} : vector<64x128xf32> to vector<64x32xf32>
    %119 = arith.truncf %118 : vector<64x32xf32> to vector<64x32xbf16>
    %120 = vector.shape_cast %119 : vector<64x32xbf16> to vector<4x16x32xbf16>
    %121 = vector.extract_strided_slice %15 {offsets = [0, 96], sizes = [64, 32], strides = [1, 1]} : vector<64x128xf32> to vector<64x32xf32>
    %122 = arith.truncf %121 : vector<64x32xf32> to vector<64x32xbf16>
    %123 = vector.shape_cast %122 : vector<64x32xbf16> to vector<4x16x32xbf16>
    %124 = vector.extract_strided_slice %16 {offsets = [0, 96], sizes = [64, 32], strides = [1, 1]} : vector<64x128xf32> to vector<64x32xf32>
    %125 = arith.truncf %124 : vector<64x32xf32> to vector<64x32xbf16>
    %126 = vector.shape_cast %125 : vector<64x32xbf16> to vector<4x16x32xbf16>
    "tpu.trace_start"() <{level = 10 : i32, message = "bqd,bkd->bqk"}> : () -> ()
    %cst_31 = arith.constant dense<0.000000e+00> : vector<4x16x16xf32>
    %127 = tpu.matmul %120, %123, %cst_31 {dimension_numbers = #tpu.dot_dimension_numbers<[2], [2], [1], [1], [0, 0, 0, 1, 1, 1], [0], [0]>} : vector<4x16x32xbf16>, vector<4x16x32xbf16>, vector<4x16x16xf32> -> vector<4x16x16xf32>
    "tpu.trace_stop"() : () -> ()
    %128 = vector.extract_strided_slice %4 {offsets = [0, 3, 0], sizes = [4, 1, 16], strides = [1, 1, 1]} : vector<4x4x16xf32> to vector<4x1x16xf32>
    %129 = vector.shape_cast %128 : vector<4x1x16xf32> to vector<4x16xf32>
    %130 = vector.shape_cast %129 : vector<4x16xf32> to vector<4x1x16xf32>
    %cst_32 = arith.constant 5.000000e-01 : f32
    %131 = vector.broadcast %cst_32 : f32 to vector<4x1x16xf32>
    %132 = arith.cmpf ogt, %130, %131 : vector<4x1x16xf32>
    %133 = vector.shape_cast %7 : vector<16x16xi1> to vector<1x16x16xi1>
    %134 = vector.broadcast %132 : vector<4x1x16xi1> to vector<4x16x16xi1>
    %135 = vector.broadcast %133 : vector<1x16x16xi1> to vector<4x16x16xi1>
    %136 = arith.andi %134, %135 : vector<4x16x16xi1>
    %cst_33 = arith.constant -1.000000e+30 : f32
    %137 = vector.broadcast %cst_33 : f32 to vector<4x16x16xf32>
    %138 = arith.select %136, %137, %127 : vector<4x16x16xi1>, vector<4x16x16xf32>
    %cst_34 = arith.constant dense<0xFF800000> : vector<4x16xf32>
    %139 = vector.multi_reduction <maximumf>, %138, %cst_34 [2] : vector<4x16x16xf32> to vector<4x16xf32>
    %140 = vector.shape_cast %139 : vector<4x16xf32> to vector<4x16x1xf32>
    %141 = vector.broadcast %140 : vector<4x16x1xf32> to vector<4x16x16xf32>
    %142 = arith.subf %138, %141 : vector<4x16x16xf32>
    %143 = math.exp %142 : vector<4x16x16xf32>
    %cst_35 = arith.constant dense<0.000000e+00> : vector<4x16xf32>
    %144 = vector.multi_reduction <add>, %143, %cst_35 [2] : vector<4x16x16xf32> to vector<4x16xf32>
    %145 = vector.shape_cast %144 : vector<4x16xf32> to vector<4x16x1xf32>
    %146 = tpu.reciprocal %145 {approx = true} : vector<4x16x1xf32> -> vector<4x16x1xf32>
    %147 = vector.broadcast %146 : vector<4x16x1xf32> to vector<4x16x16xf32>
    %148 = arith.mulf %143, %147 : vector<4x16x16xf32>
    %149 = arith.truncf %148 : vector<4x16x16xf32> to vector<4x16x16xbf16>
    "tpu.trace_start"() <{level = 10 : i32, message = "bqk,bkd->bqd"}> : () -> ()
    %cst_36 = arith.constant dense<0.000000e+00> : vector<4x16x32xf32>
    %150 = tpu.matmul %149, %126, %cst_36 {dimension_numbers = #tpu.dot_dimension_numbers<[2], [1], [1], [2], [0, 0, 0, 1, 1, 2], [0], [0]>} : vector<4x16x16xbf16>, vector<4x16x32xbf16>, vector<4x16x32xf32> -> vector<4x16x32xf32>
    "tpu.trace_stop"() : () -> ()
    %151 = tpu.concatenate %51, %84, %117, %150 in 2 : vector<4x16x32xf32>, vector<4x16x32xf32>, vector<4x16x32xf32>, vector<4x16x32xf32> -> vector<4x16x128xf32>
    %152 = vector.shape_cast %151 : vector<4x16x128xf32> to vector<64x128xf32>
    %153 = arith.truncf %152 : vector<64x128xf32> to vector<64x128xbf16>
    %c0_37 = arith.constant 0 : index
    %c0_38 = arith.constant 0 : index
    %154 = vector.load %arg6[%c0_37, %c0_38] : memref<128x128xbf16, #tpu.memory_space<vmem>>, vector<128x128xbf16>
    %cst_39 = arith.constant dense<0.000000e+00> : vector<64x128xf32>
    %155 = tpu.matmul %153, %154, %cst_39 {dimension_numbers = #tpu.dot_dimension_numbers<[1], [0], [0], [1], [0, 0, 1, 1], [], []>} : vector<64x128xbf16>, vector<128x128xbf16>, vector<64x128xf32> -> vector<64x128xf32>
    %c0_40 = arith.constant 0 : index
    %c0_41 = arith.constant 0 : index
    %156 = vector.load %arg7[%c0_40, %c0_41] : memref<1x128xf32, #tpu.memory_space<vmem>>, vector<1x128xf32>
    %157 = vector.broadcast %156 : vector<1x128xf32> to vector<64x128xf32>
    %158 = arith.addf %155, %157 : vector<64x128xf32>
    %159 = arith.addf %158, %1 : vector<64x128xf32>
    %160 = arith.truncf %159 : vector<64x128xf32> to vector<64x128xbf16>
    %c0_42 = arith.constant 0 : index
    %c0_43 = arith.constant 0 : index
    %161 = vector.load %arg8[%c0_42, %c0_43] : memref<128x128xbf16, #tpu.memory_space<vmem>>, vector<128x128xbf16>
    %cst_44 = arith.constant dense<0.000000e+00> : vector<64x128xf32>
    %162 = tpu.matmul %160, %161, %cst_44 {dimension_numbers = #tpu.dot_dimension_numbers<[1], [0], [0], [1], [0, 0, 1, 1], [], []>} : vector<64x128xbf16>, vector<128x128xbf16>, vector<64x128xf32> -> vector<64x128xf32>
    %c0_45 = arith.constant 0 : index
    %c0_46 = arith.constant 0 : index
    %163 = vector.load %arg9[%c0_45, %c0_46] : memref<1x128xf32, #tpu.memory_space<vmem>>, vector<1x128xf32>
    %164 = vector.broadcast %163 : vector<1x128xf32> to vector<64x128xf32>
    %165 = arith.addf %162, %164 : vector<64x128xf32>
    %166 = arith.truncf %3 : vector<64x128xf32> to vector<64x128xbf16>
    %c0_47 = arith.constant 0 : index
    %c0_48 = arith.constant 0 : index
    %167 = vector.load %arg10[%c0_47, %c0_48] : memref<128x256xbf16, #tpu.memory_space<vmem>>, vector<128x256xbf16>
    %cst_49 = arith.constant dense<0.000000e+00> : vector<64x256xf32>
    %168 = tpu.matmul %166, %167, %cst_49 {dimension_numbers = #tpu.dot_dimension_numbers<[1], [0], [0], [1], [0, 0, 1, 1], [], []>} : vector<64x128xbf16>, vector<128x256xbf16>, vector<64x256xf32> -> vector<64x256xf32>
    %c0_50 = arith.constant 0 : index
    %c0_51 = arith.constant 0 : index
    %169 = vector.load %arg11[%c0_50, %c0_51] : memref<1x256xf32, #tpu.memory_space<vmem>>, vector<1x256xf32>
    %170 = vector.broadcast %169 : vector<1x256xf32> to vector<64x256xf32>
    %171 = arith.addf %168, %170 : vector<64x256xf32>
    %172 = vector.extract_strided_slice %171 {offsets = [0, 0], sizes = [64, 128], strides = [1, 1]} : vector<64x256xf32> to vector<64x128xf32>
    %173 = vector.extract_strided_slice %171 {offsets = [0, 128], sizes = [64, 128], strides = [1, 1]} : vector<64x256xf32> to vector<64x128xf32>
    %cst_52 = arith.constant 0.176776692 : f32
    %174 = vector.broadcast %cst_52 : f32 to vector<64x128xf32>
    %175 = arith.mulf %165, %174 : vector<64x128xf32>
    %176 = vector.extract_strided_slice %175 {offsets = [0, 0], sizes = [64, 32], strides = [1, 1]} : vector<64x128xf32> to vector<64x32xf32>
    %177 = arith.truncf %176 : vector<64x32xf32> to vector<64x32xbf16>
    %178 = vector.shape_cast %177 : vector<64x32xbf16> to vector<4x16x32xbf16>
    %179 = vector.extract_strided_slice %172 {offsets = [0, 0], sizes = [64, 32], strides = [1, 1]} : vector<64x128xf32> to vector<64x32xf32>
    %180 = arith.truncf %179 : vector<64x32xf32> to vector<64x32xbf16>
    %181 = vector.shape_cast %180 : vector<64x32xbf16> to vector<4x16x32xbf16>
    %182 = vector.extract_strided_slice %173 {offsets = [0, 0], sizes = [64, 32], strides = [1, 1]} : vector<64x128xf32> to vector<64x32xf32>
    %183 = arith.truncf %182 : vector<64x32xf32> to vector<64x32xbf16>
    %184 = vector.shape_cast %183 : vector<64x32xbf16> to vector<4x16x32xbf16>
    "tpu.trace_start"() <{level = 10 : i32, message = "bqd,bkd->bqk"}> : () -> ()
    %cst_53 = arith.constant dense<0.000000e+00> : vector<4x16x16xf32>
    %185 = tpu.matmul %178, %181, %cst_53 {dimension_numbers = #tpu.dot_dimension_numbers<[2], [2], [1], [1], [0, 0, 0, 1, 1, 1], [0], [0]>} : vector<4x16x32xbf16>, vector<4x16x32xbf16>, vector<4x16x16xf32> -> vector<4x16x16xf32>
    "tpu.trace_stop"() : () -> ()
    %186 = vector.extract_strided_slice %4 {offsets = [0, 0, 0], sizes = [4, 1, 16], strides = [1, 1, 1]} : vector<4x4x16xf32> to vector<4x1x16xf32>
    %187 = vector.shape_cast %186 : vector<4x1x16xf32> to vector<4x16xf32>
    %188 = vector.shape_cast %187 : vector<4x16xf32> to vector<4x1x16xf32>
    %cst_54 = arith.constant 5.000000e-01 : f32
    %189 = vector.broadcast %cst_54 : f32 to vector<4x1x16xf32>
    %190 = arith.cmpf ogt, %188, %189 : vector<4x1x16xf32>
    %191 = vector.shape_cast %190 : vector<4x1x16xi1> to vector<4x1x16xi1>
    %192 = vector.broadcast %191 : vector<4x1x16xi1> to vector<4x16x16xi1>
    %cst_55 = arith.constant -1.000000e+30 : f32
    %193 = vector.broadcast %cst_55 : f32 to vector<4x16x16xf32>
    %194 = arith.select %192, %193, %185 : vector<4x16x16xi1>, vector<4x16x16xf32>
    %cst_56 = arith.constant dense<0xFF800000> : vector<4x16xf32>
    %195 = vector.multi_reduction <maximumf>, %194, %cst_56 [2] : vector<4x16x16xf32> to vector<4x16xf32>
    %196 = vector.shape_cast %195 : vector<4x16xf32> to vector<4x16x1xf32>
    %197 = vector.broadcast %196 : vector<4x16x1xf32> to vector<4x16x16xf32>
    %198 = arith.subf %194, %197 : vector<4x16x16xf32>
    %199 = math.exp %198 : vector<4x16x16xf32>
    %cst_57 = arith.constant dense<0.000000e+00> : vector<4x16xf32>
    %200 = vector.multi_reduction <add>, %199, %cst_57 [2] : vector<4x16x16xf32> to vector<4x16xf32>
    %201 = vector.shape_cast %200 : vector<4x16xf32> to vector<4x16x1xf32>
    %202 = tpu.reciprocal %201 {approx = true} : vector<4x16x1xf32> -> vector<4x16x1xf32>
    %203 = vector.broadcast %202 : vector<4x16x1xf32> to vector<4x16x16xf32>
    %204 = arith.mulf %199, %203 : vector<4x16x16xf32>
    %205 = arith.truncf %204 : vector<4x16x16xf32> to vector<4x16x16xbf16>
    "tpu.trace_start"() <{level = 10 : i32, message = "bqk,bkd->bqd"}> : () -> ()
    %cst_58 = arith.constant dense<0.000000e+00> : vector<4x16x32xf32>
    %206 = tpu.matmul %205, %184, %cst_58 {dimension_numbers = #tpu.dot_dimension_numbers<[2], [1], [1], [2], [0, 0, 0, 1, 1, 2], [0], [0]>} : vector<4x16x16xbf16>, vector<4x16x32xbf16>, vector<4x16x32xf32> -> vector<4x16x32xf32>
    "tpu.trace_stop"() : () -> ()
    %207 = vector.extract_strided_slice %175 {offsets = [0, 32], sizes = [64, 32], strides = [1, 1]} : vector<64x128xf32> to vector<64x32xf32>
    %208 = arith.truncf %207 : vector<64x32xf32> to vector<64x32xbf16>
    %209 = vector.shape_cast %208 : vector<64x32xbf16> to vector<4x16x32xbf16>
    %210 = vector.extract_strided_slice %172 {offsets = [0, 32], sizes = [64, 32], strides = [1, 1]} : vector<64x128xf32> to vector<64x32xf32>
    %211 = arith.truncf %210 : vector<64x32xf32> to vector<64x32xbf16>
    %212 = vector.shape_cast %211 : vector<64x32xbf16> to vector<4x16x32xbf16>
    %213 = vector.extract_strided_slice %173 {offsets = [0, 32], sizes = [64, 32], strides = [1, 1]} : vector<64x128xf32> to vector<64x32xf32>
    %214 = arith.truncf %213 : vector<64x32xf32> to vector<64x32xbf16>
    %215 = vector.shape_cast %214 : vector<64x32xbf16> to vector<4x16x32xbf16>
    "tpu.trace_start"() <{level = 10 : i32, message = "bqd,bkd->bqk"}> : () -> ()
    %cst_59 = arith.constant dense<0.000000e+00> : vector<4x16x16xf32>
    %216 = tpu.matmul %209, %212, %cst_59 {dimension_numbers = #tpu.dot_dimension_numbers<[2], [2], [1], [1], [0, 0, 0, 1, 1, 1], [0], [0]>} : vector<4x16x32xbf16>, vector<4x16x32xbf16>, vector<4x16x16xf32> -> vector<4x16x16xf32>
    "tpu.trace_stop"() : () -> ()
    %217 = vector.extract_strided_slice %4 {offsets = [0, 1, 0], sizes = [4, 1, 16], strides = [1, 1, 1]} : vector<4x4x16xf32> to vector<4x1x16xf32>
    %218 = vector.shape_cast %217 : vector<4x1x16xf32> to vector<4x16xf32>
    %219 = vector.shape_cast %218 : vector<4x16xf32> to vector<4x1x16xf32>
    %cst_60 = arith.constant 5.000000e-01 : f32
    %220 = vector.broadcast %cst_60 : f32 to vector<4x1x16xf32>
    %221 = arith.cmpf ogt, %219, %220 : vector<4x1x16xf32>
    %222 = vector.shape_cast %221 : vector<4x1x16xi1> to vector<4x1x16xi1>
    %223 = vector.broadcast %222 : vector<4x1x16xi1> to vector<4x16x16xi1>
    %cst_61 = arith.constant -1.000000e+30 : f32
    %224 = vector.broadcast %cst_61 : f32 to vector<4x16x16xf32>
    %225 = arith.select %223, %224, %216 : vector<4x16x16xi1>, vector<4x16x16xf32>
    %cst_62 = arith.constant dense<0xFF800000> : vector<4x16xf32>
    %226 = vector.multi_reduction <maximumf>, %225, %cst_62 [2] : vector<4x16x16xf32> to vector<4x16xf32>
    %227 = vector.shape_cast %226 : vector<4x16xf32> to vector<4x16x1xf32>
    %228 = vector.broadcast %227 : vector<4x16x1xf32> to vector<4x16x16xf32>
    %229 = arith.subf %225, %228 : vector<4x16x16xf32>
    %230 = math.exp %229 : vector<4x16x16xf32>
    %cst_63 = arith.constant dense<0.000000e+00> : vector<4x16xf32>
    %231 = vector.multi_reduction <add>, %230, %cst_63 [2] : vector<4x16x16xf32> to vector<4x16xf32>
    %232 = vector.shape_cast %231 : vector<4x16xf32> to vector<4x16x1xf32>
    %233 = tpu.reciprocal %232 {approx = true} : vector<4x16x1xf32> -> vector<4x16x1xf32>
    %234 = vector.broadcast %233 : vector<4x16x1xf32> to vector<4x16x16xf32>
    %235 = arith.mulf %230, %234 : vector<4x16x16xf32>
    %236 = arith.truncf %235 : vector<4x16x16xf32> to vector<4x16x16xbf16>
    "tpu.trace_start"() <{level = 10 : i32, message = "bqk,bkd->bqd"}> : () -> ()
    %cst_64 = arith.constant dense<0.000000e+00> : vector<4x16x32xf32>
    %237 = tpu.matmul %236, %215, %cst_64 {dimension_numbers = #tpu.dot_dimension_numbers<[2], [1], [1], [2], [0, 0, 0, 1, 1, 2], [0], [0]>} : vector<4x16x16xbf16>, vector<4x16x32xbf16>, vector<4x16x32xf32> -> vector<4x16x32xf32>
    "tpu.trace_stop"() : () -> ()
    %238 = vector.extract_strided_slice %175 {offsets = [0, 64], sizes = [64, 32], strides = [1, 1]} : vector<64x128xf32> to vector<64x32xf32>
    %239 = arith.truncf %238 : vector<64x32xf32> to vector<64x32xbf16>
    %240 = vector.shape_cast %239 : vector<64x32xbf16> to vector<4x16x32xbf16>
    %241 = vector.extract_strided_slice %172 {offsets = [0, 64], sizes = [64, 32], strides = [1, 1]} : vector<64x128xf32> to vector<64x32xf32>
    %242 = arith.truncf %241 : vector<64x32xf32> to vector<64x32xbf16>
    %243 = vector.shape_cast %242 : vector<64x32xbf16> to vector<4x16x32xbf16>
    %244 = vector.extract_strided_slice %173 {offsets = [0, 64], sizes = [64, 32], strides = [1, 1]} : vector<64x128xf32> to vector<64x32xf32>
    %245 = arith.truncf %244 : vector<64x32xf32> to vector<64x32xbf16>
    %246 = vector.shape_cast %245 : vector<64x32xbf16> to vector<4x16x32xbf16>
    "tpu.trace_start"() <{level = 10 : i32, message = "bqd,bkd->bqk"}> : () -> ()
    %cst_65 = arith.constant dense<0.000000e+00> : vector<4x16x16xf32>
    %247 = tpu.matmul %240, %243, %cst_65 {dimension_numbers = #tpu.dot_dimension_numbers<[2], [2], [1], [1], [0, 0, 0, 1, 1, 1], [0], [0]>} : vector<4x16x32xbf16>, vector<4x16x32xbf16>, vector<4x16x16xf32> -> vector<4x16x16xf32>
    "tpu.trace_stop"() : () -> ()
    %248 = vector.extract_strided_slice %4 {offsets = [0, 2, 0], sizes = [4, 1, 16], strides = [1, 1, 1]} : vector<4x4x16xf32> to vector<4x1x16xf32>
    %249 = vector.shape_cast %248 : vector<4x1x16xf32> to vector<4x16xf32>
    %250 = vector.shape_cast %249 : vector<4x16xf32> to vector<4x1x16xf32>
    %cst_66 = arith.constant 5.000000e-01 : f32
    %251 = vector.broadcast %cst_66 : f32 to vector<4x1x16xf32>
    %252 = arith.cmpf ogt, %250, %251 : vector<4x1x16xf32>
    %253 = vector.shape_cast %252 : vector<4x1x16xi1> to vector<4x1x16xi1>
    %254 = vector.broadcast %253 : vector<4x1x16xi1> to vector<4x16x16xi1>
    %cst_67 = arith.constant -1.000000e+30 : f32
    %255 = vector.broadcast %cst_67 : f32 to vector<4x16x16xf32>
    %256 = arith.select %254, %255, %247 : vector<4x16x16xi1>, vector<4x16x16xf32>
    %cst_68 = arith.constant dense<0xFF800000> : vector<4x16xf32>
    %257 = vector.multi_reduction <maximumf>, %256, %cst_68 [2] : vector<4x16x16xf32> to vector<4x16xf32>
    %258 = vector.shape_cast %257 : vector<4x16xf32> to vector<4x16x1xf32>
    %259 = vector.broadcast %258 : vector<4x16x1xf32> to vector<4x16x16xf32>
    %260 = arith.subf %256, %259 : vector<4x16x16xf32>
    %261 = math.exp %260 : vector<4x16x16xf32>
    %cst_69 = arith.constant dense<0.000000e+00> : vector<4x16xf32>
    %262 = vector.multi_reduction <add>, %261, %cst_69 [2] : vector<4x16x16xf32> to vector<4x16xf32>
    %263 = vector.shape_cast %262 : vector<4x16xf32> to vector<4x16x1xf32>
    %264 = tpu.reciprocal %263 {approx = true} : vector<4x16x1xf32> -> vector<4x16x1xf32>
    %265 = vector.broadcast %264 : vector<4x16x1xf32> to vector<4x16x16xf32>
    %266 = arith.mulf %261, %265 : vector<4x16x16xf32>
    %267 = arith.truncf %266 : vector<4x16x16xf32> to vector<4x16x16xbf16>
    "tpu.trace_start"() <{level = 10 : i32, message = "bqk,bkd->bqd"}> : () -> ()
    %cst_70 = arith.constant dense<0.000000e+00> : vector<4x16x32xf32>
    %268 = tpu.matmul %267, %246, %cst_70 {dimension_numbers = #tpu.dot_dimension_numbers<[2], [1], [1], [2], [0, 0, 0, 1, 1, 2], [0], [0]>} : vector<4x16x16xbf16>, vector<4x16x32xbf16>, vector<4x16x32xf32> -> vector<4x16x32xf32>
    "tpu.trace_stop"() : () -> ()
    %269 = vector.extract_strided_slice %175 {offsets = [0, 96], sizes = [64, 32], strides = [1, 1]} : vector<64x128xf32> to vector<64x32xf32>
    %270 = arith.truncf %269 : vector<64x32xf32> to vector<64x32xbf16>
    %271 = vector.shape_cast %270 : vector<64x32xbf16> to vector<4x16x32xbf16>
    %272 = vector.extract_strided_slice %172 {offsets = [0, 96], sizes = [64, 32], strides = [1, 1]} : vector<64x128xf32> to vector<64x32xf32>
    %273 = arith.truncf %272 : vector<64x32xf32> to vector<64x32xbf16>
    %274 = vector.shape_cast %273 : vector<64x32xbf16> to vector<4x16x32xbf16>
    %275 = vector.extract_strided_slice %173 {offsets = [0, 96], sizes = [64, 32], strides = [1, 1]} : vector<64x128xf32> to vector<64x32xf32>
    %276 = arith.truncf %275 : vector<64x32xf32> to vector<64x32xbf16>
    %277 = vector.shape_cast %276 : vector<64x32xbf16> to vector<4x16x32xbf16>
    "tpu.trace_start"() <{level = 10 : i32, message = "bqd,bkd->bqk"}> : () -> ()
    %cst_71 = arith.constant dense<0.000000e+00> : vector<4x16x16xf32>
    %278 = tpu.matmul %271, %274, %cst_71 {dimension_numbers = #tpu.dot_dimension_numbers<[2], [2], [1], [1], [0, 0, 0, 1, 1, 1], [0], [0]>} : vector<4x16x32xbf16>, vector<4x16x32xbf16>, vector<4x16x16xf32> -> vector<4x16x16xf32>
    "tpu.trace_stop"() : () -> ()
    %279 = vector.extract_strided_slice %4 {offsets = [0, 3, 0], sizes = [4, 1, 16], strides = [1, 1, 1]} : vector<4x4x16xf32> to vector<4x1x16xf32>
    %280 = vector.shape_cast %279 : vector<4x1x16xf32> to vector<4x16xf32>
    %281 = vector.shape_cast %280 : vector<4x16xf32> to vector<4x1x16xf32>
    %cst_72 = arith.constant 5.000000e-01 : f32
    %282 = vector.broadcast %cst_72 : f32 to vector<4x1x16xf32>
    %283 = arith.cmpf ogt, %281, %282 : vector<4x1x16xf32>
    %284 = vector.shape_cast %283 : vector<4x1x16xi1> to vector<4x1x16xi1>
    %285 = vector.broadcast %284 : vector<4x1x16xi1> to vector<4x16x16xi1>
    %cst_73 = arith.constant -1.000000e+30 : f32
    %286 = vector.broadcast %cst_73 : f32 to vector<4x16x16xf32>
    %287 = arith.select %285, %286, %278 : vector<4x16x16xi1>, vector<4x16x16xf32>
    %cst_74 = arith.constant dense<0xFF800000> : vector<4x16xf32>
    %288 = vector.multi_reduction <maximumf>, %287, %cst_74 [2] : vector<4x16x16xf32> to vector<4x16xf32>
    %289 = vector.shape_cast %288 : vector<4x16xf32> to vector<4x16x1xf32>
    %290 = vector.broadcast %289 : vector<4x16x1xf32> to vector<4x16x16xf32>
    %291 = arith.subf %287, %290 : vector<4x16x16xf32>
    %292 = math.exp %291 : vector<4x16x16xf32>
    %cst_75 = arith.constant dense<0.000000e+00> : vector<4x16xf32>
    %293 = vector.multi_reduction <add>, %292, %cst_75 [2] : vector<4x16x16xf32> to vector<4x16xf32>
    %294 = vector.shape_cast %293 : vector<4x16xf32> to vector<4x16x1xf32>
    %295 = tpu.reciprocal %294 {approx = true} : vector<4x16x1xf32> -> vector<4x16x1xf32>
    %296 = vector.broadcast %295 : vector<4x16x1xf32> to vector<4x16x16xf32>
    %297 = arith.mulf %292, %296 : vector<4x16x16xf32>
    %298 = arith.truncf %297 : vector<4x16x16xf32> to vector<4x16x16xbf16>
    "tpu.trace_start"() <{level = 10 : i32, message = "bqk,bkd->bqd"}> : () -> ()
    %cst_76 = arith.constant dense<0.000000e+00> : vector<4x16x32xf32>
    %299 = tpu.matmul %298, %277, %cst_76 {dimension_numbers = #tpu.dot_dimension_numbers<[2], [1], [1], [2], [0, 0, 0, 1, 1, 2], [0], [0]>} : vector<4x16x16xbf16>, vector<4x16x32xbf16>, vector<4x16x32xf32> -> vector<4x16x32xf32>
    "tpu.trace_stop"() : () -> ()
    %300 = tpu.concatenate %206, %237, %268, %299 in 2 : vector<4x16x32xf32>, vector<4x16x32xf32>, vector<4x16x32xf32>, vector<4x16x32xf32> -> vector<4x16x128xf32>
    %301 = vector.shape_cast %300 : vector<4x16x128xf32> to vector<64x128xf32>
    %302 = arith.truncf %301 : vector<64x128xf32> to vector<64x128xbf16>
    %c0_77 = arith.constant 0 : index
    %c0_78 = arith.constant 0 : index
    %303 = vector.load %arg12[%c0_77, %c0_78] : memref<128x128xbf16, #tpu.memory_space<vmem>>, vector<128x128xbf16>
    %cst_79 = arith.constant dense<0.000000e+00> : vector<64x128xf32>
    %304 = tpu.matmul %302, %303, %cst_79 {dimension_numbers = #tpu.dot_dimension_numbers<[1], [0], [0], [1], [0, 0, 1, 1], [], []>} : vector<64x128xbf16>, vector<128x128xbf16>, vector<64x128xf32> -> vector<64x128xf32>
    %c0_80 = arith.constant 0 : index
    %c0_81 = arith.constant 0 : index
    %305 = vector.load %arg13[%c0_80, %c0_81] : memref<1x128xf32, #tpu.memory_space<vmem>>, vector<1x128xf32>
    %306 = vector.broadcast %305 : vector<1x128xf32> to vector<64x128xf32>
    %307 = arith.addf %304, %306 : vector<64x128xf32>
    %308 = arith.addf %307, %159 : vector<64x128xf32>
    %cst_82 = arith.constant dense<0.000000e+00> : vector<64xf32>
    %309 = vector.multi_reduction <add>, %308, %cst_82 [1] : vector<64x128xf32> to vector<64xf32>
    %310 = vector.shape_cast %309 : vector<64xf32> to vector<64x1xf32>
    %cst_83 = arith.constant 1.280000e+02 : f32
    %311 = vector.broadcast %cst_83 : f32 to vector<64x1xf32>
    %312 = arith.divf %310, %311 : vector<64x1xf32>
    %313 = vector.broadcast %312 : vector<64x1xf32> to vector<64x128xf32>
    %314 = arith.subf %308, %313 : vector<64x128xf32>
    %315 = arith.mulf %314, %314 : vector<64x128xf32>
    %cst_84 = arith.constant dense<0.000000e+00> : vector<64xf32>
    %316 = vector.multi_reduction <add>, %315, %cst_84 [1] : vector<64x128xf32> to vector<64xf32>
    %317 = vector.shape_cast %316 : vector<64xf32> to vector<64x1xf32>
    %cst_85 = arith.constant 1.280000e+02 : f32
    %318 = vector.broadcast %cst_85 : f32 to vector<64x1xf32>
    %319 = arith.divf %317, %318 : vector<64x1xf32>
    %320 = vector.broadcast %312 : vector<64x1xf32> to vector<64x128xf32>
    %321 = arith.subf %308, %320 : vector<64x128xf32>
    %cst_86 = arith.constant 9.99999974E-6 : f32
    %322 = vector.broadcast %cst_86 : f32 to vector<64x1xf32>
    %323 = arith.addf %319, %322 : vector<64x1xf32>
    %324 = math.rsqrt %323 : vector<64x1xf32>
    %325 = vector.broadcast %324 : vector<64x1xf32> to vector<64x128xf32>
    %326 = arith.mulf %321, %325 : vector<64x128xf32>
    %c0_87 = arith.constant 0 : index
    %c0_88 = arith.constant 0 : index
    %327 = vector.load %arg14[%c0_87, %c0_88] : memref<1x128xf32, #tpu.memory_space<vmem>>, vector<1x128xf32>
    %328 = vector.broadcast %327 : vector<1x128xf32> to vector<64x128xf32>
    %329 = arith.mulf %326, %328 : vector<64x128xf32>
    %c0_89 = arith.constant 0 : index
    %c0_90 = arith.constant 0 : index
    %330 = vector.load %arg15[%c0_89, %c0_90] : memref<1x128xf32, #tpu.memory_space<vmem>>, vector<1x128xf32>
    %331 = vector.broadcast %330 : vector<1x128xf32> to vector<64x128xf32>
    %332 = arith.addf %329, %331 : vector<64x128xf32>
    %333 = arith.truncf %332 : vector<64x128xf32> to vector<64x128xbf16>
    %c0_91 = arith.constant 0 : index
    %c0_92 = arith.constant 0 : index
    %334 = vector.load %arg16[%c0_91, %c0_92] : memref<128x128xbf16, #tpu.memory_space<vmem>>, vector<128x128xbf16>
    %cst_93 = arith.constant dense<0.000000e+00> : vector<64x128xf32>
    %335 = tpu.matmul %333, %334, %cst_93 {dimension_numbers = #tpu.dot_dimension_numbers<[1], [0], [0], [1], [0, 0, 1, 1], [], []>} : vector<64x128xbf16>, vector<128x128xbf16>, vector<64x128xf32> -> vector<64x128xf32>
    %c0_94 = arith.constant 0 : index
    %c0_95 = arith.constant 0 : index
    %336 = vector.load %arg17[%c0_94, %c0_95] : memref<1x128xf32, #tpu.memory_space<vmem>>, vector<1x128xf32>
    %337 = vector.broadcast %336 : vector<1x128xf32> to vector<64x128xf32>
    %338 = arith.addf %335, %337 : vector<64x128xf32>
    %cst_96 = arith.constant 5.000000e-01 : f32
    %339 = vector.broadcast %cst_96 : f32 to vector<64x128xf32>
    %340 = arith.mulf %339, %338 : vector<64x128xf32>
    %cst_97 = arith.constant 0.707106769 : f32
    %341 = vector.broadcast %cst_97 : f32 to vector<64x128xf32>
    %342 = arith.mulf %338, %341 : vector<64x128xf32>
    %cst_98 = arith.constant 0.000000e+00 : f32
    %343 = vector.broadcast %cst_98 : f32 to vector<64x128xf32>
    %344 = arith.cmpf olt, %342, %343 : vector<64x128xf32>
    %cst_99 = arith.constant -1.000000e+00 : f32
    %cst_100 = arith.constant 1.000000e+00 : f32
    %345 = vector.broadcast %cst_99 : f32 to vector<64x128xf32>
    %346 = vector.broadcast %cst_100 : f32 to vector<64x128xf32>
    %347 = arith.select %344, %345, %346 : vector<64x128xi1>, vector<64x128xf32>
    %348 = arith.mulf %342, %347 : vector<64x128xf32>
    %cst_101 = arith.constant 0.327591091 : f32
    %349 = vector.broadcast %cst_101 : f32 to vector<64x128xf32>
    %350 = arith.mulf %349, %348 : vector<64x128xf32>
    %cst_102 = arith.constant 1.000000e+00 : f32
    %351 = vector.broadcast %cst_102 : f32 to vector<64x128xf32>
    %352 = arith.addf %351, %350 : vector<64x128xf32>
    %353 = tpu.reciprocal %352 {approx = true} : vector<64x128xf32> -> vector<64x128xf32>
    %cst_103 = arith.constant 1.06140542 : f32
    %354 = vector.broadcast %cst_103 : f32 to vector<64x128xf32>
    %355 = arith.mulf %354, %353 : vector<64x128xf32>
    %cst_104 = arith.constant -1.45315206 : f32
    %356 = vector.broadcast %cst_104 : f32 to vector<64x128xf32>
    %357 = arith.addf %355, %356 : vector<64x128xf32>
    %358 = arith.mulf %357, %353 : vector<64x128xf32>
    %cst_105 = arith.constant 1.42141378 : f32
    %359 = vector.broadcast %cst_105 : f32 to vector<64x128xf32>
    %360 = arith.addf %358, %359 : vector<64x128xf32>
    %361 = arith.mulf %360, %353 : vector<64x128xf32>
    %cst_106 = arith.constant -0.284496725 : f32
    %362 = vector.broadcast %cst_106 : f32 to vector<64x128xf32>
    %363 = arith.addf %361, %362 : vector<64x128xf32>
    %364 = arith.mulf %363, %353 : vector<64x128xf32>
    %cst_107 = arith.constant 0.254829586 : f32
    %365 = vector.broadcast %cst_107 : f32 to vector<64x128xf32>
    %366 = arith.addf %364, %365 : vector<64x128xf32>
    %367 = arith.mulf %366, %353 : vector<64x128xf32>
    %cst_108 = arith.constant 0.000000e+00 : f32
    %368 = vector.broadcast %cst_108 : f32 to vector<64x128xf32>
    %369 = arith.subf %368, %348 : vector<64x128xf32>
    %370 = arith.mulf %369, %348 : vector<64x128xf32>
    %371 = math.exp %370 : vector<64x128xf32>
    %372 = arith.mulf %367, %371 : vector<64x128xf32>
    %cst_109 = arith.constant 1.000000e+00 : f32
    %373 = vector.broadcast %cst_109 : f32 to vector<64x128xf32>
    %374 = arith.subf %373, %372 : vector<64x128xf32>
    %375 = arith.mulf %347, %374 : vector<64x128xf32>
    %cst_110 = arith.constant 1.000000e+00 : f32
    %376 = vector.broadcast %cst_110 : f32 to vector<64x128xf32>
    %377 = arith.addf %376, %375 : vector<64x128xf32>
    %378 = arith.mulf %340, %377 : vector<64x128xf32>
    %379 = arith.truncf %378 : vector<64x128xf32> to vector<64x128xbf16>
    %c0_111 = arith.constant 0 : index
    %c0_112 = arith.constant 0 : index
    %380 = vector.load %arg18[%c0_111, %c0_112] : memref<128x128xbf16, #tpu.memory_space<vmem>>, vector<128x128xbf16>
    %cst_113 = arith.constant dense<0.000000e+00> : vector<64x128xf32>
    %381 = tpu.matmul %379, %380, %cst_113 {dimension_numbers = #tpu.dot_dimension_numbers<[1], [0], [0], [1], [0, 0, 1, 1], [], []>} : vector<64x128xbf16>, vector<128x128xbf16>, vector<64x128xf32> -> vector<64x128xf32>
    %c0_114 = arith.constant 0 : index
    %c0_115 = arith.constant 0 : index
    %382 = vector.load %arg19[%c0_114, %c0_115] : memref<1x128xf32, #tpu.memory_space<vmem>>, vector<1x128xf32>
    %383 = vector.broadcast %382 : vector<1x128xf32> to vector<64x128xf32>
    %384 = arith.addf %381, %383 : vector<64x128xf32>
    %cst_116 = arith.constant 5.000000e-01 : f32
    %385 = vector.broadcast %cst_116 : f32 to vector<64x128xf32>
    %386 = arith.mulf %385, %384 : vector<64x128xf32>
    %cst_117 = arith.constant 0.707106769 : f32
    %387 = vector.broadcast %cst_117 : f32 to vector<64x128xf32>
    %388 = arith.mulf %384, %387 : vector<64x128xf32>
    %cst_118 = arith.constant 0.000000e+00 : f32
    %389 = vector.broadcast %cst_118 : f32 to vector<64x128xf32>
    %390 = arith.cmpf olt, %388, %389 : vector<64x128xf32>
    %cst_119 = arith.constant -1.000000e+00 : f32
    %cst_120 = arith.constant 1.000000e+00 : f32
    %391 = vector.broadcast %cst_119 : f32 to vector<64x128xf32>
    %392 = vector.broadcast %cst_120 : f32 to vector<64x128xf32>
    %393 = arith.select %390, %391, %392 : vector<64x128xi1>, vector<64x128xf32>
    %394 = arith.mulf %388, %393 : vector<64x128xf32>
    %cst_121 = arith.constant 0.327591091 : f32
    %395 = vector.broadcast %cst_121 : f32 to vector<64x128xf32>
    %396 = arith.mulf %395, %394 : vector<64x128xf32>
    %cst_122 = arith.constant 1.000000e+00 : f32
    %397 = vector.broadcast %cst_122 : f32 to vector<64x128xf32>
    %398 = arith.addf %397, %396 : vector<64x128xf32>
    %399 = tpu.reciprocal %398 {approx = true} : vector<64x128xf32> -> vector<64x128xf32>
    %cst_123 = arith.constant 1.06140542 : f32
    %400 = vector.broadcast %cst_123 : f32 to vector<64x128xf32>
    %401 = arith.mulf %400, %399 : vector<64x128xf32>
    %cst_124 = arith.constant -1.45315206 : f32
    %402 = vector.broadcast %cst_124 : f32 to vector<64x128xf32>
    %403 = arith.addf %401, %402 : vector<64x128xf32>
    %404 = arith.mulf %403, %399 : vector<64x128xf32>
    %cst_125 = arith.constant 1.42141378 : f32
    %405 = vector.broadcast %cst_125 : f32 to vector<64x128xf32>
    %406 = arith.addf %404, %405 : vector<64x128xf32>
    %407 = arith.mulf %406, %399 : vector<64x128xf32>
    %cst_126 = arith.constant -0.284496725 : f32
    %408 = vector.broadcast %cst_126 : f32 to vector<64x128xf32>
    %409 = arith.addf %407, %408 : vector<64x128xf32>
    %410 = arith.mulf %409, %399 : vector<64x128xf32>
    %cst_127 = arith.constant 0.254829586 : f32
    %411 = vector.broadcast %cst_127 : f32 to vector<64x128xf32>
    %412 = arith.addf %410, %411 : vector<64x128xf32>
    %413 = arith.mulf %412, %399 : vector<64x128xf32>
    %cst_128 = arith.constant 0.000000e+00 : f32
    %414 = vector.broadcast %cst_128 : f32 to vector<64x128xf32>
    %415 = arith.subf %414, %394 : vector<64x128xf32>
    %416 = arith.mulf %415, %394 : vector<64x128xf32>
    %417 = math.exp %416 : vector<64x128xf32>
    %418 = arith.mulf %413, %417 : vector<64x128xf32>
    %cst_129 = arith.constant 1.000000e+00 : f32
    %419 = vector.broadcast %cst_129 : f32 to vector<64x128xf32>
    %420 = arith.subf %419, %418 : vector<64x128xf32>
    %421 = arith.mulf %393, %420 : vector<64x128xf32>
    %cst_130 = arith.constant 1.000000e+00 : f32
    %422 = vector.broadcast %cst_130 : f32 to vector<64x128xf32>
    %423 = arith.addf %422, %421 : vector<64x128xf32>
    %424 = arith.mulf %386, %423 : vector<64x128xf32>
    %425 = arith.addf %308, %424 : vector<64x128xf32>
    %426 = vector.shape_cast %425 : vector<64x128xf32> to vector<4x16x128xf32>
    %c0_131 = arith.constant 0 : index
    %c0_132 = arith.constant 0 : index
    %c0_133 = arith.constant 0 : index
    %427 = vector.load %arg20[%c0_131, %c0_132, %c0_133] : memref<4x16x128xf32, #tpu.memory_space<vmem>>, vector<4x16x128xf32>
    tpu.vector_store %arg20[%c0_131, %c0_132, %c0_133], %426 {strides = array<i32>} : memref<4x16x128xf32, #tpu.memory_space<vmem>>, vector<4x16x128xf32>,
    return
  }
  func.func @transform_0(%arg0: i32) -> (i32, i32, i32) {
    %c0_i32 = arith.constant 0 : i32
    %c0_i32_0 = arith.constant 0 : i32
    %c0_i32_1 = arith.constant 0 : i32
    return %arg0, %c0_i32, %c0_i32_0 : i32, i32, i32
  }
  func.func @transform_1(%arg0: i32) -> (i32, i32, i32) {
    %c0_i32 = arith.constant 0 : i32
    %c0_i32_0 = arith.constant 0 : i32
    %c0_i32_1 = arith.constant 0 : i32
    return %arg0, %c0_i32, %c0_i32_0 : i32, i32, i32
  }
  func.func @transform_2(%arg0: i32) -> (i32, i32, i32) {
    %c0_i32 = arith.constant 0 : i32
    %c0_i32_0 = arith.constant 0 : i32
    %c0_i32_1 = arith.constant 0 : i32
    return %arg0, %c0_i32, %c0_i32_0 : i32, i32, i32
  }
  func.func @transform_3(%arg0: i32) -> (i32, i32) {
    %c0_i32 = arith.constant 0 : i32
    %c0_i32_0 = arith.constant 0 : i32
    %c0_i32_1 = arith.constant 0 : i32
    return %c0_i32, %c0_i32_0 : i32, i32
  }
  func.func @transform_4(%arg0: i32) -> (i32, i32) {
    %c0_i32 = arith.constant 0 : i32
    %c0_i32_0 = arith.constant 0 : i32
    %c0_i32_1 = arith.constant 0 : i32
    return %c0_i32, %c0_i32_0 : i32, i32
  }
  func.func @transform_5(%arg0: i32) -> (i32, i32) {
    %c0_i32 = arith.constant 0 : i32
    %c0_i32_0 = arith.constant 0 : i32
    %c0_i32_1 = arith.constant 0 : i32
    return %c0_i32, %c0_i32_0 : i32, i32
  }
  func.func @transform_6(%arg0: i32) -> (i32, i32) {
    %c0_i32 = arith.constant 0 : i32
    %c0_i32_0 = arith.constant 0 : i32
    %c0_i32_1 = arith.constant 0 : i32
    return %c0_i32, %c0_i32_0 : i32, i32
  }
  func.func @transform_7(%arg0: i32) -> (i32, i32) {
    %c0_i32 = arith.constant 0 : i32
    %c0_i32_0 = arith.constant 0 : i32
    %c0_i32_1 = arith.constant 0 : i32
    return %c0_i32, %c0_i32_0 : i32, i32
  }
  func.func @transform_8(%arg0: i32) -> (i32, i32) {
    %c0_i32 = arith.constant 0 : i32
    %c0_i32_0 = arith.constant 0 : i32
    %c0_i32_1 = arith.constant 0 : i32
    return %c0_i32, %c0_i32_0 : i32, i32
  }
  func.func @transform_9(%arg0: i32) -> (i32, i32) {
    %c0_i32 = arith.constant 0 : i32
    %c0_i32_0 = arith.constant 0 : i32
    %c0_i32_1 = arith.constant 0 : i32
    return %c0_i32, %c0_i32_0 : i32, i32
  }
  func.func @transform_10(%arg0: i32) -> (i32, i32) {
    %c0_i32 = arith.constant 0 : i32
    %c0_i32_0 = arith.constant 0 : i32
    %c0_i32_1 = arith.constant 0 : i32
    return %c0_i32, %c0_i32_0 : i32, i32
  }
  func.func @transform_11(%arg0: i32) -> (i32, i32) {
    %c0_i32 = arith.constant 0 : i32
    %c0_i32_0 = arith.constant 0 : i32
    %c0_i32_1 = arith.constant 0 : i32
    return %c0_i32, %c0_i32_0 : i32, i32
  }
  func.func @transform_12(%arg0: i32) -> (i32, i32) {
    %c0_i32 = arith.constant 0 : i32
    %c0_i32_0 = arith.constant 0 : i32
    %c0_i32_1 = arith.constant 0 : i32
    return %c0_i32, %c0_i32_0 : i32, i32
  }
  func.func @transform_13(%arg0: i32) -> (i32, i32) {
    %c0_i32 = arith.constant 0 : i32
    %c0_i32_0 = arith.constant 0 : i32
    %c0_i32_1 = arith.constant 0 : i32
    return %c0_i32, %c0_i32_0 : i32, i32
  }
  func.func @transform_14(%arg0: i32) -> (i32, i32) {
    %c0_i32 = arith.constant 0 : i32
    %c0_i32_0 = arith.constant 0 : i32
    %c0_i32_1 = arith.constant 0 : i32
    return %c0_i32, %c0_i32_0 : i32, i32
  }
  func.func @transform_15(%arg0: i32) -> (i32, i32) {
    %c0_i32 = arith.constant 0 : i32
    %c0_i32_0 = arith.constant 0 : i32
    %c0_i32_1 = arith.constant 0 : i32
    return %c0_i32, %c0_i32_0 : i32, i32
  }
  func.func @transform_16(%arg0: i32) -> (i32, i32) {
    %c0_i32 = arith.constant 0 : i32
    %c0_i32_0 = arith.constant 0 : i32
    %c0_i32_1 = arith.constant 0 : i32
    return %c0_i32, %c0_i32_0 : i32, i32
  }
  func.func @transform_17(%arg0: i32) -> (i32, i32) {
    %c0_i32 = arith.constant 0 : i32
    %c0_i32_0 = arith.constant 0 : i32
    %c0_i32_1 = arith.constant 0 : i32
    return %c0_i32, %c0_i32_0 : i32, i32
  }
  func.func @transform_18(%arg0: i32) -> (i32, i32) {
    %c0_i32 = arith.constant 0 : i32
    %c0_i32_0 = arith.constant 0 : i32
    %c0_i32_1 = arith.constant 0 : i32
    return %c0_i32, %c0_i32_0 : i32, i32
  }
  func.func @transform_19(%arg0: i32) -> (i32, i32, i32) {
    %c0_i32 = arith.constant 0 : i32
    %c0_i32_0 = arith.constant 0 : i32
    %c0_i32_1 = arith.constant 0 : i32
    return %arg0, %c0_i32, %c0_i32_0 : i32, i32, i32
  }
}

</mosaic_0001>

<llo_original>
// kernel: decoder_block_forward.1
$region0: #{decoder_block_forward.1}
  #allocation0 [shape = 'u32[]', space=smem, size = 0x4, offset = 0x4, fixed_abs, tag = 'smem constant byte address 0x4 - core index']
  #allocation1 [shape = 'u32[144,128]{1,0:T(1,128)}', space=vmem, size = 0x12000, scoped, tag = 'internal scratch']
  %s0 = inlined_call_operand.vmem [shape: f32[8,16,128], index: 0, kind: input, shape index: {}]
  %s1 = inlined_call_operand.hbm [shape: f32[8,16,128], index: 1, kind: input, shape index: {}]
  %s2 = inlined_call_operand.vmem [shape: f32[8,4,16], index: 2, kind: input, shape index: {}]
  %s3 = inlined_call_operand.vmem [shape: bf16[128,384], index: 3, kind: input, shape index: {}]
  %s4 = inlined_call_operand.vmem [shape: f32[1,384], index: 4, kind: input, shape index: {}]
  %s5 = inlined_call_operand.hbm [shape: bf16[128,128], index: 5, kind: input, shape index: {}]
  %s6 = inlined_call_operand.vmem [shape: f32[1,128], index: 6, kind: input, shape index: {}]
  %s7 = inlined_call_operand.hbm [shape: bf16[128,128], index: 7, kind: input, shape index: {}]
  %s8 = inlined_call_operand.vmem [shape: f32[1,128], index: 8, kind: input, shape index: {}]
  %s9 = inlined_call_operand.hbm [shape: bf16[128,256], index: 9, kind: input, shape index: {}]
  %s10 = inlined_call_operand.vmem [shape: f32[1,256], index: 10, kind: input, shape index: {}]
  %s11 = inlined_call_operand.hbm [shape: bf16[128,128], index: 11, kind: input, shape index: {}]
  %s12 = inlined_call_operand.vmem [shape: f32[1,128], index: 12, kind: input, shape index: {}]
  %s13 = inlined_call_operand.vmem [shape: f32[1,128], index: 13, kind: input, shape index: {}]
  %s14 = inlined_call_operand.vmem [shape: f32[1,128], index: 14, kind: input, shape index: {}]
  %s15 = inlined_call_operand.hbm [shape: bf16[128,128], index: 15, kind: input, shape index: {}]
  %s16 = inlined_call_operand.vmem [shape: f32[1,128], index: 16, kind: input, shape index: {}]
  %s17 = inlined_call_operand.hbm [shape: bf16[128,128], index: 17, kind: input, shape index: {}]
  %s18 = inlined_call_operand.vmem [shape: f32[1,128], index: 18, kind: input, shape index: {}]
  %s19 = inlined_call_operand.hbm [shape: f32[8,16,128], index: 19, kind: output, shape index: {}]
  %s20 = sld [smem:[#allocation0]]
  $region137: #{decoder_block_forward.1} parent=0
    _
  %s22 = ssub.s32 1, %s20
  %s23 = scalar_select 0, %s22, %s20
  $region1: #{decoder_block_forward.1} parent=0
    #allocation2 [shape = 'u8[65536]{0}', space=vmem, size = 0x10000, scoped, tag = 'input window, operand 1']
    #allocation3 [shape = 's32[2]{0}', space=sflag, size = 0x8, scoped, tag = 'scoped memory for decoder_block_forward.1']
    #allocation4 [shape = 's32[2]{0}', space=sflag, size = 0x8, scoped, tag = 'scoped memory for decoder_block_forward.1']
    #allocation5 [shape = 'u8[32768]{0}', space=vmem, size = 0x8000, scoped, tag = 'input window, operand 5, single buffered']
    #allocation6 [shape = 's32[1]{0}', space=sflag, size = 0x4, scoped, tag = 'scoped memory for decoder_block_forward.1']
    #allocation7 [shape = 'u8[32768]{0}', space=vmem, size = 0x8000, scoped, tag = 'input window, operand 7, single buffered']
    #allocation8 [shape = 'u8[65536]{0}', space=vmem, size = 0x10000, scoped, tag = 'input window, operand 9, single buffered']
    #allocation9 [shape = 's32[1]{0}', space=sflag, size = 0x4, scoped, tag = 'scoped memory for decoder_block_forward.1']
    #allocation10 [shape = 'u8[32768]{0}', space=vmem, size = 0x8000, scoped, tag = 'input window, operand 11, single buffered']
    #allocation11 [shape = 'u8[32768]{0}', space=vmem, size = 0x8000, scoped, tag = 'input window, operand 15, single buffered']
    #allocation12 [shape = 's32[1]{0}', space=sflag, size = 0x4, scoped, tag = 'scoped memory for decoder_block_forward.1']
    #allocation13 [shape = 'u8[32768]{0}', space=vmem, size = 0x8000, scoped, tag = 'input window, operand 17, single buffered']
    #allocation14 [shape = 'u8[65536]{0}', space=vmem, size = 0x10000, scoped, tag = 'output window, operand 0']
    %24 = vsyncpa [#allocation3], 0
    %s25 = scalar_lea.sflag [#allocation3], 1
    %26 = vsyncpa %s25, 0
    %27 = vsyncpa [#allocation6], 0
    %28 = vsyncpa [#allocation9], 0
    %29 = vsyncpa [#allocation12], 0
    %30 = vsyncpa [#allocation4], 0
    %s31 = scalar_lea.sflag [#allocation4], 1
    %32 = vsyncpa %s31, 0
    loop: start=0, step=1, limit=4
    $region2: #{decoder_block_forward.1} parent=1 // loop_pre_header
      _
    $region3: #{decoder_block_forward.1} parent=1 // loop_header
      %s34 = sphi 0, %s38
      %p35 = scmp.ge.s32.totalorder %s34, 4
      %s44 = sphi 0, %s46
      %s47 = sphi 0, %s44
      %s48 = sphi 0, %s47
      %s64 = sphi 0, %s48
      %s70 = sphi 0, %s72
      %s73 = sphi 0, %s70
      %s74 = sphi 0, %s73
      %s90 = sphi 0, %s74
      %s96 = sphi 0, %s98
      %s99 = sphi 0, %s96
      %s100 = sphi 0, %s99
      %s116 = sphi 0, %s100
      %s120 = sphi 0, %s120
      %s122 = sphi 0, %s120
      %s123 = sphi 0, %s122
      %s137 = sphi 0, %s123
      %s141 = sphi 0, %s141
      %s143 = sphi 0, %s141
      %s144 = sphi 0, %s143
      %s158 = sphi 0, %s144
      %s162 = sphi 0, %s162
      %s164 = sphi 0, %s162
      %s165 = sphi 0, %s164
      %s179 = sphi 0, %s165
      %s183 = sphi 0, %s183
      %s185 = sphi 0, %s183
      %s186 = sphi 0, %s185
      %s200 = sphi 0, %s186
      %s204 = sphi 0, %s204
      %s206 = sphi 0, %s204
      %s207 = sphi 0, %s206
      %s221 = sphi 0, %s207
      %s225 = sphi 0, %s225
      %s227 = sphi 0, %s225
      %s228 = sphi 0, %s227
      %s242 = sphi 0, %s228
      %s246 = sphi 0, %s246
      %s248 = sphi 0, %s246
      %s249 = sphi 0, %s248
      %s263 = sphi 0, %s249
      %s267 = sphi 0, %s267
      %s269 = sphi 0, %s267
      %s270 = sphi 0, %s269
      %s284 = sphi 0, %s270
      %s288 = sphi 0, %s288
      %s290 = sphi 0, %s288
      %s291 = sphi 0, %s290
      %s305 = sphi 0, %s291
      %s309 = sphi 0, %s309
      %s311 = sphi 0, %s309
      %s312 = sphi 0, %s311
      %s326 = sphi 0, %s312
      %s330 = sphi 0, %s330
      %s332 = sphi 0, %s330
      %s333 = sphi 0, %s332
      %s347 = sphi 0, %s333
      %s351 = sphi 0, %s351
      %s353 = sphi 0, %s351
      %s354 = sphi 0, %s353
      %s368 = sphi 0, %s354
      %s372 = sphi 0, %s372
      %s374 = sphi 0, %s372
      %s375 = sphi 0, %s374
      %s389 = sphi 0, %s375
      %s393 = sphi 0, %s393
      %s395 = sphi 0, %s393
      %s396 = sphi 0, %s395
      %s410 = sphi 0, %s396
      %s414 = sphi 0, %s414
      %s416 = sphi 0, %s414
      %s417 = sphi 0, %s416
      %s431 = sphi 0, %s417
      %s435 = sphi 0, %s435
      %s437 = sphi 0, %s435
      %s438 = sphi 0, %s437
      %s452 = sphi 0, %s438
      %s458 = sphi 0, %s460
      %s461 = sphi 0, %s458
      %s462 = sphi 0, %s461
      %s478 = sphi 0, %s462
    $region4: #{decoder_block_forward.1} parent=1 // loop_header_branch
      %37 = sbr.rel (%p35) target = $region8
    $region5: #{decoder_block_forward.1} parent=1 // loop_body
      %s39 = ssub.s32 %s34, 1
      %s40 = ssub.s32 %s34, 2
      %s41 = sadd.s32 %s34, 1
      %s42 = ssub.s32 %s34, %s41
      %p43 = scmp.eq.s32.totalorder %s42, 0
      %s45 = sadd.s32 %s44, 1
      %s46 = scalar_select %p43, %s44, %s45
      %p49 = pneg %p43
      %p50 = scmp.eq.s32.totalorder %s34, 1
      %p51 = por %p49, %p50
      %p52 = scmp.ne.s32.totalorder %s44, %s47
      %p53 = scmp.eq.s32.totalorder %s34, 0
      %p54 = por %p52, %p53
      %p55 = scmp.ne.s32.totalorder %s44, %s47
      %p56 = scmp.eq.s32.totalorder %s39, 1
      %p57 = por %p55, %p56
      %p58 = scmp.ne.s32.totalorder %s47, %s48
      %p59 = scmp.eq.s32.totalorder %s39, 0
      %p60 = por %p58, %p59
      %p61 = scmp.ne.s32.totalorder %s47, %s48
      %p62 = scmp.eq.s32.totalorder %s40, 1
      %p63 = por %p61, %p62
      %p65 = scmp.ne.s32.totalorder %s48, %s64
      %p66 = scmp.eq.s32.totalorder %s40, 0
      %p67 = por %p65, %p66
      %s68 = ssub.s32 %s34, %s41
      %p69 = scmp.eq.s32.totalorder %s68, 0
      %s71 = sadd.s32 %s70, 1
      %s72 = scalar_select %p69, %s70, %s71
      %p75 = pneg %p69
      %p76 = scmp.eq.s32.totalorder %s34, 1
      %p77 = por %p75, %p76
      %p78 = scmp.ne.s32.totalorder %s70, %s73
      %p79 = scmp.eq.s32.totalorder %s34, 0
      %p80 = por %p78, %p79
      %p81 = scmp.ne.s32.totalorder %s70, %s73
      %p82 = scmp.eq.s32.totalorder %s39, 1
      %p83 = por %p81, %p82
      %p84 = scmp.ne.s32.totalorder %s73, %s74
      %p85 = scmp.eq.s32.totalorder %s39, 0
      %p86 = por %p84, %p85
      %p87 = scmp.ne.s32.totalorder %s73, %s74
      %p88 = scmp.eq.s32.totalorder %s40, 1
      %p89 = por %p87, %p88
      %p91 = scmp.ne.s32.totalorder %s74, %s90
      %p92 = scmp.eq.s32.totalorder %s40, 0
      %p93 = por %p91, %p92
      %s94 = ssub.s32 %s34, %s41
      %p95 = scmp.eq.s32.totalorder %s94, 0
      %s97 = sadd.s32 %s96, 1
      %s98 = scalar_select %p95, %s96, %s97
      %p101 = pneg %p95
      %p102 = scmp.eq.s32.totalorder %s34, 1
      %p103 = por %p101, %p102
      %p104 = scmp.ne.s32.totalorder %s96, %s99
      %p105 = scmp.eq.s32.totalorder %s34, 0
      %p106 = por %p104, %p105
      %p107 = scmp.ne.s32.totalorder %s96, %s99
      %p108 = scmp.eq.s32.totalorder %s39, 1
      %p109 = por %p107, %p108
      %p110 = scmp.ne.s32.totalorder %s99, %s100
      %p111 = scmp.eq.s32.totalorder %s39, 0
      %p112 = por %p110, %p111
      %p113 = scmp.ne.s32.totalorder %s99, %s100
      %p114 = scmp.eq.s32.totalorder %s40, 1
      %p115 = por %p113, %p114
      %p117 = scmp.ne.s32.totalorder %s100, %s116
      %p118 = scmp.eq.s32.totalorder %s40, 0
      %p119 = por %p117, %p118
      %s121 = sadd.s32 %s120, 1
      %p124 = scmp.eq.s32.totalorder %s34, 1
      %p125 = scmp.ne.s32.totalorder %s120, %s122
      %p126 = scmp.eq.s32.totalorder %s34, 0
      %p127 = por %p125, %p126
      %p128 = scmp.ne.s32.totalorder %s120, %s122
      %p129 = scmp.eq.s32.totalorder %s39, 1
      %p130 = por %p128, %p129
      %p131 = scmp.ne.s32.totalorder %s122, %s123
      %p132 = scmp.eq.s32.totalorder %s39, 0
      %p133 = por %p131, %p132
      %p134 = scmp.ne.s32.totalorder %s122, %s123
      %p135 = scmp.eq.s32.totalorder %s40, 1
      %p136 = por %p134, %p135
      %p138 = scmp.ne.s32.totalorder %s123, %s137
      %p139 = scmp.eq.s32.totalorder %s40, 0
      %p140 = por %p138, %p139
      %s142 = sadd.s32 %s141, 1
      %p145 = scmp.eq.s32.totalorder %s34, 1
      %p146 = scmp.ne.s32.totalorder %s141, %s143
      %p147 = scmp.eq.s32.totalorder %s34, 0
      %p148 = por %p146, %p147
      %p149 = scmp.ne.s32.totalorder %s141, %s143
      %p150 = scmp.eq.s32.totalorder %s39, 1
      %p151 = por %p149, %p150
      %p152 = scmp.ne.s32.totalorder %s143, %s144
      %p153 = scmp.eq.s32.totalorder %s39, 0
      %p154 = por %p152, %p153
      %p155 = scmp.ne.s32.totalorder %s143, %s144
      %p156 = scmp.eq.s32.totalorder %s40, 1
      %p157 = por %p155, %p156
      %p159 = scmp.ne.s32.totalorder %s144, %s158
      %p160 = scmp.eq.s32.totalorder %s40, 0
      %p161 = por %p159, %p160
      %s163 = sadd.s32 %s162, 1
      %p166 = scmp.eq.s32.totalorder %s34, 1
      %p167 = scmp.ne.s32.totalorder %s162, %s164
      %p168 = scmp.eq.s32.totalorder %s34, 0
      %p169 = por %p167, %p168
      %p170 = scmp.ne.s32.totalorder %s162, %s164
      %p171 = scmp.eq.s32.totalorder %s39, 1
      %p172 = por %p170, %p171
      %p173 = scmp.ne.s32.totalorder %s164, %s165
      %p174 = scmp.eq.s32.totalorder %s39, 0
      %p175 = por %p173, %p174
      %p176 = scmp.ne.s32.totalorder %s164, %s165
      %p177 = scmp.eq.s32.totalorder %s40, 1
      %p178 = por %p176, %p177
      %p180 = scmp.ne.s32.totalorder %s165, %s179
      %p181 = scmp.eq.s32.totalorder %s40, 0
      %p182 = por %p180, %p181
      %s184 = sadd.s32 %s183, 1
      %p187 = scmp.eq.s32.totalorder %s34, 1
      %p188 = scmp.ne.s32.totalorder %s183, %s185
      %p189 = scmp.eq.s32.totalorder %s34, 0
      %p190 = por %p188, %p189
      %p191 = scmp.ne.s32.totalorder %s183, %s185
      %p192 = scmp.eq.s32.totalorder %s39, 1
      %p193 = por %p191, %p192
      %p194 = scmp.ne.s32.totalorder %s185, %s186
      %p195 = scmp.eq.s32.totalorder %s39, 0
      %p196 = por %p194, %p195
      %p197 = scmp.ne.s32.totalorder %s185, %s186
      %p198 = scmp.eq.s32.totalorder %s40, 1
      %p199 = por %p197, %p198
      %p201 = scmp.ne.s32.totalorder %s186, %s200
      %p202 = scmp.eq.s32.totalorder %s40, 0
      %p203 = por %p201, %p202
      %s205 = sadd.s32 %s204, 1
      %p208 = scmp.eq.s32.totalorder %s34, 1
      %p209 = scmp.ne.s32.totalorder %s204, %s206
      %p210 = scmp.eq.s32.totalorder %s34, 0
      %p211 = por %p209, %p210
      %p212 = scmp.ne.s32.totalorder %s204, %s206
      %p213 = scmp.eq.s32.totalorder %s39, 1
      %p214 = por %p212, %p213
      %p215 = scmp.ne.s32.totalorder %s206, %s207
      %p216 = scmp.eq.s32.totalorder %s39, 0
      %p217 = por %p215, %p216
      %p218 = scmp.ne.s32.totalorder %s206, %s207
      %p219 = scmp.eq.s32.totalorder %s40, 1
      %p220 = por %p218, %p219
      %p222 = scmp.ne.s32.totalorder %s207, %s221
      %p223 = scmp.eq.s32.totalorder %s40, 0
      %p224 = por %p222, %p223
      %s226 = sadd.s32 %s225, 1
      %p229 = scmp.eq.s32.totalorder %s34, 1
      %p230 = scmp.ne.s32.totalorder %s225, %s227
      %p231 = scmp.eq.s32.totalorder %s34, 0
      %p232 = por %p230, %p231
      %p233 = scmp.ne.s32.totalorder %s225, %s227
      %p234 = scmp.eq.s32.totalorder %s39, 1
      %p235 = por %p233, %p234
      %p236 = scmp.ne.s32.totalorder %s227, %s228
      %p237 = scmp.eq.s32.totalorder %s39, 0
      %p238 = por %p236, %p237
      %p239 = scmp.ne.s32.totalorder %s227, %s228
      %p240 = scmp.eq.s32.totalorder %s40, 1
      %p241 = por %p239, %p240
      %p243 = scmp.ne.s32.totalorder %s228, %s242
      %p244 = scmp.eq.s32.totalorder %s40, 0
      %p245 = por %p243, %p244
      %s247 = sadd.s32 %s246, 1
      %p250 = scmp.eq.s32.totalorder %s34, 1
      %p251 = scmp.ne.s32.totalorder %s246, %s248
      %p252 = scmp.eq.s32.totalorder %s34, 0
      %p253 = por %p251, %p252
      %p254 = scmp.ne.s32.totalorder %s246, %s248
      %p255 = scmp.eq.s32.totalorder %s39, 1
      %p256 = por %p254, %p255
      %p257 = scmp.ne.s32.totalorder %s248, %s249
      %p258 = scmp.eq.s32.totalorder %s39, 0
      %p259 = por %p257, %p258
      %p260 = scmp.ne.s32.totalorder %s248, %s249
      %p261 = scmp.eq.s32.totalorder %s40, 1
      %p262 = por %p260, %p261
      %p264 = scmp.ne.s32.totalorder %s249, %s263
      %p265 = scmp.eq.s32.totalorder %s40, 0
      %p266 = por %p264, %p265
      %s268 = sadd.s32 %s267, 1
      %p271 = scmp.eq.s32.totalorder %s34, 1
      %p272 = scmp.ne.s32.totalorder %s267, %s269
      %p273 = scmp.eq.s32.totalorder %s34, 0
      %p274 = por %p272, %p273
      %p275 = scmp.ne.s32.totalorder %s267, %s269
      %p276 = scmp.eq.s32.totalorder %s39, 1
      %p277 = por %p275, %p276
      %p278 = scmp.ne.s32.totalorder %s269, %s270
      %p279 = scmp.eq.s32.totalorder %s39, 0
      %p280 = por %p278, %p279
      %p281 = scmp.ne.s32.totalorder %s269, %s270
      %p282 = scmp.eq.s32.totalorder %s40, 1
      %p283 = por %p281, %p282
      %p285 = scmp.ne.s32.totalorder %s270, %s284
      %p286 = scmp.eq.s32.totalorder %s40, 0
      %p287 = por %p285, %p286
      %s289 = sadd.s32 %s288, 1
      %p292 = scmp.eq.s32.totalorder %s34, 1
      %p293 = scmp.ne.s32.totalorder %s288, %s290
      %p294 = scmp.eq.s32.totalorder %s34, 0
      %p295 = por %p293, %p294
      %p296 = scmp.ne.s32.totalorder %s288, %s290
      %p297 = scmp.eq.s32.totalorder %s39, 1
      %p298 = por %p296, %p297
      %p299 = scmp.ne.s32.totalorder %s290, %s291
      %p300 = scmp.eq.s32.totalorder %s39, 0
      %p301 = por %p299, %p300
      %p302 = scmp.ne.s32.totalorder %s290, %s291
      %p303 = scmp.eq.s32.totalorder %s40, 1
      %p304 = por %p302, %p303
      %p306 = scmp.ne.s32.totalorder %s291, %s305
      %p307 = scmp.eq.s32.totalorder %s40, 0
      %p308 = por %p306, %p307
      %s310 = sadd.s32 %s309, 1
      %p313 = scmp.eq.s32.totalorder %s34, 1
      %p314 = scmp.ne.s32.totalorder %s309, %s311
      %p315 = scmp.eq.s32.totalorder %s34, 0
      %p316 = por %p314, %p315
      %p317 = scmp.ne.s32.totalorder %s309, %s311
      %p318 = scmp.eq.s32.totalorder %s39, 1
      %p319 = por %p317, %p318
      %p320 = scmp.ne.s32.totalorder %s311, %s312
      %p321 = scmp.eq.s32.totalorder %s39, 0
      %p322 = por %p320, %p321
      %p323 = scmp.ne.s32.totalorder %s311, %s312
      %p324 = scmp.eq.s32.totalorder %s40, 1
      %p325 = por %p323, %p324
      %p327 = scmp.ne.s32.totalorder %s312, %s326
      %p328 = scmp.eq.s32.totalorder %s40, 0
      %p329 = por %p327, %p328
      %s331 = sadd.s32 %s330, 1
      %p334 = scmp.eq.s32.totalorder %s34, 1
      %p335 = scmp.ne.s32.totalorder %s330, %s332
      %p336 = scmp.eq.s32.totalorder %s34, 0
      %p337 = por %p335, %p336
      %p338 = scmp.ne.s32.totalorder %s330, %s332
      %p339 = scmp.eq.s32.totalorder %s39, 1
      %p340 = por %p338, %p339
      %p341 = scmp.ne.s32.totalorder %s332, %s333
      %p342 = scmp.eq.s32.totalorder %s39, 0
      %p343 = por %p341, %p342
      %p344 = scmp.ne.s32.totalorder %s332, %s333
      %p345 = scmp.eq.s32.totalorder %s40, 1
      %p346 = por %p344, %p345
      %p348 = scmp.ne.s32.totalorder %s333, %s347
      %p349 = scmp.eq.s32.totalorder %s40, 0
      %p350 = por %p348, %p349
      %s352 = sadd.s32 %s351, 1
      %p355 = scmp.eq.s32.totalorder %s34, 1
      %p356 = scmp.ne.s32.totalorder %s351, %s353
      %p357 = scmp.eq.s32.totalorder %s34, 0
      %p358 = por %p356, %p357
      %p359 = scmp.ne.s32.totalorder %s351, %s353
      %p360 = scmp.eq.s32.totalorder %s39, 1
      %p361 = por %p359, %p360
      %p362 = scmp.ne.s32.totalorder %s353, %s354
      %p363 = scmp.eq.s32.totalorder %s39, 0
      %p364 = por %p362, %p363
      %p365 = scmp.ne.s32.totalorder %s353, %s354
      %p366 = scmp.eq.s32.totalorder %s40, 1
      %p367 = por %p365, %p366
      %p369 = scmp.ne.s32.totalorder %s354, %s368
      %p370 = scmp.eq.s32.totalorder %s40, 0
      %p371 = por %p369, %p370
      %s373 = sadd.s32 %s372, 1
      %p376 = scmp.eq.s32.totalorder %s34, 1
      %p377 = scmp.ne.s32.totalorder %s372, %s374
      %p378 = scmp.eq.s32.totalorder %s34, 0
      %p379 = por %p377, %p378
      %p380 = scmp.ne.s32.totalorder %s372, %s374
      %p381 = scmp.eq.s32.totalorder %s39, 1
      %p382 = por %p380, %p381
      %p383 = scmp.ne.s32.totalorder %s374, %s375
      %p384 = scmp.eq.s32.totalorder %s39, 0
      %p385 = por %p383, %p384
      %p386 = scmp.ne.s32.totalorder %s374, %s375
      %p387 = scmp.eq.s32.totalorder %s40, 1
      %p388 = por %p386, %p387
      %p390 = scmp.ne.s32.totalorder %s375, %s389
      %p391 = scmp.eq.s32.totalorder %s40, 0
      %p392 = por %p390, %p391
      %s394 = sadd.s32 %s393, 1
      %p397 = scmp.eq.s32.totalorder %s34, 1
      %p398 = scmp.ne.s32.totalorder %s393, %s395
      %p399 = scmp.eq.s32.totalorder %s34, 0
      %p400 = por %p398, %p399
      %p401 = scmp.ne.s32.totalorder %s393, %s395
      %p402 = scmp.eq.s32.totalorder %s39, 1
      %p403 = por %p401, %p402
      %p404 = scmp.ne.s32.totalorder %s395, %s396
      %p405 = scmp.eq.s32.totalorder %s39, 0
      %p406 = por %p404, %p405
      %p407 = scmp.ne.s32.totalorder %s395, %s396
      %p408 = scmp.eq.s32.totalorder %s40, 1
      %p409 = por %p407, %p408
      %p411 = scmp.ne.s32.totalorder %s396, %s410
      %p412 = scmp.eq.s32.totalorder %s40, 0
      %p413 = por %p411, %p412
      %s415 = sadd.s32 %s414, 1
      %p418 = scmp.eq.s32.totalorder %s34, 1
      %p419 = scmp.ne.s32.totalorder %s414, %s416
      %p420 = scmp.eq.s32.totalorder %s34, 0
      %p421 = por %p419, %p420
      %p422 = scmp.ne.s32.totalorder %s414, %s416
      %p423 = scmp.eq.s32.totalorder %s39, 1
      %p424 = por %p422, %p423
      %p425 = scmp.ne.s32.totalorder %s416, %s417
      %p426 = scmp.eq.s32.totalorder %s39, 0
      %p427 = por %p425, %p426
      %p428 = scmp.ne.s32.totalorder %s416, %s417
      %p429 = scmp.eq.s32.totalorder %s40, 1
      %p430 = por %p428, %p429
      %p432 = scmp.ne.s32.totalorder %s417, %s431
      %p433 = scmp.eq.s32.totalorder %s40, 0
      %p434 = por %p432, %p433
      %s436 = sadd.s32 %s435, 1
      %p439 = scmp.eq.s32.totalorder %s34, 1
      %p440 = scmp.ne.s32.totalorder %s435, %s437
      %p441 = scmp.eq.s32.totalorder %s34, 0
      %p442 = por %p440, %p441
      %p443 = scmp.ne.s32.totalorder %s435, %s437
      %p444 = scmp.eq.s32.totalorder %s39, 1
      %p445 = por %p443, %p444
      %p446 = scmp.ne.s32.totalorder %s437, %s438
      %p447 = scmp.eq.s32.totalorder %s39, 0
      %p448 = por %p446, %p447
      %p449 = scmp.ne.s32.totalorder %s437, %s438
      %p450 = scmp.eq.s32.totalorder %s40, 1
      %p451 = por %p449, %p450
      %p453 = scmp.ne.s32.totalorder %s438, %s452
      %p454 = scmp.eq.s32.totalorder %s40, 0
      %p455 = por %p453, %p454
      %s456 = ssub.s32 %s34, %s41
      %p457 = scmp.eq.s32.totalorder %s456, 0
      %s459 = sadd.s32 %s458, 1
      %s460 = scalar_select %p457, %s458, %s459
      %p463 = pneg %p457
      %p464 = scmp.eq.s32.totalorder %s34, 1
      %p465 = por %p463, %p464
      %p466 = scmp.ne.s32.totalorder %s458, %s461
      %p467 = scmp.eq.s32.totalorder %s34, 0
      %p468 = por %p466, %p467
      %p469 = scmp.ne.s32.totalorder %s458, %s461
      %p470 = scmp.eq.s32.totalorder %s39, 1
      %p471 = por %p469, %p470
      %p472 = scmp.ne.s32.totalorder %s461, %s462
      %p473 = scmp.eq.s32.totalorder %s39, 0
      %p474 = por %p472, %p473
      %p475 = scmp.ne.s32.totalorder %s461, %s462
      %p476 = scmp.eq.s32.totalorder %s40, 1
      %p477 = por %p475, %p476
      %p479 = scmp.ne.s32.totalorder %s462, %s478
      %p480 = scmp.eq.s32.totalorder %s40, 0
      %p481 = por %p479, %p480
      %p482 = scmp.le.s32.totalorder 1, %s34
      %p483 = scmp.lt.s32.totalorder %s34, 3
      %p484 = pnand %p482, %p483
      %p485 = pneg %p484
      // Predicated region
      $region9: #{decoder_block_forward.1} parent=5 // pred_check
        _
      $region10: #{decoder_block_forward.1} parent=5 // pred_check_branch
        %487 = sbr.rel (%p484) target = $region12
      $region11: #{decoder_block_forward.1} parent=5 // pred_region
        %s488 = ssub.s32 %s34, 1
        // Predicated region
        $region13: #{decoder_block_forward.1} parent=11 // pred_check
          %p489 = pneg %p133
        $region14: #{decoder_block_forward.1} parent=11 // pred_check_branch
          %491 = sbr.rel (%p489) target = $region16
        $region15: #{decoder_block_forward.1} parent=11 // pred_region
          _
        $region16: #{decoder_block_forward.1} parent=11 // pred_fallthru
          _
        // Predicated region
        $region17: #{decoder_block_forward.1} parent=11 // pred_check
          %p492 = pneg %p154
        $region18: #{decoder_block_forward.1} parent=11 // pred_check_branch
          %494 = sbr.rel (%p492) target = $region20
        $region19: #{decoder_block_forward.1} parent=11 // pred_region
          _
        $region20: #{decoder_block_forward.1} parent=11 // pred_fallthru
          _
        // Predicated region
        $region21: #{decoder_block_forward.1} parent=11 // pred_check
          %p495 = pneg %p175
        $region22: #{decoder_block_forward.1} parent=11 // pred_check_branch
          %497 = sbr.rel (%p495) target = $region24
        $region23: #{decoder_block_forward.1} parent=11 // pred_region
          %s499 = ssub.s32 1024, 1024
          %500 = vsyncadd [#allocation6], %s499
          %s501 = sshll.u32 [#allocation5], 4
          %s502 = int_to_ptr.vmem [resolvable:$true] %s501
          %507 = dma.hbm_to_vmem [thread:$0]  %s5, 1024, %s502, [#allocation6], 64, 64, 4
        $region24: #{decoder_block_forward.1} parent=11 // pred_fallthru
          _
        // Predicated region
        $region25: #{decoder_block_forward.1} parent=11 // pred_check
          %p508 = pneg %p196
        $region26: #{decoder_block_forward.1} parent=11 // pred_check_branch
          %510 = sbr.rel (%p508) target = $region28
        $region27: #{decoder_block_forward.1} parent=11 // pred_region
          _
        $region28: #{decoder_block_forward.1} parent=11 // pred_fallthru
          _
        // Predicated region
        $region29: #{decoder_block_forward.1} parent=11 // pred_check
          %p511 = pneg %p217
        $region30: #{decoder_block_forward.1} parent=11 // pred_check_branch
          %513 = sbr.rel (%p511) target = $region32
        $region31: #{decoder_block_forward.1} parent=11 // pred_region
          %s515 = ssub.s32 1024, 1024
          %516 = vsyncadd [#allocation6], %s515
          %s517 = sshll.u32 [#allocation7], 4
          %s518 = int_to_ptr.vmem [resolvable:$true] %s517
          %523 = dma.hbm_to_vmem [thread:$0]  %s7, 1024, %s518, [#allocation6], 64, 64, 4
        $region32: #{decoder_block_forward.1} parent=11 // pred_fallthru
          _
        // Predicated region
        $region33: #{decoder_block_forward.1} parent=11 // pred_check
          %p524 = pneg %p238
        $region34: #{decoder_block_forward.1} parent=11 // pred_check_branch
          %526 = sbr.rel (%p524) target = $region36
        $region35: #{decoder_block_forward.1} parent=11 // pred_region
          _
        $region36: #{decoder_block_forward.1} parent=11 // pred_fallthru
          _
        // Predicated region
        $region37: #{decoder_block_forward.1} parent=11 // pred_check
          %p527 = pneg %p259
        $region38: #{decoder_block_forward.1} parent=11 // pred_check_branch
          %529 = sbr.rel (%p527) target = $region40
        $region39: #{decoder_block_forward.1} parent=11 // pred_region
          %s531 = ssub.s32 2048, 2048
          %532 = vsyncadd [#allocation9], %s531
          %s533 = sshll.u32 [#allocation8], 4
          %s534 = int_to_ptr.vmem [resolvable:$true] %s533
          %539 = dma.hbm_to_vmem [thread:$0]  %s9, 2048, %s534, [#allocation9], 128, 128, 8
        $region40: #{decoder_block_forward.1} parent=11 // pred_fallthru
          _
        // Predicated region
        $region41: #{decoder_block_forward.1} parent=11 // pred_check
          %p540 = pneg %p280
        $region42: #{decoder_block_forward.1} parent=11 // pred_check_branch
          %542 = sbr.rel (%p540) target = $region44
        $region43: #{decoder_block_forward.1} parent=11 // pred_region
          _
        $region44: #{decoder_block_forward.1} parent=11 // pred_fallthru
          _
        // Predicated region
        $region45: #{decoder_block_forward.1} parent=11 // pred_check
          %p543 = pneg %p301
        $region46: #{decoder_block_forward.1} parent=11 // pred_check_branch
          %545 = sbr.rel (%p543) target = $region48
        $region47: #{decoder_block_forward.1} parent=11 // pred_region
          %s547 = ssub.s32 1024, 1024
          %548 = vsyncadd [#allocation9], %s547
          %s549 = sshll.u32 [#allocation10], 4
          %s550 = int_to_ptr.vmem [resolvable:$true] %s549
          %555 = dma.hbm_to_vmem [thread:$0]  %s11, 1024, %s550, [#allocation9], 64, 64, 4
        $region48: #{decoder_block_forward.1} parent=11 // pred_fallthru
          _
        // Predicated region
        $region49: #{decoder_block_forward.1} parent=11 // pred_check
          %p556 = pneg %p322
        $region50: #{decoder_block_forward.1} parent=11 // pred_check_branch
          %558 = sbr.rel (%p556) target = $region52
        $region51: #{decoder_block_forward.1} parent=11 // pred_region
          _
        $region52: #{decoder_block_forward.1} parent=11 // pred_fallthru
          _
        // Predicated region
        $region53: #{decoder_block_forward.1} parent=11 // pred_check
          %p559 = pneg %p343
        $region54: #{decoder_block_forward.1} parent=11 // pred_check_branch
          %561 = sbr.rel (%p559) target = $region56
        $region55: #{decoder_block_forward.1} parent=11 // pred_region
          _
        $region56: #{decoder_block_forward.1} parent=11 // pred_fallthru
          _
        // Predicated region
        $region57: #{decoder_block_forward.1} parent=11 // pred_check
          %p562 = pneg %p364
        $region58: #{decoder_block_forward.1} parent=11 // pred_check_branch
          %564 = sbr.rel (%p562) target = $region60
        $region59: #{decoder_block_forward.1} parent=11 // pred_region
          _
        $region60: #{decoder_block_forward.1} parent=11 // pred_fallthru
          _
        // Predicated region
        $region61: #{decoder_block_forward.1} parent=11 // pred_check
          %p565 = pneg %p385
        $region62: #{decoder_block_forward.1} parent=11 // pred_check_branch
          %567 = sbr.rel (%p565) target = $region64
        $region63: #{decoder_block_forward.1} parent=11 // pred_region
          %s569 = ssub.s32 1024, 1024
          %570 = vsyncadd [#allocation12], %s569
          %s571 = sshll.u32 [#allocation11], 4
          %s572 = int_to_ptr.vmem [resolvable:$true] %s571
          %577 = dma.hbm_to_vmem [thread:$0]  %s15, 1024, %s572, [#allocation12], 64, 64, 4
        $region64: #{decoder_block_forward.1} parent=11 // pred_fallthru
          _
        // Predicated region
        $region65: #{decoder_block_forward.1} parent=11 // pred_check
          %p578 = pneg %p406
        $region66: #{decoder_block_forward.1} parent=11 // pred_check_branch
          %580 = sbr.rel (%p578) target = $region68
        $region67: #{decoder_block_forward.1} parent=11 // pred_region
          _
        $region68: #{decoder_block_forward.1} parent=11 // pred_fallthru
          _
        // Predicated region
        $region69: #{decoder_block_forward.1} parent=11 // pred_check
          %p581 = pneg %p427
        $region70: #{decoder_block_forward.1} parent=11 // pred_check_branch
          %583 = sbr.rel (%p581) target = $region72
        $region71: #{decoder_block_forward.1} parent=11 // pred_region
          %s585 = ssub.s32 1024, 1024
          %586 = vsyncadd [#allocation12], %s585
          %s587 = sshll.u32 [#allocation13], 4
          %s588 = int_to_ptr.vmem [resolvable:$true] %s587
          %593 = dma.hbm_to_vmem [thread:$0]  %s17, 1024, %s588, [#allocation12], 64, 64, 4
        $region72: #{decoder_block_forward.1} parent=11 // pred_fallthru
          _
        // Predicated region
        $region73: #{decoder_block_forward.1} parent=11 // pred_check
          %p594 = pneg %p448
        $region74: #{decoder_block_forward.1} parent=11 // pred_check_branch
          %596 = sbr.rel (%p594) target = $region76
        $region75: #{decoder_block_forward.1} parent=11 // pred_region
          _
        $region76: #{decoder_block_forward.1} parent=11 // pred_fallthru
          _
      $region12: #{decoder_block_forward.1} parent=5 // pred_fallthru
        _
      %p597 = scmp.lt.s32.totalorder %s34, 2
      // Predicated region
      $region77: #{decoder_block_forward.1} parent=5 // pred_check
        %p598 = pneg %p597
      $region78: #{decoder_block_forward.1} parent=5 // pred_check_branch
        %600 = sbr.rel (%p598) target = $region80
      $region79: #{decoder_block_forward.1} parent=5 // pred_region
        // Predicated region
        $region81: #{decoder_block_forward.1} parent=79 // pred_check
          %p601 = pneg %p54
        $region82: #{decoder_block_forward.1} parent=79 // pred_check_branch
          %603 = sbr.rel (%p601) target = $region84
        $region83: #{decoder_block_forward.1} parent=79 // pred_region
          %s604 = smul.u32 4, %s34
          %p605 = scmp.lt.s32.totalorder %s604, 7
          %s606 = scalar_select %p605, %s604, 7
          %s607 = smul.addr %s606, 2
          %s608 = smul.addr %s607, 8
          %s609 = scalar_lea.vmem %s0, %s608
          %s610 = smul.u32 4, %s34
        $region84: #{decoder_block_forward.1} parent=79 // pred_fallthru
          _
        // Predicated region
        $region85: #{decoder_block_forward.1} parent=79 // pred_check
          %p611 = pneg %p80
        $region86: #{decoder_block_forward.1} parent=79 // pred_check_branch
          %613 = sbr.rel (%p611) target = $region88
        $region87: #{decoder_block_forward.1} parent=79 // pred_region
          %s614 = sand.u32 %s70, 1
          %s615 = scalar_lea.sflag [#allocation3], %s614
          %s616 = sand.u32 %s70, 1
          %s617 = smul.addr %s616, 64
          %s618 = scalar_lea.vmem [#allocation2], %s617
          %s619 = smul.u32 4, %s34
          %s621 = ssub.s32 1024, 1024
          %622 = vsyncadd %s615, %s621
          %s623 = smul.addr %s619, 2
          %s624 = smul.addr %s623, 128
          %s625 = scalar_lea.hbm %s1, %s624
          %s626 = sshll.u32 %s618, 4
          %s627 = int_to_ptr.vmem [resolvable:$true] %s626
          %632 = dma.hbm_to_vmem [thread:$0]  %s625, 1024, %s627, %s615, 128, 128, 8
        $region88: #{decoder_block_forward.1} parent=79 // pred_fallthru
          _
        // Predicated region
        $region89: #{decoder_block_forward.1} parent=79 // pred_check
          %p633 = pneg %p106
        $region90: #{decoder_block_forward.1} parent=79 // pred_check_branch
          %635 = sbr.rel (%p633) target = $region92
        $region91: #{decoder_block_forward.1} parent=79 // pred_region
          %s636 = smul.u32 4, %s34
          %p637 = scmp.lt.s32.totalorder %s636, 7
          %s638 = scalar_select %p637, %s636, 7
          %s639 = smul.addr %s638, 4
          %s640 = scalar_lea.vmem %s2, %s639
          %s641 = smul.u32 4, %s34
        $region92: #{decoder_block_forward.1} parent=79 // pred_fallthru
          _
      $region80: #{decoder_block_forward.1} parent=5 // pred_fallthru
        _
      %p642 = scmp.le.s32.totalorder 1, %s34
      %p643 = scmp.lt.s32.totalorder %s34, 3
      %p644 = pnand %p642, %p643
      %p645 = pneg %p644
      // Predicated region
      $region93: #{decoder_block_forward.1} parent=5 // pred_check
        _
      $region94: #{decoder_block_forward.1} parent=5 // pred_check_branch
        %647 = sbr.rel (%p644) target = $region96
      $region95: #{decoder_block_forward.1} parent=5 // pred_region
        %s648 = ssub.s32 %s34, 1
        %s649 = sand.u32 %s73, 1
        %s650 = scalar_lea.sflag [#allocation3], %s649
        %s651 = sand.u32 %s73, 1
        %s652 = smul.addr %s651, 64
        %s653 = scalar_lea.vmem [#allocation2], %s652
        // Predicated region
        $region97: #{decoder_block_forward.1} parent=95 // pred_check
          %p654 = pneg %p86
        $region98: #{decoder_block_forward.1} parent=95 // pred_check_branch
          %656 = sbr.rel (%p654) target = $region100
        $region99: #{decoder_block_forward.1} parent=95 // pred_region
          %657 = dma.done %s650, 1024
        $region100: #{decoder_block_forward.1} parent=95 // pred_fallthru
          _
        // Predicated region
        $region101: #{decoder_block_forward.1} parent=95 // pred_check
          %p658 = pneg %p175
        $region102: #{decoder_block_forward.1} parent=95 // pred_check_branch
          %660 = sbr.rel (%p658) target = $region104
        $region103: #{decoder_block_forward.1} parent=95 // pred_region
          %661 = dma.done [#allocation6], 1024
        $region104: #{decoder_block_forward.1} parent=95 // pred_fallthru
          _
        // Predicated region
        $region105: #{decoder_block_forward.1} parent=95 // pred_check
          %p662 = pneg %p217
        $region106: #{decoder_block_forward.1} parent=95 // pred_check_branch
          %664 = sbr.rel (%p662) target = $region108
        $region107: #{decoder_block_forward.1} parent=95 // pred_region
          %665 = dma.done [#allocation6], 1024
        $region108: #{decoder_block_forward.1} parent=95 // pred_fallthru
          _
        // Predicated region
        $region109: #{decoder_block_forward.1} parent=95 // pred_check
          %p666 = pneg %p259
        $region110: #{decoder_block_forward.1} parent=95 // pred_check_branch
          %668 = sbr.rel (%p666) target = $region112
        $region111: #{decoder_block_forward.1} parent=95 // pred_region
          %669 = dma.done [#allocation9], 2048
        $region112: #{decoder_block_forward.1} parent=95 // pred_fallthru
          _
        // Predicated region
        $region113: #{decoder_block_forward.1} parent=95 // pred_check
          %p670 = pneg %p301
        $region114: #{decoder_block_forward.1} parent=95 // pred_check_branch
          %672 = sbr.rel (%p670) target = $region116
        $region115: #{decoder_block_forward.1} parent=95 // pred_region
          %673 = dma.done [#allocation9], 1024
        $region116: #{decoder_block_forward.1} parent=95 // pred_fallthru
          _
        // Predicated region
        $region117: #{decoder_block_forward.1} parent=95 // pred_check
          %p674 = pneg %p385
        $region118: #{decoder_block_forward.1} parent=95 // pred_check_branch
          %676 = sbr.rel (%p674) target = $region120
        $region119: #{decoder_block_forward.1} parent=95 // pred_region
          %677 = dma.done [#allocation12], 1024
        $region120: #{decoder_block_forward.1} parent=95 // pred_fallthru
          _
        // Predicated region
        $region121: #{decoder_block_forward.1} parent=95 // pred_check
          %p678 = pneg %p427
        $region122: #{decoder_block_forward.1} parent=95 // pred_check_branch
          %680 = sbr.rel (%p678) target = $region124
        $region123: #{decoder_block_forward.1} parent=95 // pred_region
          %681 = dma.done [#allocation12], 1024
        $region124: #{decoder_block_forward.1} parent=95 // pred_fallthru
          _
        %s682 = smul.u32 4, %s39
        %p683 = scmp.lt.s32.totalorder %s682, 7
        %s684 = scalar_select %p683, %s682, 7
        %s685 = smul.addr %s684, 2
        %s686 = smul.addr %s685, 8
        %s687 = scalar_lea.vmem %s0, %s686
        %p688 = pneg %p60
        %p689 = pneg %p57
        %s690 = sand.u32 %s73, 1
        %s691 = scalar_lea.sflag [#allocation3], %s690
        %s692 = sand.u32 %s73, 1
        %s693 = smul.addr %s692, 64
        %s694 = scalar_lea.vmem [#allocation2], %s693
        %p695 = pneg %p86
        %p696 = pneg %p83
        %s697 = smul.u32 4, %s39
        %p698 = scmp.lt.s32.totalorder %s697, 7
        %s699 = scalar_select %p698, %s697, 7
        %s700 = smul.addr %s699, 4
        %s701 = scalar_lea.vmem %s2, %s700
        %p702 = pneg %p112
        %p703 = pneg %p109
        %p704 = pneg %p133
        %p705 = pneg %p130
        %p706 = pneg %p154
        %p707 = pneg %p151
        %p708 = pneg %p175
        %p709 = pneg %p172
        %p710 = pneg %p196
        %p711 = pneg %p193
        %p712 = pneg %p217
        %p713 = pneg %p214
        %p714 = pneg %p238
        %p715 = pneg %p235
        %p716 = pneg %p259
        %p717 = pneg %p256
        %p718 = pneg %p280
        %p719 = pneg %p277
        %p720 = pneg %p301
        %p721 = pneg %p298
        %p722 = pneg %p322
        %p723 = pneg %p319
        %p724 = pneg %p343
        %p725 = pneg %p340
        %p726 = pneg %p364
        %p727 = pneg %p361
        %p728 = pneg %p385
        %p729 = pneg %p382
        %p730 = pneg %p406
        %p731 = pneg %p403
        %p732 = pneg %p427
        %p733 = pneg %p424
        %p734 = pneg %p448
        %p735 = pneg %p445
        %p736 = pneg %p474
        %p737 = pneg %p471
        %s738 = sand.u32 %s461, 1
        %s739 = scalar_lea.sflag [#allocation4], %s738
        %s740 = sand.u32 %s461, 1
        %s741 = smul.addr %s740, 64
        %s742 = scalar_lea.vmem [#allocation14], %s741
        %s743 = smul.u32 4, %s39
        %p744 = scmp.lt.s32.totalorder %s743, 7
        %s745 = scalar_select %p744, %s743, 7
        %s746 = smul.addr %s745, 2
        %s747 = smul.addr %s746, 8
        %s748 = scalar_lea.vmem %s0, %s747
        %s749 = smul.u32 4, %s39
        %s750 = smul.u32 4, %s39
        %s751 = smul.u32 4, %s39
        %p752 = scmp.lt.s32.totalorder %s751, 7
        %s753 = scalar_select %p752, %s751, 7
        %s754 = smul.addr %s753, 4
        %s755 = scalar_lea.vmem %s2, %s754
        %s756 = smul.u32 4, %s39
        %s757 = smul.u32 4, %s39
        %v759 = vld [vmem:[%s748] sm:$0xff]
        %v760 = vld [vmem:[%s748 + $0x8] sm:$0xff]
        %v761 = vld [vmem:[%s748 + $0x10] sm:$0xff]
        %v762 = vld [vmem:[%s748 + $0x18] sm:$0xff]
        %v763 = vld [vmem:[%s748 + $0x20] sm:$0xff]
        %v764 = vld [vmem:[%s748 + $0x28] sm:$0xff]
        %v765 = vld [vmem:[%s748 + $0x30] sm:$0xff]
        %v766 = vld [vmem:[%s748 + $0x38] sm:$0xff]
        %v767 = vld [vmem:[%s653] sm:$0xff]
        %v768 = vld [vmem:[%s653 + $0x8] sm:$0xff]
        %v769 = vld [vmem:[%s653 + $0x10] sm:$0xff]
        %v770 = vld [vmem:[%s653 + $0x18] sm:$0xff]
        %v771 = vld [vmem:[%s653 + $0x20] sm:$0xff]
        %v772 = vld [vmem:[%s653 + $0x28] sm:$0xff]
        %v773 = vld [vmem:[%s653 + $0x30] sm:$0xff]
        %v774 = vld [vmem:[%s653 + $0x38] sm:$0xff]
        %v775 = vld [vmem:[%s755] sm:$0xf]
        %v776 = vld [vmem:[%s755 + $0x4] sm:$0xf]
        %v777 = vld [vmem:[%s755 + $0x8] sm:$0xf]
        %v778 = vld [vmem:[%s755 + $0xc] sm:$0xf]
        %v779 = vlaneseq
        %v780 = vshrl.u32 %v779, 7
        %v781 = vadd.s32 %v780, 8
        %v782 = vlaneseq
        %v783 = vand.u32 %v782, 127
        %vm784 = vcmp.ge.s32.totalorder %v780, %v783
        %vm785 = vcmp.ge.s32.totalorder %v781, %v783
        %v786 = vpack.c.bf16 %v760, %v759
        %v787 = vpack.c.bf16 %v762, %v761
        %v788 = vpack.c.bf16 %v764, %v763
        %v789 = vpack.c.bf16 %v766, %v765
        %v790 = vld [vmem:[%s3] sm:$0xff]
        %v791 = vld [vmem:[%s3 + $0x8] sm:$0xf]
        %v792 = vld [vmem:[%s3 + $0xc] sm:$0xff]
        %v793 = vld [vmem:[%s3 + $0x14] sm:$0xf]
        %v794 = vld [vmem:[%s3 + $0x18] sm:$0xff]
        %v795 = vld [vmem:[%s3 + $0x20] sm:$0xf]
        %v796 = vld [vmem:[%s3 + $0x24] sm:$0xff]
        %v797 = vld [vmem:[%s3 + $0x2c] sm:$0xf]
        %v798 = vld [vmem:[%s3 + $0x30] sm:$0xff]
        %v799 = vld [vmem:[%s3 + $0x38] sm:$0xf]
        %v800 = vld [vmem:[%s3 + $0x3c] sm:$0xff]
        %v801 = vld [vmem:[%s3 + $0x44] sm:$0xf]
        %v802 = vld [vmem:[%s3 + $0x48] sm:$0xff]
        %v803 = vld [vmem:[%s3 + $0x50] sm:$0xf]
        %v804 = vld [vmem:[%s3 + $0x54] sm:$0xff]
        %v805 = vld [vmem:[%s3 + $0x5c] sm:$0xf]
        %v806 = vld [vmem:[%s3 + $0x60] sm:$0xff]
        %v807 = vld [vmem:[%s3 + $0x68] sm:$0xf]
        %v808 = vld [vmem:[%s3 + $0x6c] sm:$0xff]
        %v809 = vld [vmem:[%s3 + $0x74] sm:$0xf]
        %v810 = vld [vmem:[%s3 + $0x78] sm:$0xff]
        %v811 = vld [vmem:[%s3 + $0x80] sm:$0xf]
        %v812 = vld [vmem:[%s3 + $0x84] sm:$0xff]
        %v813 = vld [vmem:[%s3 + $0x8c] sm:$0xf]
        %v814 = vld [vmem:[%s3 + $0x90] sm:$0xff]
        %v815 = vld [vmem:[%s3 + $0x98] sm:$0xf]
        %v816 = vld [vmem:[%s3 + $0x9c] sm:$0xff]
        %v817 = vld [vmem:[%s3 + $0xa4] sm:$0xf]
        %v818 = vld [vmem:[%s3 + $0xa8] sm:$0xff]
        %v819 = vld [vmem:[%s3 + $0xb0] sm:$0xf]
        %v820 = vld [vmem:[%s3 + $0xb4] sm:$0xff]
        %v821 = vld [vmem:[%s3 + $0xbc] sm:$0xf]
        %v822 = vld [vmem:[%s4] sm:$0x7]
        %v824 = vlaneseq
        %v825 = vshrl.u32 %v824, 7
        %v826 = vsub.s32 0, %v825
        %v827 = vrot.slane %v822, %v826
        %v828 = vlaneseq
        %v829 = vshrl.u32 %v828, 7
        %v830 = vsub.s32 1, %v829
        %v831 = vrot.slane %v822, %v830
        %v832 = vlaneseq
        %v833 = vshrl.u32 %v832, 7
        %v834 = vsub.s32 2, %v833
        %v835 = vrot.slane %v822, %v834
        %v871 = vunpack.c.l.b16 %v790
        %v872 = vunpack.c.h.b16 %v790
        %v873 = vunpack.c.l.b16 %v791
        %v874 = vunpack.c.l.b16 %v792
        %v875 = vunpack.c.h.b16 %v792
        %v876 = vunpack.c.l.b16 %v793
        %v877 = vunpack.c.l.b16 %v794
        %v878 = vunpack.c.h.b16 %v794
        %v879 = vunpack.c.l.b16 %v795
        %v880 = vunpack.c.l.b16 %v796
        %v881 = vunpack.c.h.b16 %v796
        %v882 = vunpack.c.l.b16 %v797
        %v883 = vunpack.c.l.b16 %v798
        %v884 = vunpack.c.h.b16 %v798
        %v885 = vunpack.c.l.b16 %v799
        %v886 = vunpack.c.l.b16 %v800
        %v887 = vunpack.c.h.b16 %v800
        %v888 = vunpack.c.l.b16 %v801
        %v889 = vunpack.c.l.b16 %v802
        %v890 = vunpack.c.h.b16 %v802
        %v891 = vunpack.c.l.b16 %v803
        %v892 = vunpack.c.l.b16 %v804
        %v893 = vunpack.c.h.b16 %v804
        %v894 = vunpack.c.l.b16 %v805
        %v895 = vunpack.c.l.b16 %v806
        %v896 = vunpack.c.h.b16 %v806
        %v897 = vunpack.c.l.b16 %v807
        %v898 = vunpack.c.l.b16 %v808
        %v899 = vunpack.c.h.b16 %v808
        %v900 = vunpack.c.l.b16 %v809
        %v901 = vunpack.c.l.b16 %v810
        %v902 = vunpack.c.h.b16 %v810
        %v903 = vunpack.c.l.b16 %v811
        %v904 = vunpack.c.l.b16 %v812
        %v905 = vunpack.c.h.b16 %v812
        %v906 = vunpack.c.l.b16 %v813
        %v907 = vunpack.c.l.b16 %v814
        %v908 = vunpack.c.h.b16 %v814
        %v909 = vunpack.c.l.b16 %v815
        %v910 = vunpack.c.l.b16 %v816
        %v911 = vunpack.c.h.b16 %v816
        %v912 = vunpack.c.l.b16 %v817
        %v913 = vunpack.c.l.b16 %v818
        %v914 = vunpack.c.h.b16 %v818
        %v915 = vunpack.c.l.b16 %v819
        %v916 = vunpack.c.l.b16 %v820
        %v917 = vunpack.c.h.b16 %v820
        %v918 = vunpack.c.l.b16 %v821
        %v919 = vpack.c.b16 %v874, %v871
        %v920 = vpack.c.b16 %v875, %v872
        %v921 = vpack.c.b16 %v876, %v873
        %v922 = vpack.c.b16 %v880, %v877
        %v923 = vpack.c.b16 %v881, %v878
        %v924 = vpack.c.b16 %v882, %v879
        %v925 = vpack.c.b16 %v886, %v883
        %v926 = vpack.c.b16 %v887, %v884
        %v927 = vpack.c.b16 %v888, %v885
        %v928 = vpack.c.b16 %v892, %v889
        %v929 = vpack.c.b16 %v893, %v890
        %v930 = vpack.c.b16 %v894, %v891
        %v931 = vpack.c.b16 %v898, %v895
        %v932 = vpack.c.b16 %v899, %v896
        %v933 = vpack.c.b16 %v900, %v897
        %v934 = vpack.c.b16 %v904, %v901
        %v935 = vpack.c.b16 %v905, %v902
        %v936 = vpack.c.b16 %v906, %v903
        %v937 = vpack.c.b16 %v910, %v907
        %v938 = vpack.c.b16 %v911, %v908
        %v939 = vpack.c.b16 %v912, %v909
        %v940 = vpack.c.b16 %v916, %v913
        %v941 = vpack.c.b16 %v917, %v914
        %v942 = vpack.c.b16 %v918, %v915
        %967 = vmatprep.subr.bf16.mxu0 %v941
        %968 = vmatpush1.bf16.msra.mxu0 %v940
        %969 = vmatprep.subr.bf16.mxu0 %v938
        %970 = vmatpush1.bf16.msra.mxu0 %v937
        %971 = vmatprep.subr.bf16.mxu0 %v935
        %972 = vmatpush1.bf16.msra.mxu0 %v934
        %973 = vmatprep.subr.bf16.mxu0 %v932
        %974 = vmatpush1.bf16.msra.mxu0 %v931
        %975 = vmatprep.subr.bf16.mxu0 %v929
        %976 = vmatpush1.bf16.msra.mxu0 %v928
        %977 = vmatprep.subr.bf16.mxu0 %v926
        %978 = vmatpush1.bf16.msra.mxu0 %v925
        %979 = vmatprep.subr.bf16.mxu0 %v923
        %980 = vmatpush1.bf16.msra.mxu0 %v922
        %981 = vmatprep.subr.bf16.mxu0 %v920
        %982 = vmatpush1.bf16.msra.mxu0 %v919
        %983 = vmatprep.subr.bf16.mxu0 0
        %984 = vmatpush2.bf16.msra.mxu0 0
        %985 = vmatprep.subr.bf16.mxu0 0
        %986 = vmatpush2.bf16.msra.mxu0 0
        %987 = vmatprep.subr.bf16.mxu0 0
        %988 = vmatpush2.bf16.msra.mxu0 0
        %989 = vmatprep.subr.bf16.mxu0 0
        %990 = vmatpush2.bf16.msra.mxu0 0
        %991 = vmatprep.subr.bf16.mxu0 0
        %992 = vmatpush2.bf16.msra.mxu0 0
        %993 = vmatprep.subr.bf16.mxu0 0
        %994 = vmatpush2.bf16.msra.mxu0 0
        %995 = vmatprep.subr.bf16.mxu0 0
        %996 = vmatpush2.bf16.msra.mxu0 0
        %997 = vmatprep.subr.bf16.mxu0 0
        %998 = vmatpush2.bf16.msra.mxu0 0
        %999 = vmatprep.mubr.bf16.mxu0 0
        %1000 = vmatmul.mubr.bf16.gmra.mxu0 %v786
        %v1001 = vpop.f32.mrf.mxu0
        %v1002 = vadd.f32 %v827, %v1001
        %v1003 = vpop.f32.mrf.mxu0
        %v1004 = vadd.f32 %v831, %v1003
        %v1005 = vpop.f32.mrf.mxu0
        %v1006 = vadd.f32 %v827, %v1005
        %v1007 = vpop.f32.mrf.mxu0
        %v1008 = vadd.f32 %v831, %v1007
        %1009 = vmatprep.mubr.bf16.mxu0 0
        %1010 = vmatmul.mubr.bf16.gmra.mxu0 %v787
        %v1011 = vpop.f32.mrf.mxu0
        %v1012 = vadd.f32 %v827, %v1011
        %v1013 = vpop.f32.mrf.mxu0
        %v1014 = vadd.f32 %v831, %v1013
        %v1015 = vpop.f32.mrf.mxu0
        %v1016 = vadd.f32 %v827, %v1015
        %v1017 = vpop.f32.mrf.mxu0
        %v1018 = vadd.f32 %v831, %v1017
        %1019 = vmatprep.mubr.bf16.mxu0 0
        %1020 = vmatmul.mubr.bf16.gmra.mxu0 %v788
        %v1021 = vpop.f32.mrf.mxu0
        %v1022 = vadd.f32 %v827, %v1021
        %v1023 = vpop.f32.mrf.mxu0
        %v1024 = vadd.f32 %v831, %v1023
        %v1025 = vpop.f32.mrf.mxu0
        %v1026 = vadd.f32 %v827, %v1025
        %v1027 = vpop.f32.mrf.mxu0
        %v1028 = vadd.f32 %v831, %v1027
        %1029 = vmatprep.mubr.bf16.mxu0 0
        %1030 = vmatmul.mubr.bf16.gmra.mxu0 %v789
        %v1031 = vpop.f32.mrf.mxu0
        %v1032 = vadd.f32 %v827, %v1031
        %v1033 = vpop.f32.mrf.mxu0
        %v1034 = vadd.f32 %v831, %v1033
        %v1035 = vpop.f32.mrf.mxu0
        %v1036 = vadd.f32 %v827, %v1035
        %v1037 = vpop.f32.mrf.mxu0
        %v1038 = vadd.f32 %v831, %v1037
        %1039 = vdwg.mxu0
        %1040 = vmatprep.subr.bf16.mxu0 0
        %1041 = vmatpush1.bf16.msra.mxu0 %v942
        %1042 = vmatprep.subr.bf16.mxu0 0
        %1043 = vmatpush1.bf16.msra.mxu0 %v939
        %1044 = vmatprep.subr.bf16.mxu0 0
        %1045 = vmatpush1.bf16.msra.mxu0 %v936
        %1046 = vmatprep.subr.bf16.mxu0 0
        %1047 = vmatpush1.bf16.msra.mxu0 %v933
        %1048 = vmatprep.subr.bf16.mxu0 0
        %1049 = vmatpush1.bf16.msra.mxu0 %v930
        %1050 = vmatprep.subr.bf16.mxu0 0
        %1051 = vmatpush1.bf16.msra.mxu0 %v927
        %1052 = vmatprep.subr.bf16.mxu0 0
        %1053 = vmatpush1.bf16.msra.mxu0 %v924
        %1054 = vmatprep.subr.bf16.mxu0 0
        %1055 = vmatpush1.bf16.msra.mxu0 %v921
        %1056 = vmatprep.subr.bf16.mxu0 0
        %1057 = vmatpush2.bf16.msra.mxu0 0
        %1058 = vmatprep.subr.bf16.mxu0 0
        %1059 = vmatpush2.bf16.msra.mxu0 0
        %1060 = vmatprep.subr.bf16.mxu0 0
        %1061 = vmatpush2.bf16.msra.mxu0 0
        %1062 = vmatprep.subr.bf16.mxu0 0
        %1063 = vmatpush2.bf16.msra.mxu0 0
        %1064 = vmatprep.subr.bf16.mxu0 0
        %1065 = vmatpush2.bf16.msra.mxu0 0
        %1066 = vmatprep.subr.bf16.mxu0 0
        %1067 = vmatpush2.bf16.msra.mxu0 0
        %1068 = vmatprep.subr.bf16.mxu0 0
        %1069 = vmatpush2.bf16.msra.mxu0 0
        %1070 = vmatprep.subr.bf16.mxu0 0
        %1071 = vmatpush2.bf16.msra.mxu0 0
        %1072 = vmatprep.mubr.bf16.mxu0 0
        %1073 = vmatmul.mubr.bf16.gmra.mxu0 %v786
        %v1074 = vpop.f32.mrf.mxu0
        %v1075 = vadd.f32 %v835, %v1074
        %v1076 = vpop.f32.mrf.mxu0
        %v1077 = vpop.f32.mrf.mxu0
        %v1078 = vadd.f32 %v835, %v1077
        %v1079 = vpop.f32.mrf.mxu0
        %1080 = vmatprep.mubr.bf16.mxu0 0
        %1081 = vmatmul.mubr.bf16.gmra.mxu0 %v787
        %v1082 = vpop.f32.mrf.mxu0
        %v1083 = vadd.f32 %v835, %v1082
        %v1084 = vpop.f32.mrf.mxu0
        %v1085 = vpop.f32.mrf.mxu0
        %v1086 = vadd.f32 %v835, %v1085
        %v1087 = vpop.f32.mrf.mxu0
        %1088 = vmatprep.mubr.bf16.mxu0 0
        %1089 = vmatmul.mubr.bf16.gmra.mxu0 %v788
        %v1090 = vpop.f32.mrf.mxu0
        %v1091 = vadd.f32 %v835, %v1090
        %v1092 = vpop.f32.mrf.mxu0
        %v1093 = vpop.f32.mrf.mxu0
        %v1094 = vadd.f32 %v835, %v1093
        %v1095 = vpop.f32.mrf.mxu0
        %1096 = vmatprep.mubr.bf16.mxu0 0
        %1097 = vmatmul.mubr.bf16.gmra.mxu0 %v789
        %v1098 = vpop.f32.mrf.mxu0
        %v1099 = vadd.f32 %v835, %v1098
        %v1100 = vpop.f32.mrf.mxu0
        %v1101 = vpop.f32.mrf.mxu0
        %v1102 = vadd.f32 %v835, %v1101
        %v1103 = vpop.f32.mrf.mxu0
        %1104 = vdwg.mxu0
        %v1105 = vmul.f32 %v1002, 0.17677669
        %v1106 = vmul.f32 %v1006, 0.17677669
        %v1107 = vmul.f32 %v1012, 0.17677669
        %v1108 = vmul.f32 %v1016, 0.17677669
        %v1109 = vmul.f32 %v1022, 0.17677669
        %v1110 = vmul.f32 %v1026, 0.17677669
        %v1111 = vmul.f32 %v1032, 0.17677669
        %v1112 = vmul.f32 %v1036, 0.17677669
        %v1113 = vpack.c.bf16 %v1106, %v1105
        %v1114 = vpack.c.bf16 %v1108, %v1107
        %v1115 = vpack.c.bf16 %v1110, %v1109
        %v1116 = vpack.c.bf16 %v1112, %v1111
        %v1117 = vpack.c.bf16 %v1008, %v1004
        %v1118 = vpack.c.bf16 %v1018, %v1014
        %v1119 = vpack.c.bf16 %v1028, %v1024
        %v1120 = vpack.c.bf16 %v1038, %v1034
        %v1121 = vpack.c.bf16 %v1078, %v1075
        %v1122 = vpack.c.bf16 %v1086, %v1083
        %v1123 = vpack.c.bf16 %v1094, %v1091
        %v1124 = vpack.c.bf16 %v1102, %v1099
        %vm1125 = vcmask 261120
        %v1127 = vsel %vm1125, %v1113, 0
        %v1130 = vsel %vm1125, %v1117, 0
        %1132 = vmatprep.subr.bf16.mxu0 0
        %1133 = vmatpush1.bf16.xpose.msra.mxu0 0
        %1134 = vmatprep.subr.bf16.mxu0 0
        %1135 = vmatpush1.bf16.xpose.msra.mxu0 0
        %1136 = vmatprep.subr.bf16.mxu0 0
        %1137 = vmatpush1.bf16.xpose.msra.mxu0 0
        %1138 = vmatprep.subr.bf16.mxu0 0
        %1139 = vmatpush1.bf16.xpose.msra.mxu0 0
        %1140 = vmatprep.subr.bf16.mxu0 0
        %1141 = vmatpush1.bf16.xpose.msra.mxu0 0
        %1142 = vmatprep.subr.bf16.mxu0 0
        %1143 = vmatpush1.bf16.xpose.msra.mxu0 0
        %1144 = vmatprep.subr.bf16.mxu0 0
        %1145 = vmatpush1.bf16.xpose.msra.mxu0 0
        %1146 = vmatprep.subr.bf16.mxu0 0
        %1147 = vmatpush1.bf16.xpose.msra.mxu0 %v1130
        %1148 = vmatprep.subr.bf16.mxu0 0
        %1149 = vmatpush2.bf16.xpose.msra.mxu0 0
        %1150 = vmatprep.subr.bf16.mxu0 0
        %1151 = vmatpush2.bf16.xpose.msra.mxu0 0
        %1152 = vmatprep.subr.bf16.mxu0 0
        %1153 = vmatpush2.bf16.xpose.msra.mxu0 0
        %1154 = vmatprep.subr.bf16.mxu0 0
        %1155 = vmatpush2.bf16.xpose.msra.mxu0 0
        %1156 = vmatprep.subr.bf16.mxu0 0
        %1157 = vmatpush2.bf16.xpose.msra.mxu0 0
        %1158 = vmatprep.subr.bf16.mxu0 0
        %1159 = vmatpush2.bf16.xpose.msra.mxu0 0
        %1160 = vmatprep.subr.bf16.mxu0 0
        %1161 = vmatpush2.bf16.xpose.msra.mxu0 0
        %1162 = vmatprep.subr.bf16.mxu0 0
        %1163 = vmatpush2.bf16.xpose.msra.mxu0 0
        %1164 = vmatprep.mubr.bf16.mxu0 0
        %1165 = vmatmul.mubr.bf16.gmra.mxu0 %v1127
        %v1166 = vpop.f32.mrf.mxu0
        %v1167 = vadd.f32 0.0, %v1166
        %v1168 = vpop.f32.mrf.mxu0
        %v1169 = vpop.f32.mrf.mxu0
        %v1170 = vadd.f32 0.0, %v1169
        %v1171 = vpop.f32.mrf.mxu0
        %1172 = vdwg.mxu0
        %v1174 = vsel %vm1125, %v1114, 0
        %v1177 = vsel %vm1125, %v1118, 0
        %1179 = vmatprep.subr.bf16.mxu0 0
        %1180 = vmatpush1.bf16.xpose.msra.mxu0 0
        %1181 = vmatprep.subr.bf16.mxu0 0
        %1182 = vmatpush1.bf16.xpose.msra.mxu0 0
        %1183 = vmatprep.subr.bf16.mxu0 0
        %1184 = vmatpush1.bf16.xpose.msra.mxu0 0
        %1185 = vmatprep.subr.bf16.mxu0 0
        %1186 = vmatpush1.bf16.xpose.msra.mxu0 0
        %1187 = vmatprep.subr.bf16.mxu0 0
        %1188 = vmatpush1.bf16.xpose.msra.mxu0 0
        %1189 = vmatprep.subr.bf16.mxu0 0
        %1190 = vmatpush1.bf16.xpose.msra.mxu0 0
        %1191 = vmatprep.subr.bf16.mxu0 0
        %1192 = vmatpush1.bf16.xpose.msra.mxu0 0
        %1193 = vmatprep.subr.bf16.mxu0 0
        %1194 = vmatpush1.bf16.xpose.msra.mxu0 %v1177
        %1195 = vmatprep.subr.bf16.mxu0 0
        %1196 = vmatpush2.bf16.xpose.msra.mxu0 0
        %1197 = vmatprep.subr.bf16.mxu0 0
        %1198 = vmatpush2.bf16.xpose.msra.mxu0 0
        %1199 = vmatprep.subr.bf16.mxu0 0
        %1200 = vmatpush2.bf16.xpose.msra.mxu0 0
        %1201 = vmatprep.subr.bf16.mxu0 0
        %1202 = vmatpush2.bf16.xpose.msra.mxu0 0
        %1203 = vmatprep.subr.bf16.mxu0 0
        %1204 = vmatpush2.bf16.xpose.msra.mxu0 0
        %1205 = vmatprep.subr.bf16.mxu0 0
        %1206 = vmatpush2.bf16.xpose.msra.mxu0 0
        %1207 = vmatprep.subr.bf16.mxu0 0
        %1208 = vmatpush2.bf16.xpose.msra.mxu0 0
        %1209 = vmatprep.subr.bf16.mxu0 0
        %1210 = vmatpush2.bf16.xpose.msra.mxu0 0
        %1211 = vmatprep.mubr.bf16.mxu0 0
        %1212 = vmatmul.mubr.bf16.gmra.mxu0 %v1174
        %v1213 = vpop.f32.mrf.mxu0
        %v1214 = vadd.f32 0.0, %v1213
        %v1215 = vpop.f32.mrf.mxu0
        %v1216 = vpop.f32.mrf.mxu0
        %v1217 = vadd.f32 0.0, %v1216
        %v1218 = vpop.f32.mrf.mxu0
        %1219 = vdwg.mxu0
        %v1221 = vsel %vm1125, %v1115, 0
        %v1224 = vsel %vm1125, %v1119, 0
        %1226 = vmatprep.subr.bf16.mxu0 0
        %1227 = vmatpush1.bf16.xpose.msra.mxu0 0
        %1228 = vmatprep.subr.bf16.mxu0 0
        %1229 = vmatpush1.bf16.xpose.msra.mxu0 0
        %1230 = vmatprep.subr.bf16.mxu0 0
        %1231 = vmatpush1.bf16.xpose.msra.mxu0 0
        %1232 = vmatprep.subr.bf16.mxu0 0
        %1233 = vmatpush1.bf16.xpose.msra.mxu0 0
        %1234 = vmatprep.subr.bf16.mxu0 0
        %1235 = vmatpush1.bf16.xpose.msra.mxu0 0
        %1236 = vmatprep.subr.bf16.mxu0 0
        %1237 = vmatpush1.bf16.xpose.msra.mxu0 0
        %1238 = vmatprep.subr.bf16.mxu0 0
        %1239 = vmatpush1.bf16.xpose.msra.mxu0 0
        %1240 = vmatprep.subr.bf16.mxu0 0
        %1241 = vmatpush1.bf16.xpose.msra.mxu0 %v1224
        %1242 = vmatprep.subr.bf16.mxu0 0
        %1243 = vmatpush2.bf16.xpose.msra.mxu0 0
        %1244 = vmatprep.subr.bf16.mxu0 0
        %1245 = vmatpush2.bf16.xpose.msra.mxu0 0
        %1246 = vmatprep.subr.bf16.mxu0 0
        %1247 = vmatpush2.bf16.xpose.msra.mxu0 0
        %1248 = vmatprep.subr.bf16.mxu0 0
        %1249 = vmatpush2.bf16.xpose.msra.mxu0 0
        %1250 = vmatprep.subr.bf16.mxu0 0
        %1251 = vmatpush2.bf16.xpose.msra.mxu0 0
        %1252 = vmatprep.subr.bf16.mxu0 0
        %1253 = vmatpush2.bf16.xpose.msra.mxu0 0
        %1254 = vmatprep.subr.bf16.mxu0 0
        %1255 = vmatpush2.bf16.xpose.msra.mxu0 0
        %1256 = vmatprep.subr.bf16.mxu0 0
        %1257 = vmatpush2.bf16.xpose.msra.mxu0 0
        %1258 = vmatprep.mubr.bf16.mxu0 0
        %1259 = vmatmul.mubr.bf16.gmra.mxu0 %v1221
        %v1260 = vpop.f32.mrf.mxu0
        %v1261 = vadd.f32 0.0, %v1260
        %v1262 = vpop.f32.mrf.mxu0
        %v1263 = vpop.f32.mrf.mxu0
        %v1264 = vadd.f32 0.0, %v1263
        %v1265 = vpop.f32.mrf.mxu0
        %1266 = vdwg.mxu0
        %v1268 = vsel %vm1125, %v1116, 0
        %v1271 = vsel %vm1125, %v1120, 0
        %1273 = vmatprep.subr.bf16.mxu0 0
        %1274 = vmatpush1.bf16.xpose.msra.mxu0 0
        %1275 = vmatprep.subr.bf16.mxu0 0
        %1276 = vmatpush1.bf16.xpose.msra.mxu0 0
        %1277 = vmatprep.subr.bf16.mxu0 0
        %1278 = vmatpush1.bf16.xpose.msra.mxu0 0
        %1279 = vmatprep.subr.bf16.mxu0 0
        %1280 = vmatpush1.bf16.xpose.msra.mxu0 0
        %1281 = vmatprep.subr.bf16.mxu0 0
        %1282 = vmatpush1.bf16.xpose.msra.mxu0 0
        %1283 = vmatprep.subr.bf16.mxu0 0
        %1284 = vmatpush1.bf16.xpose.msra.mxu0 0
        %1285 = vmatprep.subr.bf16.mxu0 0
        %1286 = vmatpush1.bf16.xpose.msra.mxu0 0
        %1287 = vmatprep.subr.bf16.mxu0 0
        %1288 = vmatpush1.bf16.xpose.msra.mxu0 %v1271
        %1289 = vmatprep.subr.bf16.mxu0 0
        %1290 = vmatpush2.bf16.xpose.msra.mxu0 0
        %1291 = vmatprep.subr.bf16.mxu0 0
        %1292 = vmatpush2.bf16.xpose.msra.mxu0 0
        %1293 = vmatprep.subr.bf16.mxu0 0
        %1294 = vmatpush2.bf16.xpose.msra.mxu0 0
        %1295 = vmatprep.subr.bf16.mxu0 0
        %1296 = vmatpush2.bf16.xpose.msra.mxu0 0
        %1297 = vmatprep.subr.bf16.mxu0 0
        %1298 = vmatpush2.bf16.xpose.msra.mxu0 0
        %1299 = vmatprep.subr.bf16.mxu0 0
        %1300 = vmatpush2.bf16.xpose.msra.mxu0 0
        %1301 = vmatprep.subr.bf16.mxu0 0
        %1302 = vmatpush2.bf16.xpose.msra.mxu0 0
        %1303 = vmatprep.subr.bf16.mxu0 0
        %1304 = vmatpush2.bf16.xpose.msra.mxu0 0
        %1305 = vmatprep.mubr.bf16.mxu0 0
        %1306 = vmatmul.mubr.bf16.gmra.mxu0 %v1268
        %v1307 = vpop.f32.mrf.mxu0
        %v1308 = vadd.f32 0.0, %v1307
        %v1309 = vpop.f32.mrf.mxu0
        %v1310 = vpop.f32.mrf.mxu0
        %v1311 = vadd.f32 0.0, %v1310
        %v1312 = vpop.f32.mrf.mxu0
        %1313 = vdwg.mxu0
        %vm1314 = vcmp.gt.f32.partialorder %v775, 0.5
        %vm1315 = vcmp.gt.f32.partialorder %v776, 0.5
        %vm1316 = vcmp.gt.f32.partialorder %v777, 0.5
        %vm1317 = vcmp.gt.f32.partialorder %v778, 0.5
        %v1318 = vsel %vm1314, 1, 0
        %v1319 = vsel %vm1315, 1, 0
        %v1320 = vsel %vm1316, 1, 0
        %v1321 = vsel %vm1317, 1, 0
        %v1322 = vlaneseq
        %v1323 = vshrl.u32 %v1322, 7
        %v1324 = vsub.s32 0, %v1323
        %v1325 = vrot.slane %v1318, %v1324
        %v1326 = vlaneseq
        %v1327 = vshrl.u32 %v1326, 7
        %v1328 = vsub.s32 0, %v1327
        %v1329 = vrot.slane %v1319, %v1328
        %v1330 = vlaneseq
        %v1331 = vshrl.u32 %v1330, 7
        %v1332 = vsub.s32 0, %v1331
        %v1333 = vrot.slane %v1320, %v1332
        %v1334 = vlaneseq
        %v1335 = vshrl.u32 %v1334, 7
        %v1336 = vsub.s32 0, %v1335
        %v1337 = vrot.slane %v1321, %v1336
        %vm1338 = vcmp.eq.s32.totalorder %v1325, 1
        %vm1339 = vcmp.eq.s32.totalorder %v1329, 1
        %vm1340 = vcmp.eq.s32.totalorder %v1333, 1
        %vm1341 = vcmp.eq.s32.totalorder %v1337, 1
        %v1342 = vsel %vm784, 1, 0
        %v1343 = vsel %vm785, 1, 0
        %vm1344 = vcmp.eq.s32.totalorder %v1342, 1
        %vm1345 = vcmp.eq.s32.totalorder %v1343, 1
        %vm1346 = vmand %vm1338, %vm1344
        %vm1347 = vmand %vm1338, %vm1345
        %vm1348 = vmand %vm1339, %vm1344
        %vm1349 = vmand %vm1339, %vm1345
        %vm1350 = vmand %vm1340, %vm1344
        %vm1351 = vmand %vm1340, %vm1345
        %vm1352 = vmand %vm1341, %vm1344
        %vm1353 = vmand %vm1341, %vm1345
        %v1354 = vsel %vm1346, -1e+30, %v1167
        %v1355 = vsel %vm1347, -1e+30, %v1170
        %v1356 = vsel %vm1348, -1e+30, %v1214
        %v1357 = vsel %vm1349, -1e+30, %v1217
        %v1358 = vsel %vm1350, -1e+30, %v1261
        %v1359 = vsel %vm1351, -1e+30, %v1264
        %v1360 = vsel %vm1352, -1e+30, %v1308
        %v1361 = vsel %vm1353, -1e+30, %v1311
        %vm1362 = vcmask 130048
        %v1363 = vsel %vm1362, %v1354, -inf
        %1364 = vmax.xlane.f32.xlu0 %v1363
        %v1365 = vpop.xlane.xlu0 %1364
        %v1366 = vsel %vm1362, %v1355, -inf
        %1367 = vmax.xlane.f32.xlu0 %v1366
        %v1368 = vpop.xlane.xlu0 %1367
        %v1369 = vsel %vm1362, %v1356, -inf
        %1370 = vmax.xlane.f32.xlu0 %v1369
        %v1371 = vpop.xlane.xlu0 %1370
        %v1372 = vsel %vm1362, %v1357, -inf
        %1373 = vmax.xlane.f32.xlu0 %v1372
        %v1374 = vpop.xlane.xlu0 %1373
        %v1375 = vsel %vm1362, %v1358, -inf
        %1376 = vmax.xlane.f32.xlu0 %v1375
        %v1377 = vpop.xlane.xlu0 %1376
        %v1378 = vsel %vm1362, %v1359, -inf
        %1379 = vmax.xlane.f32.xlu0 %v1378
        %v1380 = vpop.xlane.xlu0 %1379
        %v1381 = vsel %vm1362, %v1360, -inf
        %1382 = vmax.xlane.f32.xlu0 %v1381
        %v1383 = vpop.xlane.xlu0 %1382
        %v1384 = vsel %vm1362, %v1361, -inf
        %1385 = vmax.xlane.f32.xlu0 %v1384
        %v1386 = vpop.xlane.xlu0 %1385
        %v1387 = vsub.f32 %v1354, %v1365
        %v1388 = vsub.f32 %v1355, %v1368
        %v1389 = vsub.f32 %v1356, %v1371
        %v1390 = vsub.f32 %v1357, %v1374
        %v1391 = vsub.f32 %v1358, %v1377
        %v1392 = vsub.f32 %v1359, %v1380
        %v1393 = vsub.f32 %v1360, %v1383
        %v1394 = vsub.f32 %v1361, %v1386
        %v1395 = vmul.f32 %v1387, 1.442695
        %v1396 = vpow.pop %v1395
        %v1397 = vmul.f32 %v1388, 1.442695
        %v1398 = vpow.pop %v1397
        %v1399 = vmul.f32 %v1389, 1.442695
        %v1400 = vpow.pop %v1399
        %v1401 = vmul.f32 %v1390, 1.442695
        %v1402 = vpow.pop %v1401
        %v1403 = vmul.f32 %v1391, 1.442695
        %v1404 = vpow.pop %v1403
        %v1405 = vmul.f32 %v1392, 1.442695
        %v1406 = vpow.pop %v1405
        %v1407 = vmul.f32 %v1393, 1.442695
        %v1408 = vpow.pop %v1407
        %v1409 = vmul.f32 %v1394, 1.442695
        %v1410 = vpow.pop %v1409
        %v1411 = vsel %vm1362, %v1396, 0.0
        %1412 = vadd.xlane.f32.xlu0 %v1411
        %v1413 = vpop.xlane.xlu0 %1412
        %v1414 = vsel %vm1362, %v1398, 0.0
        %1415 = vadd.xlane.f32.xlu0 %v1414
        %v1416 = vpop.xlane.xlu0 %1415
        %v1417 = vsel %vm1362, %v1400, 0.0
        %1418 = vadd.xlane.f32.xlu0 %v1417
        %v1419 = vpop.xlane.xlu0 %1418
        %v1420 = vsel %vm1362, %v1402, 0.0
        %1421 = vadd.xlane.f32.xlu0 %v1420
        %v1422 = vpop.xlane.xlu0 %1421
        %v1423 = vsel %vm1362, %v1404, 0.0
        %1424 = vadd.xlane.f32.xlu0 %v1423
        %v1425 = vpop.xlane.xlu0 %1424
        %v1426 = vsel %vm1362, %v1406, 0.0
        %1427 = vadd.xlane.f32.xlu0 %v1426
        %v1428 = vpop.xlane.xlu0 %1427
        %v1429 = vsel %vm1362, %v1408, 0.0
        %1430 = vadd.xlane.f32.xlu0 %v1429
        %v1431 = vpop.xlane.xlu0 %1430
        %v1432 = vsel %vm1362, %v1410, 0.0
        %1433 = vadd.xlane.f32.xlu0 %v1432
        %v1434 = vpop.xlane.xlu0 %1433
        %v1435 = vrcp.pop %v1413
        %v1436 = vrcp.pop %v1416
        %v1437 = vrcp.pop %v1419
        %v1438 = vrcp.pop %v1422
        %v1439 = vrcp.pop %v1425
        %v1440 = vrcp.pop %v1428
        %v1441 = vrcp.pop %v1431
        %v1442 = vrcp.pop %v1434
        %v1443 = vmul.f32 %v1396, %v1435
        %v1444 = vmul.f32 %v1398, %v1436
        %v1445 = vmul.f32 %v1400, %v1437
        %v1446 = vmul.f32 %v1402, %v1438
        %v1447 = vmul.f32 %v1404, %v1439
        %v1448 = vmul.f32 %v1406, %v1440
        %v1449 = vmul.f32 %v1408, %v1441
        %v1450 = vmul.f32 %v1410, %v1442
        %v1451 = vpack.c.bf16 %v1444, %v1443
        %v1452 = vpack.c.bf16 %v1446, %v1445
        %v1453 = vpack.c.bf16 %v1448, %v1447
        %v1454 = vpack.c.bf16 %v1450, %v1449
        %v1456 = vsel %vm1362, %v1451, 0
        %1458 = vmatprep.subr.bf16.mxu0 0
        %1459 = vmatpush1.bf16.msra.mxu0 0
        %1460 = vmatprep.subr.bf16.mxu0 0
        %1461 = vmatpush1.bf16.msra.mxu0 0
        %1462 = vmatprep.subr.bf16.mxu0 0
        %1463 = vmatpush1.bf16.msra.mxu0 0
        %1464 = vmatprep.subr.bf16.mxu0 0
        %1465 = vmatpush1.bf16.msra.mxu0 0
        %1466 = vmatprep.subr.bf16.mxu0 0
        %1467 = vmatpush1.bf16.msra.mxu0 0
        %1468 = vmatprep.subr.bf16.mxu0 0
        %1469 = vmatpush1.bf16.msra.mxu0 0
        %1470 = vmatprep.subr.bf16.mxu0 0
        %1471 = vmatpush1.bf16.msra.mxu0 0
        %1472 = vmatprep.subr.bf16.mxu0 0
        %1473 = vmatpush1.bf16.msra.mxu0 %v1121
        %1474 = vmatprep.subr.bf16.mxu0 0
        %1475 = vmatpush2.bf16.msra.mxu0 0
        %1476 = vmatprep.subr.bf16.mxu0 0
        %1477 = vmatpush2.bf16.msra.mxu0 0
        %1478 = vmatprep.subr.bf16.mxu0 0
        %1479 = vmatpush2.bf16.msra.mxu0 0
        %1480 = vmatprep.subr.bf16.mxu0 0
        %1481 = vmatpush2.bf16.msra.mxu0 0
        %1482 = vmatprep.subr.bf16.mxu0 0
        %1483 = vmatpush2.bf16.msra.mxu0 0
        %1484 = vmatprep.subr.bf16.mxu0 0
        %1485 = vmatpush2.bf16.msra.mxu0 0
        %1486 = vmatprep.subr.bf16.mxu0 0
        %1487 = vmatpush2.bf16.msra.mxu0 0
        %1488 = vmatprep.subr.bf16.mxu0 0
        %1489 = vmatpush2.bf16.msra.mxu0 0
        %1490 = vmatprep.mubr.bf16.mxu0 0
        %1491 = vmatmul.mubr.bf16.gmra.mxu0 %v1456
        %v1492 = vpop.f32.mrf.mxu0
        %v1493 = vadd.f32 0.0, %v1492
        %v1494 = vpop.f32.mrf.mxu0
        %v1495 = vpop.f32.mrf.mxu0
        %v1496 = vadd.f32 0.0, %v1495
        %v1497 = vpop.f32.mrf.mxu0
        %1498 = vdwg.mxu0
        %v1500 = vsel %vm1362, %v1452, 0
        %1502 = vmatprep.subr.bf16.mxu0 0
        %1503 = vmatpush1.bf16.msra.mxu0 0
        %1504 = vmatprep.subr.bf16.mxu0 0
        %1505 = vmatpush1.bf16.msra.mxu0 0
        %1506 = vmatprep.subr.bf16.mxu0 0
        %1507 = vmatpush1.bf16.msra.mxu0 0
        %1508 = vmatprep.subr.bf16.mxu0 0
        %1509 = vmatpush1.bf16.msra.mxu0 0
        %1510 = vmatprep.subr.bf16.mxu0 0
        %1511 = vmatpush1.bf16.msra.mxu0 0
        %1512 = vmatprep.subr.bf16.mxu0 0
        %1513 = vmatpush1.bf16.msra.mxu0 0
        %1514 = vmatprep.subr.bf16.mxu0 0
        %1515 = vmatpush1.bf16.msra.mxu0 0
        %1516 = vmatprep.subr.bf16.mxu0 0
        %1517 = vmatpush1.bf16.msra.mxu0 %v1122
        %1518 = vmatprep.subr.bf16.mxu0 0
        %1519 = vmatpush2.bf16.msra.mxu0 0
        %1520 = vmatprep.subr.bf16.mxu0 0
        %1521 = vmatpush2.bf16.msra.mxu0 0
        %1522 = vmatprep.subr.bf16.mxu0 0
        %1523 = vmatpush2.bf16.msra.mxu0 0
        %1524 = vmatprep.subr.bf16.mxu0 0
        %1525 = vmatpush2.bf16.msra.mxu0 0
        %1526 = vmatprep.subr.bf16.mxu0 0
        %1527 = vmatpush2.bf16.msra.mxu0 0
        %1528 = vmatprep.subr.bf16.mxu0 0
        %1529 = vmatpush2.bf16.msra.mxu0 0
        %1530 = vmatprep.subr.bf16.mxu0 0
        %1531 = vmatpush2.bf16.msra.mxu0 0
        %1532 = vmatprep.subr.bf16.mxu0 0
        %1533 = vmatpush2.bf16.msra.mxu0 0
        %1534 = vmatprep.mubr.bf16.mxu0 0
        %1535 = vmatmul.mubr.bf16.gmra.mxu0 %v1500
        %v1536 = vpop.f32.mrf.mxu0
        %v1537 = vadd.f32 0.0, %v1536
        %v1538 = vpop.f32.mrf.mxu0
        %v1539 = vpop.f32.mrf.mxu0
        %v1540 = vadd.f32 0.0, %v1539
        %v1541 = vpop.f32.mrf.mxu0
        %1542 = vdwg.mxu0
        %v1544 = vsel %vm1362, %v1453, 0
        %1546 = vmatprep.subr.bf16.mxu0 0
        %1547 = vmatpush1.bf16.msra.mxu0 0
        %1548 = vmatprep.subr.bf16.mxu0 0
        %1549 = vmatpush1.bf16.msra.mxu0 0
        %1550 = vmatprep.subr.bf16.mxu0 0
        %1551 = vmatpush1.bf16.msra.mxu0 0
        %1552 = vmatprep.subr.bf16.mxu0 0
        %1553 = vmatpush1.bf16.msra.mxu0 0
        %1554 = vmatprep.subr.bf16.mxu0 0
        %1555 = vmatpush1.bf16.msra.mxu0 0
        %1556 = vmatprep.subr.bf16.mxu0 0
        %1557 = vmatpush1.bf16.msra.mxu0 0
        %1558 = vmatprep.subr.bf16.mxu0 0
        %1559 = vmatpush1.bf16.msra.mxu0 0
        %1560 = vmatprep.subr.bf16.mxu0 0
        %1561 = vmatpush1.bf16.msra.mxu0 %v1123
        %1562 = vmatprep.subr.bf16.mxu0 0
        %1563 = vmatpush2.bf16.msra.mxu0 0
        %1564 = vmatprep.subr.bf16.mxu0 0
        %1565 = vmatpush2.bf16.msra.mxu0 0
        %1566 = vmatprep.subr.bf16.mxu0 0
        %1567 = vmatpush2.bf16.msra.mxu0 0
        %1568 = vmatprep.subr.bf16.mxu0 0
        %1569 = vmatpush2.bf16.msra.mxu0 0
        %1570 = vmatprep.subr.bf16.mxu0 0
        %1571 = vmatpush2.bf16.msra.mxu0 0
        %1572 = vmatprep.subr.bf16.mxu0 0
        %1573 = vmatpush2.bf16.msra.mxu0 0
        %1574 = vmatprep.subr.bf16.mxu0 0
        %1575 = vmatpush2.bf16.msra.mxu0 0
        %1576 = vmatprep.subr.bf16.mxu0 0
        %1577 = vmatpush2.bf16.msra.mxu0 0
        %1578 = vmatprep.mubr.bf16.mxu0 0
        %1579 = vmatmul.mubr.bf16.gmra.mxu0 %v1544
        %v1580 = vpop.f32.mrf.mxu0
        %v1581 = vadd.f32 0.0, %v1580
        %v1582 = vpop.f32.mrf.mxu0
        %v1583 = vpop.f32.mrf.mxu0
        %v1584 = vadd.f32 0.0, %v1583
        %v1585 = vpop.f32.mrf.mxu0
        %1586 = vdwg.mxu0
        %v1588 = vsel %vm1362, %v1454, 0
        %1590 = vmatprep.subr.bf16.mxu0 0
        %1591 = vmatpush1.bf16.msra.mxu0 0
        %1592 = vmatprep.subr.bf16.mxu0 0
        %1593 = vmatpush1.bf16.msra.mxu0 0
        %1594 = vmatprep.subr.bf16.mxu0 0
        %1595 = vmatpush1.bf16.msra.mxu0 0
        %1596 = vmatprep.subr.bf16.mxu0 0
        %1597 = vmatpush1.bf16.msra.mxu0 0
        %1598 = vmatprep.subr.bf16.mxu0 0
        %1599 = vmatpush1.bf16.msra.mxu0 0
        %1600 = vmatprep.subr.bf16.mxu0 0
        %1601 = vmatpush1.bf16.msra.mxu0 0
        %1602 = vmatprep.subr.bf16.mxu0 0
        %1603 = vmatpush1.bf16.msra.mxu0 0
        %1604 = vmatprep.subr.bf16.mxu0 0
        %1605 = vmatpush1.bf16.msra.mxu0 %v1124
        %1606 = vmatprep.subr.bf16.mxu0 0
        %1607 = vmatpush2.bf16.msra.mxu0 0
        %1608 = vmatprep.subr.bf16.mxu0 0
        %1609 = vmatpush2.bf16.msra.mxu0 0
        %1610 = vmatprep.subr.bf16.mxu0 0
        %1611 = vmatpush2.bf16.msra.mxu0 0
        %1612 = vmatprep.subr.bf16.mxu0 0
        %1613 = vmatpush2.bf16.msra.mxu0 0
        %1614 = vmatprep.subr.bf16.mxu0 0
        %1615 = vmatpush2.bf16.msra.mxu0 0
        %1616 = vmatprep.subr.bf16.mxu0 0
        %1617 = vmatpush2.bf16.msra.mxu0 0
        %1618 = vmatprep.subr.bf16.mxu0 0
        %1619 = vmatpush2.bf16.msra.mxu0 0
        %1620 = vmatprep.subr.bf16.mxu0 0
        %1621 = vmatpush2.bf16.msra.mxu0 0
        %1622 = vmatprep.mubr.bf16.mxu0 0
        %1623 = vmatmul.mubr.bf16.gmra.mxu0 %v1588
        %v1624 = vpop.f32.mrf.mxu0
        %v1625 = vadd.f32 0.0, %v1624
        %v1626 = vpop.f32.mrf.mxu0
        %v1627 = vpop.f32.mrf.mxu0
        %v1628 = vadd.f32 0.0, %v1627
        %v1629 = vpop.f32.mrf.mxu0
        %1630 = vdwg.mxu0
        %1632 = vrot.lane.b32.xlu0 %v1113, 96
        %v1633 = vpop.permute.xlu0 %1632
        %1635 = vrot.lane.b32.xlu0 %v1117, 96
        %v1636 = vpop.permute.xlu0 %1635
        %v1638 = vsel %vm1125, %v1633, 0
        %v1641 = vsel %vm1125, %v1636, 0
        %1643 = vmatprep.subr.bf16.mxu0 0
        %1644 = vmatpush1.bf16.xpose.msra.mxu0 0
        %1645 = vmatprep.subr.bf16.mxu0 0
        %1646 = vmatpush1.bf16.xpose.msra.mxu0 0
        %1647 = vmatprep.subr.bf16.mxu0 0
        %1648 = vmatpush1.bf16.xpose.msra.mxu0 0
        %1649 = vmatprep.subr.bf16.mxu0 0
        %1650 = vmatpush1.bf16.xpose.msra.mxu0 0
        %1651 = vmatprep.subr.bf16.mxu0 0
        %1652 = vmatpush1.bf16.xpose.msra.mxu0 0
        %1653 = vmatprep.subr.bf16.mxu0 0
        %1654 = vmatpush1.bf16.xpose.msra.mxu0 0
        %1655 = vmatprep.subr.bf16.mxu0 0
        %1656 = vmatpush1.bf16.xpose.msra.mxu0 0
        %1657 = vmatprep.subr.bf16.mxu0 0
        %1658 = vmatpush1.bf16.xpose.msra.mxu0 %v1641
        %1659 = vmatprep.subr.bf16.mxu0 0
        %1660 = vmatpush2.bf16.xpose.msra.mxu0 0
        %1661 = vmatprep.subr.bf16.mxu0 0
        %1662 = vmatpush2.bf16.xpose.msra.mxu0 0
        %1663 = vmatprep.subr.bf16.mxu0 0
        %1664 = vmatpush2.bf16.xpose.msra.mxu0 0
        %1665 = vmatprep.subr.bf16.mxu0 0
        %1666 = vmatpush2.bf16.xpose.msra.mxu0 0
        %1667 = vmatprep.subr.bf16.mxu0 0
        %1668 = vmatpush2.bf16.xpose.msra.mxu0 0
        %1669 = vmatprep.subr.bf16.mxu0 0
        %1670 = vmatpush2.bf16.xpose.msra.mxu0 0
        %1671 = vmatprep.subr.bf16.mxu0 0
        %1672 = vmatpush2.bf16.xpose.msra.mxu0 0
        %1673 = vmatprep.subr.bf16.mxu0 0
        %1674 = vmatpush2.bf16.xpose.msra.mxu0 0
        %1675 = vmatprep.mubr.bf16.mxu0 0
        %1676 = vmatmul.mubr.bf16.gmra.mxu0 %v1638
        %v1677 = vpop.f32.mrf.mxu0
        %v1678 = vadd.f32 0.0, %v1677
        %v1679 = vpop.f32.mrf.mxu0
        %v1680 = vpop.f32.mrf.mxu0
        %v1681 = vadd.f32 0.0, %v1680
        %v1682 = vpop.f32.mrf.mxu0
        %1683 = vdwg.mxu0
        %1685 = vrot.lane.b32.xlu0 %v1114, 96
        %v1686 = vpop.permute.xlu0 %1685
        %1688 = vrot.lane.b32.xlu0 %v1118, 96
        %v1689 = vpop.permute.xlu0 %1688
        %v1691 = vsel %vm1125, %v1686, 0
        %v1694 = vsel %vm1125, %v1689, 0
        %1696 = vmatprep.subr.bf16.mxu0 0
        %1697 = vmatpush1.bf16.xpose.msra.mxu0 0
        %1698 = vmatprep.subr.bf16.mxu0 0
        %1699 = vmatpush1.bf16.xpose.msra.mxu0 0
        %1700 = vmatprep.subr.bf16.mxu0 0
        %1701 = vmatpush1.bf16.xpose.msra.mxu0 0
        %1702 = vmatprep.subr.bf16.mxu0 0
        %1703 = vmatpush1.bf16.xpose.msra.mxu0 0
        %1704 = vmatprep.subr.bf16.mxu0 0
        %1705 = vmatpush1.bf16.xpose.msra.mxu0 0
        %1706 = vmatprep.subr.bf16.mxu0 0
        %1707 = vmatpush1.bf16.xpose.msra.mxu0 0
        %1708 = vmatprep.subr.bf16.mxu0 0
        %1709 = vmatpush1.bf16.xpose.msra.mxu0 0
        %1710 = vmatprep.subr.bf16.mxu0 0
        %1711 = vmatpush1.bf16.xpose.msra.mxu0 %v1694
        %1712 = vmatprep.subr.bf16.mxu0 0
        %1713 = vmatpush2.bf16.xpose.msra.mxu0 0
        %1714 = vmatprep.subr.bf16.mxu0 0
        %1715 = vmatpush2.bf16.xpose.msra.mxu0 0
        %1716 = vmatprep.subr.bf16.mxu0 0
        %1717 = vmatpush2.bf16.xpose.msra.mxu0 0
        %1718 = vmatprep.subr.bf16.mxu0 0
        %1719 = vmatpush2.bf16.xpose.msra.mxu0 0
        %1720 = vmatprep.subr.bf16.mxu0 0
        %1721 = vmatpush2.bf16.xpose.msra.mxu0 0
        %1722 = vmatprep.subr.bf16.mxu0 0
        %1723 = vmatpush2.bf16.xpose.msra.mxu0 0
        %1724 = vmatprep.subr.bf16.mxu0 0
        %1725 = vmatpush2.bf16.xpose.msra.mxu0 0
        %1726 = vmatprep.subr.bf16.mxu0 0
        %1727 = vmatpush2.bf16.xpose.msra.mxu0 0
        %1728 = vmatprep.mubr.bf16.mxu0 0
        %1729 = vmatmul.mubr.bf16.gmra.mxu0 %v1691
        %v1730 = vpop.f32.mrf.mxu0
        %v1731 = vadd.f32 0.0, %v1730
        %v1732 = vpop.f32.mrf.mxu0
        %v1733 = vpop.f32.mrf.mxu0
        %v1734 = vadd.f32 0.0, %v1733
        %v1735 = vpop.f32.mrf.mxu0
        %1736 = vdwg.mxu0
        %1738 = vrot.lane.b32.xlu0 %v1115, 96
        %v1739 = vpop.permute.xlu0 %1738
        %1741 = vrot.lane.b32.xlu0 %v1119, 96
        %v1742 = vpop.permute.xlu0 %1741
        %v1744 = vsel %vm1125, %v1739, 0
        %v1747 = vsel %vm1125, %v1742, 0
        %1749 = vmatprep.subr.bf16.mxu0 0
        %1750 = vmatpush1.bf16.xpose.msra.mxu0 0
        %1751 = vmatprep.subr.bf16.mxu0 0
        %1752 = vmatpush1.bf16.xpose.msra.mxu0 0
        %1753 = vmatprep.subr.bf16.mxu0 0
        %1754 = vmatpush1.bf16.xpose.msra.mxu0 0
        %1755 = vmatprep.subr.bf16.mxu0 0
        %1756 = vmatpush1.bf16.xpose.msra.mxu0 0
        %1757 = vmatprep.subr.bf16.mxu0 0
        %1758 = vmatpush1.bf16.xpose.msra.mxu0 0
        %1759 = vmatprep.subr.bf16.mxu0 0
        %1760 = vmatpush1.bf16.xpose.msra.mxu0 0
        %1761 = vmatprep.subr.bf16.mxu0 0
        %1762 = vmatpush1.bf16.xpose.msra.mxu0 0
        %1763 = vmatprep.subr.bf16.mxu0 0
        %1764 = vmatpush1.bf16.xpose.msra.mxu0 %v1747
        %1765 = vmatprep.subr.bf16.mxu0 0
        %1766 = vmatpush2.bf16.xpose.msra.mxu0 0
        %1767 = vmatprep.subr.bf16.mxu0 0
        %1768 = vmatpush2.bf16.xpose.msra.mxu0 0
        %1769 = vmatprep.subr.bf16.mxu0 0
        %1770 = vmatpush2.bf16.xpose.msra.mxu0 0
        %1771 = vmatprep.subr.bf16.mxu0 0
        %1772 = vmatpush2.bf16.xpose.msra.mxu0 0
        %1773 = vmatprep.subr.bf16.mxu0 0
        %1774 = vmatpush2.bf16.xpose.msra.mxu0 0
        %1775 = vmatprep.subr.bf16.mxu0 0
        %1776 = vmatpush2.bf16.xpose.msra.mxu0 0
        %1777 = vmatprep.subr.bf16.mxu0 0
        %1778 = vmatpush2.bf16.xpose.msra.mxu0 0
        %1779 = vmatprep.subr.bf16.mxu0 0
        %1780 = vmatpush2.bf16.xpose.msra.mxu0 0
        %1781 = vmatprep.mubr.bf16.mxu0 0
        %1782 = vmatmul.mubr.bf16.gmra.mxu0 %v1744
        %v1783 = vpop.f32.mrf.mxu0
        %v1784 = vadd.f32 0.0, %v1783
        %v1785 = vpop.f32.mrf.mxu0
        %v1786 = vpop.f32.mrf.mxu0
        %v1787 = vadd.f32 0.0, %v1786
        %v1788 = vpop.f32.mrf.mxu0
        %1789 = vdwg.mxu0
        %1791 = vrot.lane.b32.xlu0 %v1116, 96
        %v1792 = vpop.permute.xlu0 %1791
        %1794 = vrot.lane.b32.xlu0 %v1120, 96
        %v1795 = vpop.permute.xlu0 %1794
        %v1797 = vsel %vm1125, %v1792, 0
        %v1800 = vsel %vm1125, %v1795, 0
        %1802 = vmatprep.subr.bf16.mxu0 0
        %1803 = vmatpush1.bf16.xpose.msra.mxu0 0
        %1804 = vmatprep.subr.bf16.mxu0 0
        %1805 = vmatpush1.bf16.xpose.msra.mxu0 0
        %1806 = vmatprep.subr.bf16.mxu0 0
        %1807 = vmatpush1.bf16.xpose.msra.mxu0 0
        %1808 = vmatprep.subr.bf16.mxu0 0
        %1809 = vmatpush1.bf16.xpose.msra.mxu0 0
        %1810 = vmatprep.subr.bf16.mxu0 0
        %1811 = vmatpush1.bf16.xpose.msra.mxu0 0
        %1812 = vmatprep.subr.bf16.mxu0 0
        %1813 = vmatpush1.bf16.xpose.msra.mxu0 0
        %1814 = vmatprep.subr.bf16.mxu0 0
        %1815 = vmatpush1.bf16.xpose.msra.mxu0 0
        %1816 = vmatprep.subr.bf16.mxu0 0
        %1817 = vmatpush1.bf16.xpose.msra.mxu0 %v1800
        %1818 = vmatprep.subr.bf16.mxu0 0
        %1819 = vmatpush2.bf16.xpose.msra.mxu0 0
        %1820 = vmatprep.subr.bf16.mxu0 0
        %1821 = vmatpush2.bf16.xpose.msra.mxu0 0
        %1822 = vmatprep.subr.bf16.mxu0 0
        %1823 = vmatpush2.bf16.xpose.msra.mxu0 0
        %1824 = vmatprep.subr.bf16.mxu0 0
        %1825 = vmatpush2.bf16.xpose.msra.mxu0 0
        %1826 = vmatprep.subr.bf16.mxu0 0
        %1827 = vmatpush2.bf16.xpose.msra.mxu0 0
        %1828 = vmatprep.subr.bf16.mxu0 0
        %1829 = vmatpush2.bf16.xpose.msra.mxu0 0
        %1830 = vmatprep.subr.bf16.mxu0 0
        %1831 = vmatpush2.bf16.xpose.msra.mxu0 0
        %1832 = vmatprep.subr.bf16.mxu0 0
        %1833 = vmatpush2.bf16.xpose.msra.mxu0 0
        %1834 = vmatprep.mubr.bf16.mxu0 0
        %1835 = vmatmul.mubr.bf16.gmra.mxu0 %v1797
        %v1836 = vpop.f32.mrf.mxu0
        %v1837 = vadd.f32 0.0, %v1836
        %v1838 = vpop.f32.mrf.mxu0
        %v1839 = vpop.f32.mrf.mxu0
        %v1840 = vadd.f32 0.0, %v1839
        %v1841 = vpop.f32.mrf.mxu0
        %1842 = vdwg.mxu0
        %v1843 = vlaneseq
        %v1844 = vshrl.u32 %v1843, 7
        %v1845 = vsub.s32 1, %v1844
        %v1846 = vrot.slane %v1318, %v1845
        %v1847 = vlaneseq
        %v1848 = vshrl.u32 %v1847, 7
        %v1849 = vsub.s32 1, %v1848
        %v1850 = vrot.slane %v1319, %v1849
        %v1851 = vlaneseq
        %v1852 = vshrl.u32 %v1851, 7
        %v1853 = vsub.s32 1, %v1852
        %v1854 = vrot.slane %v1320, %v1853
        %v1855 = vlaneseq
        %v1856 = vshrl.u32 %v1855, 7
        %v1857 = vsub.s32 1, %v1856
        %v1858 = vrot.slane %v1321, %v1857
        %vm1859 = vcmp.eq.s32.totalorder %v1846, 1
        %vm1860 = vcmp.eq.s32.totalorder %v1850, 1
        %vm1861 = vcmp.eq.s32.totalorder %v1854, 1
        %vm1862 = vcmp.eq.s32.totalorder %v1858, 1
        %vm1863 = vmand %vm1859, %vm1344
        %vm1864 = vmand %vm1859, %vm1345
        %vm1865 = vmand %vm1860, %vm1344
        %vm1866 = vmand %vm1860, %vm1345
        %vm1867 = vmand %vm1861, %vm1344
        %vm1868 = vmand %vm1861, %vm1345
        %vm1869 = vmand %vm1862, %vm1344
        %vm1870 = vmand %vm1862, %vm1345
        %v1871 = vsel %vm1863, -1e+30, %v1678
        %v1872 = vsel %vm1864, -1e+30, %v1681
        %v1873 = vsel %vm1865, -1e+30, %v1731
        %v1874 = vsel %vm1866, -1e+30, %v1734
        %v1875 = vsel %vm1867, -1e+30, %v1784
        %v1876 = vsel %vm1868, -1e+30, %v1787
        %v1877 = vsel %vm1869, -1e+30, %v1837
        %v1878 = vsel %vm1870, -1e+30, %v1840
        %v1879 = vsel %vm1362, %v1871, -inf
        %1880 = vmax.xlane.f32.xlu0 %v1879
        %v1881 = vpop.xlane.xlu0 %1880
        %v1882 = vsel %vm1362, %v1872, -inf
        %1883 = vmax.xlane.f32.xlu0 %v1882
        %v1884 = vpop.xlane.xlu0 %1883
        %v1885 = vsel %vm1362, %v1873, -inf
        %1886 = vmax.xlane.f32.xlu0 %v1885
        %v1887 = vpop.xlane.xlu0 %1886
        %v1888 = vsel %vm1362, %v1874, -inf
        %1889 = vmax.xlane.f32.xlu0 %v1888
        %v1890 = vpop.xlane.xlu0 %1889
        %v1891 = vsel %vm1362, %v1875, -inf
        %1892 = vmax.xlane.f32.xlu0 %v1891
        %v1893 = vpop.xlane.xlu0 %1892
        %v1894 = vsel %vm1362, %v1876, -inf
        %1895 = vmax.xlane.f32.xlu0 %v1894
        %v1896 = vpop.xlane.xlu0 %1895
        %v1897 = vsel %vm1362, %v1877, -inf
        %1898 = vmax.xlane.f32.xlu0 %v1897
        %v1899 = vpop.xlane.xlu0 %1898
        %v1900 = vsel %vm1362, %v1878, -inf
        %1901 = vmax.xlane.f32.xlu0 %v1900
        %v1902 = vpop.xlane.xlu0 %1901
        %v1903 = vsub.f32 %v1871, %v1881
        %v1904 = vsub.f32 %v1872, %v1884
        %v1905 = vsub.f32 %v1873, %v1887
        %v1906 = vsub.f32 %v1874, %v1890
        %v1907 = vsub.f32 %v1875, %v1893
        %v1908 = vsub.f32 %v1876, %v1896
        %v1909 = vsub.f32 %v1877, %v1899
        %v1910 = vsub.f32 %v1878, %v1902
        %v1911 = vmul.f32 %v1903, 1.442695
        %v1912 = vpow.pop %v1911
        %v1913 = vmul.f32 %v1904, 1.442695
        %v1914 = vpow.pop %v1913
        %v1915 = vmul.f32 %v1905, 1.442695
        %v1916 = vpow.pop %v1915
        %v1917 = vmul.f32 %v1906, 1.442695
        %v1918 = vpow.pop %v1917
        %v1919 = vmul.f32 %v1907, 1.442695
        %v1920 = vpow.pop %v1919
        %v1921 = vmul.f32 %v1908, 1.442695
        %v1922 = vpow.pop %v1921
        %v1923 = vmul.f32 %v1909, 1.442695
        %v1924 = vpow.pop %v1923
        %v1925 = vmul.f32 %v1910, 1.442695
        %v1926 = vpow.pop %v1925
        %v1927 = vsel %vm1362, %v1912, 0.0
        %1928 = vadd.xlane.f32.xlu0 %v1927
        %v1929 = vpop.xlane.xlu0 %1928
        %v1930 = vsel %vm1362, %v1914, 0.0
        %1931 = vadd.xlane.f32.xlu0 %v1930
        %v1932 = vpop.xlane.xlu0 %1931
        %v1933 = vsel %vm1362, %v1916, 0.0
        %1934 = vadd.xlane.f32.xlu0 %v1933
        %v1935 = vpop.xlane.xlu0 %1934
        %v1936 = vsel %vm1362, %v1918, 0.0
        %1937 = vadd.xlane.f32.xlu0 %v1936
        %v1938 = vpop.xlane.xlu0 %1937
        %v1939 = vsel %vm1362, %v1920, 0.0
        %1940 = vadd.xlane.f32.xlu0 %v1939
        %v1941 = vpop.xlane.xlu0 %1940
        %v1942 = vsel %vm1362, %v1922, 0.0
        %1943 = vadd.xlane.f32.xlu0 %v1942
        %v1944 = vpop.xlane.xlu0 %1943
        %v1945 = vsel %vm1362, %v1924, 0.0
        %1946 = vadd.xlane.f32.xlu0 %v1945
        %v1947 = vpop.xlane.xlu0 %1946
        %v1948 = vsel %vm1362, %v1926, 0.0
        %1949 = vadd.xlane.f32.xlu0 %v1948
        %v1950 = vpop.xlane.xlu0 %1949
        %v1951 = vrcp.pop %v1929
        %v1952 = vrcp.pop %v1932
        %v1953 = vrcp.pop %v1935
        %v1954 = vrcp.pop %v1938
        %v1955 = vrcp.pop %v1941
        %v1956 = vrcp.pop %v1944
        %v1957 = vrcp.pop %v1947
        %v1958 = vrcp.pop %v1950
        %v1959 = vmul.f32 %v1912, %v1951
        %v1960 = vmul.f32 %v1914, %v1952
        %v1961 = vmul.f32 %v1916, %v1953
        %v1962 = vmul.f32 %v1918, %v1954
        %v1963 = vmul.f32 %v1920, %v1955
        %v1964 = vmul.f32 %v1922, %v1956
        %v1965 = vmul.f32 %v1924, %v1957
        %v1966 = vmul.f32 %v1926, %v1958
        %v1967 = vpack.c.bf16 %v1960, %v1959
        %v1968 = vpack.c.bf16 %v1962, %v1961
        %v1969 = vpack.c.bf16 %v1964, %v1963
        %v1970 = vpack.c.bf16 %v1966, %v1965
        %1972 = vrot.lane.b32.xlu0 %v1121, 96
        %v1973 = vpop.permute.xlu0 %1972
        %v1976 = vsel %vm1362, %v1967, 0
        %1978 = vmatprep.subr.bf16.mxu0 0
        %1979 = vmatpush1.bf16.msra.mxu0 0
        %1980 = vmatprep.subr.bf16.mxu0 0
        %1981 = vmatpush1.bf16.msra.mxu0 0
        %1982 = vmatprep.subr.bf16.mxu0 0
        %1983 = vmatpush1.bf16.msra.mxu0 0
        %1984 = vmatprep.subr.bf16.mxu0 0
        %1985 = vmatpush1.bf16.msra.mxu0 0
        %1986 = vmatprep.subr.bf16.mxu0 0
        %1987 = vmatpush1.bf16.msra.mxu0 0
        %1988 = vmatprep.subr.bf16.mxu0 0
        %1989 = vmatpush1.bf16.msra.mxu0 0
        %1990 = vmatprep.subr.bf16.mxu0 0
        %1991 = vmatpush1.bf16.msra.mxu0 0
        %1992 = vmatprep.subr.bf16.mxu0 0
        %1993 = vmatpush1.bf16.msra.mxu0 %v1973
        %1994 = vmatprep.subr.bf16.mxu0 0
        %1995 = vmatpush2.bf16.msra.mxu0 0
        %1996 = vmatprep.subr.bf16.mxu0 0
        %1997 = vmatpush2.bf16.msra.mxu0 0
        %1998 = vmatprep.subr.bf16.mxu0 0
        %1999 = vmatpush2.bf16.msra.mxu0 0
        %2000 = vmatprep.subr.bf16.mxu0 0
        %2001 = vmatpush2.bf16.msra.mxu0 0
        %2002 = vmatprep.subr.bf16.mxu0 0
        %2003 = vmatpush2.bf16.msra.mxu0 0
        %2004 = vmatprep.subr.bf16.mxu0 0
        %2005 = vmatpush2.bf16.msra.mxu0 0
        %2006 = vmatprep.subr.bf16.mxu0 0
        %2007 = vmatpush2.bf16.msra.mxu0 0
        %2008 = vmatprep.subr.bf16.mxu0 0
        %2009 = vmatpush2.bf16.msra.mxu0 0
        %2010 = vmatprep.mubr.bf16.mxu0 0
        %2011 = vmatmul.mubr.bf16.gmra.mxu0 %v1976
        %v2012 = vpop.f32.mrf.mxu0
        %v2013 = vadd.f32 0.0, %v2012
        %v2014 = vpop.f32.mrf.mxu0
        %v2015 = vpop.f32.mrf.mxu0
        %v2016 = vadd.f32 0.0, %v2015
        %v2017 = vpop.f32.mrf.mxu0
        %2018 = vdwg.mxu0
        %2020 = vrot.lane.b32.xlu0 %v1122, 96
        %v2021 = vpop.permute.xlu0 %2020
        %v2024 = vsel %vm1362, %v1968, 0
        %2026 = vmatprep.subr.bf16.mxu0 0
        %2027 = vmatpush1.bf16.msra.mxu0 0
        %2028 = vmatprep.subr.bf16.mxu0 0
        %2029 = vmatpush1.bf16.msra.mxu0 0
        %2030 = vmatprep.subr.bf16.mxu0 0
        %2031 = vmatpush1.bf16.msra.mxu0 0
        %2032 = vmatprep.subr.bf16.mxu0 0
        %2033 = vmatpush1.bf16.msra.mxu0 0
        %2034 = vmatprep.subr.bf16.mxu0 0
        %2035 = vmatpush1.bf16.msra.mxu0 0
        %2036 = vmatprep.subr.bf16.mxu0 0
        %2037 = vmatpush1.bf16.msra.mxu0 0
        %2038 = vmatprep.subr.bf16.mxu0 0
        %2039 = vmatpush1.bf16.msra.mxu0 0
        %2040 = vmatprep.subr.bf16.mxu0 0
        %2041 = vmatpush1.bf16.msra.mxu0 %v2021
        %2042 = vmatprep.subr.bf16.mxu0 0
        %2043 = vmatpush2.bf16.msra.mxu0 0
        %2044 = vmatprep.subr.bf16.mxu0 0
        %2045 = vmatpush2.bf16.msra.mxu0 0
        %2046 = vmatprep.subr.bf16.mxu0 0
        %2047 = vmatpush2.bf16.msra.mxu0 0
        %2048 = vmatprep.subr.bf16.mxu0 0
        %2049 = vmatpush2.bf16.msra.mxu0 0
        %2050 = vmatprep.subr.bf16.mxu0 0
        %2051 = vmatpush2.bf16.msra.mxu0 0
        %2052 = vmatprep.subr.bf16.mxu0 0
        %2053 = vmatpush2.bf16.msra.mxu0 0
        %2054 = vmatprep.subr.bf16.mxu0 0
        %2055 = vmatpush2.bf16.msra.mxu0 0
        %2056 = vmatprep.subr.bf16.mxu0 0
        %2057 = vmatpush2.bf16.msra.mxu0 0
        %2058 = vmatprep.mubr.bf16.mxu0 0
        %2059 = vmatmul.mubr.bf16.gmra.mxu0 %v2024
        %v2060 = vpop.f32.mrf.mxu0
        %v2061 = vadd.f32 0.0, %v2060
        %v2062 = vpop.f32.mrf.mxu0
        %v2063 = vpop.f32.mrf.mxu0
        %v2064 = vadd.f32 0.0, %v2063
        %v2065 = vpop.f32.mrf.mxu0
        %2066 = vdwg.mxu0
        %2068 = vrot.lane.b32.xlu0 %v1123, 96
        %v2069 = vpop.permute.xlu0 %2068
        %v2072 = vsel %vm1362, %v1969, 0
        %2074 = vmatprep.subr.bf16.mxu0 0
        %2075 = vmatpush1.bf16.msra.mxu0 0
        %2076 = vmatprep.subr.bf16.mxu0 0
        %2077 = vmatpush1.bf16.msra.mxu0 0
        %2078 = vmatprep.subr.bf16.mxu0 0
        %2079 = vmatpush1.bf16.msra.mxu0 0
        %2080 = vmatprep.subr.bf16.mxu0 0
        %2081 = vmatpush1.bf16.msra.mxu0 0
        %2082 = vmatprep.subr.bf16.mxu0 0
        %2083 = vmatpush1.bf16.msra.mxu0 0
        %2084 = vmatprep.subr.bf16.mxu0 0
        %2085 = vmatpush1.bf16.msra.mxu0 0
        %2086 = vmatprep.subr.bf16.mxu0 0
        %2087 = vmatpush1.bf16.msra.mxu0 0
        %2088 = vmatprep.subr.bf16.mxu0 0
        %2089 = vmatpush1.bf16.msra.mxu0 %v2069
        %2090 = vmatprep.subr.bf16.mxu0 0
        %2091 = vmatpush2.bf16.msra.mxu0 0
        %2092 = vmatprep.subr.bf16.mxu0 0
        %2093 = vmatpush2.bf16.msra.mxu0 0
        %2094 = vmatprep.subr.bf16.mxu0 0
        %2095 = vmatpush2.bf16.msra.mxu0 0
        %2096 = vmatprep.subr.bf16.mxu0 0
        %2097 = vmatpush2.bf16.msra.mxu0 0
        %2098 = vmatprep.subr.bf16.mxu0 0
        %2099 = vmatpush2.bf16.msra.mxu0 0
        %2100 = vmatprep.subr.bf16.mxu0 0
        %2101 = vmatpush2.bf16.msra.mxu0 0
        %2102 = vmatprep.subr.bf16.mxu0 0
        %2103 = vmatpush2.bf16.msra.mxu0 0
        %2104 = vmatprep.subr.bf16.mxu0 0
        %2105 = vmatpush2.bf16.msra.mxu0 0
        %2106 = vmatprep.mubr.bf16.mxu0 0
        %2107 = vmatmul.mubr.bf16.gmra.mxu0 %v2072
        %v2108 = vpop.f32.mrf.mxu0
        %v2109 = vadd.f32 0.0, %v2108
        %v2110 = vpop.f32.mrf.mxu0
        %v2111 = vpop.f32.mrf.mxu0
        %v2112 = vadd.f32 0.0, %v2111
        %v2113 = vpop.f32.mrf.mxu0
        %2114 = vdwg.mxu0
        %2116 = vrot.lane.b32.xlu0 %v1124, 96
        %v2117 = vpop.permute.xlu0 %2116
        %v2120 = vsel %vm1362, %v1970, 0
        %2122 = vmatprep.subr.bf16.mxu0 0
        %2123 = vmatpush1.bf16.msra.mxu0 0
        %2124 = vmatprep.subr.bf16.mxu0 0
        %2125 = vmatpush1.bf16.msra.mxu0 0
        %2126 = vmatprep.subr.bf16.mxu0 0
        %2127 = vmatpush1.bf16.msra.mxu0 0
        %2128 = vmatprep.subr.bf16.mxu0 0
        %2129 = vmatpush1.bf16.msra.mxu0 0
        %2130 = vmatprep.subr.bf16.mxu0 0
        %2131 = vmatpush1.bf16.msra.mxu0 0
        %2132 = vmatprep.subr.bf16.mxu0 0
        %2133 = vmatpush1.bf16.msra.mxu0 0
        %2134 = vmatprep.subr.bf16.mxu0 0
        %2135 = vmatpush1.bf16.msra.mxu0 0
        %2136 = vmatprep.subr.bf16.mxu0 0
        %2137 = vmatpush1.bf16.msra.mxu0 %v2117
        %2138 = vmatprep.subr.bf16.mxu0 0
        %2139 = vmatpush2.bf16.msra.mxu0 0
        %2140 = vmatprep.subr.bf16.mxu0 0
        %2141 = vmatpush2.bf16.msra.mxu0 0
        %2142 = vmatprep.subr.bf16.mxu0 0
        %2143 = vmatpush2.bf16.msra.mxu0 0
        %2144 = vmatprep.subr.bf16.mxu0 0
        %2145 = vmatpush2.bf16.msra.mxu0 0
        %2146 = vmatprep.subr.bf16.mxu0 0
        %2147 = vmatpush2.bf16.msra.mxu0 0
        %2148 = vmatprep.subr.bf16.mxu0 0
        %2149 = vmatpush2.bf16.msra.mxu0 0
        %2150 = vmatprep.subr.bf16.mxu0 0
        %2151 = vmatpush2.bf16.msra.mxu0 0
        %2152 = vmatprep.subr.bf16.mxu0 0
        %2153 = vmatpush2.bf16.msra.mxu0 0
        %2154 = vmatprep.mubr.bf16.mxu0 0
        %2155 = vmatmul.mubr.bf16.gmra.mxu0 %v2120
        %v2156 = vpop.f32.mrf.mxu0
        %v2157 = vadd.f32 0.0, %v2156
        %v2158 = vpop.f32.mrf.mxu0
        %v2159 = vpop.f32.mrf.mxu0
        %v2160 = vadd.f32 0.0, %v2159
        %v2161 = vpop.f32.mrf.mxu0
        %2162 = vdwg.mxu0
        %2163 = vrot.lane.b32.xlu0 %v1113, 64
        %v2164 = vpop.permute.xlu0 %2163
        %2165 = vrot.lane.b32.xlu0 %v1117, 64
        %v2166 = vpop.permute.xlu0 %2165
        %v2168 = vsel %vm1125, %v2164, 0
        %v2171 = vsel %vm1125, %v2166, 0
        %2173 = vmatprep.subr.bf16.mxu0 0
        %2174 = vmatpush1.bf16.xpose.msra.mxu0 0
        %2175 = vmatprep.subr.bf16.mxu0 0
        %2176 = vmatpush1.bf16.xpose.msra.mxu0 0
        %2177 = vmatprep.subr.bf16.mxu0 0
        %2178 = vmatpush1.bf16.xpose.msra.mxu0 0
        %2179 = vmatprep.subr.bf16.mxu0 0
        %2180 = vmatpush1.bf16.xpose.msra.mxu0 0
        %2181 = vmatprep.subr.bf16.mxu0 0
        %2182 = vmatpush1.bf16.xpose.msra.mxu0 0
        %2183 = vmatprep.subr.bf16.mxu0 0
        %2184 = vmatpush1.bf16.xpose.msra.mxu0 0
        %2185 = vmatprep.subr.bf16.mxu0 0
        %2186 = vmatpush1.bf16.xpose.msra.mxu0 0
        %2187 = vmatprep.subr.bf16.mxu0 0
        %2188 = vmatpush1.bf16.xpose.msra.mxu0 %v2171
        %2189 = vmatprep.subr.bf16.mxu0 0
        %2190 = vmatpush2.bf16.xpose.msra.mxu0 0
        %2191 = vmatprep.subr.bf16.mxu0 0
        %2192 = vmatpush2.bf16.xpose.msra.mxu0 0
        %2193 = vmatprep.subr.bf16.mxu0 0
        %2194 = vmatpush2.bf16.xpose.msra.mxu0 0
        %2195 = vmatprep.subr.bf16.mxu0 0
        %2196 = vmatpush2.bf16.xpose.msra.mxu0 0
        %2197 = vmatprep.subr.bf16.mxu0 0
        %2198 = vmatpush2.bf16.xpose.msra.mxu0 0
        %2199 = vmatprep.subr.bf16.mxu0 0
        %2200 = vmatpush2.bf16.xpose.msra.mxu0 0
        %2201 = vmatprep.subr.bf16.mxu0 0
        %2202 = vmatpush2.bf16.xpose.msra.mxu0 0
        %2203 = vmatprep.subr.bf16.mxu0 0
        %2204 = vmatpush2.bf16.xpose.msra.mxu0 0
        %2205 = vmatprep.mubr.bf16.mxu0 0
        %2206 = vmatmul.mubr.bf16.gmra.mxu0 %v2168
        %v2207 = vpop.f32.mrf.mxu0
        %v2208 = vadd.f32 0.0, %v2207
        %v2209 = vpop.f32.mrf.mxu0
        %v2210 = vpop.f32.mrf.mxu0
        %v2211 = vadd.f32 0.0, %v2210
        %v2212 = vpop.f32.mrf.mxu0
        %2213 = vdwg.mxu0
        %2214 = vrot.lane.b32.xlu0 %v1114, 64
        %v2215 = vpop.permute.xlu0 %2214
        %2216 = vrot.lane.b32.xlu0 %v1118, 64
        %v2217 = vpop.permute.xlu0 %2216
        %v2219 = vsel %vm1125, %v2215, 0
        %v2222 = vsel %vm1125, %v2217, 0
        %2224 = vmatprep.subr.bf16.mxu0 0
        %2225 = vmatpush1.bf16.xpose.msra.mxu0 0
        %2226 = vmatprep.subr.bf16.mxu0 0
        %2227 = vmatpush1.bf16.xpose.msra.mxu0 0
        %2228 = vmatprep.subr.bf16.mxu0 0
        %2229 = vmatpush1.bf16.xpose.msra.mxu0 0
        %2230 = vmatprep.subr.bf16.mxu0 0
        %2231 = vmatpush1.bf16.xpose.msra.mxu0 0
        %2232 = vmatprep.subr.bf16.mxu0 0
        %2233 = vmatpush1.bf16.xpose.msra.mxu0 0
        %2234 = vmatprep.subr.bf16.mxu0 0
        %2235 = vmatpush1.bf16.xpose.msra.mxu0 0
        %2236 = vmatprep.subr.bf16.mxu0 0
        %2237 = vmatpush1.bf16.xpose.msra.mxu0 0
        %2238 = vmatprep.subr.bf16.mxu0 0
        %2239 = vmatpush1.bf16.xpose.msra.mxu0 %v2222
        %2240 = vmatprep.subr.bf16.mxu0 0
        %2241 = vmatpush2.bf16.xpose.msra.mxu0 0
        %2242 = vmatprep.subr.bf16.mxu0 0
        %2243 = vmatpush2.bf16.xpose.msra.mxu0 0
        %2244 = vmatprep.subr.bf16.mxu0 0
        %2245 = vmatpush2.bf16.xpose.msra.mxu0 0
        %2246 = vmatprep.subr.bf16.mxu0 0
        %2247 = vmatpush2.bf16.xpose.msra.mxu0 0
        %2248 = vmatprep.subr.bf16.mxu0 0
        %2249 = vmatpush2.bf16.xpose.msra.mxu0 0
        %2250 = vmatprep.subr.bf16.mxu0 0
        %2251 = vmatpush2.bf16.xpose.msra.mxu0 0
        %2252 = vmatprep.subr.bf16.mxu0 0
        %2253 = vmatpush2.bf16.xpose.msra.mxu0 0
        %2254 = vmatprep.subr.bf16.mxu0 0
        %2255 = vmatpush2.bf16.xpose.msra.mxu0 0
        %2256 = vmatprep.mubr.bf16.mxu0 0
        %2257 = vmatmul.mubr.bf16.gmra.mxu0 %v2219
        %v2258 = vpop.f32.mrf.mxu0
        %v2259 = vadd.f32 0.0, %v2258
        %v2260 = vpop.f32.mrf.mxu0
        %v2261 = vpop.f32.mrf.mxu0
        %v2262 = vadd.f32 0.0, %v2261
        %v2263 = vpop.f32.mrf.mxu0
        %2264 = vdwg.mxu0
        %2265 = vrot.lane.b32.xlu0 %v1115, 64
        %v2266 = vpop.permute.xlu0 %2265
        %2267 = vrot.lane.b32.xlu0 %v1119, 64
        %v2268 = vpop.permute.xlu0 %2267
        %v2270 = vsel %vm1125, %v2266, 0
        %v2273 = vsel %vm1125, %v2268, 0
        %2275 = vmatprep.subr.bf16.mxu0 0
        %2276 = vmatpush1.bf16.xpose.msra.mxu0 0
        %2277 = vmatprep.subr.bf16.mxu0 0
        %2278 = vmatpush1.bf16.xpose.msra.mxu0 0
        %2279 = vmatprep.subr.bf16.mxu0 0
        %2280 = vmatpush1.bf16.xpose.msra.mxu0 0
        %2281 = vmatprep.subr.bf16.mxu0 0
        %2282 = vmatpush1.bf16.xpose.msra.mxu0 0
        %2283 = vmatprep.subr.bf16.mxu0 0
        %2284 = vmatpush1.bf16.xpose.msra.mxu0 0
        %2285 = vmatprep.subr.bf16.mxu0 0
        %2286 = vmatpush1.bf16.xpose.msra.mxu0 0
        %2287 = vmatprep.subr.bf16.mxu0 0
        %2288 = vmatpush1.bf16.xpose.msra.mxu0 0
        %2289 = vmatprep.subr.bf16.mxu0 0
        %2290 = vmatpush1.bf16.xpose.msra.mxu0 %v2273
        %2291 = vmatprep.subr.bf16.mxu0 0
        %2292 = vmatpush2.bf16.xpose.msra.mxu0 0
        %2293 = vmatprep.subr.bf16.mxu0 0
        %2294 = vmatpush2.bf16.xpose.msra.mxu0 0
        %2295 = vmatprep.subr.bf16.mxu0 0
        %2296 = vmatpush2.bf16.xpose.msra.mxu0 0
        %2297 = vmatprep.subr.bf16.mxu0 0
        %2298 = vmatpush2.bf16.xpose.msra.mxu0 0
        %2299 = vmatprep.subr.bf16.mxu0 0
        %2300 = vmatpush2.bf16.xpose.msra.mxu0 0
        %2301 = vmatprep.subr.bf16.mxu0 0
        %2302 = vmatpush2.bf16.xpose.msra.mxu0 0
        %2303 = vmatprep.subr.bf16.mxu0 0
        %2304 = vmatpush2.bf16.xpose.msra.mxu0 0
        %2305 = vmatprep.subr.bf16.mxu0 0
        %2306 = vmatpush2.bf16.xpose.msra.mxu0 0
        %2307 = vmatprep.mubr.bf16.mxu0 0
        %2308 = vmatmul.mubr.bf16.gmra.mxu0 %v2270
        %v2309 = vpop.f32.mrf.mxu0
        %v2310 = vadd.f32 0.0, %v2309
        %v2311 = vpop.f32.mrf.mxu0
        %v2312 = vpop.f32.mrf.mxu0
        %v2313 = vadd.f32 0.0, %v2312
        %v2314 = vpop.f32.mrf.mxu0
        %2315 = vdwg.mxu0
        %2316 = vrot.lane.b32.xlu0 %v1116, 64
        %v2317 = vpop.permute.xlu0 %2316
        %2318 = vrot.lane.b32.xlu0 %v1120, 64
        %v2319 = vpop.permute.xlu0 %2318
        %v2321 = vsel %vm1125, %v2317, 0
        %v2324 = vsel %vm1125, %v2319, 0
        %2326 = vmatprep.subr.bf16.mxu0 0
        %2327 = vmatpush1.bf16.xpose.msra.mxu0 0
        %2328 = vmatprep.subr.bf16.mxu0 0
        %2329 = vmatpush1.bf16.xpose.msra.mxu0 0
        %2330 = vmatprep.subr.bf16.mxu0 0
        %2331 = vmatpush1.bf16.xpose.msra.mxu0 0
        %2332 = vmatprep.subr.bf16.mxu0 0
        %2333 = vmatpush1.bf16.xpose.msra.mxu0 0
        %2334 = vmatprep.subr.bf16.mxu0 0
        %2335 = vmatpush1.bf16.xpose.msra.mxu0 0
        %2336 = vmatprep.subr.bf16.mxu0 0
        %2337 = vmatpush1.bf16.xpose.msra.mxu0 0
        %2338 = vmatprep.subr.bf16.mxu0 0
        %2339 = vmatpush1.bf16.xpose.msra.mxu0 0
        %2340 = vmatprep.subr.bf16.mxu0 0
        %2341 = vmatpush1.bf16.xpose.msra.mxu0 %v2324
        %2342 = vmatprep.subr.bf16.mxu0 0
        %2343 = vmatpush2.bf16.xpose.msra.mxu0 0
        %2344 = vmatprep.subr.bf16.mxu0 0
        %2345 = vmatpush2.bf16.xpose.msra.mxu0 0
        %2346 = vmatprep.subr.bf16.mxu0 0
        %2347 = vmatpush2.bf16.xpose.msra.mxu0 0
        %2348 = vmatprep.subr.bf16.mxu0 0
        %2349 = vmatpush2.bf16.xpose.msra.mxu0 0
        %2350 = vmatprep.subr.bf16.mxu0 0
        %2351 = vmatpush2.bf16.xpose.msra.mxu0 0
        %2352 = vmatprep.subr.bf16.mxu0 0
        %2353 = vmatpush2.bf16.xpose.msra.mxu0 0
        %2354 = vmatprep.subr.bf16.mxu0 0
        %2355 = vmatpush2.bf16.xpose.msra.mxu0 0
        %2356 = vmatprep.subr.bf16.mxu0 0
        %2357 = vmatpush2.bf16.xpose.msra.mxu0 0
        %2358 = vmatprep.mubr.bf16.mxu0 0
        %2359 = vmatmul.mubr.bf16.gmra.mxu0 %v2321
        %v2360 = vpop.f32.mrf.mxu0
        %v2361 = vadd.f32 0.0, %v2360
        %v2362 = vpop.f32.mrf.mxu0
        %v2363 = vpop.f32.mrf.mxu0
        %v2364 = vadd.f32 0.0, %v2363
        %v2365 = vpop.f32.mrf.mxu0
        %2366 = vdwg.mxu0
        %v2367 = vlaneseq
        %v2368 = vshrl.u32 %v2367, 7
        %v2369 = vsub.s32 2, %v2368
        %v2370 = vrot.slane %v1318, %v2369
        %v2371 = vlaneseq
        %v2372 = vshrl.u32 %v2371, 7
        %v2373 = vsub.s32 2, %v2372
        %v2374 = vrot.slane %v1319, %v2373
        %v2375 = vlaneseq
        %v2376 = vshrl.u32 %v2375, 7
        %v2377 = vsub.s32 2, %v2376
        %v2378 = vrot.slane %v1320, %v2377
        %v2379 = vlaneseq
        %v2380 = vshrl.u32 %v2379, 7
        %v2381 = vsub.s32 2, %v2380
        %v2382 = vrot.slane %v1321, %v2381
        %vm2383 = vcmp.eq.s32.totalorder %v2370, 1
        %vm2384 = vcmp.eq.s32.totalorder %v2374, 1
        %vm2385 = vcmp.eq.s32.totalorder %v2378, 1
        %vm2386 = vcmp.eq.s32.totalorder %v2382, 1
        %vm2387 = vmand %vm2383, %vm1344
        %vm2388 = vmand %vm2383, %vm1345
        %vm2389 = vmand %vm2384, %vm1344
        %vm2390 = vmand %vm2384, %vm1345
        %vm2391 = vmand %vm2385, %vm1344
        %vm2392 = vmand %vm2385, %vm1345
        %vm2393 = vmand %vm2386, %vm1344
        %vm2394 = vmand %vm2386, %vm1345
        %v2395 = vsel %vm2387, -1e+30, %v2208
        %v2396 = vsel %vm2388, -1e+30, %v2211
        %v2397 = vsel %vm2389, -1e+30, %v2259
        %v2398 = vsel %vm2390, -1e+30, %v2262
        %v2399 = vsel %vm2391, -1e+30, %v2310
        %v2400 = vsel %vm2392, -1e+30, %v2313
        %v2401 = vsel %vm2393, -1e+30, %v2361
        %v2402 = vsel %vm2394, -1e+30, %v2364
        %v2403 = vsel %vm1362, %v2395, -inf
        %2404 = vmax.xlane.f32.xlu0 %v2403
        %v2405 = vpop.xlane.xlu0 %2404
        %v2406 = vsel %vm1362, %v2396, -inf
        %2407 = vmax.xlane.f32.xlu0 %v2406
        %v2408 = vpop.xlane.xlu0 %2407
        %v2409 = vsel %vm1362, %v2397, -inf
        %2410 = vmax.xlane.f32.xlu0 %v2409
        %v2411 = vpop.xlane.xlu0 %2410
        %v2412 = vsel %vm1362, %v2398, -inf
        %2413 = vmax.xlane.f32.xlu0 %v2412
        %v2414 = vpop.xlane.xlu0 %2413
        %v2415 = vsel %vm1362, %v2399, -inf
        %2416 = vmax.xlane.f32.xlu0 %v2415
        %v2417 = vpop.xlane.xlu0 %2416
        %v2418 = vsel %vm1362, %v2400, -inf
        %2419 = vmax.xlane.f32.xlu0 %v2418
        %v2420 = vpop.xlane.xlu0 %2419
        %v2421 = vsel %vm1362, %v2401, -inf
        %2422 = vmax.xlane.f32.xlu0 %v2421
        %v2423 = vpop.xlane.xlu0 %2422
        %v2424 = vsel %vm1362, %v2402, -inf
        %2425 = vmax.xlane.f32.xlu0 %v2424
        %v2426 = vpop.xlane.xlu0 %2425
        %v2427 = vsub.f32 %v2395, %v2405
        %v2428 = vsub.f32 %v2396, %v2408
        %v2429 = vsub.f32 %v2397, %v2411
        %v2430 = vsub.f32 %v2398, %v2414
        %v2431 = vsub.f32 %v2399, %v2417
        %v2432 = vsub.f32 %v2400, %v2420
        %v2433 = vsub.f32 %v2401, %v2423
        %v2434 = vsub.f32 %v2402, %v2426
        %v2435 = vmul.f32 %v2427, 1.442695
        %v2436 = vpow.pop %v2435
        %v2437 = vmul.f32 %v2428, 1.442695
        %v2438 = vpow.pop %v2437
        %v2439 = vmul.f32 %v2429, 1.442695
        %v2440 = vpow.pop %v2439
        %v2441 = vmul.f32 %v2430, 1.442695
        %v2442 = vpow.pop %v2441
        %v2443 = vmul.f32 %v2431, 1.442695
        %v2444 = vpow.pop %v2443
        %v2445 = vmul.f32 %v2432, 1.442695
        %v2446 = vpow.pop %v2445
        %v2447 = vmul.f32 %v2433, 1.442695
        %v2448 = vpow.pop %v2447
        %v2449 = vmul.f32 %v2434, 1.442695
        %v2450 = vpow.pop %v2449
        %v2451 = vsel %vm1362, %v2436, 0.0
        %2452 = vadd.xlane.f32.xlu0 %v2451
        %v2453 = vpop.xlane.xlu0 %2452
        %v2454 = vsel %vm1362, %v2438, 0.0
        %2455 = vadd.xlane.f32.xlu0 %v2454
        %v2456 = vpop.xlane.xlu0 %2455
        %v2457 = vsel %vm1362, %v2440, 0.0
        %2458 = vadd.xlane.f32.xlu0 %v2457
        %v2459 = vpop.xlane.xlu0 %2458
        %v2460 = vsel %vm1362, %v2442, 0.0
        %2461 = vadd.xlane.f32.xlu0 %v2460
        %v2462 = vpop.xlane.xlu0 %2461
        %v2463 = vsel %vm1362, %v2444, 0.0
        %2464 = vadd.xlane.f32.xlu0 %v2463
        %v2465 = vpop.xlane.xlu0 %2464
        %v2466 = vsel %vm1362, %v2446, 0.0
        %2467 = vadd.xlane.f32.xlu0 %v2466
        %v2468 = vpop.xlane.xlu0 %2467
        %v2469 = vsel %vm1362, %v2448, 0.0
        %2470 = vadd.xlane.f32.xlu0 %v2469
        %v2471 = vpop.xlane.xlu0 %2470
        %v2472 = vsel %vm1362, %v2450, 0.0
        %2473 = vadd.xlane.f32.xlu0 %v2472
        %v2474 = vpop.xlane.xlu0 %2473
        %v2475 = vrcp.pop %v2453
        %v2476 = vrcp.pop %v2456
        %v2477 = vrcp.pop %v2459
        %v2478 = vrcp.pop %v2462
        %v2479 = vrcp.pop %v2465
        %v2480 = vrcp.pop %v2468
        %v2481 = vrcp.pop %v2471
        %v2482 = vrcp.pop %v2474
        %v2483 = vmul.f32 %v2436, %v2475
        %v2484 = vmul.f32 %v2438, %v2476
        %v2485 = vmul.f32 %v2440, %v2477
        %v2486 = vmul.f32 %v2442, %v2478
        %v2487 = vmul.f32 %v2444, %v2479
        %v2488 = vmul.f32 %v2446, %v2480
        %v2489 = vmul.f32 %v2448, %v2481
        %v2490 = vmul.f32 %v2450, %v2482
        %v2491 = vpack.c.bf16 %v2484, %v2483
        %v2492 = vpack.c.bf16 %v2486, %v2485
        %v2493 = vpack.c.bf16 %v2488, %v2487
        %v2494 = vpack.c.bf16 %v2490, %v2489
        %2495 = vrot.lane.b32.xlu0 %v1121, 64
        %v2496 = vpop.permute.xlu0 %2495
        %v2499 = vsel %vm1362, %v2491, 0
        %2501 = vmatprep.subr.bf16.mxu0 0
        %2502 = vmatpush1.bf16.msra.mxu0 0
        %2503 = vmatprep.subr.bf16.mxu0 0
        %2504 = vmatpush1.bf16.msra.mxu0 0
        %2505 = vmatprep.subr.bf16.mxu0 0
        %2506 = vmatpush1.bf16.msra.mxu0 0
        %2507 = vmatprep.subr.bf16.mxu0 0
        %2508 = vmatpush1.bf16.msra.mxu0 0
        %2509 = vmatprep.subr.bf16.mxu0 0
        %2510 = vmatpush1.bf16.msra.mxu0 0
        %2511 = vmatprep.subr.bf16.mxu0 0
        %2512 = vmatpush1.bf16.msra.mxu0 0
        %2513 = vmatprep.subr.bf16.mxu0 0
        %2514 = vmatpush1.bf16.msra.mxu0 0
        %2515 = vmatprep.subr.bf16.mxu0 0
        %2516 = vmatpush1.bf16.msra.mxu0 %v2496
        %2517 = vmatprep.subr.bf16.mxu0 0
        %2518 = vmatpush2.bf16.msra.mxu0 0
        %2519 = vmatprep.subr.bf16.mxu0 0
        %2520 = vmatpush2.bf16.msra.mxu0 0
        %2521 = vmatprep.subr.bf16.mxu0 0
        %2522 = vmatpush2.bf16.msra.mxu0 0
        %2523 = vmatprep.subr.bf16.mxu0 0
        %2524 = vmatpush2.bf16.msra.mxu0 0
        %2525 = vmatprep.subr.bf16.mxu0 0
        %2526 = vmatpush2.bf16.msra.mxu0 0
        %2527 = vmatprep.subr.bf16.mxu0 0
        %2528 = vmatpush2.bf16.msra.mxu0 0
        %2529 = vmatprep.subr.bf16.mxu0 0
        %2530 = vmatpush2.bf16.msra.mxu0 0
        %2531 = vmatprep.subr.bf16.mxu0 0
        %2532 = vmatpush2.bf16.msra.mxu0 0
        %2533 = vmatprep.mubr.bf16.mxu0 0
        %2534 = vmatmul.mubr.bf16.gmra.mxu0 %v2499
        %v2535 = vpop.f32.mrf.mxu0
        %v2536 = vadd.f32 0.0, %v2535
        %v2537 = vpop.f32.mrf.mxu0
        %v2538 = vpop.f32.mrf.mxu0
        %v2539 = vadd.f32 0.0, %v2538
        %v2540 = vpop.f32.mrf.mxu0
        %2541 = vdwg.mxu0
        %2542 = vrot.lane.b32.xlu0 %v1122, 64
        %v2543 = vpop.permute.xlu0 %2542
        %v2546 = vsel %vm1362, %v2492, 0
        %2548 = vmatprep.subr.bf16.mxu0 0
        %2549 = vmatpush1.bf16.msra.mxu0 0
        %2550 = vmatprep.subr.bf16.mxu0 0
        %2551 = vmatpush1.bf16.msra.mxu0 0
        %2552 = vmatprep.subr.bf16.mxu0 0
        %2553 = vmatpush1.bf16.msra.mxu0 0
        %2554 = vmatprep.subr.bf16.mxu0 0
        %2555 = vmatpush1.bf16.msra.mxu0 0
        %2556 = vmatprep.subr.bf16.mxu0 0
        %2557 = vmatpush1.bf16.msra.mxu0 0
        %2558 = vmatprep.subr.bf16.mxu0 0
        %2559 = vmatpush1.bf16.msra.mxu0 0
        %2560 = vmatprep.subr.bf16.mxu0 0
        %2561 = vmatpush1.bf16.msra.mxu0 0
        %2562 = vmatprep.subr.bf16.mxu0 0
        %2563 = vmatpush1.bf16.msra.mxu0 %v2543
        %2564 = vmatprep.subr.bf16.mxu0 0
        %2565 = vmatpush2.bf16.msra.mxu0 0
        %2566 = vmatprep.subr.bf16.mxu0 0
        %2567 = vmatpush2.bf16.msra.mxu0 0
        %2568 = vmatprep.subr.bf16.mxu0 0
        %2569 = vmatpush2.bf16.msra.mxu0 0
        %2570 = vmatprep.subr.bf16.mxu0 0
        %2571 = vmatpush2.bf16.msra.mxu0 0
        %2572 = vmatprep.subr.bf16.mxu0 0
        %2573 = vmatpush2.bf16.msra.mxu0 0
        %2574 = vmatprep.subr.bf16.mxu0 0
        %2575 = vmatpush2.bf16.msra.mxu0 0
        %2576 = vmatprep.subr.bf16.mxu0 0
        %2577 = vmatpush2.bf16.msra.mxu0 0
        %2578 = vmatprep.subr.bf16.mxu0 0
        %2579 = vmatpush2.bf16.msra.mxu0 0
        %2580 = vmatprep.mubr.bf16.mxu0 0
        %2581 = vmatmul.mubr.bf16.gmra.mxu0 %v2546
        %v2582 = vpop.f32.mrf.mxu0
        %v2583 = vadd.f32 0.0, %v2582
        %v2584 = vpop.f32.mrf.mxu0
        %v2585 = vpop.f32.mrf.mxu0
        %v2586 = vadd.f32 0.0, %v2585
        %v2587 = vpop.f32.mrf.mxu0
        %2588 = vdwg.mxu0
        %2589 = vrot.lane.b32.xlu0 %v1123, 64
        %v2590 = vpop.permute.xlu0 %2589
        %v2593 = vsel %vm1362, %v2493, 0
        %2595 = vmatprep.subr.bf16.mxu0 0
        %2596 = vmatpush1.bf16.msra.mxu0 0
        %2597 = vmatprep.subr.bf16.mxu0 0
        %2598 = vmatpush1.bf16.msra.mxu0 0
        %2599 = vmatprep.subr.bf16.mxu0 0
        %2600 = vmatpush1.bf16.msra.mxu0 0
        %2601 = vmatprep.subr.bf16.mxu0 0
        %2602 = vmatpush1.bf16.msra.mxu0 0
        %2603 = vmatprep.subr.bf16.mxu0 0
        %2604 = vmatpush1.bf16.msra.mxu0 0
        %2605 = vmatprep.subr.bf16.mxu0 0
        %2606 = vmatpush1.bf16.msra.mxu0 0
        %2607 = vmatprep.subr.bf16.mxu0 0
        %2608 = vmatpush1.bf16.msra.mxu0 0
        %2609 = vmatprep.subr.bf16.mxu0 0
        %2610 = vmatpush1.bf16.msra.mxu0 %v2590
        %2611 = vmatprep.subr.bf16.mxu0 0
        %2612 = vmatpush2.bf16.msra.mxu0 0
        %2613 = vmatprep.subr.bf16.mxu0 0
        %2614 = vmatpush2.bf16.msra.mxu0 0
        %2615 = vmatprep.subr.bf16.mxu0 0
        %2616 = vmatpush2.bf16.msra.mxu0 0
        %2617 = vmatprep.subr.bf16.mxu0 0
        %2618 = vmatpush2.bf16.msra.mxu0 0
        %2619 = vmatprep.subr.bf16.mxu0 0
        %2620 = vmatpush2.bf16.msra.mxu0 0
        %2621 = vmatprep.subr.bf16.mxu0 0
        %2622 = vmatpush2.bf16.msra.mxu0 0
        %2623 = vmatprep.subr.bf16.mxu0 0
        %2624 = vmatpush2.bf16.msra.mxu0 0
        %2625 = vmatprep.subr.bf16.mxu0 0
        %2626 = vmatpush2.bf16.msra.mxu0 0
        %2627 = vmatprep.mubr.bf16.mxu0 0
        %2628 = vmatmul.mubr.bf16.gmra.mxu0 %v2593
        %v2629 = vpop.f32.mrf.mxu0
        %v2630 = vadd.f32 0.0, %v2629
        %v2631 = vpop.f32.mrf.mxu0
        %v2632 = vpop.f32.mrf.mxu0
        %v2633 = vadd.f32 0.0, %v2632
        %v2634 = vpop.f32.mrf.mxu0
        %2635 = vdwg.mxu0
        %2636 = vrot.lane.b32.xlu0 %v1124, 64
        %v2637 = vpop.permute.xlu0 %2636
        %v2640 = vsel %vm1362, %v2494, 0
        %2642 = vmatprep.subr.bf16.mxu0 0
        %2643 = vmatpush1.bf16.msra.mxu0 0
        %2644 = vmatprep.subr.bf16.mxu0 0
        %2645 = vmatpush1.bf16.msra.mxu0 0
        %2646 = vmatprep.subr.bf16.mxu0 0
        %2647 = vmatpush1.bf16.msra.mxu0 0
        %2648 = vmatprep.subr.bf16.mxu0 0
        %2649 = vmatpush1.bf16.msra.mxu0 0
        %2650 = vmatprep.subr.bf16.mxu0 0
        %2651 = vmatpush1.bf16.msra.mxu0 0
        %2652 = vmatprep.subr.bf16.mxu0 0
        %2653 = vmatpush1.bf16.msra.mxu0 0
        %2654 = vmatprep.subr.bf16.mxu0 0
        %2655 = vmatpush1.bf16.msra.mxu0 0
        %2656 = vmatprep.subr.bf16.mxu0 0
        %2657 = vmatpush1.bf16.msra.mxu0 %v2637
        %2658 = vmatprep.subr.bf16.mxu0 0
        %2659 = vmatpush2.bf16.msra.mxu0 0
        %2660 = vmatprep.subr.bf16.mxu0 0
        %2661 = vmatpush2.bf16.msra.mxu0 0
        %2662 = vmatprep.subr.bf16.mxu0 0
        %2663 = vmatpush2.bf16.msra.mxu0 0
        %2664 = vmatprep.subr.bf16.mxu0 0
        %2665 = vmatpush2.bf16.msra.mxu0 0
        %2666 = vmatprep.subr.bf16.mxu0 0
        %2667 = vmatpush2.bf16.msra.mxu0 0
        %2668 = vmatprep.subr.bf16.mxu0 0
        %2669 = vmatpush2.bf16.msra.mxu0 0
        %2670 = vmatprep.subr.bf16.mxu0 0
        %2671 = vmatpush2.bf16.msra.mxu0 0
        %2672 = vmatprep.subr.bf16.mxu0 0
        %2673 = vmatpush2.bf16.msra.mxu0 0
        %2674 = vmatprep.mubr.bf16.mxu0 0
        %2675 = vmatmul.mubr.bf16.gmra.mxu0 %v2640
        %v2676 = vpop.f32.mrf.mxu0
        %v2677 = vadd.f32 0.0, %v2676
        %v2678 = vpop.f32.mrf.mxu0
        %v2679 = vpop.f32.mrf.mxu0
        %v2680 = vadd.f32 0.0, %v2679
        %v2681 = vpop.f32.mrf.mxu0
        %2682 = vdwg.mxu0
        %2683 = vrot.lane.b32.xlu0 %v1113, 32
        %v2684 = vpop.permute.xlu0 %2683
        %2685 = vrot.lane.b32.xlu0 %v1117, 32
        %v2686 = vpop.permute.xlu0 %2685
        %v2688 = vsel %vm1125, %v2684, 0
        %v2691 = vsel %vm1125, %v2686, 0
        %2693 = vmatprep.subr.bf16.mxu0 0
        %2694 = vmatpush1.bf16.xpose.msra.mxu0 0
        %2695 = vmatprep.subr.bf16.mxu0 0
        %2696 = vmatpush1.bf16.xpose.msra.mxu0 0
        %2697 = vmatprep.subr.bf16.mxu0 0
        %2698 = vmatpush1.bf16.xpose.msra.mxu0 0
        %2699 = vmatprep.subr.bf16.mxu0 0
        %2700 = vmatpush1.bf16.xpose.msra.mxu0 0
        %2701 = vmatprep.subr.bf16.mxu0 0
        %2702 = vmatpush1.bf16.xpose.msra.mxu0 0
        %2703 = vmatprep.subr.bf16.mxu0 0
        %2704 = vmatpush1.bf16.xpose.msra.mxu0 0
        %2705 = vmatprep.subr.bf16.mxu0 0
        %2706 = vmatpush1.bf16.xpose.msra.mxu0 0
        %2707 = vmatprep.subr.bf16.mxu0 0
        %2708 = vmatpush1.bf16.xpose.msra.mxu0 %v2691
        %2709 = vmatprep.subr.bf16.mxu0 0
        %2710 = vmatpush2.bf16.xpose.msra.mxu0 0
        %2711 = vmatprep.subr.bf16.mxu0 0
        %2712 = vmatpush2.bf16.xpose.msra.mxu0 0
        %2713 = vmatprep.subr.bf16.mxu0 0
        %2714 = vmatpush2.bf16.xpose.msra.mxu0 0
        %2715 = vmatprep.subr.bf16.mxu0 0
        %2716 = vmatpush2.bf16.xpose.msra.mxu0 0
        %2717 = vmatprep.subr.bf16.mxu0 0
        %2718 = vmatpush2.bf16.xpose.msra.mxu0 0
        %2719 = vmatprep.subr.bf16.mxu0 0
        %2720 = vmatpush2.bf16.xpose.msra.mxu0 0
        %2721 = vmatprep.subr.bf16.mxu0 0
        %2722 = vmatpush2.bf16.xpose.msra.mxu0 0
        %2723 = vmatprep.subr.bf16.mxu0 0
        %2724 = vmatpush2.bf16.xpose.msra.mxu0 0
        %2725 = vmatprep.mubr.bf16.mxu0 0
        %2726 = vmatmul.mubr.bf16.gmra.mxu0 %v2688
        %v2727 = vpop.f32.mrf.mxu0
        %v2728 = vadd.f32 0.0, %v2727
        %v2729 = vpop.f32.mrf.mxu0
        %v2730 = vpop.f32.mrf.mxu0
        %v2731 = vadd.f32 0.0, %v2730
        %v2732 = vpop.f32.mrf.mxu0
        %2733 = vdwg.mxu0
        %2734 = vrot.lane.b32.xlu0 %v1114, 32
        %v2735 = vpop.permute.xlu0 %2734
        %2736 = vrot.lane.b32.xlu0 %v1118, 32
        %v2737 = vpop.permute.xlu0 %2736
        %v2739 = vsel %vm1125, %v2735, 0
        %v2742 = vsel %vm1125, %v2737, 0
        %2744 = vmatprep.subr.bf16.mxu0 0
        %2745 = vmatpush1.bf16.xpose.msra.mxu0 0
        %2746 = vmatprep.subr.bf16.mxu0 0
        %2747 = vmatpush1.bf16.xpose.msra.mxu0 0
        %2748 = vmatprep.subr.bf16.mxu0 0
        %2749 = vmatpush1.bf16.xpose.msra.mxu0 0
        %2750 = vmatprep.subr.bf16.mxu0 0
        %2751 = vmatpush1.bf16.xpose.msra.mxu0 0
        %2752 = vmatprep.subr.bf16.mxu0 0
        %2753 = vmatpush1.bf16.xpose.msra.mxu0 0
        %2754 = vmatprep.subr.bf16.mxu0 0
        %2755 = vmatpush1.bf16.xpose.msra.mxu0 0
        %2756 = vmatprep.subr.bf16.mxu0 0
        %2757 = vmatpush1.bf16.xpose.msra.mxu0 0
        %2758 = vmatprep.subr.bf16.mxu0 0
        %2759 = vmatpush1.bf16.xpose.msra.mxu0 %v2742
        %2760 = vmatprep.subr.bf16.mxu0 0
        %2761 = vmatpush2.bf16.xpose.msra.mxu0 0
        %2762 = vmatprep.subr.bf16.mxu0 0
        %2763 = vmatpush2.bf16.xpose.msra.mxu0 0
        %2764 = vmatprep.subr.bf16.mxu0 0
        %2765 = vmatpush2.bf16.xpose.msra.mxu0 0
        %2766 = vmatprep.subr.bf16.mxu0 0
        %2767 = vmatpush2.bf16.xpose.msra.mxu0 0
        %2768 = vmatprep.subr.bf16.mxu0 0
        %2769 = vmatpush2.bf16.xpose.msra.mxu0 0
        %2770 = vmatprep.subr.bf16.mxu0 0
        %2771 = vmatpush2.bf16.xpose.msra.mxu0 0
        %2772 = vmatprep.subr.bf16.mxu0 0
        %2773 = vmatpush2.bf16.xpose.msra.mxu0 0
        %2774 = vmatprep.subr.bf16.mxu0 0
        %2775 = vmatpush2.bf16.xpose.msra.mxu0 0
        %2776 = vmatprep.mubr.bf16.mxu0 0
        %2777 = vmatmul.mubr.bf16.gmra.mxu0 %v2739
        %v2778 = vpop.f32.mrf.mxu0
        %v2779 = vadd.f32 0.0, %v2778
        %v2780 = vpop.f32.mrf.mxu0
        %v2781 = vpop.f32.mrf.mxu0
        %v2782 = vadd.f32 0.0, %v2781
        %v2783 = vpop.f32.mrf.mxu0
        %2784 = vdwg.mxu0
        %2785 = vrot.lane.b32.xlu0 %v1115, 32
        %v2786 = vpop.permute.xlu0 %2785
        %2787 = vrot.lane.b32.xlu0 %v1119, 32
        %v2788 = vpop.permute.xlu0 %2787
        %v2790 = vsel %vm1125, %v2786, 0
        %v2793 = vsel %vm1125, %v2788, 0
        %2795 = vmatprep.subr.bf16.mxu0 0
        %2796 = vmatpush1.bf16.xpose.msra.mxu0 0
        %2797 = vmatprep.subr.bf16.mxu0 0
        %2798 = vmatpush1.bf16.xpose.msra.mxu0 0
        %2799 = vmatprep.subr.bf16.mxu0 0
        %2800 = vmatpush1.bf16.xpose.msra.mxu0 0
        %2801 = vmatprep.subr.bf16.mxu0 0
        %2802 = vmatpush1.bf16.xpose.msra.mxu0 0
        %2803 = vmatprep.subr.bf16.mxu0 0
        %2804 = vmatpush1.bf16.xpose.msra.mxu0 0
        %2805 = vmatprep.subr.bf16.mxu0 0
        %2806 = vmatpush1.bf16.xpose.msra.mxu0 0
        %2807 = vmatprep.subr.bf16.mxu0 0
        %2808 = vmatpush1.bf16.xpose.msra.mxu0 0
        %2809 = vmatprep.subr.bf16.mxu0 0
        %2810 = vmatpush1.bf16.xpose.msra.mxu0 %v2793
        %2811 = vmatprep.subr.bf16.mxu0 0
        %2812 = vmatpush2.bf16.xpose.msra.mxu0 0
        %2813 = vmatprep.subr.bf16.mxu0 0
        %2814 = vmatpush2.bf16.xpose.msra.mxu0 0
        %2815 = vmatprep.subr.bf16.mxu0 0
        %2816 = vmatpush2.bf16.xpose.msra.mxu0 0
        %2817 = vmatprep.subr.bf16.mxu0 0
        %2818 = vmatpush2.bf16.xpose.msra.mxu0 0
        %2819 = vmatprep.subr.bf16.mxu0 0
        %2820 = vmatpush2.bf16.xpose.msra.mxu0 0
        %2821 = vmatprep.subr.bf16.mxu0 0
        %2822 = vmatpush2.bf16.xpose.msra.mxu0 0
        %2823 = vmatprep.subr.bf16.mxu0 0
        %2824 = vmatpush2.bf16.xpose.msra.mxu0 0
        %2825 = vmatprep.subr.bf16.mxu0 0
        %2826 = vmatpush2.bf16.xpose.msra.mxu0 0
        %2827 = vmatprep.mubr.bf16.mxu0 0
        %2828 = vmatmul.mubr.bf16.gmra.mxu0 %v2790
        %v2829 = vpop.f32.mrf.mxu0
        %v2830 = vadd.f32 0.0, %v2829
        %v2831 = vpop.f32.mrf.mxu0
        %v2832 = vpop.f32.mrf.mxu0
        %v2833 = vadd.f32 0.0, %v2832
        %v2834 = vpop.f32.mrf.mxu0
        %2835 = vdwg.mxu0
        %2836 = vrot.lane.b32.xlu0 %v1116, 32
        %v2837 = vpop.permute.xlu0 %2836
        %2838 = vrot.lane.b32.xlu0 %v1120, 32
        %v2839 = vpop.permute.xlu0 %2838
        %v2841 = vsel %vm1125, %v2837, 0
        %v2844 = vsel %vm1125, %v2839, 0
        %2846 = vmatprep.subr.bf16.mxu0 0
        %2847 = vmatpush1.bf16.xpose.msra.mxu0 0
        %2848 = vmatprep.subr.bf16.mxu0 0
        %2849 = vmatpush1.bf16.xpose.msra.mxu0 0
        %2850 = vmatprep.subr.bf16.mxu0 0
        %2851 = vmatpush1.bf16.xpose.msra.mxu0 0
        %2852 = vmatprep.subr.bf16.mxu0 0
        %2853 = vmatpush1.bf16.xpose.msra.mxu0 0
        %2854 = vmatprep.subr.bf16.mxu0 0
        %2855 = vmatpush1.bf16.xpose.msra.mxu0 0
        %2856 = vmatprep.subr.bf16.mxu0 0
        %2857 = vmatpush1.bf16.xpose.msra.mxu0 0
        %2858 = vmatprep.subr.bf16.mxu0 0
        %2859 = vmatpush1.bf16.xpose.msra.mxu0 0
        %2860 = vmatprep.subr.bf16.mxu0 0
        %2861 = vmatpush1.bf16.xpose.msra.mxu0 %v2844
        %2862 = vmatprep.subr.bf16.mxu0 0
        %2863 = vmatpush2.bf16.xpose.msra.mxu0 0
        %2864 = vmatprep.subr.bf16.mxu0 0
        %2865 = vmatpush2.bf16.xpose.msra.mxu0 0
        %2866 = vmatprep.subr.bf16.mxu0 0
        %2867 = vmatpush2.bf16.xpose.msra.mxu0 0
        %2868 = vmatprep.subr.bf16.mxu0 0
        %2869 = vmatpush2.bf16.xpose.msra.mxu0 0
        %2870 = vmatprep.subr.bf16.mxu0 0
        %2871 = vmatpush2.bf16.xpose.msra.mxu0 0
        %2872 = vmatprep.subr.bf16.mxu0 0
        %2873 = vmatpush2.bf16.xpose.msra.mxu0 0
        %2874 = vmatprep.subr.bf16.mxu0 0
        %2875 = vmatpush2.bf16.xpose.msra.mxu0 0
        %2876 = vmatprep.subr.bf16.mxu0 0
        %2877 = vmatpush2.bf16.xpose.msra.mxu0 0
        %2878 = vmatprep.mubr.bf16.mxu0 0
        %2879 = vmatmul.mubr.bf16.gmra.mxu0 %v2841
        %v2880 = vpop.f32.mrf.mxu0
        %v2881 = vadd.f32 0.0, %v2880
        %v2882 = vpop.f32.mrf.mxu0
        %v2883 = vpop.f32.mrf.mxu0
        %v2884 = vadd.f32 0.0, %v2883
        %v2885 = vpop.f32.mrf.mxu0
        %2886 = vdwg.mxu0
        %v2887 = vlaneseq
        %v2888 = vshrl.u32 %v2887, 7
        %v2889 = vsub.s32 3, %v2888
        %v2890 = vrot.slane %v1318, %v2889
        %v2891 = vlaneseq
        %v2892 = vshrl.u32 %v2891, 7
        %v2893 = vsub.s32 3, %v2892
        %v2894 = vrot.slane %v1319, %v2893
        %v2895 = vlaneseq
        %v2896 = vshrl.u32 %v2895, 7
        %v2897 = vsub.s32 3, %v2896
        %v2898 = vrot.slane %v1320, %v2897
        %v2899 = vlaneseq
        %v2900 = vshrl.u32 %v2899, 7
        %v2901 = vsub.s32 3, %v2900
        %v2902 = vrot.slane %v1321, %v2901
        %vm2903 = vcmp.eq.s32.totalorder %v2890, 1
        %vm2904 = vcmp.eq.s32.totalorder %v2894, 1
        %vm2905 = vcmp.eq.s32.totalorder %v2898, 1
        %vm2906 = vcmp.eq.s32.totalorder %v2902, 1
        %vm2907 = vmand %vm2903, %vm1344
        %vm2908 = vmand %vm2903, %vm1345
        %vm2909 = vmand %vm2904, %vm1344
        %vm2910 = vmand %vm2904, %vm1345
        %vm2911 = vmand %vm2905, %vm1344
        %vm2912 = vmand %vm2905, %vm1345
        %vm2913 = vmand %vm2906, %vm1344
        %vm2914 = vmand %vm2906, %vm1345
        %v2915 = vsel %vm2907, -1e+30, %v2728
        %v2916 = vsel %vm2908, -1e+30, %v2731
        %v2917 = vsel %vm2909, -1e+30, %v2779
        %v2918 = vsel %vm2910, -1e+30, %v2782
        %v2919 = vsel %vm2911, -1e+30, %v2830
        %v2920 = vsel %vm2912, -1e+30, %v2833
        %v2921 = vsel %vm2913, -1e+30, %v2881
        %v2922 = vsel %vm2914, -1e+30, %v2884
        %v2923 = vsel %vm1362, %v2915, -inf
        %2924 = vmax.xlane.f32.xlu0 %v2923
        %v2925 = vpop.xlane.xlu0 %2924
        %v2926 = vsel %vm1362, %v2916, -inf
        %2927 = vmax.xlane.f32.xlu0 %v2926
        %v2928 = vpop.xlane.xlu0 %2927
        %v2929 = vsel %vm1362, %v2917, -inf
        %2930 = vmax.xlane.f32.xlu0 %v2929
        %v2931 = vpop.xlane.xlu0 %2930
        %v2932 = vsel %vm1362, %v2918, -inf
        %2933 = vmax.xlane.f32.xlu0 %v2932
        %v2934 = vpop.xlane.xlu0 %2933
        %v2935 = vsel %vm1362, %v2919, -inf
        %2936 = vmax.xlane.f32.xlu0 %v2935
        %v2937 = vpop.xlane.xlu0 %2936
        %v2938 = vsel %vm1362, %v2920, -inf
        %2939 = vmax.xlane.f32.xlu0 %v2938
        %v2940 = vpop.xlane.xlu0 %2939
        %v2941 = vsel %vm1362, %v2921, -inf
        %2942 = vmax.xlane.f32.xlu0 %v2941
        %v2943 = vpop.xlane.xlu0 %2942
        %v2944 = vsel %vm1362, %v2922, -inf
        %2945 = vmax.xlane.f32.xlu0 %v2944
        %v2946 = vpop.xlane.xlu0 %2945
        %v2947 = vsub.f32 %v2915, %v2925
        %v2948 = vsub.f32 %v2916, %v2928
        %v2949 = vsub.f32 %v2917, %v2931
        %v2950 = vsub.f32 %v2918, %v2934
        %v2951 = vsub.f32 %v2919, %v2937
        %v2952 = vsub.f32 %v2920, %v2940
        %v2953 = vsub.f32 %v2921, %v2943
        %v2954 = vsub.f32 %v2922, %v2946
        %v2955 = vmul.f32 %v2947, 1.442695
        %v2956 = vpow.pop %v2955
        %v2957 = vmul.f32 %v2948, 1.442695
        %v2958 = vpow.pop %v2957
        %v2959 = vmul.f32 %v2949, 1.442695
        %v2960 = vpow.pop %v2959
        %v2961 = vmul.f32 %v2950, 1.442695
        %v2962 = vpow.pop %v2961
        %v2963 = vmul.f32 %v2951, 1.442695
        %v2964 = vpow.pop %v2963
        %v2965 = vmul.f32 %v2952, 1.442695
        %v2966 = vpow.pop %v2965
        %v2967 = vmul.f32 %v2953, 1.442695
        %v2968 = vpow.pop %v2967
        %v2969 = vmul.f32 %v2954, 1.442695
        %v2970 = vpow.pop %v2969
        %v2971 = vsel %vm1362, %v2956, 0.0
        %2972 = vadd.xlane.f32.xlu0 %v2971
        %v2973 = vpop.xlane.xlu0 %2972
        %v2974 = vsel %vm1362, %v2958, 0.0
        %2975 = vadd.xlane.f32.xlu0 %v2974
        %v2976 = vpop.xlane.xlu0 %2975
        %v2977 = vsel %vm1362, %v2960, 0.0
        %2978 = vadd.xlane.f32.xlu0 %v2977
        %v2979 = vpop.xlane.xlu0 %2978
        %v2980 = vsel %vm1362, %v2962, 0.0
        %2981 = vadd.xlane.f32.xlu0 %v2980
        %v2982 = vpop.xlane.xlu0 %2981
        %v2983 = vsel %vm1362, %v2964, 0.0
        %2984 = vadd.xlane.f32.xlu0 %v2983
        %v2985 = vpop.xlane.xlu0 %2984
        %v2986 = vsel %vm1362, %v2966, 0.0
        %2987 = vadd.xlane.f32.xlu0 %v2986
        %v2988 = vpop.xlane.xlu0 %2987
        %v2989 = vsel %vm1362, %v2968, 0.0
        %2990 = vadd.xlane.f32.xlu0 %v2989
        %v2991 = vpop.xlane.xlu0 %2990
        %v2992 = vsel %vm1362, %v2970, 0.0
        %2993 = vadd.xlane.f32.xlu0 %v2992
        %v2994 = vpop.xlane.xlu0 %2993
        %v2995 = vrcp.pop %v2973
        %v2996 = vrcp.pop %v2976
        %v2997 = vrcp.pop %v2979
        %v2998 = vrcp.pop %v2982
        %v2999 = vrcp.pop %v2985
        %v3000 = vrcp.pop %v2988
        %v3001 = vrcp.pop %v2991
        %v3002 = vrcp.pop %v2994
        %v3003 = vmul.f32 %v2956, %v2995
        %v3004 = vmul.f32 %v2958, %v2996
        %v3005 = vmul.f32 %v2960, %v2997
        %v3006 = vmul.f32 %v2962, %v2998
        %v3007 = vmul.f32 %v2964, %v2999
        %v3008 = vmul.f32 %v2966, %v3000
        %v3009 = vmul.f32 %v2968, %v3001
        %v3010 = vmul.f32 %v2970, %v3002
        %v3011 = vpack.c.bf16 %v3004, %v3003
        %v3012 = vpack.c.bf16 %v3006, %v3005
        %v3013 = vpack.c.bf16 %v3008, %v3007
        %v3014 = vpack.c.bf16 %v3010, %v3009
        %3015 = vrot.lane.b32.xlu0 %v1121, 32
        %v3016 = vpop.permute.xlu0 %3015
        %v3019 = vsel %vm1362, %v3011, 0
        %3021 = vmatprep.subr.bf16.mxu0 0
        %3022 = vmatpush1.bf16.msra.mxu0 0
        %3023 = vmatprep.subr.bf16.mxu0 0
        %3024 = vmatpush1.bf16.msra.mxu0 0
        %3025 = vmatprep.subr.bf16.mxu0 0
        %3026 = vmatpush1.bf16.msra.mxu0 0
        %3027 = vmatprep.subr.bf16.mxu0 0
        %3028 = vmatpush1.bf16.msra.mxu0 0
        %3029 = vmatprep.subr.bf16.mxu0 0
        %3030 = vmatpush1.bf16.msra.mxu0 0
        %3031 = vmatprep.subr.bf16.mxu0 0
        %3032 = vmatpush1.bf16.msra.mxu0 0
        %3033 = vmatprep.subr.bf16.mxu0 0
        %3034 = vmatpush1.bf16.msra.mxu0 0
        %3035 = vmatprep.subr.bf16.mxu0 0
        %3036 = vmatpush1.bf16.msra.mxu0 %v3016
        %3037 = vmatprep.subr.bf16.mxu0 0
        %3038 = vmatpush2.bf16.msra.mxu0 0
        %3039 = vmatprep.subr.bf16.mxu0 0
        %3040 = vmatpush2.bf16.msra.mxu0 0
        %3041 = vmatprep.subr.bf16.mxu0 0
        %3042 = vmatpush2.bf16.msra.mxu0 0
        %3043 = vmatprep.subr.bf16.mxu0 0
        %3044 = vmatpush2.bf16.msra.mxu0 0
        %3045 = vmatprep.subr.bf16.mxu0 0
        %3046 = vmatpush2.bf16.msra.mxu0 0
        %3047 = vmatprep.subr.bf16.mxu0 0
        %3048 = vmatpush2.bf16.msra.mxu0 0
        %3049 = vmatprep.subr.bf16.mxu0 0
        %3050 = vmatpush2.bf16.msra.mxu0 0
        %3051 = vmatprep.subr.bf16.mxu0 0
        %3052 = vmatpush2.bf16.msra.mxu0 0
        %3053 = vmatprep.mubr.bf16.mxu0 0
        %3054 = vmatmul.mubr.bf16.gmra.mxu0 %v3019
        %v3055 = vpop.f32.mrf.mxu0
        %v3056 = vadd.f32 0.0, %v3055
        %v3057 = vpop.f32.mrf.mxu0
        %v3058 = vpop.f32.mrf.mxu0
        %v3059 = vadd.f32 0.0, %v3058
        %v3060 = vpop.f32.mrf.mxu0
        %3061 = vdwg.mxu0
        %3062 = vrot.lane.b32.xlu0 %v1122, 32
        %v3063 = vpop.permute.xlu0 %3062
        %v3066 = vsel %vm1362, %v3012, 0
        %3068 = vmatprep.subr.bf16.mxu0 0
        %3069 = vmatpush1.bf16.msra.mxu0 0
        %3070 = vmatprep.subr.bf16.mxu0 0
        %3071 = vmatpush1.bf16.msra.mxu0 0
        %3072 = vmatprep.subr.bf16.mxu0 0
        %3073 = vmatpush1.bf16.msra.mxu0 0
        %3074 = vmatprep.subr.bf16.mxu0 0
        %3075 = vmatpush1.bf16.msra.mxu0 0
        %3076 = vmatprep.subr.bf16.mxu0 0
        %3077 = vmatpush1.bf16.msra.mxu0 0
        %3078 = vmatprep.subr.bf16.mxu0 0
        %3079 = vmatpush1.bf16.msra.mxu0 0
        %3080 = vmatprep.subr.bf16.mxu0 0
        %3081 = vmatpush1.bf16.msra.mxu0 0
        %3082 = vmatprep.subr.bf16.mxu0 0
        %3083 = vmatpush1.bf16.msra.mxu0 %v3063
        %3084 = vmatprep.subr.bf16.mxu0 0
        %3085 = vmatpush2.bf16.msra.mxu0 0
        %3086 = vmatprep.subr.bf16.mxu0 0
        %3087 = vmatpush2.bf16.msra.mxu0 0
        %3088 = vmatprep.subr.bf16.mxu0 0
        %3089 = vmatpush2.bf16.msra.mxu0 0
        %3090 = vmatprep.subr.bf16.mxu0 0
        %3091 = vmatpush2.bf16.msra.mxu0 0
        %3092 = vmatprep.subr.bf16.mxu0 0
        %3093 = vmatpush2.bf16.msra.mxu0 0
        %3094 = vmatprep.subr.bf16.mxu0 0
        %3095 = vmatpush2.bf16.msra.mxu0 0
        %3096 = vmatprep.subr.bf16.mxu0 0
        %3097 = vmatpush2.bf16.msra.mxu0 0
        %3098 = vmatprep.subr.bf16.mxu0 0
        %3099 = vmatpush2.bf16.msra.mxu0 0
        %3100 = vmatprep.mubr.bf16.mxu0 0
        %3101 = vmatmul.mubr.bf16.gmra.mxu0 %v3066
        %v3102 = vpop.f32.mrf.mxu0
        %v3103 = vadd.f32 0.0, %v3102
        %v3104 = vpop.f32.mrf.mxu0
        %v3105 = vpop.f32.mrf.mxu0
        %v3106 = vadd.f32 0.0, %v3105
        %v3107 = vpop.f32.mrf.mxu0
        %3108 = vdwg.mxu0
        %3109 = vrot.lane.b32.xlu0 %v1123, 32
        %v3110 = vpop.permute.xlu0 %3109
        %v3113 = vsel %vm1362, %v3013, 0
        %3115 = vmatprep.subr.bf16.mxu0 0
        %3116 = vmatpush1.bf16.msra.mxu0 0
        %3117 = vmatprep.subr.bf16.mxu0 0
        %3118 = vmatpush1.bf16.msra.mxu0 0
        %3119 = vmatprep.subr.bf16.mxu0 0
        %3120 = vmatpush1.bf16.msra.mxu0 0
        %3121 = vmatprep.subr.bf16.mxu0 0
        %3122 = vmatpush1.bf16.msra.mxu0 0
        %3123 = vmatprep.subr.bf16.mxu0 0
        %3124 = vmatpush1.bf16.msra.mxu0 0
        %3125 = vmatprep.subr.bf16.mxu0 0
        %3126 = vmatpush1.bf16.msra.mxu0 0
        %3127 = vmatprep.subr.bf16.mxu0 0
        %3128 = vmatpush1.bf16.msra.mxu0 0
        %3129 = vmatprep.subr.bf16.mxu0 0
        %3130 = vmatpush1.bf16.msra.mxu0 %v3110
        %3131 = vmatprep.subr.bf16.mxu0 0
        %3132 = vmatpush2.bf16.msra.mxu0 0
        %3133 = vmatprep.subr.bf16.mxu0 0
        %3134 = vmatpush2.bf16.msra.mxu0 0
        %3135 = vmatprep.subr.bf16.mxu0 0
        %3136 = vmatpush2.bf16.msra.mxu0 0
        %3137 = vmatprep.subr.bf16.mxu0 0
        %3138 = vmatpush2.bf16.msra.mxu0 0
        %3139 = vmatprep.subr.bf16.mxu0 0
        %3140 = vmatpush2.bf16.msra.mxu0 0
        %3141 = vmatprep.subr.bf16.mxu0 0
        %3142 = vmatpush2.bf16.msra.mxu0 0
        %3143 = vmatprep.subr.bf16.mxu0 0
        %3144 = vmatpush2.bf16.msra.mxu0 0
        %3145 = vmatprep.subr.bf16.mxu0 0
        %3146 = vmatpush2.bf16.msra.mxu0 0
        %3147 = vmatprep.mubr.bf16.mxu0 0
        %3148 = vmatmul.mubr.bf16.gmra.mxu0 %v3113
        %v3149 = vpop.f32.mrf.mxu0
        %v3150 = vadd.f32 0.0, %v3149
        %v3151 = vpop.f32.mrf.mxu0
        %v3152 = vpop.f32.mrf.mxu0
        %v3153 = vadd.f32 0.0, %v3152
        %v3154 = vpop.f32.mrf.mxu0
        %3155 = vdwg.mxu0
        %3156 = vrot.lane.b32.xlu0 %v1124, 32
        %v3157 = vpop.permute.xlu0 %3156
        %v3160 = vsel %vm1362, %v3014, 0
        %3162 = vmatprep.subr.bf16.mxu0 0
        %3163 = vmatpush1.bf16.msra.mxu0 0
        %3164 = vmatprep.subr.bf16.mxu0 0
        %3165 = vmatpush1.bf16.msra.mxu0 0
        %3166 = vmatprep.subr.bf16.mxu0 0
        %3167 = vmatpush1.bf16.msra.mxu0 0
        %3168 = vmatprep.subr.bf16.mxu0 0
        %3169 = vmatpush1.bf16.msra.mxu0 0
        %3170 = vmatprep.subr.bf16.mxu0 0
        %3171 = vmatpush1.bf16.msra.mxu0 0
        %3172 = vmatprep.subr.bf16.mxu0 0
        %3173 = vmatpush1.bf16.msra.mxu0 0
        %3174 = vmatprep.subr.bf16.mxu0 0
        %3175 = vmatpush1.bf16.msra.mxu0 0
        %3176 = vmatprep.subr.bf16.mxu0 0
        %3177 = vmatpush1.bf16.msra.mxu0 %v3157
        %3178 = vmatprep.subr.bf16.mxu0 0
        %3179 = vmatpush2.bf16.msra.mxu0 0
        %3180 = vmatprep.subr.bf16.mxu0 0
        %3181 = vmatpush2.bf16.msra.mxu0 0
        %3182 = vmatprep.subr.bf16.mxu0 0
        %3183 = vmatpush2.bf16.msra.mxu0 0
        %3184 = vmatprep.subr.bf16.mxu0 0
        %3185 = vmatpush2.bf16.msra.mxu0 0
        %3186 = vmatprep.subr.bf16.mxu0 0
        %3187 = vmatpush2.bf16.msra.mxu0 0
        %3188 = vmatprep.subr.bf16.mxu0 0
        %3189 = vmatpush2.bf16.msra.mxu0 0
        %3190 = vmatprep.subr.bf16.mxu0 0
        %3191 = vmatpush2.bf16.msra.mxu0 0
        %3192 = vmatprep.subr.bf16.mxu0 0
        %3193 = vmatpush2.bf16.msra.mxu0 0
        %3194 = vmatprep.mubr.bf16.mxu0 0
        %3195 = vmatmul.mubr.bf16.gmra.mxu0 %v3160
        %v3196 = vpop.f32.mrf.mxu0
        %v3197 = vadd.f32 0.0, %v3196
        %v3198 = vpop.f32.mrf.mxu0
        %v3199 = vpop.f32.mrf.mxu0
        %v3200 = vadd.f32 0.0, %v3199
        %v3201 = vpop.f32.mrf.mxu0
        %3202 = vdwg.mxu0
        %3211 = vrot.lane.b32.xlu0 %v2013, 32
        %v3212 = vpop.permute.xlu0 %3211
        %3213 = vrot.lane.b32.xlu0 %v2016, 32
        %v3214 = vpop.permute.xlu0 %3213
        %3215 = vrot.lane.b32.xlu0 %v2061, 32
        %v3216 = vpop.permute.xlu0 %3215
        %3217 = vrot.lane.b32.xlu0 %v2064, 32
        %v3218 = vpop.permute.xlu0 %3217
        %3219 = vrot.lane.b32.xlu0 %v2109, 32
        %v3220 = vpop.permute.xlu0 %3219
        %3221 = vrot.lane.b32.xlu0 %v2112, 32
        %v3222 = vpop.permute.xlu0 %3221
        %3223 = vrot.lane.b32.xlu0 %v2157, 32
        %v3224 = vpop.permute.xlu0 %3223
        %3225 = vrot.lane.b32.xlu0 %v2160, 32
        %v3226 = vpop.permute.xlu0 %3225
        %3243 = vrot.lane.b32.xlu0 %v2536, 64
        %v3244 = vpop.permute.xlu0 %3243
        %3245 = vrot.lane.b32.xlu0 %v2539, 64
        %v3246 = vpop.permute.xlu0 %3245
        %3247 = vrot.lane.b32.xlu0 %v2583, 64
        %v3248 = vpop.permute.xlu0 %3247
        %3249 = vrot.lane.b32.xlu0 %v2586, 64
        %v3250 = vpop.permute.xlu0 %3249
        %3251 = vrot.lane.b32.xlu0 %v2630, 64
        %v3252 = vpop.permute.xlu0 %3251
        %3253 = vrot.lane.b32.xlu0 %v2633, 64
        %v3254 = vpop.permute.xlu0 %3253
        %3255 = vrot.lane.b32.xlu0 %v2677, 64
        %v3256 = vpop.permute.xlu0 %3255
        %3257 = vrot.lane.b32.xlu0 %v2680, 64
        %v3258 = vpop.permute.xlu0 %3257
        %3275 = vrot.lane.b32.xlu0 %v3056, 96
        %v3276 = vpop.permute.xlu0 %3275
        %3277 = vrot.lane.b32.xlu0 %v3059, 96
        %v3278 = vpop.permute.xlu0 %3277
        %3279 = vrot.lane.b32.xlu0 %v3103, 96
        %v3280 = vpop.permute.xlu0 %3279
        %3281 = vrot.lane.b32.xlu0 %v3106, 96
        %v3282 = vpop.permute.xlu0 %3281
        %3283 = vrot.lane.b32.xlu0 %v3150, 96
        %v3284 = vpop.permute.xlu0 %3283
        %3285 = vrot.lane.b32.xlu0 %v3153, 96
        %v3286 = vpop.permute.xlu0 %3285
        %3287 = vrot.lane.b32.xlu0 %v3197, 96
        %v3288 = vpop.permute.xlu0 %3287
        %3289 = vrot.lane.b32.xlu0 %v3200, 96
        %v3290 = vpop.permute.xlu0 %3289
        %v3299 = vsel %vm1125, %v1493, %v3212
        %v3300 = vsel %vm1125, %v1496, %v3214
        %v3301 = vsel %vm1125, %v1537, %v3216
        %v3302 = vsel %vm1125, %v1540, %v3218
        %v3303 = vsel %vm1125, %v1581, %v3220
        %v3304 = vsel %vm1125, %v1584, %v3222
        %v3305 = vsel %vm1125, %v1625, %v3224
        %v3306 = vsel %vm1125, %v1628, %v3226
        %vm3307 = vcmask 523264
        %v3308 = vsel %vm3307, %v3299, %v3244
        %v3309 = vsel %vm3307, %v3300, %v3246
        %v3310 = vsel %vm3307, %v3301, %v3248
        %v3311 = vsel %vm3307, %v3302, %v3250
        %v3312 = vsel %vm3307, %v3303, %v3252
        %v3313 = vsel %vm3307, %v3304, %v3254
        %v3314 = vsel %vm3307, %v3305, %v3256
        %v3315 = vsel %vm3307, %v3306, %v3258
        %vm3316 = vcmask 785408
        %v3317 = vsel %vm3316, %v3308, %v3276
        %v3318 = vsel %vm3316, %v3309, %v3278
        %v3319 = vsel %vm3316, %v3310, %v3280
        %v3320 = vsel %vm3316, %v3311, %v3282
        %v3321 = vsel %vm3316, %v3312, %v3284
        %v3322 = vsel %vm3316, %v3313, %v3286
        %v3323 = vsel %vm3316, %v3314, %v3288
        %v3324 = vsel %vm3316, %v3315, %v3290
        %v3325 = vpack.c.bf16 %v3318, %v3317
        %v3326 = vpack.c.bf16 %v3320, %v3319
        %v3327 = vpack.c.bf16 %v3322, %v3321
        %v3328 = vpack.c.bf16 %v3324, %v3323
        %v3329 = vld [vmem:[#allocation5] sm:$0xf]
        %v3330 = vld [vmem:[#allocation5 + $0x4] sm:$0xf]
        %v3331 = vld [vmem:[#allocation5 + $0x8] sm:$0xf]
        %v3332 = vld [vmem:[#allocation5 + $0xc] sm:$0xf]
        %v3333 = vld [vmem:[#allocation5 + $0x10] sm:$0xf]
        %v3334 = vld [vmem:[#allocation5 + $0x14] sm:$0xf]
        %v3335 = vld [vmem:[#allocation5 + $0x18] sm:$0xf]
        %v3336 = vld [vmem:[#allocation5 + $0x1c] sm:$0xf]
        %v3337 = vld [vmem:[#allocation5 + $0x20] sm:$0xf]
        %v3338 = vld [vmem:[#allocation5 + $0x24] sm:$0xf]
        %v3339 = vld [vmem:[#allocation5 + $0x28] sm:$0xf]
        %v3340 = vld [vmem:[#allocation5 + $0x2c] sm:$0xf]
        %v3341 = vld [vmem:[#allocation5 + $0x30] sm:$0xf]
        %v3342 = vld [vmem:[#allocation5 + $0x34] sm:$0xf]
        %v3343 = vld [vmem:[#allocation5 + $0x38] sm:$0xf]
        %v3344 = vld [vmem:[#allocation5 + $0x3c] sm:$0xf]
        %v3345 = vld [vmem:[%s6] sm:$0x1]
        %v3347 = vlaneseq
        %v3348 = vshrl.u32 %v3347, 7
        %v3349 = vsub.s32 0, %v3348
        %v3350 = vrot.slane %v3345, %v3349
        %v3368 = vunpack.c.l.b16 %v3329
        %v3369 = vunpack.c.l.b16 %v3330
        %v3370 = vunpack.c.l.b16 %v3331
        %v3371 = vunpack.c.l.b16 %v3332
        %v3372 = vunpack.c.l.b16 %v3333
        %v3373 = vunpack.c.l.b16 %v3334
        %v3374 = vunpack.c.l.b16 %v3335
        %v3375 = vunpack.c.l.b16 %v3336
        %v3376 = vunpack.c.l.b16 %v3337
        %v3377 = vunpack.c.l.b16 %v3338
        %v3378 = vunpack.c.l.b16 %v3339
        %v3379 = vunpack.c.l.b16 %v3340
        %v3380 = vunpack.c.l.b16 %v3341
        %v3381 = vunpack.c.l.b16 %v3342
        %v3382 = vunpack.c.l.b16 %v3343
        %v3383 = vunpack.c.l.b16 %v3344
        %v3384 = vpack.c.b16 %v3369, %v3368
        %v3385 = vpack.c.b16 %v3371, %v3370
        %v3386 = vpack.c.b16 %v3373, %v3372
        %v3387 = vpack.c.b16 %v3375, %v3374
        %v3388 = vpack.c.b16 %v3377, %v3376
        %v3389 = vpack.c.b16 %v3379, %v3378
        %v3390 = vpack.c.b16 %v3381, %v3380
        %v3391 = vpack.c.b16 %v3383, %v3382
        %3400 = vmatprep.subr.bf16.mxu0 0
        %3401 = vmatpush1.bf16.msra.mxu0 %v3391
        %3402 = vmatprep.subr.bf16.mxu0 0
        %3403 = vmatpush1.bf16.msra.mxu0 %v3390
        %3404 = vmatprep.subr.bf16.mxu0 0
        %3405 = vmatpush1.bf16.msra.mxu0 %v3389
        %3406 = vmatprep.subr.bf16.mxu0 0
        %3407 = vmatpush1.bf16.msra.mxu0 %v3388
        %3408 = vmatprep.subr.bf16.mxu0 0
        %3409 = vmatpush1.bf16.msra.mxu0 %v3387
        %3410 = vmatprep.subr.bf16.mxu0 0
        %3411 = vmatpush1.bf16.msra.mxu0 %v3386
        %3412 = vmatprep.subr.bf16.mxu0 0
        %3413 = vmatpush1.bf16.msra.mxu0 %v3385
        %3414 = vmatprep.subr.bf16.mxu0 0
        %3415 = vmatpush1.bf16.msra.mxu0 %v3384
        %3416 = vmatprep.subr.bf16.mxu0 0
        %3417 = vmatpush2.bf16.msra.mxu0 0
        %3418 = vmatprep.subr.bf16.mxu0 0
        %3419 = vmatpush2.bf16.msra.mxu0 0
        %3420 = vmatprep.subr.bf16.mxu0 0
        %3421 = vmatpush2.bf16.msra.mxu0 0
        %3422 = vmatprep.subr.bf16.mxu0 0
        %3423 = vmatpush2.bf16.msra.mxu0 0
        %3424 = vmatprep.subr.bf16.mxu0 0
        %3425 = vmatpush2.bf16.msra.mxu0 0
        %3426 = vmatprep.subr.bf16.mxu0 0
        %3427 = vmatpush2.bf16.msra.mxu0 0
        %3428 = vmatprep.subr.bf16.mxu0 0
        %3429 = vmatpush2.bf16.msra.mxu0 0
        %3430 = vmatprep.subr.bf16.mxu0 0
        %3431 = vmatpush2.bf16.msra.mxu0 0
        %3432 = vmatprep.mubr.bf16.mxu0 0
        %3433 = vmatmul.mubr.bf16.gmra.mxu0 %v3325
        %v3434 = vpop.f32.mrf.mxu0
        %v3435 = vadd.f32 %v3350, %v3434
        %v3436 = vpop.f32.mrf.mxu0
        %v3437 = vpop.f32.mrf.mxu0
        %v3438 = vadd.f32 %v3350, %v3437
        %v3439 = vpop.f32.mrf.mxu0
        %3440 = vmatprep.mubr.bf16.mxu0 0
        %3441 = vmatmul.mubr.bf16.gmra.mxu0 %v3326
        %v3442 = vpop.f32.mrf.mxu0
        %v3443 = vadd.f32 %v3350, %v3442
        %v3444 = vpop.f32.mrf.mxu0
        %v3445 = vpop.f32.mrf.mxu0
        %v3446 = vadd.f32 %v3350, %v3445
        %v3447 = vpop.f32.mrf.mxu0
        %3448 = vmatprep.mubr.bf16.mxu0 0
        %3449 = vmatmul.mubr.bf16.gmra.mxu0 %v3327
        %v3450 = vpop.f32.mrf.mxu0
        %v3451 = vadd.f32 %v3350, %v3450
        %v3452 = vpop.f32.mrf.mxu0
        %v3453 = vpop.f32.mrf.mxu0
        %v3454 = vadd.f32 %v3350, %v3453
        %v3455 = vpop.f32.mrf.mxu0
        %3456 = vmatprep.mubr.bf16.mxu0 0
        %3457 = vmatmul.mubr.bf16.gmra.mxu0 %v3328
        %v3458 = vpop.f32.mrf.mxu0
        %v3459 = vadd.f32 %v3350, %v3458
        %v3460 = vpop.f32.mrf.mxu0
        %v3461 = vpop.f32.mrf.mxu0
        %v3462 = vadd.f32 %v3350, %v3461
        %v3463 = vpop.f32.mrf.mxu0
        %3464 = vdwg.mxu0
        %v3465 = vadd.f32 %v3435, %v759
        %v3466 = vadd.f32 %v3438, %v760
        %v3467 = vadd.f32 %v3443, %v761
        %v3468 = vadd.f32 %v3446, %v762
        %v3469 = vadd.f32 %v3451, %v763
        %v3470 = vadd.f32 %v3454, %v764
        %v3471 = vadd.f32 %v3459, %v765
        %v3472 = vadd.f32 %v3462, %v766
        %v3473 = vpack.c.bf16 %v3466, %v3465
        %v3474 = vpack.c.bf16 %v3468, %v3467
        %v3475 = vpack.c.bf16 %v3470, %v3469
        %v3476 = vpack.c.bf16 %v3472, %v3471
        %v3477 = vld [vmem:[#allocation7] sm:$0xf]
        %v3478 = vld [vmem:[#allocation7 + $0x4] sm:$0xf]
        %v3479 = vld [vmem:[#allocation7 + $0x8] sm:$0xf]
        %v3480 = vld [vmem:[#allocation7 + $0xc] sm:$0xf]
        %v3481 = vld [vmem:[#allocation7 + $0x10] sm:$0xf]
        %v3482 = vld [vmem:[#allocation7 + $0x14] sm:$0xf]
        %v3483 = vld [vmem:[#allocation7 + $0x18] sm:$0xf]
        %v3484 = vld [vmem:[#allocation7 + $0x1c] sm:$0xf]
        %v3485 = vld [vmem:[#allocation7 + $0x20] sm:$0xf]
        %v3486 = vld [vmem:[#allocation7 + $0x24] sm:$0xf]
        %v3487 = vld [vmem:[#allocation7 + $0x28] sm:$0xf]
        %v3488 = vld [vmem:[#allocation7 + $0x2c] sm:$0xf]
        %v3489 = vld [vmem:[#allocation7 + $0x30] sm:$0xf]
        %v3490 = vld [vmem:[#allocation7 + $0x34] sm:$0xf]
        %v3491 = vld [vmem:[#allocation7 + $0x38] sm:$0xf]
        %v3492 = vld [vmem:[#allocation7 + $0x3c] sm:$0xf]
        %v3493 = vld [vmem:[%s8] sm:$0x1]
        %v3495 = vlaneseq
        %v3496 = vshrl.u32 %v3495, 7
        %v3497 = vsub.s32 0, %v3496
        %v3498 = vrot.slane %v3493, %v3497
        %v3516 = vunpack.c.l.b16 %v3477
        %v3517 = vunpack.c.l.b16 %v3478
        %v3518 = vunpack.c.l.b16 %v3479
        %v3519 = vunpack.c.l.b16 %v3480
        %v3520 = vunpack.c.l.b16 %v3481
        %v3521 = vunpack.c.l.b16 %v3482
        %v3522 = vunpack.c.l.b16 %v3483
        %v3523 = vunpack.c.l.b16 %v3484
        %v3524 = vunpack.c.l.b16 %v3485
        %v3525 = vunpack.c.l.b16 %v3486
        %v3526 = vunpack.c.l.b16 %v3487
        %v3527 = vunpack.c.l.b16 %v3488
        %v3528 = vunpack.c.l.b16 %v3489
        %v3529 = vunpack.c.l.b16 %v3490
        %v3530 = vunpack.c.l.b16 %v3491
        %v3531 = vunpack.c.l.b16 %v3492
        %v3532 = vpack.c.b16 %v3517, %v3516
        %v3533 = vpack.c.b16 %v3519, %v3518
        %v3534 = vpack.c.b16 %v3521, %v3520
        %v3535 = vpack.c.b16 %v3523, %v3522
        %v3536 = vpack.c.b16 %v3525, %v3524
        %v3537 = vpack.c.b16 %v3527, %v3526
        %v3538 = vpack.c.b16 %v3529, %v3528
        %v3539 = vpack.c.b16 %v3531, %v3530
        %3548 = vmatprep.subr.bf16.mxu0 0
        %3549 = vmatpush1.bf16.msra.mxu0 %v3539
        %3550 = vmatprep.subr.bf16.mxu0 0
        %3551 = vmatpush1.bf16.msra.mxu0 %v3538
        %3552 = vmatprep.subr.bf16.mxu0 0
        %3553 = vmatpush1.bf16.msra.mxu0 %v3537
        %3554 = vmatprep.subr.bf16.mxu0 0
        %3555 = vmatpush1.bf16.msra.mxu0 %v3536
        %3556 = vmatprep.subr.bf16.mxu0 0
        %3557 = vmatpush1.bf16.msra.mxu0 %v3535
        %3558 = vmatprep.subr.bf16.mxu0 0
        %3559 = vmatpush1.bf16.msra.mxu0 %v3534
        %3560 = vmatprep.subr.bf16.mxu0 0
        %3561 = vmatpush1.bf16.msra.mxu0 %v3533
        %3562 = vmatprep.subr.bf16.mxu0 0
        %3563 = vmatpush1.bf16.msra.mxu0 %v3532
        %3564 = vmatprep.subr.bf16.mxu0 0
        %3565 = vmatpush2.bf16.msra.mxu0 0
        %3566 = vmatprep.subr.bf16.mxu0 0
        %3567 = vmatpush2.bf16.msra.mxu0 0
        %3568 = vmatprep.subr.bf16.mxu0 0
        %3569 = vmatpush2.bf16.msra.mxu0 0
        %3570 = vmatprep.subr.bf16.mxu0 0
        %3571 = vmatpush2.bf16.msra.mxu0 0
        %3572 = vmatprep.subr.bf16.mxu0 0
        %3573 = vmatpush2.bf16.msra.mxu0 0
        %3574 = vmatprep.subr.bf16.mxu0 0
        %3575 = vmatpush2.bf16.msra.mxu0 0
        %3576 = vmatprep.subr.bf16.mxu0 0
        %3577 = vmatpush2.bf16.msra.mxu0 0
        %3578 = vmatprep.subr.bf16.mxu0 0
        %3579 = vmatpush2.bf16.msra.mxu0 0
        %3580 = vmatprep.mubr.bf16.mxu0 0
        %3581 = vmatmul.mubr.bf16.gmra.mxu0 %v3473
        %v3582 = vpop.f32.mrf.mxu0
        %v3583 = vadd.f32 %v3498, %v3582
        %v3584 = vpop.f32.mrf.mxu0
        %v3585 = vpop.f32.mrf.mxu0
        %v3586 = vadd.f32 %v3498, %v3585
        %v3587 = vpop.f32.mrf.mxu0
        %3588 = vmatprep.mubr.bf16.mxu0 0
        %3589 = vmatmul.mubr.bf16.gmra.mxu0 %v3474
        %v3590 = vpop.f32.mrf.mxu0
        %v3591 = vadd.f32 %v3498, %v3590
        %v3592 = vpop.f32.mrf.mxu0
        %v3593 = vpop.f32.mrf.mxu0
        %v3594 = vadd.f32 %v3498, %v3593
        %v3595 = vpop.f32.mrf.mxu0
        %3596 = vmatprep.mubr.bf16.mxu0 0
        %3597 = vmatmul.mubr.bf16.gmra.mxu0 %v3475
        %v3598 = vpop.f32.mrf.mxu0
        %v3599 = vadd.f32 %v3498, %v3598
        %v3600 = vpop.f32.mrf.mxu0
        %v3601 = vpop.f32.mrf.mxu0
        %v3602 = vadd.f32 %v3498, %v3601
        %v3603 = vpop.f32.mrf.mxu0
        %3604 = vmatprep.mubr.bf16.mxu0 0
        %3605 = vmatmul.mubr.bf16.gmra.mxu0 %v3476
        %v3606 = vpop.f32.mrf.mxu0
        %v3607 = vadd.f32 %v3498, %v3606
        %v3608 = vpop.f32.mrf.mxu0
        %v3609 = vpop.f32.mrf.mxu0
        %v3610 = vadd.f32 %v3498, %v3609
        %v3611 = vpop.f32.mrf.mxu0
        %3612 = vdwg.mxu0
        %v3613 = vpack.c.bf16 %v768, %v767
        %v3614 = vpack.c.bf16 %v770, %v769
        %v3615 = vpack.c.bf16 %v772, %v771
        %v3616 = vpack.c.bf16 %v774, %v773
        %v3617 = vld [vmem:[#allocation8] sm:$0xff]
        %v3618 = vld [vmem:[#allocation8 + $0x8] sm:$0xff]
        %v3619 = vld [vmem:[#allocation8 + $0x10] sm:$0xff]
        %v3620 = vld [vmem:[#allocation8 + $0x18] sm:$0xff]
        %v3621 = vld [vmem:[#allocation8 + $0x20] sm:$0xff]
        %v3622 = vld [vmem:[#allocation8 + $0x28] sm:$0xff]
        %v3623 = vld [vmem:[#allocation8 + $0x30] sm:$0xff]
        %v3624 = vld [vmem:[#allocation8 + $0x38] sm:$0xff]
        %v3625 = vld [vmem:[#allocation8 + $0x40] sm:$0xff]
        %v3626 = vld [vmem:[#allocation8 + $0x48] sm:$0xff]
        %v3627 = vld [vmem:[#allocation8 + $0x50] sm:$0xff]
        %v3628 = vld [vmem:[#allocation8 + $0x58] sm:$0xff]
        %v3629 = vld [vmem:[#allocation8 + $0x60] sm:$0xff]
        %v3630 = vld [vmem:[#allocation8 + $0x68] sm:$0xff]
        %v3631 = vld [vmem:[#allocation8 + $0x70] sm:$0xff]
        %v3632 = vld [vmem:[#allocation8 + $0x78] sm:$0xff]
        %v3633 = vld [vmem:[%s10] sm:$0x3]
        %v3635 = vlaneseq
        %v3636 = vshrl.u32 %v3635, 7
        %v3637 = vsub.s32 0, %v3636
        %v3638 = vrot.slane %v3633, %v3637
        %v3639 = vlaneseq
        %v3640 = vshrl.u32 %v3639, 7
        %v3641 = vsub.s32 1, %v3640
        %v3642 = vrot.slane %v3633, %v3641
        %v3661 = vunpack.c.l.b16 %v3617
        %v3662 = vunpack.c.h.b16 %v3617
        %v3663 = vunpack.c.l.b16 %v3618
        %v3664 = vunpack.c.h.b16 %v3618
        %v3665 = vunpack.c.l.b16 %v3619
        %v3666 = vunpack.c.h.b16 %v3619
        %v3667 = vunpack.c.l.b16 %v3620
        %v3668 = vunpack.c.h.b16 %v3620
        %v3669 = vunpack.c.l.b16 %v3621
        %v3670 = vunpack.c.h.b16 %v3621
        %v3671 = vunpack.c.l.b16 %v3622
        %v3672 = vunpack.c.h.b16 %v3622
        %v3673 = vunpack.c.l.b16 %v3623
        %v3674 = vunpack.c.h.b16 %v3623
        %v3675 = vunpack.c.l.b16 %v3624
        %v3676 = vunpack.c.h.b16 %v3624
        %v3677 = vunpack.c.l.b16 %v3625
        %v3678 = vunpack.c.h.b16 %v3625
        %v3679 = vunpack.c.l.b16 %v3626
        %v3680 = vunpack.c.h.b16 %v3626
        %v3681 = vunpack.c.l.b16 %v3627
        %v3682 = vunpack.c.h.b16 %v3627
        %v3683 = vunpack.c.l.b16 %v3628
        %v3684 = vunpack.c.h.b16 %v3628
        %v3685 = vunpack.c.l.b16 %v3629
        %v3686 = vunpack.c.h.b16 %v3629
        %v3687 = vunpack.c.l.b16 %v3630
        %v3688 = vunpack.c.h.b16 %v3630
        %v3689 = vunpack.c.l.b16 %v3631
        %v3690 = vunpack.c.h.b16 %v3631
        %v3691 = vunpack.c.l.b16 %v3632
        %v3692 = vunpack.c.h.b16 %v3632
        %v3693 = vpack.c.b16 %v3663, %v3661
        %v3694 = vpack.c.b16 %v3664, %v3662
        %v3695 = vpack.c.b16 %v3667, %v3665
        %v3696 = vpack.c.b16 %v3668, %v3666
        %v3697 = vpack.c.b16 %v3671, %v3669
        %v3698 = vpack.c.b16 %v3672, %v3670
        %v3699 = vpack.c.b16 %v3675, %v3673
        %v3700 = vpack.c.b16 %v3676, %v3674
        %v3701 = vpack.c.b16 %v3679, %v3677
        %v3702 = vpack.c.b16 %v3680, %v3678
        %v3703 = vpack.c.b16 %v3683, %v3681
        %v3704 = vpack.c.b16 %v3684, %v3682
        %v3705 = vpack.c.b16 %v3687, %v3685
        %v3706 = vpack.c.b16 %v3688, %v3686
        %v3707 = vpack.c.b16 %v3691, %v3689
        %v3708 = vpack.c.b16 %v3692, %v3690
        %3725 = vmatprep.subr.bf16.mxu0 %v3708
        %3726 = vmatpush1.bf16.msra.mxu0 %v3707
        %3727 = vmatprep.subr.bf16.mxu0 %v3706
        %3728 = vmatpush1.bf16.msra.mxu0 %v3705
        %3729 = vmatprep.subr.bf16.mxu0 %v3704
        %3730 = vmatpush1.bf16.msra.mxu0 %v3703
        %3731 = vmatprep.subr.bf16.mxu0 %v3702
        %3732 = vmatpush1.bf16.msra.mxu0 %v3701
        %3733 = vmatprep.subr.bf16.mxu0 %v3700
        %3734 = vmatpush1.bf16.msra.mxu0 %v3699
        %3735 = vmatprep.subr.bf16.mxu0 %v3698
        %3736 = vmatpush1.bf16.msra.mxu0 %v3697
        %3737 = vmatprep.subr.bf16.mxu0 %v3696
        %3738 = vmatpush1.bf16.msra.mxu0 %v3695
        %3739 = vmatprep.subr.bf16.mxu0 %v3694
        %3740 = vmatpush1.bf16.msra.mxu0 %v3693
        %3741 = vmatprep.subr.bf16.mxu0 0
        %3742 = vmatpush2.bf16.msra.mxu0 0
        %3743 = vmatprep.subr.bf16.mxu0 0
        %3744 = vmatpush2.bf16.msra.mxu0 0
        %3745 = vmatprep.subr.bf16.mxu0 0
        %3746 = vmatpush2.bf16.msra.mxu0 0
        %3747 = vmatprep.subr.bf16.mxu0 0
        %3748 = vmatpush2.bf16.msra.mxu0 0
        %3749 = vmatprep.subr.bf16.mxu0 0
        %3750 = vmatpush2.bf16.msra.mxu0 0
        %3751 = vmatprep.subr.bf16.mxu0 0
        %3752 = vmatpush2.bf16.msra.mxu0 0
        %3753 = vmatprep.subr.bf16.mxu0 0
        %3754 = vmatpush2.bf16.msra.mxu0 0
        %3755 = vmatprep.subr.bf16.mxu0 0
        %3756 = vmatpush2.bf16.msra.mxu0 0
        %3757 = vmatprep.mubr.bf16.mxu0 0
        %3758 = vmatmul.mubr.bf16.gmra.mxu0 %v3613
        %v3759 = vpop.f32.mrf.mxu0
        %v3760 = vadd.f32 %v3638, %v3759
        %v3761 = vpop.f32.mrf.mxu0
        %v3762 = vadd.f32 %v3642, %v3761
        %v3763 = vpop.f32.mrf.mxu0
        %v3764 = vadd.f32 %v3638, %v3763
        %v3765 = vpop.f32.mrf.mxu0
        %v3766 = vadd.f32 %v3642, %v3765
        %3767 = vmatprep.mubr.bf16.mxu0 0
        %3768 = vmatmul.mubr.bf16.gmra.mxu0 %v3614
        %v3769 = vpop.f32.mrf.mxu0
        %v3770 = vadd.f32 %v3638, %v3769
        %v3771 = vpop.f32.mrf.mxu0
        %v3772 = vadd.f32 %v3642, %v3771
        %v3773 = vpop.f32.mrf.mxu0
        %v3774 = vadd.f32 %v3638, %v3773
        %v3775 = vpop.f32.mrf.mxu0
        %v3776 = vadd.f32 %v3642, %v3775
        %3777 = vmatprep.mubr.bf16.mxu0 0
        %3778 = vmatmul.mubr.bf16.gmra.mxu0 %v3615
        %v3779 = vpop.f32.mrf.mxu0
        %v3780 = vadd.f32 %v3638, %v3779
        %v3781 = vpop.f32.mrf.mxu0
        %v3782 = vadd.f32 %v3642, %v3781
        %v3783 = vpop.f32.mrf.mxu0
        %v3784 = vadd.f32 %v3638, %v3783
        %v3785 = vpop.f32.mrf.mxu0
        %v3786 = vadd.f32 %v3642, %v3785
        %3787 = vmatprep.mubr.bf16.mxu0 0
        %3788 = vmatmul.mubr.bf16.gmra.mxu0 %v3616
        %v3789 = vpop.f32.mrf.mxu0
        %v3790 = vadd.f32 %v3638, %v3789
        %v3791 = vpop.f32.mrf.mxu0
        %v3792 = vadd.f32 %v3642, %v3791
        %v3793 = vpop.f32.mrf.mxu0
        %v3794 = vadd.f32 %v3638, %v3793
        %v3795 = vpop.f32.mrf.mxu0
        %v3796 = vadd.f32 %v3642, %v3795
        %3797 = vdwg.mxu0
        %v3798 = vmul.f32 %v3583, 0.17677669
        %v3799 = vmul.f32 %v3586, 0.17677669
        %v3800 = vmul.f32 %v3591, 0.17677669
        %v3801 = vmul.f32 %v3594, 0.17677669
        %v3802 = vmul.f32 %v3599, 0.17677669
        %v3803 = vmul.f32 %v3602, 0.17677669
        %v3804 = vmul.f32 %v3607, 0.17677669
        %v3805 = vmul.f32 %v3610, 0.17677669
        %v3806 = vpack.c.bf16 %v3799, %v3798
        %v3807 = vpack.c.bf16 %v3801, %v3800
        %v3808 = vpack.c.bf16 %v3803, %v3802
        %v3809 = vpack.c.bf16 %v3805, %v3804
        %v3810 = vpack.c.bf16 %v3764, %v3760
        %v3811 = vpack.c.bf16 %v3774, %v3770
        %v3812 = vpack.c.bf16 %v3784, %v3780
        %v3813 = vpack.c.bf16 %v3794, %v3790
        %v3814 = vpack.c.bf16 %v3766, %v3762
        %v3815 = vpack.c.bf16 %v3776, %v3772
        %v3816 = vpack.c.bf16 %v3786, %v3782
        %v3817 = vpack.c.bf16 %v3796, %v3792
        %v3819 = vsel %vm1125, %v3806, 0
        %v3822 = vsel %vm1125, %v3810, 0
        %3824 = vmatprep.subr.bf16.mxu0 0
        %3825 = vmatpush1.bf16.xpose.msra.mxu0 0
        %3826 = vmatprep.subr.bf16.mxu0 0
        %3827 = vmatpush1.bf16.xpose.msra.mxu0 0
        %3828 = vmatprep.subr.bf16.mxu0 0
        %3829 = vmatpush1.bf16.xpose.msra.mxu0 0
        %3830 = vmatprep.subr.bf16.mxu0 0
        %3831 = vmatpush1.bf16.xpose.msra.mxu0 0
        %3832 = vmatprep.subr.bf16.mxu0 0
        %3833 = vmatpush1.bf16.xpose.msra.mxu0 0
        %3834 = vmatprep.subr.bf16.mxu0 0
        %3835 = vmatpush1.bf16.xpose.msra.mxu0 0
        %3836 = vmatprep.subr.bf16.mxu0 0
        %3837 = vmatpush1.bf16.xpose.msra.mxu0 0
        %3838 = vmatprep.subr.bf16.mxu0 0
        %3839 = vmatpush1.bf16.xpose.msra.mxu0 %v3822
        %3840 = vmatprep.subr.bf16.mxu0 0
        %3841 = vmatpush2.bf16.xpose.msra.mxu0 0
        %3842 = vmatprep.subr.bf16.mxu0 0
        %3843 = vmatpush2.bf16.xpose.msra.mxu0 0
        %3844 = vmatprep.subr.bf16.mxu0 0
        %3845 = vmatpush2.bf16.xpose.msra.mxu0 0
        %3846 = vmatprep.subr.bf16.mxu0 0
        %3847 = vmatpush2.bf16.xpose.msra.mxu0 0
        %3848 = vmatprep.subr.bf16.mxu0 0
        %3849 = vmatpush2.bf16.xpose.msra.mxu0 0
        %3850 = vmatprep.subr.bf16.mxu0 0
        %3851 = vmatpush2.bf16.xpose.msra.mxu0 0
        %3852 = vmatprep.subr.bf16.mxu0 0
        %3853 = vmatpush2.bf16.xpose.msra.mxu0 0
        %3854 = vmatprep.subr.bf16.mxu0 0
        %3855 = vmatpush2.bf16.xpose.msra.mxu0 0
        %3856 = vmatprep.mubr.bf16.mxu0 0
        %3857 = vmatmul.mubr.bf16.gmra.mxu0 %v3819
        %v3858 = vpop.f32.mrf.mxu0
        %v3859 = vadd.f32 0.0, %v3858
        %v3860 = vpop.f32.mrf.mxu0
        %v3861 = vpop.f32.mrf.mxu0
        %v3862 = vadd.f32 0.0, %v3861
        %v3863 = vpop.f32.mrf.mxu0
        %3864 = vdwg.mxu0
        %v3866 = vsel %vm1125, %v3807, 0
        %v3869 = vsel %vm1125, %v3811, 0
        %3871 = vmatprep.subr.bf16.mxu0 0
        %3872 = vmatpush1.bf16.xpose.msra.mxu0 0
        %3873 = vmatprep.subr.bf16.mxu0 0
        %3874 = vmatpush1.bf16.xpose.msra.mxu0 0
        %3875 = vmatprep.subr.bf16.mxu0 0
        %3876 = vmatpush1.bf16.xpose.msra.mxu0 0
        %3877 = vmatprep.subr.bf16.mxu0 0
        %3878 = vmatpush1.bf16.xpose.msra.mxu0 0
        %3879 = vmatprep.subr.bf16.mxu0 0
        %3880 = vmatpush1.bf16.xpose.msra.mxu0 0
        %3881 = vmatprep.subr.bf16.mxu0 0
        %3882 = vmatpush1.bf16.xpose.msra.mxu0 0
        %3883 = vmatprep.subr.bf16.mxu0 0
        %3884 = vmatpush1.bf16.xpose.msra.mxu0 0
        %3885 = vmatprep.subr.bf16.mxu0 0
        %3886 = vmatpush1.bf16.xpose.msra.mxu0 %v3869
        %3887 = vmatprep.subr.bf16.mxu0 0
        %3888 = vmatpush2.bf16.xpose.msra.mxu0 0
        %3889 = vmatprep.subr.bf16.mxu0 0
        %3890 = vmatpush2.bf16.xpose.msra.mxu0 0
        %3891 = vmatprep.subr.bf16.mxu0 0
        %3892 = vmatpush2.bf16.xpose.msra.mxu0 0
        %3893 = vmatprep.subr.bf16.mxu0 0
        %3894 = vmatpush2.bf16.xpose.msra.mxu0 0
        %3895 = vmatprep.subr.bf16.mxu0 0
        %3896 = vmatpush2.bf16.xpose.msra.mxu0 0
        %3897 = vmatprep.subr.bf16.mxu0 0
        %3898 = vmatpush2.bf16.xpose.msra.mxu0 0
        %3899 = vmatprep.subr.bf16.mxu0 0
        %3900 = vmatpush2.bf16.xpose.msra.mxu0 0
        %3901 = vmatprep.subr.bf16.mxu0 0
        %3902 = vmatpush2.bf16.xpose.msra.mxu0 0
        %3903 = vmatprep.mubr.bf16.mxu0 0
        %3904 = vmatmul.mubr.bf16.gmra.mxu0 %v3866
        %v3905 = vpop.f32.mrf.mxu0
        %v3906 = vadd.f32 0.0, %v3905
        %v3907 = vpop.f32.mrf.mxu0
        %v3908 = vpop.f32.mrf.mxu0
        %v3909 = vadd.f32 0.0, %v3908
        %v3910 = vpop.f32.mrf.mxu0
        %3911 = vdwg.mxu0
        %v3913 = vsel %vm1125, %v3808, 0
        %v3916 = vsel %vm1125, %v3812, 0
        %3918 = vmatprep.subr.bf16.mxu0 0
        %3919 = vmatpush1.bf16.xpose.msra.mxu0 0
        %3920 = vmatprep.subr.bf16.mxu0 0
        %3921 = vmatpush1.bf16.xpose.msra.mxu0 0
        %3922 = vmatprep.subr.bf16.mxu0 0
        %3923 = vmatpush1.bf16.xpose.msra.mxu0 0
        %3924 = vmatprep.subr.bf16.mxu0 0
        %3925 = vmatpush1.bf16.xpose.msra.mxu0 0
        %3926 = vmatprep.subr.bf16.mxu0 0
        %3927 = vmatpush1.bf16.xpose.msra.mxu0 0
        %3928 = vmatprep.subr.bf16.mxu0 0
        %3929 = vmatpush1.bf16.xpose.msra.mxu0 0
        %3930 = vmatprep.subr.bf16.mxu0 0
        %3931 = vmatpush1.bf16.xpose.msra.mxu0 0
        %3932 = vmatprep.subr.bf16.mxu0 0
        %3933 = vmatpush1.bf16.xpose.msra.mxu0 %v3916
        %3934 = vmatprep.subr.bf16.mxu0 0
        %3935 = vmatpush2.bf16.xpose.msra.mxu0 0
        %3936 = vmatprep.subr.bf16.mxu0 0
        %3937 = vmatpush2.bf16.xpose.msra.mxu0 0
        %3938 = vmatprep.subr.bf16.mxu0 0
        %3939 = vmatpush2.bf16.xpose.msra.mxu0 0
        %3940 = vmatprep.subr.bf16.mxu0 0
        %3941 = vmatpush2.bf16.xpose.msra.mxu0 0
        %3942 = vmatprep.subr.bf16.mxu0 0
        %3943 = vmatpush2.bf16.xpose.msra.mxu0 0
        %3944 = vmatprep.subr.bf16.mxu0 0
        %3945 = vmatpush2.bf16.xpose.msra.mxu0 0
        %3946 = vmatprep.subr.bf16.mxu0 0
        %3947 = vmatpush2.bf16.xpose.msra.mxu0 0
        %3948 = vmatprep.subr.bf16.mxu0 0
        %3949 = vmatpush2.bf16.xpose.msra.mxu0 0
        %3950 = vmatprep.mubr.bf16.mxu0 0
        %3951 = vmatmul.mubr.bf16.gmra.mxu0 %v3913
        %v3952 = vpop.f32.mrf.mxu0
        %v3953 = vadd.f32 0.0, %v3952
        %v3954 = vpop.f32.mrf.mxu0
        %v3955 = vpop.f32.mrf.mxu0
        %v3956 = vadd.f32 0.0, %v3955
        %v3957 = vpop.f32.mrf.mxu0
        %3958 = vdwg.mxu0
        %v3960 = vsel %vm1125, %v3809, 0
        %v3963 = vsel %vm1125, %v3813, 0
        %3965 = vmatprep.subr.bf16.mxu0 0
        %3966 = vmatpush1.bf16.xpose.msra.mxu0 0
        %3967 = vmatprep.subr.bf16.mxu0 0
        %3968 = vmatpush1.bf16.xpose.msra.mxu0 0
        %3969 = vmatprep.subr.bf16.mxu0 0
        %3970 = vmatpush1.bf16.xpose.msra.mxu0 0
        %3971 = vmatprep.subr.bf16.mxu0 0
        %3972 = vmatpush1.bf16.xpose.msra.mxu0 0
        %3973 = vmatprep.subr.bf16.mxu0 0
        %3974 = vmatpush1.bf16.xpose.msra.mxu0 0
        %3975 = vmatprep.subr.bf16.mxu0 0
        %3976 = vmatpush1.bf16.xpose.msra.mxu0 0
        %3977 = vmatprep.subr.bf16.mxu0 0
        %3978 = vmatpush1.bf16.xpose.msra.mxu0 0
        %3979 = vmatprep.subr.bf16.mxu0 0
        %3980 = vmatpush1.bf16.xpose.msra.mxu0 %v3963
        %3981 = vmatprep.subr.bf16.mxu0 0
        %3982 = vmatpush2.bf16.xpose.msra.mxu0 0
        %3983 = vmatprep.subr.bf16.mxu0 0
        %3984 = vmatpush2.bf16.xpose.msra.mxu0 0
        %3985 = vmatprep.subr.bf16.mxu0 0
        %3986 = vmatpush2.bf16.xpose.msra.mxu0 0
        %3987 = vmatprep.subr.bf16.mxu0 0
        %3988 = vmatpush2.bf16.xpose.msra.mxu0 0
        %3989 = vmatprep.subr.bf16.mxu0 0
        %3990 = vmatpush2.bf16.xpose.msra.mxu0 0
        %3991 = vmatprep.subr.bf16.mxu0 0
        %3992 = vmatpush2.bf16.xpose.msra.mxu0 0
        %3993 = vmatprep.subr.bf16.mxu0 0
        %3994 = vmatpush2.bf16.xpose.msra.mxu0 0
        %3995 = vmatprep.subr.bf16.mxu0 0
        %3996 = vmatpush2.bf16.xpose.msra.mxu0 0
        %3997 = vmatprep.mubr.bf16.mxu0 0
        %3998 = vmatmul.mubr.bf16.gmra.mxu0 %v3960
        %v3999 = vpop.f32.mrf.mxu0
        %v4000 = vadd.f32 0.0, %v3999
        %v4001 = vpop.f32.mrf.mxu0
        %v4002 = vpop.f32.mrf.mxu0
        %v4003 = vadd.f32 0.0, %v4002
        %v4004 = vpop.f32.mrf.mxu0
        %4005 = vdwg.mxu0
        %v4006 = vsel %vm1338, -1e+30, %v3859
        %v4007 = vsel %vm1338, -1e+30, %v3862
        %v4008 = vsel %vm1339, -1e+30, %v3906
        %v4009 = vsel %vm1339, -1e+30, %v3909
        %v4010 = vsel %vm1340, -1e+30, %v3953
        %v4011 = vsel %vm1340, -1e+30, %v3956
        %v4012 = vsel %vm1341, -1e+30, %v4000
        %v4013 = vsel %vm1341, -1e+30, %v4003
        %v4014 = vsel %vm1362, %v4006, -inf
        %4015 = vmax.xlane.f32.xlu0 %v4014
        %v4016 = vpop.xlane.xlu0 %4015
        %v4017 = vsel %vm1362, %v4007, -inf
        %4018 = vmax.xlane.f32.xlu0 %v4017
        %v4019 = vpop.xlane.xlu0 %4018
        %v4020 = vsel %vm1362, %v4008, -inf
        %4021 = vmax.xlane.f32.xlu0 %v4020
        %v4022 = vpop.xlane.xlu0 %4021
        %v4023 = vsel %vm1362, %v4009, -inf
        %4024 = vmax.xlane.f32.xlu0 %v4023
        %v4025 = vpop.xlane.xlu0 %4024
        %v4026 = vsel %vm1362, %v4010, -inf
        %4027 = vmax.xlane.f32.xlu0 %v4026
        %v4028 = vpop.xlane.xlu0 %4027
        %v4029 = vsel %vm1362, %v4011, -inf
        %4030 = vmax.xlane.f32.xlu0 %v4029
        %v4031 = vpop.xlane.xlu0 %4030
        %v4032 = vsel %vm1362, %v4012, -inf
        %4033 = vmax.xlane.f32.xlu0 %v4032
        %v4034 = vpop.xlane.xlu0 %4033
        %v4035 = vsel %vm1362, %v4013, -inf
        %4036 = vmax.xlane.f32.xlu0 %v4035
        %v4037 = vpop.xlane.xlu0 %4036
        %v4038 = vsub.f32 %v4006, %v4016
        %v4039 = vsub.f32 %v4007, %v4019
        %v4040 = vsub.f32 %v4008, %v4022
        %v4041 = vsub.f32 %v4009, %v4025
        %v4042 = vsub.f32 %v4010, %v4028
        %v4043 = vsub.f32 %v4011, %v4031
        %v4044 = vsub.f32 %v4012, %v4034
        %v4045 = vsub.f32 %v4013, %v4037
        %v4046 = vmul.f32 %v4038, 1.442695
        %v4047 = vpow.pop %v4046
        %v4048 = vmul.f32 %v4039, 1.442695
        %v4049 = vpow.pop %v4048
        %v4050 = vmul.f32 %v4040, 1.442695
        %v4051 = vpow.pop %v4050
        %v4052 = vmul.f32 %v4041, 1.442695
        %v4053 = vpow.pop %v4052
        %v4054 = vmul.f32 %v4042, 1.442695
        %v4055 = vpow.pop %v4054
        %v4056 = vmul.f32 %v4043, 1.442695
        %v4057 = vpow.pop %v4056
        %v4058 = vmul.f32 %v4044, 1.442695
        %v4059 = vpow.pop %v4058
        %v4060 = vmul.f32 %v4045, 1.442695
        %v4061 = vpow.pop %v4060
        %v4062 = vsel %vm1362, %v4047, 0.0
        %4063 = vadd.xlane.f32.xlu0 %v4062
        %v4064 = vpop.xlane.xlu0 %4063
        %v4065 = vsel %vm1362, %v4049, 0.0
        %4066 = vadd.xlane.f32.xlu0 %v4065
        %v4067 = vpop.xlane.xlu0 %4066
        %v4068 = vsel %vm1362, %v4051, 0.0
        %4069 = vadd.xlane.f32.xlu0 %v4068
        %v4070 = vpop.xlane.xlu0 %4069
        %v4071 = vsel %vm1362, %v4053, 0.0
        %4072 = vadd.xlane.f32.xlu0 %v4071
        %v4073 = vpop.xlane.xlu0 %4072
        %v4074 = vsel %vm1362, %v4055, 0.0
        %4075 = vadd.xlane.f32.xlu0 %v4074
        %v4076 = vpop.xlane.xlu0 %4075
        %v4077 = vsel %vm1362, %v4057, 0.0
        %4078 = vadd.xlane.f32.xlu0 %v4077
        %v4079 = vpop.xlane.xlu0 %4078
        %v4080 = vsel %vm1362, %v4059, 0.0
        %4081 = vadd.xlane.f32.xlu0 %v4080
        %v4082 = vpop.xlane.xlu0 %4081
        %v4083 = vsel %vm1362, %v4061, 0.0
        %4084 = vadd.xlane.f32.xlu0 %v4083
        %v4085 = vpop.xlane.xlu0 %4084
        %v4086 = vrcp.pop %v4064
        %v4087 = vrcp.pop %v4067
        %v4088 = vrcp.pop %v4070
        %v4089 = vrcp.pop %v4073
        %v4090 = vrcp.pop %v4076
        %v4091 = vrcp.pop %v4079
        %v4092 = vrcp.pop %v4082
        %v4093 = vrcp.pop %v4085
        %v4094 = vmul.f32 %v4047, %v4086
        %v4095 = vmul.f32 %v4049, %v4087
        %v4096 = vmul.f32 %v4051, %v4088
        %v4097 = vmul.f32 %v4053, %v4089
        %v4098 = vmul.f32 %v4055, %v4090
        %v4099 = vmul.f32 %v4057, %v4091
        %v4100 = vmul.f32 %v4059, %v4092
        %v4101 = vmul.f32 %v4061, %v4093
        %v4102 = vpack.c.bf16 %v4095, %v4094
        %v4103 = vpack.c.bf16 %v4097, %v4096
        %v4104 = vpack.c.bf16 %v4099, %v4098
        %v4105 = vpack.c.bf16 %v4101, %v4100
        %v4107 = vsel %vm1362, %v4102, 0
        %4109 = vmatprep.subr.bf16.mxu0 0
        %4110 = vmatpush1.bf16.msra.mxu0 0
        %4111 = vmatprep.subr.bf16.mxu0 0
        %4112 = vmatpush1.bf16.msra.mxu0 0
        %4113 = vmatprep.subr.bf16.mxu0 0
        %4114 = vmatpush1.bf16.msra.mxu0 0
        %4115 = vmatprep.subr.bf16.mxu0 0
        %4116 = vmatpush1.bf16.msra.mxu0 0
        %4117 = vmatprep.subr.bf16.mxu0 0
        %4118 = vmatpush1.bf16.msra.mxu0 0
        %4119 = vmatprep.subr.bf16.mxu0 0
        %4120 = vmatpush1.bf16.msra.mxu0 0
        %4121 = vmatprep.subr.bf16.mxu0 0
        %4122 = vmatpush1.bf16.msra.mxu0 0
        %4123 = vmatprep.subr.bf16.mxu0 0
        %4124 = vmatpush1.bf16.msra.mxu0 %v3814
        %4125 = vmatprep.subr.bf16.mxu0 0
        %4126 = vmatpush2.bf16.msra.mxu0 0
        %4127 = vmatprep.subr.bf16.mxu0 0
        %4128 = vmatpush2.bf16.msra.mxu0 0
        %4129 = vmatprep.subr.bf16.mxu0 0
        %4130 = vmatpush2.bf16.msra.mxu0 0
        %4131 = vmatprep.subr.bf16.mxu0 0
        %4132 = vmatpush2.bf16.msra.mxu0 0
        %4133 = vmatprep.subr.bf16.mxu0 0
        %4134 = vmatpush2.bf16.msra.mxu0 0
        %4135 = vmatprep.subr.bf16.mxu0 0
        %4136 = vmatpush2.bf16.msra.mxu0 0
        %4137 = vmatprep.subr.bf16.mxu0 0
        %4138 = vmatpush2.bf16.msra.mxu0 0
        %4139 = vmatprep.subr.bf16.mxu0 0
        %4140 = vmatpush2.bf16.msra.mxu0 0
        %4141 = vmatprep.mubr.bf16.mxu0 0
        %4142 = vmatmul.mubr.bf16.gmra.mxu0 %v4107
        %v4143 = vpop.f32.mrf.mxu0
        %v4144 = vadd.f32 0.0, %v4143
        %v4145 = vpop.f32.mrf.mxu0
        %v4146 = vpop.f32.mrf.mxu0
        %v4147 = vadd.f32 0.0, %v4146
        %v4148 = vpop.f32.mrf.mxu0
        %4149 = vdwg.mxu0
        %v4151 = vsel %vm1362, %v4103, 0
        %4153 = vmatprep.subr.bf16.mxu0 0
        %4154 = vmatpush1.bf16.msra.mxu0 0
        %4155 = vmatprep.subr.bf16.mxu0 0
        %4156 = vmatpush1.bf16.msra.mxu0 0
        %4157 = vmatprep.subr.bf16.mxu0 0
        %4158 = vmatpush1.bf16.msra.mxu0 0
        %4159 = vmatprep.subr.bf16.mxu0 0
        %4160 = vmatpush1.bf16.msra.mxu0 0
        %4161 = vmatprep.subr.bf16.mxu0 0
        %4162 = vmatpush1.bf16.msra.mxu0 0
        %4163 = vmatprep.subr.bf16.mxu0 0
        %4164 = vmatpush1.bf16.msra.mxu0 0
        %4165 = vmatprep.subr.bf16.mxu0 0
        %4166 = vmatpush1.bf16.msra.mxu0 0
        %4167 = vmatprep.subr.bf16.mxu0 0
        %4168 = vmatpush1.bf16.msra.mxu0 %v3815
        %4169 = vmatprep.subr.bf16.mxu0 0
        %4170 = vmatpush2.bf16.msra.mxu0 0
        %4171 = vmatprep.subr.bf16.mxu0 0
        %4172 = vmatpush2.bf16.msra.mxu0 0
        %4173 = vmatprep.subr.bf16.mxu0 0
        %4174 = vmatpush2.bf16.msra.mxu0 0
        %4175 = vmatprep.subr.bf16.mxu0 0
        %4176 = vmatpush2.bf16.msra.mxu0 0
        %4177 = vmatprep.subr.bf16.mxu0 0
        %4178 = vmatpush2.bf16.msra.mxu0 0
        %4179 = vmatprep.subr.bf16.mxu0 0
        %4180 = vmatpush2.bf16.msra.mxu0 0
        %4181 = vmatprep.subr.bf16.mxu0 0
        %4182 = vmatpush2.bf16.msra.mxu0 0
        %4183 = vmatprep.subr.bf16.mxu0 0
        %4184 = vmatpush2.bf16.msra.mxu0 0
        %4185 = vmatprep.mubr.bf16.mxu0 0
        %4186 = vmatmul.mubr.bf16.gmra.mxu0 %v4151
        %v4187 = vpop.f32.mrf.mxu0
        %v4188 = vadd.f32 0.0, %v4187
        %v4189 = vpop.f32.mrf.mxu0
        %v4190 = vpop.f32.mrf.mxu0
        %v4191 = vadd.f32 0.0, %v4190
        %v4192 = vpop.f32.mrf.mxu0
        %4193 = vdwg.mxu0
        %v4195 = vsel %vm1362, %v4104, 0
        %4197 = vmatprep.subr.bf16.mxu0 0
        %4198 = vmatpush1.bf16.msra.mxu0 0
        %4199 = vmatprep.subr.bf16.mxu0 0
        %4200 = vmatpush1.bf16.msra.mxu0 0
        %4201 = vmatprep.subr.bf16.mxu0 0
        %4202 = vmatpush1.bf16.msra.mxu0 0
        %4203 = vmatprep.subr.bf16.mxu0 0
        %4204 = vmatpush1.bf16.msra.mxu0 0
        %4205 = vmatprep.subr.bf16.mxu0 0
        %4206 = vmatpush1.bf16.msra.mxu0 0
        %4207 = vmatprep.subr.bf16.mxu0 0
        %4208 = vmatpush1.bf16.msra.mxu0 0
        %4209 = vmatprep.subr.bf16.mxu0 0
        %4210 = vmatpush1.bf16.msra.mxu0 0
        %4211 = vmatprep.subr.bf16.mxu0 0
        %4212 = vmatpush1.bf16.msra.mxu0 %v3816
        %4213 = vmatprep.subr.bf16.mxu0 0
        %4214 = vmatpush2.bf16.msra.mxu0 0
        %4215 = vmatprep.subr.bf16.mxu0 0
        %4216 = vmatpush2.bf16.msra.mxu0 0
        %4217 = vmatprep.subr.bf16.mxu0 0
        %4218 = vmatpush2.bf16.msra.mxu0 0
        %4219 = vmatprep.subr.bf16.mxu0 0
        %4220 = vmatpush2.bf16.msra.mxu0 0
        %4221 = vmatprep.subr.bf16.mxu0 0
        %4222 = vmatpush2.bf16.msra.mxu0 0
        %4223 = vmatprep.subr.bf16.mxu0 0
        %4224 = vmatpush2.bf16.msra.mxu0 0
        %4225 = vmatprep.subr.bf16.mxu0 0
        %4226 = vmatpush2.bf16.msra.mxu0 0
        %4227 = vmatprep.subr.bf16.mxu0 0
        %4228 = vmatpush2.bf16.msra.mxu0 0
        %4229 = vmatprep.mubr.bf16.mxu0 0
        %4230 = vmatmul.mubr.bf16.gmra.mxu0 %v4195
        %v4231 = vpop.f32.mrf.mxu0
        %v4232 = vadd.f32 0.0, %v4231
        %v4233 = vpop.f32.mrf.mxu0
        %v4234 = vpop.f32.mrf.mxu0
        %v4235 = vadd.f32 0.0, %v4234
        %v4236 = vpop.f32.mrf.mxu0
        %4237 = vdwg.mxu0
        %v4239 = vsel %vm1362, %v4105, 0
        %4241 = vmatprep.subr.bf16.mxu0 0
        %4242 = vmatpush1.bf16.msra.mxu0 0
        %4243 = vmatprep.subr.bf16.mxu0 0
        %4244 = vmatpush1.bf16.msra.mxu0 0
        %4245 = vmatprep.subr.bf16.mxu0 0
        %4246 = vmatpush1.bf16.msra.mxu0 0
        %4247 = vmatprep.subr.bf16.mxu0 0
        %4248 = vmatpush1.bf16.msra.mxu0 0
        %4249 = vmatprep.subr.bf16.mxu0 0
        %4250 = vmatpush1.bf16.msra.mxu0 0
        %4251 = vmatprep.subr.bf16.mxu0 0
        %4252 = vmatpush1.bf16.msra.mxu0 0
        %4253 = vmatprep.subr.bf16.mxu0 0
        %4254 = vmatpush1.bf16.msra.mxu0 0
        %4255 = vmatprep.subr.bf16.mxu0 0
        %4256 = vmatpush1.bf16.msra.mxu0 %v3817
        %4257 = vmatprep.subr.bf16.mxu0 0
        %4258 = vmatpush2.bf16.msra.mxu0 0
        %4259 = vmatprep.subr.bf16.mxu0 0
        %4260 = vmatpush2.bf16.msra.mxu0 0
        %4261 = vmatprep.subr.bf16.mxu0 0
        %4262 = vmatpush2.bf16.msra.mxu0 0
        %4263 = vmatprep.subr.bf16.mxu0 0
        %4264 = vmatpush2.bf16.msra.mxu0 0
        %4265 = vmatprep.subr.bf16.mxu0 0
        %4266 = vmatpush2.bf16.msra.mxu0 0
        %4267 = vmatprep.subr.bf16.mxu0 0
        %4268 = vmatpush2.bf16.msra.mxu0 0
        %4269 = vmatprep.subr.bf16.mxu0 0
        %4270 = vmatpush2.bf16.msra.mxu0 0
        %4271 = vmatprep.subr.bf16.mxu0 0
        %4272 = vmatpush2.bf16.msra.mxu0 0
        %4273 = vmatprep.mubr.bf16.mxu0 0
        %4274 = vmatmul.mubr.bf16.gmra.mxu0 %v4239
        %v4275 = vpop.f32.mrf.mxu0
        %v4276 = vadd.f32 0.0, %v4275
        %v4277 = vpop.f32.mrf.mxu0
        %v4278 = vpop.f32.mrf.mxu0
        %v4279 = vadd.f32 0.0, %v4278
        %v4280 = vpop.f32.mrf.mxu0
        %4281 = vdwg.mxu0
        %4283 = vrot.lane.b32.xlu0 %v3806, 96
        %v4284 = vpop.permute.xlu0 %4283
        %4286 = vrot.lane.b32.xlu0 %v3810, 96
        %v4287 = vpop.permute.xlu0 %4286
        %v4289 = vsel %vm1125, %v4284, 0
        %v4292 = vsel %vm1125, %v4287, 0
        %4294 = vmatprep.subr.bf16.mxu0 0
        %4295 = vmatpush1.bf16.xpose.msra.mxu0 0
        %4296 = vmatprep.subr.bf16.mxu0 0
        %4297 = vmatpush1.bf16.xpose.msra.mxu0 0
        %4298 = vmatprep.subr.bf16.mxu0 0
        %4299 = vmatpush1.bf16.xpose.msra.mxu0 0
        %4300 = vmatprep.subr.bf16.mxu0 0
        %4301 = vmatpush1.bf16.xpose.msra.mxu0 0
        %4302 = vmatprep.subr.bf16.mxu0 0
        %4303 = vmatpush1.bf16.xpose.msra.mxu0 0
        %4304 = vmatprep.subr.bf16.mxu0 0
        %4305 = vmatpush1.bf16.xpose.msra.mxu0 0
        %4306 = vmatprep.subr.bf16.mxu0 0
        %4307 = vmatpush1.bf16.xpose.msra.mxu0 0
        %4308 = vmatprep.subr.bf16.mxu0 0
        %4309 = vmatpush1.bf16.xpose.msra.mxu0 %v4292
        %4310 = vmatprep.subr.bf16.mxu0 0
        %4311 = vmatpush2.bf16.xpose.msra.mxu0 0
        %4312 = vmatprep.subr.bf16.mxu0 0
        %4313 = vmatpush2.bf16.xpose.msra.mxu0 0
        %4314 = vmatprep.subr.bf16.mxu0 0
        %4315 = vmatpush2.bf16.xpose.msra.mxu0 0
        %4316 = vmatprep.subr.bf16.mxu0 0
        %4317 = vmatpush2.bf16.xpose.msra.mxu0 0
        %4318 = vmatprep.subr.bf16.mxu0 0
        %4319 = vmatpush2.bf16.xpose.msra.mxu0 0
        %4320 = vmatprep.subr.bf16.mxu0 0
        %4321 = vmatpush2.bf16.xpose.msra.mxu0 0
        %4322 = vmatprep.subr.bf16.mxu0 0
        %4323 = vmatpush2.bf16.xpose.msra.mxu0 0
        %4324 = vmatprep.subr.bf16.mxu0 0
        %4325 = vmatpush2.bf16.xpose.msra.mxu0 0
        %4326 = vmatprep.mubr.bf16.mxu0 0
        %4327 = vmatmul.mubr.bf16.gmra.mxu0 %v4289
        %v4328 = vpop.f32.mrf.mxu0
        %v4329 = vadd.f32 0.0, %v4328
        %v4330 = vpop.f32.mrf.mxu0
        %v4331 = vpop.f32.mrf.mxu0
        %v4332 = vadd.f32 0.0, %v4331
        %v4333 = vpop.f32.mrf.mxu0
        %4334 = vdwg.mxu0
        %4336 = vrot.lane.b32.xlu0 %v3807, 96
        %v4337 = vpop.permute.xlu0 %4336
        %4339 = vrot.lane.b32.xlu0 %v3811, 96
        %v4340 = vpop.permute.xlu0 %4339
        %v4342 = vsel %vm1125, %v4337, 0
        %v4345 = vsel %vm1125, %v4340, 0
        %4347 = vmatprep.subr.bf16.mxu0 0
        %4348 = vmatpush1.bf16.xpose.msra.mxu0 0
        %4349 = vmatprep.subr.bf16.mxu0 0
        %4350 = vmatpush1.bf16.xpose.msra.mxu0 0
        %4351 = vmatprep.subr.bf16.mxu0 0
        %4352 = vmatpush1.bf16.xpose.msra.mxu0 0
        %4353 = vmatprep.subr.bf16.mxu0 0
        %4354 = vmatpush1.bf16.xpose.msra.mxu0 0
        %4355 = vmatprep.subr.bf16.mxu0 0
        %4356 = vmatpush1.bf16.xpose.msra.mxu0 0
        %4357 = vmatprep.subr.bf16.mxu0 0
        %4358 = vmatpush1.bf16.xpose.msra.mxu0 0
        %4359 = vmatprep.subr.bf16.mxu0 0
        %4360 = vmatpush1.bf16.xpose.msra.mxu0 0
        %4361 = vmatprep.subr.bf16.mxu0 0
        %4362 = vmatpush1.bf16.xpose.msra.mxu0 %v4345
        %4363 = vmatprep.subr.bf16.mxu0 0
        %4364 = vmatpush2.bf16.xpose.msra.mxu0 0
        %4365 = vmatprep.subr.bf16.mxu0 0
        %4366 = vmatpush2.bf16.xpose.msra.mxu0 0
        %4367 = vmatprep.subr.bf16.mxu0 0
        %4368 = vmatpush2.bf16.xpose.msra.mxu0 0
        %4369 = vmatprep.subr.bf16.mxu0 0
        %4370 = vmatpush2.bf16.xpose.msra.mxu0 0
        %4371 = vmatprep.subr.bf16.mxu0 0
        %4372 = vmatpush2.bf16.xpose.msra.mxu0 0
        %4373 = vmatprep.subr.bf16.mxu0 0
        %4374 = vmatpush2.bf16.xpose.msra.mxu0 0
        %4375 = vmatprep.subr.bf16.mxu0 0
        %4376 = vmatpush2.bf16.xpose.msra.mxu0 0
        %4377 = vmatprep.subr.bf16.mxu0 0
        %4378 = vmatpush2.bf16.xpose.msra.mxu0 0
        %4379 = vmatprep.mubr.bf16.mxu0 0
        %4380 = vmatmul.mubr.bf16.gmra.mxu0 %v4342
        %v4381 = vpop.f32.mrf.mxu0
        %v4382 = vadd.f32 0.0, %v4381
        %v4383 = vpop.f32.mrf.mxu0
        %v4384 = vpop.f32.mrf.mxu0
        %v4385 = vadd.f32 0.0, %v4384
        %v4386 = vpop.f32.mrf.mxu0
        %4387 = vdwg.mxu0
        %4389 = vrot.lane.b32.xlu0 %v3808, 96
        %v4390 = vpop.permute.xlu0 %4389
        %4392 = vrot.lane.b32.xlu0 %v3812, 96
        %v4393 = vpop.permute.xlu0 %4392
        %v4395 = vsel %vm1125, %v4390, 0
        %v4398 = vsel %vm1125, %v4393, 0
        %4400 = vmatprep.subr.bf16.mxu0 0
        %4401 = vmatpush1.bf16.xpose.msra.mxu0 0
        %4402 = vmatprep.subr.bf16.mxu0 0
        %4403 = vmatpush1.bf16.xpose.msra.mxu0 0
        %4404 = vmatprep.subr.bf16.mxu0 0
        %4405 = vmatpush1.bf16.xpose.msra.mxu0 0
        %4406 = vmatprep.subr.bf16.mxu0 0
        %4407 = vmatpush1.bf16.xpose.msra.mxu0 0
        %4408 = vmatprep.subr.bf16.mxu0 0
        %4409 = vmatpush1.bf16.xpose.msra.mxu0 0
        %4410 = vmatprep.subr.bf16.mxu0 0
        %4411 = vmatpush1.bf16.xpose.msra.mxu0 0
        %4412 = vmatprep.subr.bf16.mxu0 0
        %4413 = vmatpush1.bf16.xpose.msra.mxu0 0
        %4414 = vmatprep.subr.bf16.mxu0 0
        %4415 = vmatpush1.bf16.xpose.msra.mxu0 %v4398
        %4416 = vmatprep.subr.bf16.mxu0 0
        %4417 = vmatpush2.bf16.xpose.msra.mxu0 0
        %4418 = vmatprep.subr.bf16.mxu0 0
        %4419 = vmatpush2.bf16.xpose.msra.mxu0 0
        %4420 = vmatprep.subr.bf16.mxu0 0
        %4421 = vmatpush2.bf16.xpose.msra.mxu0 0
        %4422 = vmatprep.subr.bf16.mxu0 0
        %4423 = vmatpush2.bf16.xpose.msra.mxu0 0
        %4424 = vmatprep.subr.bf16.mxu0 0
        %4425 = vmatpush2.bf16.xpose.msra.mxu0 0
        %4426 = vmatprep.subr.bf16.mxu0 0
        %4427 = vmatpush2.bf16.xpose.msra.mxu0 0
        %4428 = vmatprep.subr.bf16.mxu0 0
        %4429 = vmatpush2.bf16.xpose.msra.mxu0 0
        %4430 = vmatprep.subr.bf16.mxu0 0
        %4431 = vmatpush2.bf16.xpose.msra.mxu0 0
        %4432 = vmatprep.mubr.bf16.mxu0 0
        %4433 = vmatmul.mubr.bf16.gmra.mxu0 %v4395
        %v4434 = vpop.f32.mrf.mxu0
        %v4435 = vadd.f32 0.0, %v4434
        %v4436 = vpop.f32.mrf.mxu0
        %v4437 = vpop.f32.mrf.mxu0
        %v4438 = vadd.f32 0.0, %v4437
        %v4439 = vpop.f32.mrf.mxu0
        %4440 = vdwg.mxu0
        %4442 = vrot.lane.b32.xlu0 %v3809, 96
        %v4443 = vpop.permute.xlu0 %4442
        %4445 = vrot.lane.b32.xlu0 %v3813, 96
        %v4446 = vpop.permute.xlu0 %4445
        %v4448 = vsel %vm1125, %v4443, 0
        %v4451 = vsel %vm1125, %v4446, 0
        %4453 = vmatprep.subr.bf16.mxu0 0
        %4454 = vmatpush1.bf16.xpose.msra.mxu0 0
        %4455 = vmatprep.subr.bf16.mxu0 0
        %4456 = vmatpush1.bf16.xpose.msra.mxu0 0
        %4457 = vmatprep.subr.bf16.mxu0 0
        %4458 = vmatpush1.bf16.xpose.msra.mxu0 0
        %4459 = vmatprep.subr.bf16.mxu0 0
        %4460 = vmatpush1.bf16.xpose.msra.mxu0 0
        %4461 = vmatprep.subr.bf16.mxu0 0
        %4462 = vmatpush1.bf16.xpose.msra.mxu0 0
        %4463 = vmatprep.subr.bf16.mxu0 0
        %4464 = vmatpush1.bf16.xpose.msra.mxu0 0
        %4465 = vmatprep.subr.bf16.mxu0 0
        %4466 = vmatpush1.bf16.xpose.msra.mxu0 0
        %4467 = vmatprep.subr.bf16.mxu0 0
        %4468 = vmatpush1.bf16.xpose.msra.mxu0 %v4451
        %4469 = vmatprep.subr.bf16.mxu0 0
        %4470 = vmatpush2.bf16.xpose.msra.mxu0 0
        %4471 = vmatprep.subr.bf16.mxu0 0
        %4472 = vmatpush2.bf16.xpose.msra.mxu0 0
        %4473 = vmatprep.subr.bf16.mxu0 0
        %4474 = vmatpush2.bf16.xpose.msra.mxu0 0
        %4475 = vmatprep.subr.bf16.mxu0 0
        %4476 = vmatpush2.bf16.xpose.msra.mxu0 0
        %4477 = vmatprep.subr.bf16.mxu0 0
        %4478 = vmatpush2.bf16.xpose.msra.mxu0 0
        %4479 = vmatprep.subr.bf16.mxu0 0
        %4480 = vmatpush2.bf16.xpose.msra.mxu0 0
        %4481 = vmatprep.subr.bf16.mxu0 0
        %4482 = vmatpush2.bf16.xpose.msra.mxu0 0
        %4483 = vmatprep.subr.bf16.mxu0 0
        %4484 = vmatpush2.bf16.xpose.msra.mxu0 0
        %4485 = vmatprep.mubr.bf16.mxu0 0
        %4486 = vmatmul.mubr.bf16.gmra.mxu0 %v4448
        %v4487 = vpop.f32.mrf.mxu0
        %v4488 = vadd.f32 0.0, %v4487
        %v4489 = vpop.f32.mrf.mxu0
        %v4490 = vpop.f32.mrf.mxu0
        %v4491 = vadd.f32 0.0, %v4490
        %v4492 = vpop.f32.mrf.mxu0
        %4493 = vdwg.mxu0
        %v4494 = vsel %vm1859, -1e+30, %v4329
        %v4495 = vsel %vm1859, -1e+30, %v4332
        %v4496 = vsel %vm1860, -1e+30, %v4382
        %v4497 = vsel %vm1860, -1e+30, %v4385
        %v4498 = vsel %vm1861, -1e+30, %v4435
        %v4499 = vsel %vm1861, -1e+30, %v4438
        %v4500 = vsel %vm1862, -1e+30, %v4488
        %v4501 = vsel %vm1862, -1e+30, %v4491
        %v4502 = vsel %vm1362, %v4494, -inf
        %4503 = vmax.xlane.f32.xlu0 %v4502
        %v4504 = vpop.xlane.xlu0 %4503
        %v4505 = vsel %vm1362, %v4495, -inf
        %4506 = vmax.xlane.f32.xlu0 %v4505
        %v4507 = vpop.xlane.xlu0 %4506
        %v4508 = vsel %vm1362, %v4496, -inf
        %4509 = vmax.xlane.f32.xlu0 %v4508
        %v4510 = vpop.xlane.xlu0 %4509
        %v4511 = vsel %vm1362, %v4497, -inf
        %4512 = vmax.xlane.f32.xlu0 %v4511
        %v4513 = vpop.xlane.xlu0 %4512
        %v4514 = vsel %vm1362, %v4498, -inf
        %4515 = vmax.xlane.f32.xlu0 %v4514
        %v4516 = vpop.xlane.xlu0 %4515
        %v4517 = vsel %vm1362, %v4499, -inf
        %4518 = vmax.xlane.f32.xlu0 %v4517
        %v4519 = vpop.xlane.xlu0 %4518
        %v4520 = vsel %vm1362, %v4500, -inf
        %4521 = vmax.xlane.f32.xlu0 %v4520
        %v4522 = vpop.xlane.xlu0 %4521
        %v4523 = vsel %vm1362, %v4501, -inf
        %4524 = vmax.xlane.f32.xlu0 %v4523
        %v4525 = vpop.xlane.xlu0 %4524
        %v4526 = vsub.f32 %v4494, %v4504
        %v4527 = vsub.f32 %v4495, %v4507
        %v4528 = vsub.f32 %v4496, %v4510
        %v4529 = vsub.f32 %v4497, %v4513
        %v4530 = vsub.f32 %v4498, %v4516
        %v4531 = vsub.f32 %v4499, %v4519
        %v4532 = vsub.f32 %v4500, %v4522
        %v4533 = vsub.f32 %v4501, %v4525
        %v4534 = vmul.f32 %v4526, 1.442695
        %v4535 = vpow.pop %v4534
        %v4536 = vmul.f32 %v4527, 1.442695
        %v4537 = vpow.pop %v4536
        %v4538 = vmul.f32 %v4528, 1.442695
        %v4539 = vpow.pop %v4538
        %v4540 = vmul.f32 %v4529, 1.442695
        %v4541 = vpow.pop %v4540
        %v4542 = vmul.f32 %v4530, 1.442695
        %v4543 = vpow.pop %v4542
        %v4544 = vmul.f32 %v4531, 1.442695
        %v4545 = vpow.pop %v4544
        %v4546 = vmul.f32 %v4532, 1.442695
        %v4547 = vpow.pop %v4546
        %v4548 = vmul.f32 %v4533, 1.442695
        %v4549 = vpow.pop %v4548
        %v4550 = vsel %vm1362, %v4535, 0.0
        %4551 = vadd.xlane.f32.xlu0 %v4550
        %v4552 = vpop.xlane.xlu0 %4551
        %v4553 = vsel %vm1362, %v4537, 0.0
        %4554 = vadd.xlane.f32.xlu0 %v4553
        %v4555 = vpop.xlane.xlu0 %4554
        %v4556 = vsel %vm1362, %v4539, 0.0
        %4557 = vadd.xlane.f32.xlu0 %v4556
        %v4558 = vpop.xlane.xlu0 %4557
        %v4559 = vsel %vm1362, %v4541, 0.0
        %4560 = vadd.xlane.f32.xlu0 %v4559
        %v4561 = vpop.xlane.xlu0 %4560
        %v4562 = vsel %vm1362, %v4543, 0.0
        %4563 = vadd.xlane.f32.xlu0 %v4562
        %v4564 = vpop.xlane.xlu0 %4563
        %v4565 = vsel %vm1362, %v4545, 0.0
        %4566 = vadd.xlane.f32.xlu0 %v4565
        %v4567 = vpop.xlane.xlu0 %4566
        %v4568 = vsel %vm1362, %v4547, 0.0
        %4569 = vadd.xlane.f32.xlu0 %v4568
        %v4570 = vpop.xlane.xlu0 %4569
        %v4571 = vsel %vm1362, %v4549, 0.0
        %4572 = vadd.xlane.f32.xlu0 %v4571
        %v4573 = vpop.xlane.xlu0 %4572
        %v4574 = vrcp.pop %v4552
        %v4575 = vrcp.pop %v4555
        %v4576 = vrcp.pop %v4558
        %v4577 = vrcp.pop %v4561
        %v4578 = vrcp.pop %v4564
        %v4579 = vrcp.pop %v4567
        %v4580 = vrcp.pop %v4570
        %v4581 = vrcp.pop %v4573
        %v4582 = vmul.f32 %v4535, %v4574
        %v4583 = vmul.f32 %v4537, %v4575
        %v4584 = vmul.f32 %v4539, %v4576
        %v4585 = vmul.f32 %v4541, %v4577
        %v4586 = vmul.f32 %v4543, %v4578
        %v4587 = vmul.f32 %v4545, %v4579
        %v4588 = vmul.f32 %v4547, %v4580
        %v4589 = vmul.f32 %v4549, %v4581
        %v4590 = vpack.c.bf16 %v4583, %v4582
        %v4591 = vpack.c.bf16 %v4585, %v4584
        %v4592 = vpack.c.bf16 %v4587, %v4586
        %v4593 = vpack.c.bf16 %v4589, %v4588
        %4595 = vrot.lane.b32.xlu0 %v3814, 96
        %v4596 = vpop.permute.xlu0 %4595
        %v4599 = vsel %vm1362, %v4590, 0
        %4601 = vmatprep.subr.bf16.mxu0 0
        %4602 = vmatpush1.bf16.msra.mxu0 0
        %4603 = vmatprep.subr.bf16.mxu0 0
        %4604 = vmatpush1.bf16.msra.mxu0 0
        %4605 = vmatprep.subr.bf16.mxu0 0
        %4606 = vmatpush1.bf16.msra.mxu0 0
        %4607 = vmatprep.subr.bf16.mxu0 0
        %4608 = vmatpush1.bf16.msra.mxu0 0
        %4609 = vmatprep.subr.bf16.mxu0 0
        %4610 = vmatpush1.bf16.msra.mxu0 0
        %4611 = vmatprep.subr.bf16.mxu0 0
        %4612 = vmatpush1.bf16.msra.mxu0 0
        %4613 = vmatprep.subr.bf16.mxu0 0
        %4614 = vmatpush1.bf16.msra.mxu0 0
        %4615 = vmatprep.subr.bf16.mxu0 0
        %4616 = vmatpush1.bf16.msra.mxu0 %v4596
        %4617 = vmatprep.subr.bf16.mxu0 0
        %4618 = vmatpush2.bf16.msra.mxu0 0
        %4619 = vmatprep.subr.bf16.mxu0 0
        %4620 = vmatpush2.bf16.msra.mxu0 0
        %4621 = vmatprep.subr.bf16.mxu0 0
        %4622 = vmatpush2.bf16.msra.mxu0 0
        %4623 = vmatprep.subr.bf16.mxu0 0
        %4624 = vmatpush2.bf16.msra.mxu0 0
        %4625 = vmatprep.subr.bf16.mxu0 0
        %4626 = vmatpush2.bf16.msra.mxu0 0
        %4627 = vmatprep.subr.bf16.mxu0 0
        %4628 = vmatpush2.bf16.msra.mxu0 0
        %4629 = vmatprep.subr.bf16.mxu0 0
        %4630 = vmatpush2.bf16.msra.mxu0 0
        %4631 = vmatprep.subr.bf16.mxu0 0
        %4632 = vmatpush2.bf16.msra.mxu0 0
        %4633 = vmatprep.mubr.bf16.mxu0 0
        %4634 = vmatmul.mubr.bf16.gmra.mxu0 %v4599
        %v4635 = vpop.f32.mrf.mxu0
        %v4636 = vadd.f32 0.0, %v4635
        %v4637 = vpop.f32.mrf.mxu0
        %v4638 = vpop.f32.mrf.mxu0
        %v4639 = vadd.f32 0.0, %v4638
        %v4640 = vpop.f32.mrf.mxu0
        %4641 = vdwg.mxu0
        %4643 = vrot.lane.b32.xlu0 %v3815, 96
        %v4644 = vpop.permute.xlu0 %4643
        %v4647 = vsel %vm1362, %v4591, 0
        %4649 = vmatprep.subr.bf16.mxu0 0
        %4650 = vmatpush1.bf16.msra.mxu0 0
        %4651 = vmatprep.subr.bf16.mxu0 0
        %4652 = vmatpush1.bf16.msra.mxu0 0
        %4653 = vmatprep.subr.bf16.mxu0 0
        %4654 = vmatpush1.bf16.msra.mxu0 0
        %4655 = vmatprep.subr.bf16.mxu0 0
        %4656 = vmatpush1.bf16.msra.mxu0 0
        %4657 = vmatprep.subr.bf16.mxu0 0
        %4658 = vmatpush1.bf16.msra.mxu0 0
        %4659 = vmatprep.subr.bf16.mxu0 0
        %4660 = vmatpush1.bf16.msra.mxu0 0
        %4661 = vmatprep.subr.bf16.mxu0 0
        %4662 = vmatpush1.bf16.msra.mxu0 0
        %4663 = vmatprep.subr.bf16.mxu0 0
        %4664 = vmatpush1.bf16.msra.mxu0 %v4644
        %4665 = vmatprep.subr.bf16.mxu0 0
        %4666 = vmatpush2.bf16.msra.mxu0 0
        %4667 = vmatprep.subr.bf16.mxu0 0
        %4668 = vmatpush2.bf16.msra.mxu0 0
        %4669 = vmatprep.subr.bf16.mxu0 0
        %4670 = vmatpush2.bf16.msra.mxu0 0
        %4671 = vmatprep.subr.bf16.mxu0 0
        %4672 = vmatpush2.bf16.msra.mxu0 0
        %4673 = vmatprep.subr.bf16.mxu0 0
        %4674 = vmatpush2.bf16.msra.mxu0 0
        %4675 = vmatprep.subr.bf16.mxu0 0
        %4676 = vmatpush2.bf16.msra.mxu0 0
        %4677 = vmatprep.subr.bf16.mxu0 0
        %4678 = vmatpush2.bf16.msra.mxu0 0
        %4679 = vmatprep.subr.bf16.mxu0 0
        %4680 = vmatpush2.bf16.msra.mxu0 0
        %4681 = vmatprep.mubr.bf16.mxu0 0
        %4682 = vmatmul.mubr.bf16.gmra.mxu0 %v4647
        %v4683 = vpop.f32.mrf.mxu0
        %v4684 = vadd.f32 0.0, %v4683
        %v4685 = vpop.f32.mrf.mxu0
        %v4686 = vpop.f32.mrf.mxu0
        %v4687 = vadd.f32 0.0, %v4686
        %v4688 = vpop.f32.mrf.mxu0
        %4689 = vdwg.mxu0
        %4691 = vrot.lane.b32.xlu0 %v3816, 96
        %v4692 = vpop.permute.xlu0 %4691
        %v4695 = vsel %vm1362, %v4592, 0
        %4697 = vmatprep.subr.bf16.mxu0 0
        %4698 = vmatpush1.bf16.msra.mxu0 0
        %4699 = vmatprep.subr.bf16.mxu0 0
        %4700 = vmatpush1.bf16.msra.mxu0 0
        %4701 = vmatprep.subr.bf16.mxu0 0
        %4702 = vmatpush1.bf16.msra.mxu0 0
        %4703 = vmatprep.subr.bf16.mxu0 0
        %4704 = vmatpush1.bf16.msra.mxu0 0
        %4705 = vmatprep.subr.bf16.mxu0 0
        %4706 = vmatpush1.bf16.msra.mxu0 0
        %4707 = vmatprep.subr.bf16.mxu0 0
        %4708 = vmatpush1.bf16.msra.mxu0 0
        %4709 = vmatprep.subr.bf16.mxu0 0
        %4710 = vmatpush1.bf16.msra.mxu0 0
        %4711 = vmatprep.subr.bf16.mxu0 0
        %4712 = vmatpush1.bf16.msra.mxu0 %v4692
        %4713 = vmatprep.subr.bf16.mxu0 0
        %4714 = vmatpush2.bf16.msra.mxu0 0
        %4715 = vmatprep.subr.bf16.mxu0 0
        %4716 = vmatpush2.bf16.msra.mxu0 0
        %4717 = vmatprep.subr.bf16.mxu0 0
        %4718 = vmatpush2.bf16.msra.mxu0 0
        %4719 = vmatprep.subr.bf16.mxu0 0
        %4720 = vmatpush2.bf16.msra.mxu0 0
        %4721 = vmatprep.subr.bf16.mxu0 0
        %4722 = vmatpush2.bf16.msra.mxu0 0
        %4723 = vmatprep.subr.bf16.mxu0 0
        %4724 = vmatpush2.bf16.msra.mxu0 0
        %4725 = vmatprep.subr.bf16.mxu0 0
        %4726 = vmatpush2.bf16.msra.mxu0 0
        %4727 = vmatprep.subr.bf16.mxu0 0
        %4728 = vmatpush2.bf16.msra.mxu0 0
        %4729 = vmatprep.mubr.bf16.mxu0 0
        %4730 = vmatmul.mubr.bf16.gmra.mxu0 %v4695
        %v4731 = vpop.f32.mrf.mxu0
        %v4732 = vadd.f32 0.0, %v4731
        %v4733 = vpop.f32.mrf.mxu0
        %v4734 = vpop.f32.mrf.mxu0
        %v4735 = vadd.f32 0.0, %v4734
        %v4736 = vpop.f32.mrf.mxu0
        %4737 = vdwg.mxu0
        %4739 = vrot.lane.b32.xlu0 %v3817, 96
        %v4740 = vpop.permute.xlu0 %4739
        %v4743 = vsel %vm1362, %v4593, 0
        %4745 = vmatprep.subr.bf16.mxu0 0
        %4746 = vmatpush1.bf16.msra.mxu0 0
        %4747 = vmatprep.subr.bf16.mxu0 0
        %4748 = vmatpush1.bf16.msra.mxu0 0
        %4749 = vmatprep.subr.bf16.mxu0 0
        %4750 = vmatpush1.bf16.msra.mxu0 0
        %4751 = vmatprep.subr.bf16.mxu0 0
        %4752 = vmatpush1.bf16.msra.mxu0 0
        %4753 = vmatprep.subr.bf16.mxu0 0
        %4754 = vmatpush1.bf16.msra.mxu0 0
        %4755 = vmatprep.subr.bf16.mxu0 0
        %4756 = vmatpush1.bf16.msra.mxu0 0
        %4757 = vmatprep.subr.bf16.mxu0 0
        %4758 = vmatpush1.bf16.msra.mxu0 0
        %4759 = vmatprep.subr.bf16.mxu0 0
        %4760 = vmatpush1.bf16.msra.mxu0 %v4740
        %4761 = vmatprep.subr.bf16.mxu0 0
        %4762 = vmatpush2.bf16.msra.mxu0 0
        %4763 = vmatprep.subr.bf16.mxu0 0
        %4764 = vmatpush2.bf16.msra.mxu0 0
        %4765 = vmatprep.subr.bf16.mxu0 0
        %4766 = vmatpush2.bf16.msra.mxu0 0
        %4767 = vmatprep.subr.bf16.mxu0 0
        %4768 = vmatpush2.bf16.msra.mxu0 0
        %4769 = vmatprep.subr.bf16.mxu0 0
        %4770 = vmatpush2.bf16.msra.mxu0 0
        %4771 = vmatprep.subr.bf16.mxu0 0
        %4772 = vmatpush2.bf16.msra.mxu0 0
        %4773 = vmatprep.subr.bf16.mxu0 0
        %4774 = vmatpush2.bf16.msra.mxu0 0
        %4775 = vmatprep.subr.bf16.mxu0 0
        %4776 = vmatpush2.bf16.msra.mxu0 0
        %4777 = vmatprep.mubr.bf16.mxu0 0
        %4778 = vmatmul.mubr.bf16.gmra.mxu0 %v4743
        %v4779 = vpop.f32.mrf.mxu0
        %v4780 = vadd.f32 0.0, %v4779
        %v4781 = vpop.f32.mrf.mxu0
        %v4782 = vpop.f32.mrf.mxu0
        %v4783 = vadd.f32 0.0, %v4782
        %v4784 = vpop.f32.mrf.mxu0
        %4785 = vdwg.mxu0
        %4786 = vrot.lane.b32.xlu0 %v3806, 64
        %v4787 = vpop.permute.xlu0 %4786
        %4788 = vrot.lane.b32.xlu0 %v3810, 64
        %v4789 = vpop.permute.xlu0 %4788
        %v4791 = vsel %vm1125, %v4787, 0
        %v4794 = vsel %vm1125, %v4789, 0
        %4796 = vmatprep.subr.bf16.mxu0 0
        %4797 = vmatpush1.bf16.xpose.msra.mxu0 0
        %4798 = vmatprep.subr.bf16.mxu0 0
        %4799 = vmatpush1.bf16.xpose.msra.mxu0 0
        %4800 = vmatprep.subr.bf16.mxu0 0
        %4801 = vmatpush1.bf16.xpose.msra.mxu0 0
        %4802 = vmatprep.subr.bf16.mxu0 0
        %4803 = vmatpush1.bf16.xpose.msra.mxu0 0
        %4804 = vmatprep.subr.bf16.mxu0 0
        %4805 = vmatpush1.bf16.xpose.msra.mxu0 0
        %4806 = vmatprep.subr.bf16.mxu0 0
        %4807 = vmatpush1.bf16.xpose.msra.mxu0 0
        %4808 = vmatprep.subr.bf16.mxu0 0
        %4809 = vmatpush1.bf16.xpose.msra.mxu0 0
        %4810 = vmatprep.subr.bf16.mxu0 0
        %4811 = vmatpush1.bf16.xpose.msra.mxu0 %v4794
        %4812 = vmatprep.subr.bf16.mxu0 0
        %4813 = vmatpush2.bf16.xpose.msra.mxu0 0
        %4814 = vmatprep.subr.bf16.mxu0 0
        %4815 = vmatpush2.bf16.xpose.msra.mxu0 0
        %4816 = vmatprep.subr.bf16.mxu0 0
        %4817 = vmatpush2.bf16.xpose.msra.mxu0 0
        %4818 = vmatprep.subr.bf16.mxu0 0
        %4819 = vmatpush2.bf16.xpose.msra.mxu0 0
        %4820 = vmatprep.subr.bf16.mxu0 0
        %4821 = vmatpush2.bf16.xpose.msra.mxu0 0
        %4822 = vmatprep.subr.bf16.mxu0 0
        %4823 = vmatpush2.bf16.xpose.msra.mxu0 0
        %4824 = vmatprep.subr.bf16.mxu0 0
        %4825 = vmatpush2.bf16.xpose.msra.mxu0 0
        %4826 = vmatprep.subr.bf16.mxu0 0
        %4827 = vmatpush2.bf16.xpose.msra.mxu0 0
        %4828 = vmatprep.mubr.bf16.mxu0 0
        %4829 = vmatmul.mubr.bf16.gmra.mxu0 %v4791
        %v4830 = vpop.f32.mrf.mxu0
        %v4831 = vadd.f32 0.0, %v4830
        %v4832 = vpop.f32.mrf.mxu0
        %v4833 = vpop.f32.mrf.mxu0
        %v4834 = vadd.f32 0.0, %v4833
        %v4835 = vpop.f32.mrf.mxu0
        %4836 = vdwg.mxu0
        %4837 = vrot.lane.b32.xlu0 %v3807, 64
        %v4838 = vpop.permute.xlu0 %4837
        %4839 = vrot.lane.b32.xlu0 %v3811, 64
        %v4840 = vpop.permute.xlu0 %4839
        %v4842 = vsel %vm1125, %v4838, 0
        %v4845 = vsel %vm1125, %v4840, 0
        %4847 = vmatprep.subr.bf16.mxu0 0
        %4848 = vmatpush1.bf16.xpose.msra.mxu0 0
        %4849 = vmatprep.subr.bf16.mxu0 0
        %4850 = vmatpush1.bf16.xpose.msra.mxu0 0
        %4851 = vmatprep.subr.bf16.mxu0 0
        %4852 = vmatpush1.bf16.xpose.msra.mxu0 0
        %4853 = vmatprep.subr.bf16.mxu0 0
        %4854 = vmatpush1.bf16.xpose.msra.mxu0 0
        %4855 = vmatprep.subr.bf16.mxu0 0
        %4856 = vmatpush1.bf16.xpose.msra.mxu0 0
        %4857 = vmatprep.subr.bf16.mxu0 0
        %4858 = vmatpush1.bf16.xpose.msra.mxu0 0
        %4859 = vmatprep.subr.bf16.mxu0 0
        %4860 = vmatpush1.bf16.xpose.msra.mxu0 0
        %4861 = vmatprep.subr.bf16.mxu0 0
        %4862 = vmatpush1.bf16.xpose.msra.mxu0 %v4845
        %4863 = vmatprep.subr.bf16.mxu0 0
        %4864 = vmatpush2.bf16.xpose.msra.mxu0 0
        %4865 = vmatprep.subr.bf16.mxu0 0
        %4866 = vmatpush2.bf16.xpose.msra.mxu0 0
        %4867 = vmatprep.subr.bf16.mxu0 0
        %4868 = vmatpush2.bf16.xpose.msra.mxu0 0
        %4869 = vmatprep.subr.bf16.mxu0 0
        %4870 = vmatpush2.bf16.xpose.msra.mxu0 0
        %4871 = vmatprep.subr.bf16.mxu0 0
        %4872 = vmatpush2.bf16.xpose.msra.mxu0 0
        %4873 = vmatprep.subr.bf16.mxu0 0
        %4874 = vmatpush2.bf16.xpose.msra.mxu0 0
        %4875 = vmatprep.subr.bf16.mxu0 0
        %4876 = vmatpush2.bf16.xpose.msra.mxu0 0
        %4877 = vmatprep.subr.bf16.mxu0 0
        %4878 = vmatpush2.bf16.xpose.msra.mxu0 0
        %4879 = vmatprep.mubr.bf16.mxu0 0
        %4880 = vmatmul.mubr.bf16.gmra.mxu0 %v4842
        %v4881 = vpop.f32.mrf.mxu0
        %v4882 = vadd.f32 0.0, %v4881
        %v4883 = vpop.f32.mrf.mxu0
        %v4884 = vpop.f32.mrf.mxu0
        %v4885 = vadd.f32 0.0, %v4884
        %v4886 = vpop.f32.mrf.mxu0
        %4887 = vdwg.mxu0
        %4888 = vrot.lane.b32.xlu0 %v3808, 64
        %v4889 = vpop.permute.xlu0 %4888
        %4890 = vrot.lane.b32.xlu0 %v3812, 64
        %v4891 = vpop.permute.xlu0 %4890
        %v4893 = vsel %vm1125, %v4889, 0
        %v4896 = vsel %vm1125, %v4891, 0
        %4898 = vmatprep.subr.bf16.mxu0 0
        %4899 = vmatpush1.bf16.xpose.msra.mxu0 0
        %4900 = vmatprep.subr.bf16.mxu0 0
        %4901 = vmatpush1.bf16.xpose.msra.mxu0 0
        %4902 = vmatprep.subr.bf16.mxu0 0
        %4903 = vmatpush1.bf16.xpose.msra.mxu0 0
        %4904 = vmatprep.subr.bf16.mxu0 0
        %4905 = vmatpush1.bf16.xpose.msra.mxu0 0
        %4906 = vmatprep.subr.bf16.mxu0 0
        %4907 = vmatpush1.bf16.xpose.msra.mxu0 0
        %4908 = vmatprep.subr.bf16.mxu0 0
        %4909 = vmatpush1.bf16.xpose.msra.mxu0 0
        %4910 = vmatprep.subr.bf16.mxu0 0
        %4911 = vmatpush1.bf16.xpose.msra.mxu0 0
        %4912 = vmatprep.subr.bf16.mxu0 0
        %4913 = vmatpush1.bf16.xpose.msra.mxu0 %v4896
        %4914 = vmatprep.subr.bf16.mxu0 0
        %4915 = vmatpush2.bf16.xpose.msra.mxu0 0
        %4916 = vmatprep.subr.bf16.mxu0 0
        %4917 = vmatpush2.bf16.xpose.msra.mxu0 0
        %4918 = vmatprep.subr.bf16.mxu0 0
        %4919 = vmatpush2.bf16.xpose.msra.mxu0 0
        %4920 = vmatprep.subr.bf16.mxu0 0
        %4921 = vmatpush2.bf16.xpose.msra.mxu0 0
        %4922 = vmatprep.subr.bf16.mxu0 0
        %4923 = vmatpush2.bf16.xpose.msra.mxu0 0
        %4924 = vmatprep.subr.bf16.mxu0 0
        %4925 = vmatpush2.bf16.xpose.msra.mxu0 0
        %4926 = vmatprep.subr.bf16.mxu0 0
        %4927 = vmatpush2.bf16.xpose.msra.mxu0 0
        %4928 = vmatprep.subr.bf16.mxu0 0
        %4929 = vmatpush2.bf16.xpose.msra.mxu0 0
        %4930 = vmatprep.mubr.bf16.mxu0 0
        %4931 = vmatmul.mubr.bf16.gmra.mxu0 %v4893
        %v4932 = vpop.f32.mrf.mxu0
        %v4933 = vadd.f32 0.0, %v4932
        %v4934 = vpop.f32.mrf.mxu0
        %v4935 = vpop.f32.mrf.mxu0
        %v4936 = vadd.f32 0.0, %v4935
        %v4937 = vpop.f32.mrf.mxu0
        %4938 = vdwg.mxu0
        %4939 = vrot.lane.b32.xlu0 %v3809, 64
        %v4940 = vpop.permute.xlu0 %4939
        %4941 = vrot.lane.b32.xlu0 %v3813, 64
        %v4942 = vpop.permute.xlu0 %4941
        %v4944 = vsel %vm1125, %v4940, 0
        %v4947 = vsel %vm1125, %v4942, 0
        %4949 = vmatprep.subr.bf16.mxu0 0
        %4950 = vmatpush1.bf16.xpose.msra.mxu0 0
        %4951 = vmatprep.subr.bf16.mxu0 0
        %4952 = vmatpush1.bf16.xpose.msra.mxu0 0
        %4953 = vmatprep.subr.bf16.mxu0 0
        %4954 = vmatpush1.bf16.xpose.msra.mxu0 0
        %4955 = vmatprep.subr.bf16.mxu0 0
        %4956 = vmatpush1.bf16.xpose.msra.mxu0 0
        %4957 = vmatprep.subr.bf16.mxu0 0
        %4958 = vmatpush1.bf16.xpose.msra.mxu0 0
        %4959 = vmatprep.subr.bf16.mxu0 0
        %4960 = vmatpush1.bf16.xpose.msra.mxu0 0
        %4961 = vmatprep.subr.bf16.mxu0 0
        %4962 = vmatpush1.bf16.xpose.msra.mxu0 0
        %4963 = vmatprep.subr.bf16.mxu0 0
        %4964 = vmatpush1.bf16.xpose.msra.mxu0 %v4947
        %4965 = vmatprep.subr.bf16.mxu0 0
        %4966 = vmatpush2.bf16.xpose.msra.mxu0 0
        %4967 = vmatprep.subr.bf16.mxu0 0
        %4968 = vmatpush2.bf16.xpose.msra.mxu0 0
        %4969 = vmatprep.subr.bf16.mxu0 0
        %4970 = vmatpush2.bf16.xpose.msra.mxu0 0
        %4971 = vmatprep.subr.bf16.mxu0 0
        %4972 = vmatpush2.bf16.xpose.msra.mxu0 0
        %4973 = vmatprep.subr.bf16.mxu0 0
        %4974 = vmatpush2.bf16.xpose.msra.mxu0 0
        %4975 = vmatprep.subr.bf16.mxu0 0
        %4976 = vmatpush2.bf16.xpose.msra.mxu0 0
        %4977 = vmatprep.subr.bf16.mxu0 0
        %4978 = vmatpush2.bf16.xpose.msra.mxu0 0
        %4979 = vmatprep.subr.bf16.mxu0 0
        %4980 = vmatpush2.bf16.xpose.msra.mxu0 0
        %4981 = vmatprep.mubr.bf16.mxu0 0
        %4982 = vmatmul.mubr.bf16.gmra.mxu0 %v4944
        %v4983 = vpop.f32.mrf.mxu0
        %v4984 = vadd.f32 0.0, %v4983
        %v4985 = vpop.f32.mrf.mxu0
        %v4986 = vpop.f32.mrf.mxu0
        %v4987 = vadd.f32 0.0, %v4986
        %v4988 = vpop.f32.mrf.mxu0
        %4989 = vdwg.mxu0
        %v4990 = vsel %vm2383, -1e+30, %v4831
        %v4991 = vsel %vm2383, -1e+30, %v4834
        %v4992 = vsel %vm2384, -1e+30, %v4882
        %v4993 = vsel %vm2384, -1e+30, %v4885
        %v4994 = vsel %vm2385, -1e+30, %v4933
        %v4995 = vsel %vm2385, -1e+30, %v4936
        %v4996 = vsel %vm2386, -1e+30, %v4984
        %v4997 = vsel %vm2386, -1e+30, %v4987
        %v4998 = vsel %vm1362, %v4990, -inf
        %4999 = vmax.xlane.f32.xlu0 %v4998
        %v5000 = vpop.xlane.xlu0 %4999
        %v5001 = vsel %vm1362, %v4991, -inf
        %5002 = vmax.xlane.f32.xlu0 %v5001
        %v5003 = vpop.xlane.xlu0 %5002
        %v5004 = vsel %vm1362, %v4992, -inf
        %5005 = vmax.xlane.f32.xlu0 %v5004
        %v5006 = vpop.xlane.xlu0 %5005
        %v5007 = vsel %vm1362, %v4993, -inf
        %5008 = vmax.xlane.f32.xlu0 %v5007
        %v5009 = vpop.xlane.xlu0 %5008
        %v5010 = vsel %vm1362, %v4994, -inf
        %5011 = vmax.xlane.f32.xlu0 %v5010
        %v5012 = vpop.xlane.xlu0 %5011
        %v5013 = vsel %vm1362, %v4995, -inf
        %5014 = vmax.xlane.f32.xlu0 %v5013
        %v5015 = vpop.xlane.xlu0 %5014
        %v5016 = vsel %vm1362, %v4996, -inf
        %5017 = vmax.xlane.f32.xlu0 %v5016
        %v5018 = vpop.xlane.xlu0 %5017
        %v5019 = vsel %vm1362, %v4997, -inf
        %5020 = vmax.xlane.f32.xlu0 %v5019
        %v5021 = vpop.xlane.xlu0 %5020
        %v5022 = vsub.f32 %v4990, %v5000
        %v5023 = vsub.f32 %v4991, %v5003
        %v5024 = vsub.f32 %v4992, %v5006
        %v5025 = vsub.f32 %v4993, %v5009
        %v5026 = vsub.f32 %v4994, %v5012
        %v5027 = vsub.f32 %v4995, %v5015
        %v5028 = vsub.f32 %v4996, %v5018
        %v5029 = vsub.f32 %v4997, %v5021
        %v5030 = vmul.f32 %v5022, 1.442695
        %v5031 = vpow.pop %v5030
        %v5032 = vmul.f32 %v5023, 1.442695
        %v5033 = vpow.pop %v5032
        %v5034 = vmul.f32 %v5024, 1.442695
        %v5035 = vpow.pop %v5034
        %v5036 = vmul.f32 %v5025, 1.442695
        %v5037 = vpow.pop %v5036
        %v5038 = vmul.f32 %v5026, 1.442695
        %v5039 = vpow.pop %v5038
        %v5040 = vmul.f32 %v5027, 1.442695
        %v5041 = vpow.pop %v5040
        %v5042 = vmul.f32 %v5028, 1.442695
        %v5043 = vpow.pop %v5042
        %v5044 = vmul.f32 %v5029, 1.442695
        %v5045 = vpow.pop %v5044
        %v5046 = vsel %vm1362, %v5031, 0.0
        %5047 = vadd.xlane.f32.xlu0 %v5046
        %v5048 = vpop.xlane.xlu0 %5047
        %v5049 = vsel %vm1362, %v5033, 0.0
        %5050 = vadd.xlane.f32.xlu0 %v5049
        %v5051 = vpop.xlane.xlu0 %5050
        %v5052 = vsel %vm1362, %v5035, 0.0
        %5053 = vadd.xlane.f32.xlu0 %v5052
        %v5054 = vpop.xlane.xlu0 %5053
        %v5055 = vsel %vm1362, %v5037, 0.0
        %5056 = vadd.xlane.f32.xlu0 %v5055
        %v5057 = vpop.xlane.xlu0 %5056
        %v5058 = vsel %vm1362, %v5039, 0.0
        %5059 = vadd.xlane.f32.xlu0 %v5058
        %v5060 = vpop.xlane.xlu0 %5059
        %v5061 = vsel %vm1362, %v5041, 0.0
        %5062 = vadd.xlane.f32.xlu0 %v5061
        %v5063 = vpop.xlane.xlu0 %5062
        %v5064 = vsel %vm1362, %v5043, 0.0
        %5065 = vadd.xlane.f32.xlu0 %v5064
        %v5066 = vpop.xlane.xlu0 %5065
        %v5067 = vsel %vm1362, %v5045, 0.0
        %5068 = vadd.xlane.f32.xlu0 %v5067
        %v5069 = vpop.xlane.xlu0 %5068
        %v5070 = vrcp.pop %v5048
        %v5071 = vrcp.pop %v5051
        %v5072 = vrcp.pop %v5054
        %v5073 = vrcp.pop %v5057
        %v5074 = vrcp.pop %v5060
        %v5075 = vrcp.pop %v5063
        %v5076 = vrcp.pop %v5066
        %v5077 = vrcp.pop %v5069
        %v5078 = vmul.f32 %v5031, %v5070
        %v5079 = vmul.f32 %v5033, %v5071
        %v5080 = vmul.f32 %v5035, %v5072
        %v5081 = vmul.f32 %v5037, %v5073
        %v5082 = vmul.f32 %v5039, %v5074
        %v5083 = vmul.f32 %v5041, %v5075
        %v5084 = vmul.f32 %v5043, %v5076
        %v5085 = vmul.f32 %v5045, %v5077
        %v5086 = vpack.c.bf16 %v5079, %v5078
        %v5087 = vpack.c.bf16 %v5081, %v5080
        %v5088 = vpack.c.bf16 %v5083, %v5082
        %v5089 = vpack.c.bf16 %v5085, %v5084
        %5090 = vrot.lane.b32.xlu0 %v3814, 64
        %v5091 = vpop.permute.xlu0 %5090
        %v5094 = vsel %vm1362, %v5086, 0
        %5096 = vmatprep.subr.bf16.mxu0 0
        %5097 = vmatpush1.bf16.msra.mxu0 0
        %5098 = vmatprep.subr.bf16.mxu0 0
        %5099 = vmatpush1.bf16.msra.mxu0 0
        %5100 = vmatprep.subr.bf16.mxu0 0
        %5101 = vmatpush1.bf16.msra.mxu0 0
        %5102 = vmatprep.subr.bf16.mxu0 0
        %5103 = vmatpush1.bf16.msra.mxu0 0
        %5104 = vmatprep.subr.bf16.mxu0 0
        %5105 = vmatpush1.bf16.msra.mxu0 0
        %5106 = vmatprep.subr.bf16.mxu0 0
        %5107 = vmatpush1.bf16.msra.mxu0 0
        %5108 = vmatprep.subr.bf16.mxu0 0
        %5109 = vmatpush1.bf16.msra.mxu0 0
        %5110 = vmatprep.subr.bf16.mxu0 0
        %5111 = vmatpush1.bf16.msra.mxu0 %v5091
        %5112 = vmatprep.subr.bf16.mxu0 0
        %5113 = vmatpush2.bf16.msra.mxu0 0
        %5114 = vmatprep.subr.bf16.mxu0 0
        %5115 = vmatpush2.bf16.msra.mxu0 0
        %5116 = vmatprep.subr.bf16.mxu0 0
        %5117 = vmatpush2.bf16.msra.mxu0 0
        %5118 = vmatprep.subr.bf16.mxu0 0
        %5119 = vmatpush2.bf16.msra.mxu0 0
        %5120 = vmatprep.subr.bf16.mxu0 0
        %5121 = vmatpush2.bf16.msra.mxu0 0
        %5122 = vmatprep.subr.bf16.mxu0 0
        %5123 = vmatpush2.bf16.msra.mxu0 0
        %5124 = vmatprep.subr.bf16.mxu0 0
        %5125 = vmatpush2.bf16.msra.mxu0 0
        %5126 = vmatprep.subr.bf16.mxu0 0
        %5127 = vmatpush2.bf16.msra.mxu0 0
        %5128 = vmatprep.mubr.bf16.mxu0 0
        %5129 = vmatmul.mubr.bf16.gmra.mxu0 %v5094
        %v5130 = vpop.f32.mrf.mxu0
        %v5131 = vadd.f32 0.0, %v5130
        %v5132 = vpop.f32.mrf.mxu0
        %v5133 = vpop.f32.mrf.mxu0
        %v5134 = vadd.f32 0.0, %v5133
        %v5135 = vpop.f32.mrf.mxu0
        %5136 = vdwg.mxu0
        %5137 = vrot.lane.b32.xlu0 %v3815, 64
        %v5138 = vpop.permute.xlu0 %5137
        %v5141 = vsel %vm1362, %v5087, 0
        %5143 = vmatprep.subr.bf16.mxu0 0
        %5144 = vmatpush1.bf16.msra.mxu0 0
        %5145 = vmatprep.subr.bf16.mxu0 0
        %5146 = vmatpush1.bf16.msra.mxu0 0
        %5147 = vmatprep.subr.bf16.mxu0 0
        %5148 = vmatpush1.bf16.msra.mxu0 0
        %5149 = vmatprep.subr.bf16.mxu0 0
        %5150 = vmatpush1.bf16.msra.mxu0 0
        %5151 = vmatprep.subr.bf16.mxu0 0
        %5152 = vmatpush1.bf16.msra.mxu0 0
        %5153 = vmatprep.subr.bf16.mxu0 0
        %5154 = vmatpush1.bf16.msra.mxu0 0
        %5155 = vmatprep.subr.bf16.mxu0 0
        %5156 = vmatpush1.bf16.msra.mxu0 0
        %5157 = vmatprep.subr.bf16.mxu0 0
        %5158 = vmatpush1.bf16.msra.mxu0 %v5138
        %5159 = vmatprep.subr.bf16.mxu0 0
        %5160 = vmatpush2.bf16.msra.mxu0 0
        %5161 = vmatprep.subr.bf16.mxu0 0
        %5162 = vmatpush2.bf16.msra.mxu0 0
        %5163 = vmatprep.subr.bf16.mxu0 0
        %5164 = vmatpush2.bf16.msra.mxu0 0
        %5165 = vmatprep.subr.bf16.mxu0 0
        %5166 = vmatpush2.bf16.msra.mxu0 0
        %5167 = vmatprep.subr.bf16.mxu0 0
        %5168 = vmatpush2.bf16.msra.mxu0 0
        %5169 = vmatprep.subr.bf16.mxu0 0
        %5170 = vmatpush2.bf16.msra.mxu0 0
        %5171 = vmatprep.subr.bf16.mxu0 0
        %5172 = vmatpush2.bf16.msra.mxu0 0
        %5173 = vmatprep.subr.bf16.mxu0 0
        %5174 = vmatpush2.bf16.msra.mxu0 0
        %5175 = vmatprep.mubr.bf16.mxu0 0
        %5176 = vmatmul.mubr.bf16.gmra.mxu0 %v5141
        %v5177 = vpop.f32.mrf.mxu0
        %v5178 = vadd.f32 0.0, %v5177
        %v5179 = vpop.f32.mrf.mxu0
        %v5180 = vpop.f32.mrf.mxu0
        %v5181 = vadd.f32 0.0, %v5180
        %v5182 = vpop.f32.mrf.mxu0
        %5183 = vdwg.mxu0
        %5184 = vrot.lane.b32.xlu0 %v3816, 64
        %v5185 = vpop.permute.xlu0 %5184
        %v5188 = vsel %vm1362, %v5088, 0
        %5190 = vmatprep.subr.bf16.mxu0 0
        %5191 = vmatpush1.bf16.msra.mxu0 0
        %5192 = vmatprep.subr.bf16.mxu0 0
        %5193 = vmatpush1.bf16.msra.mxu0 0
        %5194 = vmatprep.subr.bf16.mxu0 0
        %5195 = vmatpush1.bf16.msra.mxu0 0
        %5196 = vmatprep.subr.bf16.mxu0 0
        %5197 = vmatpush1.bf16.msra.mxu0 0
        %5198 = vmatprep.subr.bf16.mxu0 0
        %5199 = vmatpush1.bf16.msra.mxu0 0
        %5200 = vmatprep.subr.bf16.mxu0 0
        %5201 = vmatpush1.bf16.msra.mxu0 0
        %5202 = vmatprep.subr.bf16.mxu0 0
        %5203 = vmatpush1.bf16.msra.mxu0 0
        %5204 = vmatprep.subr.bf16.mxu0 0
        %5205 = vmatpush1.bf16.msra.mxu0 %v5185
        %5206 = vmatprep.subr.bf16.mxu0 0
        %5207 = vmatpush2.bf16.msra.mxu0 0
        %5208 = vmatprep.subr.bf16.mxu0 0
        %5209 = vmatpush2.bf16.msra.mxu0 0
        %5210 = vmatprep.subr.bf16.mxu0 0
        %5211 = vmatpush2.bf16.msra.mxu0 0
        %5212 = vmatprep.subr.bf16.mxu0 0
        %5213 = vmatpush2.bf16.msra.mxu0 0
        %5214 = vmatprep.subr.bf16.mxu0 0
        %5215 = vmatpush2.bf16.msra.mxu0 0
        %5216 = vmatprep.subr.bf16.mxu0 0
        %5217 = vmatpush2.bf16.msra.mxu0 0
        %5218 = vmatprep.subr.bf16.mxu0 0
        %5219 = vmatpush2.bf16.msra.mxu0 0
        %5220 = vmatprep.subr.bf16.mxu0 0
        %5221 = vmatpush2.bf16.msra.mxu0 0
        %5222 = vmatprep.mubr.bf16.mxu0 0
        %5223 = vmatmul.mubr.bf16.gmra.mxu0 %v5188
        %v5224 = vpop.f32.mrf.mxu0
        %v5225 = vadd.f32 0.0, %v5224
        %v5226 = vpop.f32.mrf.mxu0
        %v5227 = vpop.f32.mrf.mxu0
        %v5228 = vadd.f32 0.0, %v5227
        %v5229 = vpop.f32.mrf.mxu0
        %5230 = vdwg.mxu0
        %5231 = vrot.lane.b32.xlu0 %v3817, 64
        %v5232 = vpop.permute.xlu0 %5231
        %v5235 = vsel %vm1362, %v5089, 0
        %5237 = vmatprep.subr.bf16.mxu0 0
        %5238 = vmatpush1.bf16.msra.mxu0 0
        %5239 = vmatprep.subr.bf16.mxu0 0
        %5240 = vmatpush1.bf16.msra.mxu0 0
        %5241 = vmatprep.subr.bf16.mxu0 0
        %5242 = vmatpush1.bf16.msra.mxu0 0
        %5243 = vmatprep.subr.bf16.mxu0 0
        %5244 = vmatpush1.bf16.msra.mxu0 0
        %5245 = vmatprep.subr.bf16.mxu0 0
        %5246 = vmatpush1.bf16.msra.mxu0 0
        %5247 = vmatprep.subr.bf16.mxu0 0
        %5248 = vmatpush1.bf16.msra.mxu0 0
        %5249 = vmatprep.subr.bf16.mxu0 0
        %5250 = vmatpush1.bf16.msra.mxu0 0
        %5251 = vmatprep.subr.bf16.mxu0 0
        %5252 = vmatpush1.bf16.msra.mxu0 %v5232
        %5253 = vmatprep.subr.bf16.mxu0 0
        %5254 = vmatpush2.bf16.msra.mxu0 0
        %5255 = vmatprep.subr.bf16.mxu0 0
        %5256 = vmatpush2.bf16.msra.mxu0 0
        %5257 = vmatprep.subr.bf16.mxu0 0
        %5258 = vmatpush2.bf16.msra.mxu0 0
        %5259 = vmatprep.subr.bf16.mxu0 0
        %5260 = vmatpush2.bf16.msra.mxu0 0
        %5261 = vmatprep.subr.bf16.mxu0 0
        %5262 = vmatpush2.bf16.msra.mxu0 0
        %5263 = vmatprep.subr.bf16.mxu0 0
        %5264 = vmatpush2.bf16.msra.mxu0 0
        %5265 = vmatprep.subr.bf16.mxu0 0
        %5266 = vmatpush2.bf16.msra.mxu0 0
        %5267 = vmatprep.subr.bf16.mxu0 0
        %5268 = vmatpush2.bf16.msra.mxu0 0
        %5269 = vmatprep.mubr.bf16.mxu0 0
        %5270 = vmatmul.mubr.bf16.gmra.mxu0 %v5235
        %v5271 = vpop.f32.mrf.mxu0
        %v5272 = vadd.f32 0.0, %v5271
        %v5273 = vpop.f32.mrf.mxu0
        %v5274 = vpop.f32.mrf.mxu0
        %v5275 = vadd.f32 0.0, %v5274
        %v5276 = vpop.f32.mrf.mxu0
        %5277 = vdwg.mxu0
        %5278 = vrot.lane.b32.xlu0 %v3806, 32
        %v5279 = vpop.permute.xlu0 %5278
        %5280 = vrot.lane.b32.xlu0 %v3810, 32
        %v5281 = vpop.permute.xlu0 %5280
        %v5283 = vsel %vm1125, %v5279, 0
        %v5286 = vsel %vm1125, %v5281, 0
        %5288 = vmatprep.subr.bf16.mxu0 0
        %5289 = vmatpush1.bf16.xpose.msra.mxu0 0
        %5290 = vmatprep.subr.bf16.mxu0 0
        %5291 = vmatpush1.bf16.xpose.msra.mxu0 0
        %5292 = vmatprep.subr.bf16.mxu0 0
        %5293 = vmatpush1.bf16.xpose.msra.mxu0 0
        %5294 = vmatprep.subr.bf16.mxu0 0
        %5295 = vmatpush1.bf16.xpose.msra.mxu0 0
        %5296 = vmatprep.subr.bf16.mxu0 0
        %5297 = vmatpush1.bf16.xpose.msra.mxu0 0
        %5298 = vmatprep.subr.bf16.mxu0 0
        %5299 = vmatpush1.bf16.xpose.msra.mxu0 0
        %5300 = vmatprep.subr.bf16.mxu0 0
        %5301 = vmatpush1.bf16.xpose.msra.mxu0 0
        %5302 = vmatprep.subr.bf16.mxu0 0
        %5303 = vmatpush1.bf16.xpose.msra.mxu0 %v5286
        %5304 = vmatprep.subr.bf16.mxu0 0
        %5305 = vmatpush2.bf16.xpose.msra.mxu0 0
        %5306 = vmatprep.subr.bf16.mxu0 0
        %5307 = vmatpush2.bf16.xpose.msra.mxu0 0
        %5308 = vmatprep.subr.bf16.mxu0 0
        %5309 = vmatpush2.bf16.xpose.msra.mxu0 0
        %5310 = vmatprep.subr.bf16.mxu0 0
        %5311 = vmatpush2.bf16.xpose.msra.mxu0 0
        %5312 = vmatprep.subr.bf16.mxu0 0
        %5313 = vmatpush2.bf16.xpose.msra.mxu0 0
        %5314 = vmatprep.subr.bf16.mxu0 0
        %5315 = vmatpush2.bf16.xpose.msra.mxu0 0
        %5316 = vmatprep.subr.bf16.mxu0 0
        %5317 = vmatpush2.bf16.xpose.msra.mxu0 0
        %5318 = vmatprep.subr.bf16.mxu0 0
        %5319 = vmatpush2.bf16.xpose.msra.mxu0 0
        %5320 = vmatprep.mubr.bf16.mxu0 0
        %5321 = vmatmul.mubr.bf16.gmra.mxu0 %v5283
        %v5322 = vpop.f32.mrf.mxu0
        %v5323 = vadd.f32 0.0, %v5322
        %v5324 = vpop.f32.mrf.mxu0
        %v5325 = vpop.f32.mrf.mxu0
        %v5326 = vadd.f32 0.0, %v5325
        %v5327 = vpop.f32.mrf.mxu0
        %5328 = vdwg.mxu0
        %5329 = vrot.lane.b32.xlu0 %v3807, 32
        %v5330 = vpop.permute.xlu0 %5329
        %5331 = vrot.lane.b32.xlu0 %v3811, 32
        %v5332 = vpop.permute.xlu0 %5331
        %v5334 = vsel %vm1125, %v5330, 0
        %v5337 = vsel %vm1125, %v5332, 0
        %5339 = vmatprep.subr.bf16.mxu0 0
        %5340 = vmatpush1.bf16.xpose.msra.mxu0 0
        %5341 = vmatprep.subr.bf16.mxu0 0
        %5342 = vmatpush1.bf16.xpose.msra.mxu0 0
        %5343 = vmatprep.subr.bf16.mxu0 0
        %5344 = vmatpush1.bf16.xpose.msra.mxu0 0
        %5345 = vmatprep.subr.bf16.mxu0 0
        %5346 = vmatpush1.bf16.xpose.msra.mxu0 0
        %5347 = vmatprep.subr.bf16.mxu0 0
        %5348 = vmatpush1.bf16.xpose.msra.mxu0 0
        %5349 = vmatprep.subr.bf16.mxu0 0
        %5350 = vmatpush1.bf16.xpose.msra.mxu0 0
        %5351 = vmatprep.subr.bf16.mxu0 0
        %5352 = vmatpush1.bf16.xpose.msra.mxu0 0
        %5353 = vmatprep.subr.bf16.mxu0 0
        %5354 = vmatpush1.bf16.xpose.msra.mxu0 %v5337
        %5355 = vmatprep.subr.bf16.mxu0 0
        %5356 = vmatpush2.bf16.xpose.msra.mxu0 0
        %5357 = vmatprep.subr.bf16.mxu0 0
        %5358 = vmatpush2.bf16.xpose.msra.mxu0 0
        %5359 = vmatprep.subr.bf16.mxu0 0
        %5360 = vmatpush2.bf16.xpose.msra.mxu0 0
        %5361 = vmatprep.subr.bf16.mxu0 0
        %5362 = vmatpush2.bf16.xpose.msra.mxu0 0
        %5363 = vmatprep.subr.bf16.mxu0 0
        %5364 = vmatpush2.bf16.xpose.msra.mxu0 0
        %5365 = vmatprep.subr.bf16.mxu0 0
        %5366 = vmatpush2.bf16.xpose.msra.mxu0 0
        %5367 = vmatprep.subr.bf16.mxu0 0
        %5368 = vmatpush2.bf16.xpose.msra.mxu0 0
        %5369 = vmatprep.subr.bf16.mxu0 0
        %5370 = vmatpush2.bf16.xpose.msra.mxu0 0
        %5371 = vmatprep.mubr.bf16.mxu0 0
        %5372 = vmatmul.mubr.bf16.gmra.mxu0 %v5334
        %v5373 = vpop.f32.mrf.mxu0
        %v5374 = vadd.f32 0.0, %v5373
        %v5375 = vpop.f32.mrf.mxu0
        %v5376 = vpop.f32.mrf.mxu0
        %v5377 = vadd.f32 0.0, %v5376
        %v5378 = vpop.f32.mrf.mxu0
        %5379 = vdwg.mxu0
        %5380 = vrot.lane.b32.xlu0 %v3808, 32
        %v5381 = vpop.permute.xlu0 %5380
        %5382 = vrot.lane.b32.xlu0 %v3812, 32
        %v5383 = vpop.permute.xlu0 %5382
        %v5385 = vsel %vm1125, %v5381, 0
        %v5388 = vsel %vm1125, %v5383, 0
        %5390 = vmatprep.subr.bf16.mxu0 0
        %5391 = vmatpush1.bf16.xpose.msra.mxu0 0
        %5392 = vmatprep.subr.bf16.mxu0 0
        %5393 = vmatpush1.bf16.xpose.msra.mxu0 0
        %5394 = vmatprep.subr.bf16.mxu0 0
        %5395 = vmatpush1.bf16.xpose.msra.mxu0 0
        %5396 = vmatprep.subr.bf16.mxu0 0
        %5397 = vmatpush1.bf16.xpose.msra.mxu0 0
        %5398 = vmatprep.subr.bf16.mxu0 0
        %5399 = vmatpush1.bf16.xpose.msra.mxu0 0
        %5400 = vmatprep.subr.bf16.mxu0 0
        %5401 = vmatpush1.bf16.xpose.msra.mxu0 0
        %5402 = vmatprep.subr.bf16.mxu0 0
        %5403 = vmatpush1.bf16.xpose.msra.mxu0 0
        %5404 = vmatprep.subr.bf16.mxu0 0
        %5405 = vmatpush1.bf16.xpose.msra.mxu0 %v5388
        %5406 = vmatprep.subr.bf16.mxu0 0
        %5407 = vmatpush2.bf16.xpose.msra.mxu0 0
        %5408 = vmatprep.subr.bf16.mxu0 0
        %5409 = vmatpush2.bf16.xpose.msra.mxu0 0
        %5410 = vmatprep.subr.bf16.mxu0 0
        %5411 = vmatpush2.bf16.xpose.msra.mxu0 0
        %5412 = vmatprep.subr.bf16.mxu0 0
        %5413 = vmatpush2.bf16.xpose.msra.mxu0 0
        %5414 = vmatprep.subr.bf16.mxu0 0
        %5415 = vmatpush2.bf16.xpose.msra.mxu0 0
        %5416 = vmatprep.subr.bf16.mxu0 0
        %5417 = vmatpush2.bf16.xpose.msra.mxu0 0
        %5418 = vmatprep.subr.bf16.mxu0 0
        %5419 = vmatpush2.bf16.xpose.msra.mxu0 0
        %5420 = vmatprep.subr.bf16.mxu0 0
        %5421 = vmatpush2.bf16.xpose.msra.mxu0 0
        %5422 = vmatprep.mubr.bf16.mxu0 0
        %5423 = vmatmul.mubr.bf16.gmra.mxu0 %v5385
        %v5424 = vpop.f32.mrf.mxu0
        %v5425 = vadd.f32 0.0, %v5424
        %v5426 = vpop.f32.mrf.mxu0
        %v5427 = vpop.f32.mrf.mxu0
        %v5428 = vadd.f32 0.0, %v5427
        %v5429 = vpop.f32.mrf.mxu0
        %5430 = vdwg.mxu0
        %5431 = vrot.lane.b32.xlu0 %v3809, 32
        %v5432 = vpop.permute.xlu0 %5431
        %5433 = vrot.lane.b32.xlu0 %v3813, 32
        %v5434 = vpop.permute.xlu0 %5433
        %v5436 = vsel %vm1125, %v5432, 0
        %v5439 = vsel %vm1125, %v5434, 0
        %5441 = vmatprep.subr.bf16.mxu0 0
        %5442 = vmatpush1.bf16.xpose.msra.mxu0 0
        %5443 = vmatprep.subr.bf16.mxu0 0
        %5444 = vmatpush1.bf16.xpose.msra.mxu0 0
        %5445 = vmatprep.subr.bf16.mxu0 0
        %5446 = vmatpush1.bf16.xpose.msra.mxu0 0
        %5447 = vmatprep.subr.bf16.mxu0 0
        %5448 = vmatpush1.bf16.xpose.msra.mxu0 0
        %5449 = vmatprep.subr.bf16.mxu0 0
        %5450 = vmatpush1.bf16.xpose.msra.mxu0 0
        %5451 = vmatprep.subr.bf16.mxu0 0
        %5452 = vmatpush1.bf16.xpose.msra.mxu0 0
        %5453 = vmatprep.subr.bf16.mxu0 0
        %5454 = vmatpush1.bf16.xpose.msra.mxu0 0
        %5455 = vmatprep.subr.bf16.mxu0 0
        %5456 = vmatpush1.bf16.xpose.msra.mxu0 %v5439
        %5457 = vmatprep.subr.bf16.mxu0 0
        %5458 = vmatpush2.bf16.xpose.msra.mxu0 0
        %5459 = vmatprep.subr.bf16.mxu0 0
        %5460 = vmatpush2.bf16.xpose.msra.mxu0 0
        %5461 = vmatprep.subr.bf16.mxu0 0
        %5462 = vmatpush2.bf16.xpose.msra.mxu0 0
        %5463 = vmatprep.subr.bf16.mxu0 0
        %5464 = vmatpush2.bf16.xpose.msra.mxu0 0
        %5465 = vmatprep.subr.bf16.mxu0 0
        %5466 = vmatpush2.bf16.xpose.msra.mxu0 0
        %5467 = vmatprep.subr.bf16.mxu0 0
        %5468 = vmatpush2.bf16.xpose.msra.mxu0 0
        %5469 = vmatprep.subr.bf16.mxu0 0
        %5470 = vmatpush2.bf16.xpose.msra.mxu0 0
        %5471 = vmatprep.subr.bf16.mxu0 0
        %5472 = vmatpush2.bf16.xpose.msra.mxu0 0
        %5473 = vmatprep.mubr.bf16.mxu0 0
        %5474 = vmatmul.mubr.bf16.gmra.mxu0 %v5436
        %v5475 = vpop.f32.mrf.mxu0
        %v5476 = vadd.f32 0.0, %v5475
        %v5477 = vpop.f32.mrf.mxu0
        %v5478 = vpop.f32.mrf.mxu0
        %v5479 = vadd.f32 0.0, %v5478
        %v5480 = vpop.f32.mrf.mxu0
        %5481 = vdwg.mxu0
        %v5482 = vsel %vm2903, -1e+30, %v5323
        %v5483 = vsel %vm2903, -1e+30, %v5326
        %v5484 = vsel %vm2904, -1e+30, %v5374
        %v5485 = vsel %vm2904, -1e+30, %v5377
        %v5486 = vsel %vm2905, -1e+30, %v5425
        %v5487 = vsel %vm2905, -1e+30, %v5428
        %v5488 = vsel %vm2906, -1e+30, %v5476
        %v5489 = vsel %vm2906, -1e+30, %v5479
        %v5490 = vsel %vm1362, %v5482, -inf
        %5491 = vmax.xlane.f32.xlu0 %v5490
        %v5492 = vpop.xlane.xlu0 %5491
        %v5493 = vsel %vm1362, %v5483, -inf
        %5494 = vmax.xlane.f32.xlu0 %v5493
        %v5495 = vpop.xlane.xlu0 %5494
        %v5496 = vsel %vm1362, %v5484, -inf
        %5497 = vmax.xlane.f32.xlu0 %v5496
        %v5498 = vpop.xlane.xlu0 %5497
        %v5499 = vsel %vm1362, %v5485, -inf
        %5500 = vmax.xlane.f32.xlu0 %v5499
        %v5501 = vpop.xlane.xlu0 %5500
        %v5502 = vsel %vm1362, %v5486, -inf
        %5503 = vmax.xlane.f32.xlu0 %v5502
        %v5504 = vpop.xlane.xlu0 %5503
        %v5505 = vsel %vm1362, %v5487, -inf
        %5506 = vmax.xlane.f32.xlu0 %v5505
        %v5507 = vpop.xlane.xlu0 %5506
        %v5508 = vsel %vm1362, %v5488, -inf
        %5509 = vmax.xlane.f32.xlu0 %v5508
        %v5510 = vpop.xlane.xlu0 %5509
        %v5511 = vsel %vm1362, %v5489, -inf
        %5512 = vmax.xlane.f32.xlu0 %v5511
        %v5513 = vpop.xlane.xlu0 %5512
        %v5514 = vsub.f32 %v5482, %v5492
        %v5515 = vsub.f32 %v5483, %v5495
        %v5516 = vsub.f32 %v5484, %v5498
        %v5517 = vsub.f32 %v5485, %v5501
        %v5518 = vsub.f32 %v5486, %v5504
        %v5519 = vsub.f32 %v5487, %v5507
        %v5520 = vsub.f32 %v5488, %v5510
        %v5521 = vsub.f32 %v5489, %v5513
        %v5522 = vmul.f32 %v5514, 1.442695
        %v5523 = vpow.pop %v5522
        %v5524 = vmul.f32 %v5515, 1.442695
        %v5525 = vpow.pop %v5524
        %v5526 = vmul.f32 %v5516, 1.442695
        %v5527 = vpow.pop %v5526
        %v5528 = vmul.f32 %v5517, 1.442695
        %v5529 = vpow.pop %v5528
        %v5530 = vmul.f32 %v5518, 1.442695
        %v5531 = vpow.pop %v5530
        %v5532 = vmul.f32 %v5519, 1.442695
        %v5533 = vpow.pop %v5532
        %v5534 = vmul.f32 %v5520, 1.442695
        %v5535 = vpow.pop %v5534
        %v5536 = vmul.f32 %v5521, 1.442695
        %v5537 = vpow.pop %v5536
        %v5538 = vsel %vm1362, %v5523, 0.0
        %5539 = vadd.xlane.f32.xlu0 %v5538
        %v5540 = vpop.xlane.xlu0 %5539
        %v5541 = vsel %vm1362, %v5525, 0.0
        %5542 = vadd.xlane.f32.xlu0 %v5541
        %v5543 = vpop.xlane.xlu0 %5542
        %v5544 = vsel %vm1362, %v5527, 0.0
        %5545 = vadd.xlane.f32.xlu0 %v5544
        %v5546 = vpop.xlane.xlu0 %5545
        %v5547 = vsel %vm1362, %v5529, 0.0
        %5548 = vadd.xlane.f32.xlu0 %v5547
        %v5549 = vpop.xlane.xlu0 %5548
        %v5550 = vsel %vm1362, %v5531, 0.0
        %5551 = vadd.xlane.f32.xlu0 %v5550
        %v5552 = vpop.xlane.xlu0 %5551
        %v5553 = vsel %vm1362, %v5533, 0.0
        %5554 = vadd.xlane.f32.xlu0 %v5553
        %v5555 = vpop.xlane.xlu0 %5554
        %v5556 = vsel %vm1362, %v5535, 0.0
        %5557 = vadd.xlane.f32.xlu0 %v5556
        %v5558 = vpop.xlane.xlu0 %5557
        %v5559 = vsel %vm1362, %v5537, 0.0
        %5560 = vadd.xlane.f32.xlu0 %v5559
        %v5561 = vpop.xlane.xlu0 %5560
        %v5562 = vrcp.pop %v5540
        %v5563 = vrcp.pop %v5543
        %v5564 = vrcp.pop %v5546
        %v5565 = vrcp.pop %v5549
        %v5566 = vrcp.pop %v5552
        %v5567 = vrcp.pop %v5555
        %v5568 = vrcp.pop %v5558
        %v5569 = vrcp.pop %v5561
        %v5570 = vmul.f32 %v5523, %v5562
        %v5571 = vmul.f32 %v5525, %v5563
        %v5572 = vmul.f32 %v5527, %v5564
        %v5573 = vmul.f32 %v5529, %v5565
        %v5574 = vmul.f32 %v5531, %v5566
        %v5575 = vmul.f32 %v5533, %v5567
        %v5576 = vmul.f32 %v5535, %v5568
        %v5577 = vmul.f32 %v5537, %v5569
        %v5578 = vpack.c.bf16 %v5571, %v5570
        %v5579 = vpack.c.bf16 %v5573, %v5572
        %v5580 = vpack.c.bf16 %v5575, %v5574
        %v5581 = vpack.c.bf16 %v5577, %v5576
        %5582 = vrot.lane.b32.xlu0 %v3814, 32
        %v5583 = vpop.permute.xlu0 %5582
        %v5586 = vsel %vm1362, %v5578, 0
        %5588 = vmatprep.subr.bf16.mxu0 0
        %5589 = vmatpush1.bf16.msra.mxu0 0
        %5590 = vmatprep.subr.bf16.mxu0 0
        %5591 = vmatpush1.bf16.msra.mxu0 0
        %5592 = vmatprep.subr.bf16.mxu0 0
        %5593 = vmatpush1.bf16.msra.mxu0 0
        %5594 = vmatprep.subr.bf16.mxu0 0
        %5595 = vmatpush1.bf16.msra.mxu0 0
        %5596 = vmatprep.subr.bf16.mxu0 0
        %5597 = vmatpush1.bf16.msra.mxu0 0
        %5598 = vmatprep.subr.bf16.mxu0 0
        %5599 = vmatpush1.bf16.msra.mxu0 0
        %5600 = vmatprep.subr.bf16.mxu0 0
        %5601 = vmatpush1.bf16.msra.mxu0 0
        %5602 = vmatprep.subr.bf16.mxu0 0
        %5603 = vmatpush1.bf16.msra.mxu0 %v5583
        %5604 = vmatprep.subr.bf16.mxu0 0
        %5605 = vmatpush2.bf16.msra.mxu0 0
        %5606 = vmatprep.subr.bf16.mxu0 0
        %5607 = vmatpush2.bf16.msra.mxu0 0
        %5608 = vmatprep.subr.bf16.mxu0 0
        %5609 = vmatpush2.bf16.msra.mxu0 0
        %5610 = vmatprep.subr.bf16.mxu0 0
        %5611 = vmatpush2.bf16.msra.mxu0 0
        %5612 = vmatprep.subr.bf16.mxu0 0
        %5613 = vmatpush2.bf16.msra.mxu0 0
        %5614 = vmatprep.subr.bf16.mxu0 0
        %5615 = vmatpush2.bf16.msra.mxu0 0
        %5616 = vmatprep.subr.bf16.mxu0 0
        %5617 = vmatpush2.bf16.msra.mxu0 0
        %5618 = vmatprep.subr.bf16.mxu0 0
        %5619 = vmatpush2.bf16.msra.mxu0 0
        %5620 = vmatprep.mubr.bf16.mxu0 0
        %5621 = vmatmul.mubr.bf16.gmra.mxu0 %v5586
        %v5622 = vpop.f32.mrf.mxu0
        %v5623 = vadd.f32 0.0, %v5622
        %v5624 = vpop.f32.mrf.mxu0
        %v5625 = vpop.f32.mrf.mxu0
        %v5626 = vadd.f32 0.0, %v5625
        %v5627 = vpop.f32.mrf.mxu0
        %5628 = vdwg.mxu0
        %5629 = vrot.lane.b32.xlu0 %v3815, 32
        %v5630 = vpop.permute.xlu0 %5629
        %v5633 = vsel %vm1362, %v5579, 0
        %5635 = vmatprep.subr.bf16.mxu0 0
        %5636 = vmatpush1.bf16.msra.mxu0 0
        %5637 = vmatprep.subr.bf16.mxu0 0
        %5638 = vmatpush1.bf16.msra.mxu0 0
        %5639 = vmatprep.subr.bf16.mxu0 0
        %5640 = vmatpush1.bf16.msra.mxu0 0
        %5641 = vmatprep.subr.bf16.mxu0 0
        %5642 = vmatpush1.bf16.msra.mxu0 0
        %5643 = vmatprep.subr.bf16.mxu0 0
        %5644 = vmatpush1.bf16.msra.mxu0 0
        %5645 = vmatprep.subr.bf16.mxu0 0
        %5646 = vmatpush1.bf16.msra.mxu0 0
        %5647 = vmatprep.subr.bf16.mxu0 0
        %5648 = vmatpush1.bf16.msra.mxu0 0
        %5649 = vmatprep.subr.bf16.mxu0 0
        %5650 = vmatpush1.bf16.msra.mxu0 %v5630
        %5651 = vmatprep.subr.bf16.mxu0 0
        %5652 = vmatpush2.bf16.msra.mxu0 0
        %5653 = vmatprep.subr.bf16.mxu0 0
        %5654 = vmatpush2.bf16.msra.mxu0 0
        %5655 = vmatprep.subr.bf16.mxu0 0
        %5656 = vmatpush2.bf16.msra.mxu0 0
        %5657 = vmatprep.subr.bf16.mxu0 0
        %5658 = vmatpush2.bf16.msra.mxu0 0
        %5659 = vmatprep.subr.bf16.mxu0 0
        %5660 = vmatpush2.bf16.msra.mxu0 0
        %5661 = vmatprep.subr.bf16.mxu0 0
        %5662 = vmatpush2.bf16.msra.mxu0 0
        %5663 = vmatprep.subr.bf16.mxu0 0
        %5664 = vmatpush2.bf16.msra.mxu0 0
        %5665 = vmatprep.subr.bf16.mxu0 0
        %5666 = vmatpush2.bf16.msra.mxu0 0
        %5667 = vmatprep.mubr.bf16.mxu0 0
        %5668 = vmatmul.mubr.bf16.gmra.mxu0 %v5633
        %v5669 = vpop.f32.mrf.mxu0
        %v5670 = vadd.f32 0.0, %v5669
        %v5671 = vpop.f32.mrf.mxu0
        %v5672 = vpop.f32.mrf.mxu0
        %v5673 = vadd.f32 0.0, %v5672
        %v5674 = vpop.f32.mrf.mxu0
        %5675 = vdwg.mxu0
        %5676 = vrot.lane.b32.xlu0 %v3816, 32
        %v5677 = vpop.permute.xlu0 %5676
        %v5680 = vsel %vm1362, %v5580, 0
        %5682 = vmatprep.subr.bf16.mxu0 0
        %5683 = vmatpush1.bf16.msra.mxu0 0
        %5684 = vmatprep.subr.bf16.mxu0 0
        %5685 = vmatpush1.bf16.msra.mxu0 0
        %5686 = vmatprep.subr.bf16.mxu0 0
        %5687 = vmatpush1.bf16.msra.mxu0 0
        %5688 = vmatprep.subr.bf16.mxu0 0
        %5689 = vmatpush1.bf16.msra.mxu0 0
        %5690 = vmatprep.subr.bf16.mxu0 0
        %5691 = vmatpush1.bf16.msra.mxu0 0
        %5692 = vmatprep.subr.bf16.mxu0 0
        %5693 = vmatpush1.bf16.msra.mxu0 0
        %5694 = vmatprep.subr.bf16.mxu0 0
        %5695 = vmatpush1.bf16.msra.mxu0 0
        %5696 = vmatprep.subr.bf16.mxu0 0
        %5697 = vmatpush1.bf16.msra.mxu0 %v5677
        %5698 = vmatprep.subr.bf16.mxu0 0
        %5699 = vmatpush2.bf16.msra.mxu0 0
        %5700 = vmatprep.subr.bf16.mxu0 0
        %5701 = vmatpush2.bf16.msra.mxu0 0
        %5702 = vmatprep.subr.bf16.mxu0 0
        %5703 = vmatpush2.bf16.msra.mxu0 0
        %5704 = vmatprep.subr.bf16.mxu0 0
        %5705 = vmatpush2.bf16.msra.mxu0 0
        %5706 = vmatprep.subr.bf16.mxu0 0
        %5707 = vmatpush2.bf16.msra.mxu0 0
        %5708 = vmatprep.subr.bf16.mxu0 0
        %5709 = vmatpush2.bf16.msra.mxu0 0
        %5710 = vmatprep.subr.bf16.mxu0 0
        %5711 = vmatpush2.bf16.msra.mxu0 0
        %5712 = vmatprep.subr.bf16.mxu0 0
        %5713 = vmatpush2.bf16.msra.mxu0 0
        %5714 = vmatprep.mubr.bf16.mxu0 0
        %5715 = vmatmul.mubr.bf16.gmra.mxu0 %v5680
        %v5716 = vpop.f32.mrf.mxu0
        %v5717 = vadd.f32 0.0, %v5716
        %v5718 = vpop.f32.mrf.mxu0
        %v5719 = vpop.f32.mrf.mxu0
        %v5720 = vadd.f32 0.0, %v5719
        %v5721 = vpop.f32.mrf.mxu0
        %5722 = vdwg.mxu0
        %5723 = vrot.lane.b32.xlu0 %v3817, 32
        %v5724 = vpop.permute.xlu0 %5723
        %v5727 = vsel %vm1362, %v5581, 0
        %5729 = vmatprep.subr.bf16.mxu0 0
        %5730 = vmatpush1.bf16.msra.mxu0 0
        %5731 = vmatprep.subr.bf16.mxu0 0
        %5732 = vmatpush1.bf16.msra.mxu0 0
        %5733 = vmatprep.subr.bf16.mxu0 0
        %5734 = vmatpush1.bf16.msra.mxu0 0
        %5735 = vmatprep.subr.bf16.mxu0 0
        %5736 = vmatpush1.bf16.msra.mxu0 0
        %5737 = vmatprep.subr.bf16.mxu0 0
        %5738 = vmatpush1.bf16.msra.mxu0 0
        %5739 = vmatprep.subr.bf16.mxu0 0
        %5740 = vmatpush1.bf16.msra.mxu0 0
        %5741 = vmatprep.subr.bf16.mxu0 0
        %5742 = vmatpush1.bf16.msra.mxu0 0
        %5743 = vmatprep.subr.bf16.mxu0 0
        %5744 = vmatpush1.bf16.msra.mxu0 %v5724
        %5745 = vmatprep.subr.bf16.mxu0 0
        %5746 = vmatpush2.bf16.msra.mxu0 0
        %5747 = vmatprep.subr.bf16.mxu0 0
        %5748 = vmatpush2.bf16.msra.mxu0 0
        %5749 = vmatprep.subr.bf16.mxu0 0
        %5750 = vmatpush2.bf16.msra.mxu0 0
        %5751 = vmatprep.subr.bf16.mxu0 0
        %5752 = vmatpush2.bf16.msra.mxu0 0
        %5753 = vmatprep.subr.bf16.mxu0 0
        %5754 = vmatpush2.bf16.msra.mxu0 0
        %5755 = vmatprep.subr.bf16.mxu0 0
        %5756 = vmatpush2.bf16.msra.mxu0 0
        %5757 = vmatprep.subr.bf16.mxu0 0
        %5758 = vmatpush2.bf16.msra.mxu0 0
        %5759 = vmatprep.subr.bf16.mxu0 0
        %5760 = vmatpush2.bf16.msra.mxu0 0
        %5761 = vmatprep.mubr.bf16.mxu0 0
        %5762 = vmatmul.mubr.bf16.gmra.mxu0 %v5727
        %v5763 = vpop.f32.mrf.mxu0
        %v5764 = vadd.f32 0.0, %v5763
        %v5765 = vpop.f32.mrf.mxu0
        %v5766 = vpop.f32.mrf.mxu0
        %v5767 = vadd.f32 0.0, %v5766
        %v5768 = vpop.f32.mrf.mxu0
        %5769 = vdwg.mxu0
        %5778 = vrot.lane.b32.xlu0 %v4636, 32
        %v5779 = vpop.permute.xlu0 %5778
        %5780 = vrot.lane.b32.xlu0 %v4639, 32
        %v5781 = vpop.permute.xlu0 %5780
        %5782 = vrot.lane.b32.xlu0 %v4684, 32
        %v5783 = vpop.permute.xlu0 %5782
        %5784 = vrot.lane.b32.xlu0 %v4687, 32
        %v5785 = vpop.permute.xlu0 %5784
        %5786 = vrot.lane.b32.xlu0 %v4732, 32
        %v5787 = vpop.permute.xlu0 %5786
        %5788 = vrot.lane.b32.xlu0 %v4735, 32
        %v5789 = vpop.permute.xlu0 %5788
        %5790 = vrot.lane.b32.xlu0 %v4780, 32
        %v5791 = vpop.permute.xlu0 %5790
        %5792 = vrot.lane.b32.xlu0 %v4783, 32
        %v5793 = vpop.permute.xlu0 %5792
        %5810 = vrot.lane.b32.xlu0 %v5131, 64
        %v5811 = vpop.permute.xlu0 %5810
        %5812 = vrot.lane.b32.xlu0 %v5134, 64
        %v5813 = vpop.permute.xlu0 %5812
        %5814 = vrot.lane.b32.xlu0 %v5178, 64
        %v5815 = vpop.permute.xlu0 %5814
        %5816 = vrot.lane.b32.xlu0 %v5181, 64
        %v5817 = vpop.permute.xlu0 %5816
        %5818 = vrot.lane.b32.xlu0 %v5225, 64
        %v5819 = vpop.permute.xlu0 %5818
        %5820 = vrot.lane.b32.xlu0 %v5228, 64
        %v5821 = vpop.permute.xlu0 %5820
        %5822 = vrot.lane.b32.xlu0 %v5272, 64
        %v5823 = vpop.permute.xlu0 %5822
        %5824 = vrot.lane.b32.xlu0 %v5275, 64
        %v5825 = vpop.permute.xlu0 %5824
        %5842 = vrot.lane.b32.xlu0 %v5623, 96
        %v5843 = vpop.permute.xlu0 %5842
        %5844 = vrot.lane.b32.xlu0 %v5626, 96
        %v5845 = vpop.permute.xlu0 %5844
        %5846 = vrot.lane.b32.xlu0 %v5670, 96
        %v5847 = vpop.permute.xlu0 %5846
        %5848 = vrot.lane.b32.xlu0 %v5673, 96
        %v5849 = vpop.permute.xlu0 %5848
        %5850 = vrot.lane.b32.xlu0 %v5717, 96
        %v5851 = vpop.permute.xlu0 %5850
        %5852 = vrot.lane.b32.xlu0 %v5720, 96
        %v5853 = vpop.permute.xlu0 %5852
        %5854 = vrot.lane.b32.xlu0 %v5764, 96
        %v5855 = vpop.permute.xlu0 %5854
        %5856 = vrot.lane.b32.xlu0 %v5767, 96
        %v5857 = vpop.permute.xlu0 %5856
        %v5866 = vsel %vm1125, %v4144, %v5779
        %v5867 = vsel %vm1125, %v4147, %v5781
        %v5868 = vsel %vm1125, %v4188, %v5783
        %v5869 = vsel %vm1125, %v4191, %v5785
        %v5870 = vsel %vm1125, %v4232, %v5787
        %v5871 = vsel %vm1125, %v4235, %v5789
        %v5872 = vsel %vm1125, %v4276, %v5791
        %v5873 = vsel %vm1125, %v4279, %v5793
        %v5874 = vsel %vm3307, %v5866, %v5811
        %v5875 = vsel %vm3307, %v5867, %v5813
        %v5876 = vsel %vm3307, %v5868, %v5815
        %v5877 = vsel %vm3307, %v5869, %v5817
        %v5878 = vsel %vm3307, %v5870, %v5819
        %v5879 = vsel %vm3307, %v5871, %v5821
        %v5880 = vsel %vm3307, %v5872, %v5823
        %v5881 = vsel %vm3307, %v5873, %v5825
        %v5882 = vsel %vm3316, %v5874, %v5843
        %v5883 = vsel %vm3316, %v5875, %v5845
        %v5884 = vsel %vm3316, %v5876, %v5847
        %v5885 = vsel %vm3316, %v5877, %v5849
        %v5886 = vsel %vm3316, %v5878, %v5851
        %v5887 = vsel %vm3316, %v5879, %v5853
        %v5888 = vsel %vm3316, %v5880, %v5855
        %v5889 = vsel %vm3316, %v5881, %v5857
        %v5890 = vpack.c.bf16 %v5883, %v5882
        %v5891 = vpack.c.bf16 %v5885, %v5884
        %v5892 = vpack.c.bf16 %v5887, %v5886
        %v5893 = vpack.c.bf16 %v5889, %v5888
        %v5894 = vld [vmem:[#allocation10] sm:$0xf]
        %v5895 = vld [vmem:[#allocation10 + $0x4] sm:$0xf]
        %v5896 = vld [vmem:[#allocation10 + $0x8] sm:$0xf]
        %v5897 = vld [vmem:[#allocation10 + $0xc] sm:$0xf]
        %v5898 = vld [vmem:[#allocation10 + $0x10] sm:$0xf]
        %v5899 = vld [vmem:[#allocation10 + $0x14] sm:$0xf]
        %v5900 = vld [vmem:[#allocation10 + $0x18] sm:$0xf]
        %v5901 = vld [vmem:[#allocation10 + $0x1c] sm:$0xf]
        %v5902 = vld [vmem:[#allocation10 + $0x20] sm:$0xf]
        %v5903 = vld [vmem:[#allocation10 + $0x24] sm:$0xf]
        %v5904 = vld [vmem:[#allocation10 + $0x28] sm:$0xf]
        %v5905 = vld [vmem:[#allocation10 + $0x2c] sm:$0xf]
        %v5906 = vld [vmem:[#allocation10 + $0x30] sm:$0xf]
        %v5907 = vld [vmem:[#allocation10 + $0x34] sm:$0xf]
        %v5908 = vld [vmem:[#allocation10 + $0x38] sm:$0xf]
        %v5909 = vld [vmem:[#allocation10 + $0x3c] sm:$0xf]
        %v5910 = vld [vmem:[%s12] sm:$0x1]
        %v5912 = vlaneseq
        %v5913 = vshrl.u32 %v5912, 7
        %v5914 = vsub.s32 0, %v5913
        %v5915 = vrot.slane %v5910, %v5914
        %v5933 = vunpack.c.l.b16 %v5894
        %v5934 = vunpack.c.l.b16 %v5895
        %v5935 = vunpack.c.l.b16 %v5896
        %v5936 = vunpack.c.l.b16 %v5897
        %v5937 = vunpack.c.l.b16 %v5898
        %v5938 = vunpack.c.l.b16 %v5899
        %v5939 = vunpack.c.l.b16 %v5900
        %v5940 = vunpack.c.l.b16 %v5901
        %v5941 = vunpack.c.l.b16 %v5902
        %v5942 = vunpack.c.l.b16 %v5903
        %v5943 = vunpack.c.l.b16 %v5904
        %v5944 = vunpack.c.l.b16 %v5905
        %v5945 = vunpack.c.l.b16 %v5906
        %v5946 = vunpack.c.l.b16 %v5907
        %v5947 = vunpack.c.l.b16 %v5908
        %v5948 = vunpack.c.l.b16 %v5909
        %v5949 = vpack.c.b16 %v5934, %v5933
        %v5950 = vpack.c.b16 %v5936, %v5935
        %v5951 = vpack.c.b16 %v5938, %v5937
        %v5952 = vpack.c.b16 %v5940, %v5939
        %v5953 = vpack.c.b16 %v5942, %v5941
        %v5954 = vpack.c.b16 %v5944, %v5943
        %v5955 = vpack.c.b16 %v5946, %v5945
        %v5956 = vpack.c.b16 %v5948, %v5947
        %5965 = vmatprep.subr.bf16.mxu0 0
        %5966 = vmatpush1.bf16.msra.mxu0 %v5956
        %5967 = vmatprep.subr.bf16.mxu0 0
        %5968 = vmatpush1.bf16.msra.mxu0 %v5955
        %5969 = vmatprep.subr.bf16.mxu0 0
        %5970 = vmatpush1.bf16.msra.mxu0 %v5954
        %5971 = vmatprep.subr.bf16.mxu0 0
        %5972 = vmatpush1.bf16.msra.mxu0 %v5953
        %5973 = vmatprep.subr.bf16.mxu0 0
        %5974 = vmatpush1.bf16.msra.mxu0 %v5952
        %5975 = vmatprep.subr.bf16.mxu0 0
        %5976 = vmatpush1.bf16.msra.mxu0 %v5951
        %5977 = vmatprep.subr.bf16.mxu0 0
        %5978 = vmatpush1.bf16.msra.mxu0 %v5950
        %5979 = vmatprep.subr.bf16.mxu0 0
        %5980 = vmatpush1.bf16.msra.mxu0 %v5949
        %5981 = vmatprep.subr.bf16.mxu0 0
        %5982 = vmatpush2.bf16.msra.mxu0 0
        %5983 = vmatprep.subr.bf16.mxu0 0
        %5984 = vmatpush2.bf16.msra.mxu0 0
        %5985 = vmatprep.subr.bf16.mxu0 0
        %5986 = vmatpush2.bf16.msra.mxu0 0
        %5987 = vmatprep.subr.bf16.mxu0 0
        %5988 = vmatpush2.bf16.msra.mxu0 0
        %5989 = vmatprep.subr.bf16.mxu0 0
        %5990 = vmatpush2.bf16.msra.mxu0 0
        %5991 = vmatprep.subr.bf16.mxu0 0
        %5992 = vmatpush2.bf16.msra.mxu0 0
        %5993 = vmatprep.subr.bf16.mxu0 0
        %5994 = vmatpush2.bf16.msra.mxu0 0
        %5995 = vmatprep.subr.bf16.mxu0 0
        %5996 = vmatpush2.bf16.msra.mxu0 0
        %5997 = vmatprep.mubr.bf16.mxu0 0
        %5998 = vmatmul.mubr.bf16.gmra.mxu0 %v5890
        %v5999 = vpop.f32.mrf.mxu0
        %v6000 = vadd.f32 %v5915, %v5999
        %v6001 = vpop.f32.mrf.mxu0
        %v6002 = vpop.f32.mrf.mxu0
        %v6003 = vadd.f32 %v5915, %v6002
        %v6004 = vpop.f32.mrf.mxu0
        %6005 = vmatprep.mubr.bf16.mxu0 0
        %6006 = vmatmul.mubr.bf16.gmra.mxu0 %v5891
        %v6007 = vpop.f32.mrf.mxu0
        %v6008 = vadd.f32 %v5915, %v6007
        %v6009 = vpop.f32.mrf.mxu0
        %v6010 = vpop.f32.mrf.mxu0
        %v6011 = vadd.f32 %v5915, %v6010
        %v6012 = vpop.f32.mrf.mxu0
        %6013 = vmatprep.mubr.bf16.mxu0 0
        %6014 = vmatmul.mubr.bf16.gmra.mxu0 %v5892
        %v6015 = vpop.f32.mrf.mxu0
        %v6016 = vadd.f32 %v5915, %v6015
        %v6017 = vpop.f32.mrf.mxu0
        %v6018 = vpop.f32.mrf.mxu0
        %v6019 = vadd.f32 %v5915, %v6018
        %v6020 = vpop.f32.mrf.mxu0
        %6021 = vmatprep.mubr.bf16.mxu0 0
        %6022 = vmatmul.mubr.bf16.gmra.mxu0 %v5893
        %v6023 = vpop.f32.mrf.mxu0
        %v6024 = vadd.f32 %v5915, %v6023
        %v6025 = vpop.f32.mrf.mxu0
        %v6026 = vpop.f32.mrf.mxu0
        %v6027 = vadd.f32 %v5915, %v6026
        %v6028 = vpop.f32.mrf.mxu0
        %6029 = vdwg.mxu0
        %v6030 = vadd.f32 %v6000, %v3465
        %v6031 = vadd.f32 %v6003, %v3466
        %v6032 = vadd.f32 %v6008, %v3467
        %v6033 = vadd.f32 %v6011, %v3468
        %v6034 = vadd.f32 %v6016, %v3469
        %v6035 = vadd.f32 %v6019, %v3470
        %v6036 = vadd.f32 %v6024, %v3471
        %v6037 = vadd.f32 %v6027, %v3472
        %6038 = vadd.xlane.f32.xlu0 %v6030
        %v6039 = vpop.xlane.xlu0 %6038
        %6040 = vadd.xlane.f32.xlu0 %v6031
        %v6041 = vpop.xlane.xlu0 %6040
        %6042 = vadd.xlane.f32.xlu0 %v6032
        %v6043 = vpop.xlane.xlu0 %6042
        %6044 = vadd.xlane.f32.xlu0 %v6033
        %v6045 = vpop.xlane.xlu0 %6044
        %6046 = vadd.xlane.f32.xlu0 %v6034
        %v6047 = vpop.xlane.xlu0 %6046
        %6048 = vadd.xlane.f32.xlu0 %v6035
        %v6049 = vpop.xlane.xlu0 %6048
        %6050 = vadd.xlane.f32.xlu0 %v6036
        %v6051 = vpop.xlane.xlu0 %6050
        %6052 = vadd.xlane.f32.xlu0 %v6037
        %v6053 = vpop.xlane.xlu0 %6052
        %v6054 = vrcp.pop 128.0
        %v6055 = vmul.f32 %v6039, %v6054
        %v6056 = vmul.f32 %v6041, %v6054
        %v6057 = vmul.f32 %v6043, %v6054
        %v6058 = vmul.f32 %v6045, %v6054
        %v6059 = vmul.f32 %v6047, %v6054
        %v6060 = vmul.f32 %v6049, %v6054
        %v6061 = vmul.f32 %v6051, %v6054
        %v6062 = vmul.f32 %v6053, %v6054
        %v6063 = vsub.f32 %v6030, %v6055
        %v6064 = vsub.f32 %v6031, %v6056
        %v6065 = vsub.f32 %v6032, %v6057
        %v6066 = vsub.f32 %v6033, %v6058
        %v6067 = vsub.f32 %v6034, %v6059
        %v6068 = vsub.f32 %v6035, %v6060
        %v6069 = vsub.f32 %v6036, %v6061
        %v6070 = vsub.f32 %v6037, %v6062
        %v6071 = vmul.f32 %v6063, %v6063
        %v6072 = vmul.f32 %v6064, %v6064
        %v6073 = vmul.f32 %v6065, %v6065
        %v6074 = vmul.f32 %v6066, %v6066
        %v6075 = vmul.f32 %v6067, %v6067
        %v6076 = vmul.f32 %v6068, %v6068
        %v6077 = vmul.f32 %v6069, %v6069
        %v6078 = vmul.f32 %v6070, %v6070
        %6079 = vadd.xlane.f32.xlu0 %v6071
        %v6080 = vpop.xlane.xlu0 %6079
        %6081 = vadd.xlane.f32.xlu0 %v6072
        %v6082 = vpop.xlane.xlu0 %6081
        %6083 = vadd.xlane.f32.xlu0 %v6073
        %v6084 = vpop.xlane.xlu0 %6083
        %6085 = vadd.xlane.f32.xlu0 %v6074
        %v6086 = vpop.xlane.xlu0 %6085
        %6087 = vadd.xlane.f32.xlu0 %v6075
        %v6088 = vpop.xlane.xlu0 %6087
        %6089 = vadd.xlane.f32.xlu0 %v6076
        %v6090 = vpop.xlane.xlu0 %6089
        %6091 = vadd.xlane.f32.xlu0 %v6077
        %v6092 = vpop.xlane.xlu0 %6091
        %6093 = vadd.xlane.f32.xlu0 %v6078
        %v6094 = vpop.xlane.xlu0 %6093
        %v6095 = vmul.f32 %v6080, %v6054
        %v6096 = vmul.f32 %v6082, %v6054
        %v6097 = vmul.f32 %v6084, %v6054
        %v6098 = vmul.f32 %v6086, %v6054
        %v6099 = vmul.f32 %v6088, %v6054
        %v6100 = vmul.f32 %v6090, %v6054
        %v6101 = vmul.f32 %v6092, %v6054
        %v6102 = vmul.f32 %v6094, %v6054
        %v6103 = vadd.f32 %v6095, 1e-05
        %v6104 = vadd.f32 %v6096, 1e-05
        %v6105 = vadd.f32 %v6097, 1e-05
        %v6106 = vadd.f32 %v6098, 1e-05
        %v6107 = vadd.f32 %v6099, 1e-05
        %v6108 = vadd.f32 %v6100, 1e-05
        %v6109 = vadd.f32 %v6101, 1e-05
        %v6110 = vadd.f32 %v6102, 1e-05
        %v6111 = vrsqrt.pop %v6103
        %v6112 = vrsqrt.pop %v6104
        %v6113 = vrsqrt.pop %v6105
        %v6114 = vrsqrt.pop %v6106
        %v6115 = vrsqrt.pop %v6107
        %v6116 = vrsqrt.pop %v6108
        %v6117 = vrsqrt.pop %v6109
        %v6118 = vrsqrt.pop %v6110
        %v6119 = vmul.f32 %v6063, %v6111
        %v6120 = vmul.f32 %v6064, %v6112
        %v6121 = vmul.f32 %v6065, %v6113
        %v6122 = vmul.f32 %v6066, %v6114
        %v6123 = vmul.f32 %v6067, %v6115
        %v6124 = vmul.f32 %v6068, %v6116
        %v6125 = vmul.f32 %v6069, %v6117
        %v6126 = vmul.f32 %v6070, %v6118
        %v6127 = vld [vmem:[%s13] sm:$0x1]
        %v6129 = vlaneseq
        %v6130 = vshrl.u32 %v6129, 7
        %v6131 = vsub.s32 0, %v6130
        %v6132 = vrot.slane %v6127, %v6131
        %v6134 = vmul.f32 %v6119, %v6132
        %v6135 = vmul.f32 %v6120, %v6132
        %v6136 = vmul.f32 %v6121, %v6132
        %v6137 = vmul.f32 %v6122, %v6132
        %v6138 = vmul.f32 %v6123, %v6132
        %v6139 = vmul.f32 %v6124, %v6132
        %v6140 = vmul.f32 %v6125, %v6132
        %v6141 = vmul.f32 %v6126, %v6132
        %v6142 = vld [vmem:[%s14] sm:$0x1]
        %v6144 = vlaneseq
        %v6145 = vshrl.u32 %v6144, 7
        %v6146 = vsub.s32 0, %v6145
        %v6147 = vrot.slane %v6142, %v6146
        %v6149 = vadd.f32 %v6134, %v6147
        %v6150 = vadd.f32 %v6135, %v6147
        %v6151 = vadd.f32 %v6136, %v6147
        %v6152 = vadd.f32 %v6137, %v6147
        %v6153 = vadd.f32 %v6138, %v6147
        %v6154 = vadd.f32 %v6139, %v6147
        %v6155 = vadd.f32 %v6140, %v6147
        %v6156 = vadd.f32 %v6141, %v6147
        %v6157 = vpack.c.bf16 %v6150, %v6149
        %v6158 = vpack.c.bf16 %v6152, %v6151
        %v6159 = vpack.c.bf16 %v6154, %v6153
        %v6160 = vpack.c.bf16 %v6156, %v6155
        %v6161 = vld [vmem:[#allocation11] sm:$0xf]
        %v6162 = vld [vmem:[#allocation11 + $0x4] sm:$0xf]
        %v6163 = vld [vmem:[#allocation11 + $0x8] sm:$0xf]
        %v6164 = vld [vmem:[#allocation11 + $0xc] sm:$0xf]
        %v6165 = vld [vmem:[#allocation11 + $0x10] sm:$0xf]
        %v6166 = vld [vmem:[#allocation11 + $0x14] sm:$0xf]
        %v6167 = vld [vmem:[#allocation11 + $0x18] sm:$0xf]
        %v6168 = vld [vmem:[#allocation11 + $0x1c] sm:$0xf]
        %v6169 = vld [vmem:[#allocation11 + $0x20] sm:$0xf]
        %v6170 = vld [vmem:[#allocation11 + $0x24] sm:$0xf]
        %v6171 = vld [vmem:[#allocation11 + $0x28] sm:$0xf]
        %v6172 = vld [vmem:[#allocation11 + $0x2c] sm:$0xf]
        %v6173 = vld [vmem:[#allocation11 + $0x30] sm:$0xf]
        %v6174 = vld [vmem:[#allocation11 + $0x34] sm:$0xf]
        %v6175 = vld [vmem:[#allocation11 + $0x38] sm:$0xf]
        %v6176 = vld [vmem:[#allocation11 + $0x3c] sm:$0xf]
        %v6177 = vld [vmem:[%s16] sm:$0x1]
        %v6179 = vlaneseq
        %v6180 = vshrl.u32 %v6179, 7
        %v6181 = vsub.s32 0, %v6180
        %v6182 = vrot.slane %v6177, %v6181
        %v6200 = vunpack.c.l.b16 %v6161
        %v6201 = vunpack.c.l.b16 %v6162
        %v6202 = vunpack.c.l.b16 %v6163
        %v6203 = vunpack.c.l.b16 %v6164
        %v6204 = vunpack.c.l.b16 %v6165
        %v6205 = vunpack.c.l.b16 %v6166
        %v6206 = vunpack.c.l.b16 %v6167
        %v6207 = vunpack.c.l.b16 %v6168
        %v6208 = vunpack.c.l.b16 %v6169
        %v6209 = vunpack.c.l.b16 %v6170
        %v6210 = vunpack.c.l.b16 %v6171
        %v6211 = vunpack.c.l.b16 %v6172
        %v6212 = vunpack.c.l.b16 %v6173
        %v6213 = vunpack.c.l.b16 %v6174
        %v6214 = vunpack.c.l.b16 %v6175
        %v6215 = vunpack.c.l.b16 %v6176
        %v6216 = vpack.c.b16 %v6201, %v6200
        %v6217 = vpack.c.b16 %v6203, %v6202
        %v6218 = vpack.c.b16 %v6205, %v6204
        %v6219 = vpack.c.b16 %v6207, %v6206
        %v6220 = vpack.c.b16 %v6209, %v6208
        %v6221 = vpack.c.b16 %v6211, %v6210
        %v6222 = vpack.c.b16 %v6213, %v6212
        %v6223 = vpack.c.b16 %v6215, %v6214
        %6232 = vmatprep.subr.bf16.mxu0 0
        %6233 = vmatpush1.bf16.msra.mxu0 %v6223
        %6234 = vmatprep.subr.bf16.mxu0 0
        %6235 = vmatpush1.bf16.msra.mxu0 %v6222
        %6236 = vmatprep.subr.bf16.mxu0 0
        %6237 = vmatpush1.bf16.msra.mxu0 %v6221
        %6238 = vmatprep.subr.bf16.mxu0 0
        %6239 = vmatpush1.bf16.msra.mxu0 %v6220
        %6240 = vmatprep.subr.bf16.mxu0 0
        %6241 = vmatpush1.bf16.msra.mxu0 %v6219
        %6242 = vmatprep.subr.bf16.mxu0 0
        %6243 = vmatpush1.bf16.msra.mxu0 %v6218
        %6244 = vmatprep.subr.bf16.mxu0 0
        %6245 = vmatpush1.bf16.msra.mxu0 %v6217
        %6246 = vmatprep.subr.bf16.mxu0 0
        %6247 = vmatpush1.bf16.msra.mxu0 %v6216
        %6248 = vmatprep.subr.bf16.mxu0 0
        %6249 = vmatpush2.bf16.msra.mxu0 0
        %6250 = vmatprep.subr.bf16.mxu0 0
        %6251 = vmatpush2.bf16.msra.mxu0 0
        %6252 = vmatprep.subr.bf16.mxu0 0
        %6253 = vmatpush2.bf16.msra.mxu0 0
        %6254 = vmatprep.subr.bf16.mxu0 0
        %6255 = vmatpush2.bf16.msra.mxu0 0
        %6256 = vmatprep.subr.bf16.mxu0 0
        %6257 = vmatpush2.bf16.msra.mxu0 0
        %6258 = vmatprep.subr.bf16.mxu0 0
        %6259 = vmatpush2.bf16.msra.mxu0 0
        %6260 = vmatprep.subr.bf16.mxu0 0
        %6261 = vmatpush2.bf16.msra.mxu0 0
        %6262 = vmatprep.subr.bf16.mxu0 0
        %6263 = vmatpush2.bf16.msra.mxu0 0
        %6264 = vmatprep.mubr.bf16.mxu0 0
        %6265 = vmatmul.mubr.bf16.gmra.mxu0 %v6157
        %v6266 = vpop.f32.mrf.mxu0
        %v6267 = vadd.f32 %v6182, %v6266
        %v6268 = vpop.f32.mrf.mxu0
        %v6269 = vpop.f32.mrf.mxu0
        %v6270 = vadd.f32 %v6182, %v6269
        %v6271 = vpop.f32.mrf.mxu0
        %6272 = vmatprep.mubr.bf16.mxu0 0
        %6273 = vmatmul.mubr.bf16.gmra.mxu0 %v6158
        %v6274 = vpop.f32.mrf.mxu0
        %v6275 = vadd.f32 %v6182, %v6274
        %v6276 = vpop.f32.mrf.mxu0
        %v6277 = vpop.f32.mrf.mxu0
        %v6278 = vadd.f32 %v6182, %v6277
        %v6279 = vpop.f32.mrf.mxu0
        %6280 = vmatprep.mubr.bf16.mxu0 0
        %6281 = vmatmul.mubr.bf16.gmra.mxu0 %v6159
        %v6282 = vpop.f32.mrf.mxu0
        %v6283 = vadd.f32 %v6182, %v6282
        %v6284 = vpop.f32.mrf.mxu0
        %v6285 = vpop.f32.mrf.mxu0
        %v6286 = vadd.f32 %v6182, %v6285
        %v6287 = vpop.f32.mrf.mxu0
        %6288 = vmatprep.mubr.bf16.mxu0 0
        %6289 = vmatmul.mubr.bf16.gmra.mxu0 %v6160
        %v6290 = vpop.f32.mrf.mxu0
        %v6291 = vadd.f32 %v6182, %v6290
        %v6292 = vpop.f32.mrf.mxu0
        %v6293 = vpop.f32.mrf.mxu0
        %v6294 = vadd.f32 %v6182, %v6293
        %v6295 = vpop.f32.mrf.mxu0
        %6296 = vdwg.mxu0
        %v6297 = vmul.f32 %v6267, 0.5
        %v6298 = vmul.f32 %v6270, 0.5
        %v6299 = vmul.f32 %v6275, 0.5
        %v6300 = vmul.f32 %v6278, 0.5
        %v6301 = vmul.f32 %v6283, 0.5
        %v6302 = vmul.f32 %v6286, 0.5
        %v6303 = vmul.f32 %v6291, 0.5
        %v6304 = vmul.f32 %v6294, 0.5
        %v6305 = vmul.f32 %v6267, 0.70710677
        %v6306 = vmul.f32 %v6270, 0.70710677
        %v6307 = vmul.f32 %v6275, 0.70710677
        %v6308 = vmul.f32 %v6278, 0.70710677
        %v6309 = vmul.f32 %v6283, 0.70710677
        %v6310 = vmul.f32 %v6286, 0.70710677
        %v6311 = vmul.f32 %v6291, 0.70710677
        %v6312 = vmul.f32 %v6294, 0.70710677
        %vm6313 = vcmp.lt.f32.partialorder %v6305, 0.0
        %vm6314 = vcmp.lt.f32.partialorder %v6306, 0.0
        %vm6315 = vcmp.lt.f32.partialorder %v6307, 0.0
        %vm6316 = vcmp.lt.f32.partialorder %v6308, 0.0
        %vm6317 = vcmp.lt.f32.partialorder %v6309, 0.0
        %vm6318 = vcmp.lt.f32.partialorder %v6310, 0.0
        %vm6319 = vcmp.lt.f32.partialorder %v6311, 0.0
        %vm6320 = vcmp.lt.f32.partialorder %v6312, 0.0
        %v6321 = vsel %vm6313, -1.0, 1.0
        %v6322 = vsel %vm6314, -1.0, 1.0
        %v6323 = vsel %vm6315, -1.0, 1.0
        %v6324 = vsel %vm6316, -1.0, 1.0
        %v6325 = vsel %vm6317, -1.0, 1.0
        %v6326 = vsel %vm6318, -1.0, 1.0
        %v6327 = vsel %vm6319, -1.0, 1.0
        %v6328 = vsel %vm6320, -1.0, 1.0
        %v6329 = vmul.f32 %v6305, %v6321
        %v6330 = vmul.f32 %v6306, %v6322
        %v6331 = vmul.f32 %v6307, %v6323
        %v6332 = vmul.f32 %v6308, %v6324
        %v6333 = vmul.f32 %v6309, %v6325
        %v6334 = vmul.f32 %v6310, %v6326
        %v6335 = vmul.f32 %v6311, %v6327
        %v6336 = vmul.f32 %v6312, %v6328
        %v6337 = vmul.f32 %v6329, 0.3275911
        %v6338 = vmul.f32 %v6330, 0.3275911
        %v6339 = vmul.f32 %v6331, 0.3275911
        %v6340 = vmul.f32 %v6332, 0.3275911
        %v6341 = vmul.f32 %v6333, 0.3275911
        %v6342 = vmul.f32 %v6334, 0.3275911
        %v6343 = vmul.f32 %v6335, 0.3275911
        %v6344 = vmul.f32 %v6336, 0.3275911
        %v6345 = vadd.f32 %v6337, 1.0
        %v6346 = vadd.f32 %v6338, 1.0
        %v6347 = vadd.f32 %v6339, 1.0
        %v6348 = vadd.f32 %v6340, 1.0
        %v6349 = vadd.f32 %v6341, 1.0
        %v6350 = vadd.f32 %v6342, 1.0
        %v6351 = vadd.f32 %v6343, 1.0
        %v6352 = vadd.f32 %v6344, 1.0
        %v6353 = vrcp.pop %v6345
        %v6354 = vrcp.pop %v6346
        %v6355 = vrcp.pop %v6347
        %v6356 = vrcp.pop %v6348
        %v6357 = vrcp.pop %v6349
        %v6358 = vrcp.pop %v6350
        %v6359 = vrcp.pop %v6351
        %v6360 = vrcp.pop %v6352
        %v6361 = vmul.f32 %v6353, 1.0614054
        %v6362 = vmul.f32 %v6354, 1.0614054
        %v6363 = vmul.f32 %v6355, 1.0614054
        %v6364 = vmul.f32 %v6356, 1.0614054
        %v6365 = vmul.f32 %v6357, 1.0614054
        %v6366 = vmul.f32 %v6358, 1.0614054
        %v6367 = vmul.f32 %v6359, 1.0614054
        %v6368 = vmul.f32 %v6360, 1.0614054
        %v6369 = vadd.f32 %v6361, -1.4531521
        %v6370 = vadd.f32 %v6362, -1.4531521
        %v6371 = vadd.f32 %v6363, -1.4531521
        %v6372 = vadd.f32 %v6364, -1.4531521
        %v6373 = vadd.f32 %v6365, -1.4531521
        %v6374 = vadd.f32 %v6366, -1.4531521
        %v6375 = vadd.f32 %v6367, -1.4531521
        %v6376 = vadd.f32 %v6368, -1.4531521
        %v6377 = vmul.f32 %v6369, %v6353
        %v6378 = vmul.f32 %v6370, %v6354
        %v6379 = vmul.f32 %v6371, %v6355
        %v6380 = vmul.f32 %v6372, %v6356
        %v6381 = vmul.f32 %v6373, %v6357
        %v6382 = vmul.f32 %v6374, %v6358
        %v6383 = vmul.f32 %v6375, %v6359
        %v6384 = vmul.f32 %v6376, %v6360
        %v6385 = vadd.f32 %v6377, 1.4214138
        %v6386 = vadd.f32 %v6378, 1.4214138
        %v6387 = vadd.f32 %v6379, 1.4214138
        %v6388 = vadd.f32 %v6380, 1.4214138
        %v6389 = vadd.f32 %v6381, 1.4214138
        %v6390 = vadd.f32 %v6382, 1.4214138
        %v6391 = vadd.f32 %v6383, 1.4214138
        %v6392 = vadd.f32 %v6384, 1.4214138
        %v6393 = vmul.f32 %v6385, %v6353
        %v6394 = vmul.f32 %v6386, %v6354
        %v6395 = vmul.f32 %v6387, %v6355
        %v6396 = vmul.f32 %v6388, %v6356
        %v6397 = vmul.f32 %v6389, %v6357
        %v6398 = vmul.f32 %v6390, %v6358
        %v6399 = vmul.f32 %v6391, %v6359
        %v6400 = vmul.f32 %v6392, %v6360
        %v6401 = vadd.f32 %v6393, -0.28449672
        %v6402 = vadd.f32 %v6394, -0.28449672
        %v6403 = vadd.f32 %v6395, -0.28449672
        %v6404 = vadd.f32 %v6396, -0.28449672
        %v6405 = vadd.f32 %v6397, -0.28449672
        %v6406 = vadd.f32 %v6398, -0.28449672
        %v6407 = vadd.f32 %v6399, -0.28449672
        %v6408 = vadd.f32 %v6400, -0.28449672
        %v6409 = vmul.f32 %v6401, %v6353
        %v6410 = vmul.f32 %v6402, %v6354
        %v6411 = vmul.f32 %v6403, %v6355
        %v6412 = vmul.f32 %v6404, %v6356
        %v6413 = vmul.f32 %v6405, %v6357
        %v6414 = vmul.f32 %v6406, %v6358
        %v6415 = vmul.f32 %v6407, %v6359
        %v6416 = vmul.f32 %v6408, %v6360
        %v6417 = vadd.f32 %v6409, 0.2548296
        %v6418 = vadd.f32 %v6410, 0.2548296
        %v6419 = vadd.f32 %v6411, 0.2548296
        %v6420 = vadd.f32 %v6412, 0.2548296
        %v6421 = vadd.f32 %v6413, 0.2548296
        %v6422 = vadd.f32 %v6414, 0.2548296
        %v6423 = vadd.f32 %v6415, 0.2548296
        %v6424 = vadd.f32 %v6416, 0.2548296
        %v6425 = vmul.f32 %v6417, %v6353
        %v6426 = vmul.f32 %v6418, %v6354
        %v6427 = vmul.f32 %v6419, %v6355
        %v6428 = vmul.f32 %v6420, %v6356
        %v6429 = vmul.f32 %v6421, %v6357
        %v6430 = vmul.f32 %v6422, %v6358
        %v6431 = vmul.f32 %v6423, %v6359
        %v6432 = vmul.f32 %v6424, %v6360
        %v6433 = vsub.f32 0.0, %v6329
        %v6434 = vsub.f32 0.0, %v6330
        %v6435 = vsub.f32 0.0, %v6331
        %v6436 = vsub.f32 0.0, %v6332
        %v6437 = vsub.f32 0.0, %v6333
        %v6438 = vsub.f32 0.0, %v6334
        %v6439 = vsub.f32 0.0, %v6335
        %v6440 = vsub.f32 0.0, %v6336
        %v6441 = vmul.f32 %v6433, %v6329
        %v6442 = vmul.f32 %v6434, %v6330
        %v6443 = vmul.f32 %v6435, %v6331
        %v6444 = vmul.f32 %v6436, %v6332
        %v6445 = vmul.f32 %v6437, %v6333
        %v6446 = vmul.f32 %v6438, %v6334
        %v6447 = vmul.f32 %v6439, %v6335
        %v6448 = vmul.f32 %v6440, %v6336
        %v6449 = vmul.f32 %v6441, 1.442695
        %v6450 = vpow.pop %v6449
        %v6451 = vmul.f32 %v6442, 1.442695
        %v6452 = vpow.pop %v6451
        %v6453 = vmul.f32 %v6443, 1.442695
        %v6454 = vpow.pop %v6453
        %v6455 = vmul.f32 %v6444, 1.442695
        %v6456 = vpow.pop %v6455
        %v6457 = vmul.f32 %v6445, 1.442695
        %v6458 = vpow.pop %v6457
        %v6459 = vmul.f32 %v6446, 1.442695
        %v6460 = vpow.pop %v6459
        %v6461 = vmul.f32 %v6447, 1.442695
        %v6462 = vpow.pop %v6461
        %v6463 = vmul.f32 %v6448, 1.442695
        %v6464 = vpow.pop %v6463
        %v6465 = vmul.f32 %v6425, %v6450
        %v6466 = vmul.f32 %v6426, %v6452
        %v6467 = vmul.f32 %v6427, %v6454
        %v6468 = vmul.f32 %v6428, %v6456
        %v6469 = vmul.f32 %v6429, %v6458
        %v6470 = vmul.f32 %v6430, %v6460
        %v6471 = vmul.f32 %v6431, %v6462
        %v6472 = vmul.f32 %v6432, %v6464
        %v6473 = vsub.f32 1.0, %v6465
        %v6474 = vsub.f32 1.0, %v6466
        %v6475 = vsub.f32 1.0, %v6467
        %v6476 = vsub.f32 1.0, %v6468
        %v6477 = vsub.f32 1.0, %v6469
        %v6478 = vsub.f32 1.0, %v6470
        %v6479 = vsub.f32 1.0, %v6471
        %v6480 = vsub.f32 1.0, %v6472
        %v6481 = vmul.f32 %v6321, %v6473
        %v6482 = vmul.f32 %v6322, %v6474
        %v6483 = vmul.f32 %v6323, %v6475
        %v6484 = vmul.f32 %v6324, %v6476
        %v6485 = vmul.f32 %v6325, %v6477
        %v6486 = vmul.f32 %v6326, %v6478
        %v6487 = vmul.f32 %v6327, %v6479
        %v6488 = vmul.f32 %v6328, %v6480
        %v6489 = vadd.f32 %v6481, 1.0
        %v6490 = vadd.f32 %v6482, 1.0
        %v6491 = vadd.f32 %v6483, 1.0
        %v6492 = vadd.f32 %v6484, 1.0
        %v6493 = vadd.f32 %v6485, 1.0
        %v6494 = vadd.f32 %v6486, 1.0
        %v6495 = vadd.f32 %v6487, 1.0
        %v6496 = vadd.f32 %v6488, 1.0
        %v6497 = vmul.f32 %v6297, %v6489
        %v6498 = vmul.f32 %v6298, %v6490
        %v6499 = vmul.f32 %v6299, %v6491
        %v6500 = vmul.f32 %v6300, %v6492
        %v6501 = vmul.f32 %v6301, %v6493
        %v6502 = vmul.f32 %v6302, %v6494
        %v6503 = vmul.f32 %v6303, %v6495
        %v6504 = vmul.f32 %v6304, %v6496
        %v6505 = vpack.c.bf16 %v6498, %v6497
        %v6506 = vpack.c.bf16 %v6500, %v6499
        %v6507 = vpack.c.bf16 %v6502, %v6501
        %v6508 = vpack.c.bf16 %v6504, %v6503
        %v6509 = vld [vmem:[#allocation13] sm:$0xf]
        %v6510 = vld [vmem:[#allocation13 + $0x4] sm:$0xf]
        %v6511 = vld [vmem:[#allocation13 + $0x8] sm:$0xf]
        %v6512 = vld [vmem:[#allocation13 + $0xc] sm:$0xf]
        %v6513 = vld [vmem:[#allocation13 + $0x10] sm:$0xf]
        %v6514 = vld [vmem:[#allocation13 + $0x14] sm:$0xf]
        %v6515 = vld [vmem:[#allocation13 + $0x18] sm:$0xf]
        %v6516 = vld [vmem:[#allocation13 + $0x1c] sm:$0xf]
        %v6517 = vld [vmem:[#allocation13 + $0x20] sm:$0xf]
        %v6518 = vld [vmem:[#allocation13 + $0x24] sm:$0xf]
        %v6519 = vld [vmem:[#allocation13 + $0x28] sm:$0xf]
        %v6520 = vld [vmem:[#allocation13 + $0x2c] sm:$0xf]
        %v6521 = vld [vmem:[#allocation13 + $0x30] sm:$0xf]
        %v6522 = vld [vmem:[#allocation13 + $0x34] sm:$0xf]
        %v6523 = vld [vmem:[#allocation13 + $0x38] sm:$0xf]
        %v6524 = vld [vmem:[#allocation13 + $0x3c] sm:$0xf]
        %v6525 = vld [vmem:[%s18] sm:$0x1]
        %v6527 = vlaneseq
        %v6528 = vshrl.u32 %v6527, 7
        %v6529 = vsub.s32 0, %v6528
        %v6530 = vrot.slane %v6525, %v6529
        %v6548 = vunpack.c.l.b16 %v6509
        %v6549 = vunpack.c.l.b16 %v6510
        %v6550 = vunpack.c.l.b16 %v6511
        %v6551 = vunpack.c.l.b16 %v6512
        %v6552 = vunpack.c.l.b16 %v6513
        %v6553 = vunpack.c.l.b16 %v6514
        %v6554 = vunpack.c.l.b16 %v6515
        %v6555 = vunpack.c.l.b16 %v6516
        %v6556 = vunpack.c.l.b16 %v6517
        %v6557 = vunpack.c.l.b16 %v6518
        %v6558 = vunpack.c.l.b16 %v6519
        %v6559 = vunpack.c.l.b16 %v6520
        %v6560 = vunpack.c.l.b16 %v6521
        %v6561 = vunpack.c.l.b16 %v6522
        %v6562 = vunpack.c.l.b16 %v6523
        %v6563 = vunpack.c.l.b16 %v6524
        %v6564 = vpack.c.b16 %v6549, %v6548
        %v6565 = vpack.c.b16 %v6551, %v6550
        %v6566 = vpack.c.b16 %v6553, %v6552
        %v6567 = vpack.c.b16 %v6555, %v6554
        %v6568 = vpack.c.b16 %v6557, %v6556
        %v6569 = vpack.c.b16 %v6559, %v6558
        %v6570 = vpack.c.b16 %v6561, %v6560
        %v6571 = vpack.c.b16 %v6563, %v6562
        %6580 = vmatprep.subr.bf16.mxu0 0
        %6581 = vmatpush1.bf16.msra.mxu0 %v6571
        %6582 = vmatprep.subr.bf16.mxu0 0
        %6583 = vmatpush1.bf16.msra.mxu0 %v6570
        %6584 = vmatprep.subr.bf16.mxu0 0
        %6585 = vmatpush1.bf16.msra.mxu0 %v6569
        %6586 = vmatprep.subr.bf16.mxu0 0
        %6587 = vmatpush1.bf16.msra.mxu0 %v6568
        %6588 = vmatprep.subr.bf16.mxu0 0
        %6589 = vmatpush1.bf16.msra.mxu0 %v6567
        %6590 = vmatprep.subr.bf16.mxu0 0
        %6591 = vmatpush1.bf16.msra.mxu0 %v6566
        %6592 = vmatprep.subr.bf16.mxu0 0
        %6593 = vmatpush1.bf16.msra.mxu0 %v6565
        %6594 = vmatprep.subr.bf16.mxu0 0
        %6595 = vmatpush1.bf16.msra.mxu0 %v6564
        %6596 = vmatprep.subr.bf16.mxu0 0
        %6597 = vmatpush2.bf16.msra.mxu0 0
        %6598 = vmatprep.subr.bf16.mxu0 0
        %6599 = vmatpush2.bf16.msra.mxu0 0
        %6600 = vmatprep.subr.bf16.mxu0 0
        %6601 = vmatpush2.bf16.msra.mxu0 0
        %6602 = vmatprep.subr.bf16.mxu0 0
        %6603 = vmatpush2.bf16.msra.mxu0 0
        %6604 = vmatprep.subr.bf16.mxu0 0
        %6605 = vmatpush2.bf16.msra.mxu0 0
        %6606 = vmatprep.subr.bf16.mxu0 0
        %6607 = vmatpush2.bf16.msra.mxu0 0
        %6608 = vmatprep.subr.bf16.mxu0 0
        %6609 = vmatpush2.bf16.msra.mxu0 0
        %6610 = vmatprep.subr.bf16.mxu0 0
        %6611 = vmatpush2.bf16.msra.mxu0 0
        %6612 = vmatprep.mubr.bf16.mxu0 0
        %6613 = vmatmul.mubr.bf16.gmra.mxu0 %v6505
        %v6614 = vpop.f32.mrf.mxu0
        %v6615 = vadd.f32 %v6530, %v6614
        %v6616 = vpop.f32.mrf.mxu0
        %v6617 = vpop.f32.mrf.mxu0
        %v6618 = vadd.f32 %v6530, %v6617
        %v6619 = vpop.f32.mrf.mxu0
        %6620 = vmatprep.mubr.bf16.mxu0 0
        %6621 = vmatmul.mubr.bf16.gmra.mxu0 %v6506
        %v6622 = vpop.f32.mrf.mxu0
        %v6623 = vadd.f32 %v6530, %v6622
        %v6624 = vpop.f32.mrf.mxu0
        %v6625 = vpop.f32.mrf.mxu0
        %v6626 = vadd.f32 %v6530, %v6625
        %v6627 = vpop.f32.mrf.mxu0
        %6628 = vmatprep.mubr.bf16.mxu0 0
        %6629 = vmatmul.mubr.bf16.gmra.mxu0 %v6507
        %v6630 = vpop.f32.mrf.mxu0
        %v6631 = vadd.f32 %v6530, %v6630
        %v6632 = vpop.f32.mrf.mxu0
        %v6633 = vpop.f32.mrf.mxu0
        %v6634 = vadd.f32 %v6530, %v6633
        %v6635 = vpop.f32.mrf.mxu0
        %6636 = vmatprep.mubr.bf16.mxu0 0
        %6637 = vmatmul.mubr.bf16.gmra.mxu0 %v6508
        %v6638 = vpop.f32.mrf.mxu0
        %v6639 = vadd.f32 %v6530, %v6638
        %v6640 = vpop.f32.mrf.mxu0
        %v6641 = vpop.f32.mrf.mxu0
        %v6642 = vadd.f32 %v6530, %v6641
        %v6643 = vpop.f32.mrf.mxu0
        %6644 = vdwg.mxu0
        %v6645 = vmul.f32 %v6615, 0.5
        %v6646 = vmul.f32 %v6618, 0.5
        %v6647 = vmul.f32 %v6623, 0.5
        %v6648 = vmul.f32 %v6626, 0.5
        %v6649 = vmul.f32 %v6631, 0.5
        %v6650 = vmul.f32 %v6634, 0.5
        %v6651 = vmul.f32 %v6639, 0.5
        %v6652 = vmul.f32 %v6642, 0.5
        %v6653 = vmul.f32 %v6615, 0.70710677
        %v6654 = vmul.f32 %v6618, 0.70710677
        %v6655 = vmul.f32 %v6623, 0.70710677
        %v6656 = vmul.f32 %v6626, 0.70710677
        %v6657 = vmul.f32 %v6631, 0.70710677
        %v6658 = vmul.f32 %v6634, 0.70710677
        %v6659 = vmul.f32 %v6639, 0.70710677
        %v6660 = vmul.f32 %v6642, 0.70710677
        %vm6661 = vcmp.lt.f32.partialorder %v6653, 0.0
        %vm6662 = vcmp.lt.f32.partialorder %v6654, 0.0
        %vm6663 = vcmp.lt.f32.partialorder %v6655, 0.0
        %vm6664 = vcmp.lt.f32.partialorder %v6656, 0.0
        %vm6665 = vcmp.lt.f32.partialorder %v6657, 0.0
        %vm6666 = vcmp.lt.f32.partialorder %v6658, 0.0
        %vm6667 = vcmp.lt.f32.partialorder %v6659, 0.0
        %vm6668 = vcmp.lt.f32.partialorder %v6660, 0.0
        %v6669 = vsel %vm6661, -1.0, 1.0
        %v6670 = vsel %vm6662, -1.0, 1.0
        %v6671 = vsel %vm6663, -1.0, 1.0
        %v6672 = vsel %vm6664, -1.0, 1.0
        %v6673 = vsel %vm6665, -1.0, 1.0
        %v6674 = vsel %vm6666, -1.0, 1.0
        %v6675 = vsel %vm6667, -1.0, 1.0
        %v6676 = vsel %vm6668, -1.0, 1.0
        %v6677 = vmul.f32 %v6653, %v6669
        %v6678 = vmul.f32 %v6654, %v6670
        %v6679 = vmul.f32 %v6655, %v6671
        %v6680 = vmul.f32 %v6656, %v6672
        %v6681 = vmul.f32 %v6657, %v6673
        %v6682 = vmul.f32 %v6658, %v6674
        %v6683 = vmul.f32 %v6659, %v6675
        %v6684 = vmul.f32 %v6660, %v6676
        %v6685 = vmul.f32 %v6677, 0.3275911
        %v6686 = vmul.f32 %v6678, 0.3275911
        %v6687 = vmul.f32 %v6679, 0.3275911
        %v6688 = vmul.f32 %v6680, 0.3275911
        %v6689 = vmul.f32 %v6681, 0.3275911
        %v6690 = vmul.f32 %v6682, 0.3275911
        %v6691 = vmul.f32 %v6683, 0.3275911
        %v6692 = vmul.f32 %v6684, 0.3275911
        %v6693 = vadd.f32 %v6685, 1.0
        %v6694 = vadd.f32 %v6686, 1.0
        %v6695 = vadd.f32 %v6687, 1.0
        %v6696 = vadd.f32 %v6688, 1.0
        %v6697 = vadd.f32 %v6689, 1.0
        %v6698 = vadd.f32 %v6690, 1.0
        %v6699 = vadd.f32 %v6691, 1.0
        %v6700 = vadd.f32 %v6692, 1.0
        %v6701 = vrcp.pop %v6693
        %v6702 = vrcp.pop %v6694
        %v6703 = vrcp.pop %v6695
        %v6704 = vrcp.pop %v6696
        %v6705 = vrcp.pop %v6697
        %v6706 = vrcp.pop %v6698
        %v6707 = vrcp.pop %v6699
        %v6708 = vrcp.pop %v6700
        %v6709 = vmul.f32 %v6701, 1.0614054
        %v6710 = vmul.f32 %v6702, 1.0614054
        %v6711 = vmul.f32 %v6703, 1.0614054
        %v6712 = vmul.f32 %v6704, 1.0614054
        %v6713 = vmul.f32 %v6705, 1.0614054
        %v6714 = vmul.f32 %v6706, 1.0614054
        %v6715 = vmul.f32 %v6707, 1.0614054
        %v6716 = vmul.f32 %v6708, 1.0614054
        %v6717 = vadd.f32 %v6709, -1.4531521
        %v6718 = vadd.f32 %v6710, -1.4531521
        %v6719 = vadd.f32 %v6711, -1.4531521
        %v6720 = vadd.f32 %v6712, -1.4531521
        %v6721 = vadd.f32 %v6713, -1.4531521
        %v6722 = vadd.f32 %v6714, -1.4531521
        %v6723 = vadd.f32 %v6715, -1.4531521
        %v6724 = vadd.f32 %v6716, -1.4531521
        %v6725 = vmul.f32 %v6717, %v6701
        %v6726 = vmul.f32 %v6718, %v6702
        %v6727 = vmul.f32 %v6719, %v6703
        %v6728 = vmul.f32 %v6720, %v6704
        %v6729 = vmul.f32 %v6721, %v6705
        %v6730 = vmul.f32 %v6722, %v6706
        %v6731 = vmul.f32 %v6723, %v6707
        %v6732 = vmul.f32 %v6724, %v6708
        %v6733 = vadd.f32 %v6725, 1.4214138
        %v6734 = vadd.f32 %v6726, 1.4214138
        %v6735 = vadd.f32 %v6727, 1.4214138
        %v6736 = vadd.f32 %v6728, 1.4214138
        %v6737 = vadd.f32 %v6729, 1.4214138
        %v6738 = vadd.f32 %v6730, 1.4214138
        %v6739 = vadd.f32 %v6731, 1.4214138
        %v6740 = vadd.f32 %v6732, 1.4214138
        %v6741 = vmul.f32 %v6733, %v6701
        %v6742 = vmul.f32 %v6734, %v6702
        %v6743 = vmul.f32 %v6735, %v6703
        %v6744 = vmul.f32 %v6736, %v6704
        %v6745 = vmul.f32 %v6737, %v6705
        %v6746 = vmul.f32 %v6738, %v6706
        %v6747 = vmul.f32 %v6739, %v6707
        %v6748 = vmul.f32 %v6740, %v6708
        %v6749 = vadd.f32 %v6741, -0.28449672
        %v6750 = vadd.f32 %v6742, -0.28449672
        %v6751 = vadd.f32 %v6743, -0.28449672
        %v6752 = vadd.f32 %v6744, -0.28449672
        %v6753 = vadd.f32 %v6745, -0.28449672
        %v6754 = vadd.f32 %v6746, -0.28449672
        %v6755 = vadd.f32 %v6747, -0.28449672
        %v6756 = vadd.f32 %v6748, -0.28449672
        %v6757 = vmul.f32 %v6749, %v6701
        %v6758 = vmul.f32 %v6750, %v6702
        %v6759 = vmul.f32 %v6751, %v6703
        %v6760 = vmul.f32 %v6752, %v6704
        %v6761 = vmul.f32 %v6753, %v6705
        %v6762 = vmul.f32 %v6754, %v6706
        %v6763 = vmul.f32 %v6755, %v6707
        %v6764 = vmul.f32 %v6756, %v6708
        %v6765 = vadd.f32 %v6757, 0.2548296
        %v6766 = vadd.f32 %v6758, 0.2548296
        %v6767 = vadd.f32 %v6759, 0.2548296
        %v6768 = vadd.f32 %v6760, 0.2548296
        %v6769 = vadd.f32 %v6761, 0.2548296
        %v6770 = vadd.f32 %v6762, 0.2548296
        %v6771 = vadd.f32 %v6763, 0.2548296
        %v6772 = vadd.f32 %v6764, 0.2548296
        %v6773 = vmul.f32 %v6765, %v6701
        %v6774 = vmul.f32 %v6766, %v6702
        %v6775 = vmul.f32 %v6767, %v6703
        %v6776 = vmul.f32 %v6768, %v6704
        %v6777 = vmul.f32 %v6769, %v6705
        %v6778 = vmul.f32 %v6770, %v6706
        %v6779 = vmul.f32 %v6771, %v6707
        %v6780 = vmul.f32 %v6772, %v6708
        %v6781 = vsub.f32 0.0, %v6677
        %v6782 = vsub.f32 0.0, %v6678
        %v6783 = vsub.f32 0.0, %v6679
        %v6784 = vsub.f32 0.0, %v6680
        %v6785 = vsub.f32 0.0, %v6681
        %v6786 = vsub.f32 0.0, %v6682
        %v6787 = vsub.f32 0.0, %v6683
        %v6788 = vsub.f32 0.0, %v6684
        %v6789 = vmul.f32 %v6781, %v6677
        %v6790 = vmul.f32 %v6782, %v6678
        %v6791 = vmul.f32 %v6783, %v6679
        %v6792 = vmul.f32 %v6784, %v6680
        %v6793 = vmul.f32 %v6785, %v6681
        %v6794 = vmul.f32 %v6786, %v6682
        %v6795 = vmul.f32 %v6787, %v6683
        %v6796 = vmul.f32 %v6788, %v6684
        %v6797 = vmul.f32 %v6789, 1.442695
        %v6798 = vpow.pop %v6797
        %v6799 = vmul.f32 %v6790, 1.442695
        %v6800 = vpow.pop %v6799
        %v6801 = vmul.f32 %v6791, 1.442695
        %v6802 = vpow.pop %v6801
        %v6803 = vmul.f32 %v6792, 1.442695
        %v6804 = vpow.pop %v6803
        %v6805 = vmul.f32 %v6793, 1.442695
        %v6806 = vpow.pop %v6805
        %v6807 = vmul.f32 %v6794, 1.442695
        %v6808 = vpow.pop %v6807
        %v6809 = vmul.f32 %v6795, 1.442695
        %v6810 = vpow.pop %v6809
        %v6811 = vmul.f32 %v6796, 1.442695
        %v6812 = vpow.pop %v6811
        %v6813 = vmul.f32 %v6773, %v6798
        %v6814 = vmul.f32 %v6774, %v6800
        %v6815 = vmul.f32 %v6775, %v6802
        %v6816 = vmul.f32 %v6776, %v6804
        %v6817 = vmul.f32 %v6777, %v6806
        %v6818 = vmul.f32 %v6778, %v6808
        %v6819 = vmul.f32 %v6779, %v6810
        %v6820 = vmul.f32 %v6780, %v6812
        %v6821 = vsub.f32 1.0, %v6813
        %v6822 = vsub.f32 1.0, %v6814
        %v6823 = vsub.f32 1.0, %v6815
        %v6824 = vsub.f32 1.0, %v6816
        %v6825 = vsub.f32 1.0, %v6817
        %v6826 = vsub.f32 1.0, %v6818
        %v6827 = vsub.f32 1.0, %v6819
        %v6828 = vsub.f32 1.0, %v6820
        %v6829 = vmul.f32 %v6669, %v6821
        %v6830 = vmul.f32 %v6670, %v6822
        %v6831 = vmul.f32 %v6671, %v6823
        %v6832 = vmul.f32 %v6672, %v6824
        %v6833 = vmul.f32 %v6673, %v6825
        %v6834 = vmul.f32 %v6674, %v6826
        %v6835 = vmul.f32 %v6675, %v6827
        %v6836 = vmul.f32 %v6676, %v6828
        %v6837 = vadd.f32 %v6829, 1.0
        %v6838 = vadd.f32 %v6830, 1.0
        %v6839 = vadd.f32 %v6831, 1.0
        %v6840 = vadd.f32 %v6832, 1.0
        %v6841 = vadd.f32 %v6833, 1.0
        %v6842 = vadd.f32 %v6834, 1.0
        %v6843 = vadd.f32 %v6835, 1.0
        %v6844 = vadd.f32 %v6836, 1.0
        %v6845 = vmul.f32 %v6645, %v6837
        %v6846 = vmul.f32 %v6646, %v6838
        %v6847 = vmul.f32 %v6647, %v6839
        %v6848 = vmul.f32 %v6648, %v6840
        %v6849 = vmul.f32 %v6649, %v6841
        %v6850 = vmul.f32 %v6650, %v6842
        %v6851 = vmul.f32 %v6651, %v6843
        %v6852 = vmul.f32 %v6652, %v6844
        %v6853 = vadd.f32 %v6030, %v6845
        %v6854 = vadd.f32 %v6031, %v6846
        %v6855 = vadd.f32 %v6032, %v6847
        %v6856 = vadd.f32 %v6033, %v6848
        %v6857 = vadd.f32 %v6034, %v6849
        %v6858 = vadd.f32 %v6035, %v6850
        %v6859 = vadd.f32 %v6036, %v6851
        %v6860 = vadd.f32 %v6037, %v6852
        %6861 = vst [vmem:[%s742] sm:$0xff] %v6853
        %6862 = vst [vmem:[%s742 + $0x8] sm:$0xff] %v6854
        %6863 = vst [vmem:[%s742 + $0x10] sm:$0xff] %v6855
        %6864 = vst [vmem:[%s742 + $0x18] sm:$0xff] %v6856
        %6865 = vst [vmem:[%s742 + $0x20] sm:$0xff] %v6857
        %6866 = vst [vmem:[%s742 + $0x28] sm:$0xff] %v6858
        %6867 = vst [vmem:[%s742 + $0x30] sm:$0xff] %v6859
        %6868 = vst [vmem:[%s742 + $0x38] sm:$0xff] %v6860
        %s6869 = sand.u32 %s461, 1
        %s6870 = scalar_lea.sflag [#allocation4], %s6869
        %s6871 = sand.u32 %s461, 1
        %s6872 = smul.addr %s6871, 64
        %s6873 = scalar_lea.vmem [#allocation14], %s6872
        // Predicated region
        $region125: #{decoder_block_forward.1} parent=95 // pred_check
          %p6874 = pneg %p471
        $region126: #{decoder_block_forward.1} parent=95 // pred_check_branch
          %6876 = sbr.rel (%p6874) target = $region128
        $region127: #{decoder_block_forward.1} parent=95 // pred_region
          %s6877 = smul.u32 4, %s39
          %s6879 = ssub.s32 1024, 1024
          %6880 = vsyncadd %s6870, %s6879
          %s6881 = smul.addr %s6877, 2
          %s6882 = smul.addr %s6881, 128
          %s6883 = scalar_lea.hbm %s19, %s6882
          %s6884 = sshll.u32 %s6873, 4
          %s6885 = int_to_ptr.vmem [resolvable:$true] %s6884
          %6890 = dma.vmem_to_hbm [thread:$0]  %s6885, 1024, %s6883, %s6870, 128, 128, 8
        $region128: #{decoder_block_forward.1} parent=95 // pred_fallthru
          _
      $region96: #{decoder_block_forward.1} parent=5 // pred_fallthru
        _
      %p6891 = scmp.le.s32.totalorder 2, %s34
      // Predicated region
      $region129: #{decoder_block_forward.1} parent=5 // pred_check
        %p6892 = pneg %p6891
      $region130: #{decoder_block_forward.1} parent=5 // pred_check_branch
        %6894 = sbr.rel (%p6892) target = $region132
      $region131: #{decoder_block_forward.1} parent=5 // pred_region
        %s6895 = ssub.s32 %s34, 2
        // Predicated region
        $region133: #{decoder_block_forward.1} parent=131 // pred_check
          %p6896 = pneg %p477
        $region134: #{decoder_block_forward.1} parent=131 // pred_check_branch
          %6898 = sbr.rel (%p6896) target = $region136
        $region135: #{decoder_block_forward.1} parent=131 // pred_region
          %s6899 = sand.u32 %s462, 1
          %s6900 = scalar_lea.sflag [#allocation4], %s6899
          %s6901 = sand.u32 %s462, 1
          %s6902 = smul.addr %s6901, 64
          %s6903 = scalar_lea.vmem [#allocation14], %s6902
          %6904 = dma.done %s6900, 1024
        $region136: #{decoder_block_forward.1} parent=131 // pred_fallthru
          _
      $region132: #{decoder_block_forward.1} parent=5 // pred_fallthru
        _
    $region6: #{decoder_block_forward.1} parent=1 // loop_footer
      %s38 = sadd.s32 1, %s34
    $region7: #{decoder_block_forward.1} parent=1 // loop_footer_branch
      %33 = sbr.rel target = $region3
    $region8: #{decoder_block_forward.1} parent=1 // loop_exit
      _
    %6905 = vsyncpa [#allocation3], 1
    %s6906 = scalar_lea.sflag [#allocation3], 1
    %6907 = vsyncpa %s6906, 1
    %6908 = vsyncpa [#allocation6], 1
    %6909 = vsyncpa [#allocation9], 1
    %6910 = vsyncpa [#allocation12], 1
    %6911 = vsyncpa [#allocation4], 1
    %s6912 = scalar_lea.sflag [#allocation4], 1
    %6913 = vsyncpa %s6912, 1

</llo_original>
